<compile_context>
chip_gen: v7x
topology: tpu7x:2x2x1
jax: 0.10.0
libtpu: 0.0.40
codegen_flags: <defaults>
</compile_context>

<pallas_src>
import functools

import jax
import jax.numpy as jnp
import numpy as np
from jax.experimental import pallas as pl
from jax.experimental.pallas import tpu as pltpu


K1, S1, C1OUT = 8, 4, 16      # conv1: kernel, stride, out-channels
K2, S2, C2OUT = 4, 2, 32      # conv2: kernel, stride, out-channels
B1 = K1 // S1                 # 2: conv1 window = 2x2 grid of non-overlapping 4x4 blocks
B2 = K2 // S2                 # 2: conv2 window = 2x2 grid of non-overlapping 2x2 blocks
NQ1 = B1 * B1                 # 4 conv1 block-offset terms
NQ2 = B2 * B2                 # 4 conv2 block-offset terms (also 4 sub-positions)


def _conv_out(size, k, s):
    return (size - (k - 1) - 1) // s + 1


def _build_sel1(NBH, NBW, H2, W2):
    """sel1[q=(bi,bj)][(I,J), (q2,(I2,J2))] selects input block (I,J) for the conv1
    output at (i1,j1)=(2*I2+r2, 2*J2+c2) with q2=(r2,c2); columns are grouped by q2
    so conv2's block decomposition needs no in-kernel relayout."""
    NB2H, NB2W = H2 + 1, W2 + 1
    NB = NBH * NBW
    sel = np.zeros((NQ1, NB, NQ2 * NB2H * NB2W), np.float32)
    for bi in range(B1):
        for bj in range(B1):
            q = bi * B1 + bj
            for r2 in range(B2):
                for c2 in range(B2):
                    q2 = r2 * B2 + c2
                    for I2 in range(NB2H):
                        for J2 in range(NB2W):
                            i1 = 2 * I2 + r2
                            j1 = 2 * J2 + c2
                            col = q2 * (NB2H * NB2W) + I2 * NB2W + J2
                            sel[q, (i1 + bi) * NBW + (j1 + bj), col] = 1.0
    return sel


def _build_sel2(H2, W2):
    """sel2[qb=(bi2,bj2)][(I2,J2), (i2,j2)] = 1 iff (I2,J2) == (i2+bi2, j2+bj2)."""
    NB2H, NB2W = H2 + 1, W2 + 1
    sel = np.zeros((NQ2, NB2H * NB2W, H2 * W2), np.float32)
    for bi2 in range(B2):
        for bj2 in range(B2):
            qb = bi2 * B2 + bj2
            for i2 in range(H2):
                for j2 in range(W2):
                    sel[qb, (i2 + bi2) * NB2W + (j2 + bj2), i2 * W2 + j2] = 1.0
    return sel


def _fused_cnn_kernel(xbt_ref, w1s_ref, b1_ref, sel1_ref, w2p_ref, b2_ref, sel2_ref,
                      out_ref):
    """One grid step = BN samples.  Per sample: 13 bf16 MXU matmuls, f32 accumulation,
    both ReLUs fused, result written into a lane-dense (C2OUT, BN*P2) output slab."""
    bn = xbt_ref.shape[0]
    c1 = b1_ref.shape[0]
    c2 = b2_ref.shape[0]
    nb2 = sel2_ref.shape[1]
    p2 = sel2_ref.shape[2]

    w1s = w1s_ref[...]          # (NQ1*C1, F1) bf16, resident
    b1 = b1_ref[...]            # (C1, 1) f32
    b2 = b2_ref[...]            # (C2, 1) f32

    for s in range(bn):                                               # unrolled over BN
        xbt = xbt_ref[s]                                              # (F1, NB) bf16

        # conv1, weight-first: one stacked weight matmul, then 4 gather matmuls.
        z = jnp.dot(w1s, xbt,
                    preferred_element_type=jnp.float32).astype(jnp.bfloat16)   # (4*C1, NB)
        acc1 = jnp.dot(z[0:c1, :], sel1_ref[0],
                       preferred_element_type=jnp.float32)             # (C1, NQ2*NB2)
        for q in range(1, NQ1):
            acc1 = acc1 + jnp.dot(z[q * c1:(q + 1) * c1, :], sel1_ref[q],
                                  preferred_element_type=jnp.float32)
        a1 = jnp.maximum(acc1 + b1, 0.0).astype(jnp.bfloat16)          # (C1, NQ2*NB2)

        # conv2, block-offset form: 4 weight matmuls over the sub-position groups...
        zb = jnp.dot(w2p_ref[0], a1[:, 0:nb2],
                     preferred_element_type=jnp.float32)               # (NQ2*C2, NB2)
        for q2 in range(1, NQ2):
            zb = zb + jnp.dot(w2p_ref[q2], a1[:, q2 * nb2:(q2 + 1) * nb2],
                              preferred_element_type=jnp.float32)
        zb = zb.astype(jnp.bfloat16)

        # ...then 4 gather matmuls over the block offsets.
        y2 = jnp.dot(zb[0:c2, :], sel2_ref[0],
                     preferred_element_type=jnp.float32)               # (C2, P2)
        for qb in range(1, NQ2):
            y2 = y2 + jnp.dot(zb[qb * c2:(qb + 1) * c2, :], sel2_ref[qb],
                              preferred_element_type=jnp.float32)

        out_ref[0, :, s * p2:(s + 1) * p2] = jnp.maximum(y2 + b2, 0.0)


@functools.partial(jax.jit, static_argnames=("block_batch",))
def simple_cnn_forward(x_nchw, params, block_batch=None):
    """Replicates SimpleCNN.forward: relu(conv1) -> relu(conv2) -> view(-1, feature)."""
    w1, b1, w2, b2 = params["w1"], params["b1"], params["w2"], params["b2"]
    N, C, H, W = x_nchw.shape
    H1, W1 = _conv_out(H, K1, S1), _conv_out(W, K1, S1)
    H2, W2 = _conv_out(H1, K2, S2), _conv_out(W1, K2, S2)
    assert H2 >= 1 and W2 >= 1, "spatial input must be >= 20 for these two strided convs"

    NB2H, NB2W = H2 + 1, W2 + 1
    NB2 = NB2H * NB2W                 # conv1-activation 2x2-block grid actually used
    P1p = NQ2 * NB2                   # conv1 output columns the kernel computes
    P2 = H2 * W2
    NBH, NBW = 2 * H2 + 3, 2 * W2 + 3  # input 4x4-block grid actually used
    NB = NBH * NBW
    F1 = S1 * S1 * C

    # ---- batch tiling: BN samples per grid step, grid extent >= 2 when N >= 2 ----
    if block_batch is None:
        block_batch = max(1, min(8, N // 2)) if N >= 2 else 1
    BN = int(block_batch)
    G = -(-N // BN)
    N_pad = G * BN
    if N_pad != N:
        x_nchw = jnp.pad(x_nchw, ((0, N_pad - N), (0, 0), (0, 0), (0, 0)))

    # ---- one-shot space-to-depth (single crop+reshape+transpose, no im2col in HBM) ----
    xu = x_nchw[:, :, : S1 * NBH, : S1 * NBW].astype(jnp.bfloat16)
    xb = xu.reshape(N_pad, C, NBH, S1, NBW, S1)                       # (n, ci, I, r, J, c)
    xbt = jnp.transpose(xb, (0, 3, 5, 1, 2, 4)).reshape(N_pad, F1, NB)  # features = (r,c,ci)

    # conv1 weights stacked over the 4 (bi,bj) block offsets: (NQ1*C1OUT, F1).
    w1r = w1.reshape(C1OUT, C, B1, S1, B1, S1)                        # (co, ci, bi, r, bj, c)
    w1s = jnp.transpose(w1r, (2, 4, 0, 3, 5, 1)) \
             .reshape(NQ1 * C1OUT, F1).astype(jnp.bfloat16)

    # conv2 weights regrouped by sub-position q2=(r2,c2): (NQ2, NQ2*C2OUT, C1OUT).
    w2r = w2.reshape(C2OUT, C1OUT, B2, S2, B2, S2)                    # (co2, ci2, bi2, r2, bj2, c2)
    w2p = jnp.transpose(w2r, (3, 5, 2, 4, 0, 1)) \
             .reshape(NQ2, NQ2 * C2OUT, C1OUT).astype(jnp.bfloat16)

    sel1 = jnp.asarray(_build_sel1(NBH, NBW, H2, W2), dtype=jnp.bfloat16)   # (4, NB, P1p)
    sel2 = jnp.asarray(_build_sel2(H2, W2), dtype=jnp.bfloat16)             # (4, NB2, P2)
    b1c = b1.reshape(C1OUT, 1).astype(jnp.float32)
    b2c = b2.reshape(C2OUT, 1).astype(jnp.float32)

    out = pl.pallas_call(
        _fused_cnn_kernel,
        out_shape=jax.ShapeDtypeStruct((G, C2OUT, BN * P2), jnp.float32),
        grid=(G,),
        in_specs=[
            pl.BlockSpec((BN, F1, NB), lambda g: (g, 0, 0)),          # per-step input blocks
            pl.BlockSpec((NQ1 * C1OUT, F1), lambda g: (0, 0)),        # conv1 weights (resident)
            pl.BlockSpec((C1OUT, 1), lambda g: (0, 0)),               # conv1 bias
            pl.BlockSpec((NQ1, NB, P1p), lambda g: (0, 0, 0)),        # conv1 gather matrices
            pl.BlockSpec((NQ2, NQ2 * C2OUT, C1OUT), lambda g: (0, 0, 0)),  # conv2 weights
            pl.BlockSpec((C2OUT, 1), lambda g: (0, 0)),               # conv2 bias
            pl.BlockSpec((NQ2, NB2, P2), lambda g: (0, 0, 0)),        # conv2 gather matrices
        ],
        out_specs=pl.BlockSpec((1, C2OUT, BN * P2), lambda g: (g, 0, 0)),   # lane-dense slab
        compiler_params=pltpu.CompilerParams(
            dimension_semantics=("parallel",),                        # batch tiles over TCs
        ),
    )(xbt, w1s, b1c, sel1, w2p, b2c, sel2)

    # (G, C2, BN, P2) -> (N, C2*P2): torch's channel-major flatten order; drop batch pad.
    out = out.reshape(G, C2OUT, BN, P2).transpose(0, 2, 1, 3).reshape(N_pad, C2OUT * P2)
    return out[:N]


def init_params(key, cin):
    k1, k2, k3, k4 = jax.random.split(key, 4)
    fan1 = cin * K1 * K1
    fan2 = C1OUT * K2 * K2
    w1 = jax.random.uniform(k1, (C1OUT, cin, K1, K1), jnp.float32,
                            -1.0 / np.sqrt(fan1), 1.0 / np.sqrt(fan1))
    b1 = jax.random.uniform(k2, (C1OUT,), jnp.float32,
                            -1.0 / np.sqrt(fan1), 1.0 / np.sqrt(fan1))
    w2 = jax.random.uniform(k3, (C2OUT, C1OUT, K2, K2), jnp.float32,
                            -1.0 / np.sqrt(fan2), 1.0 / np.sqrt(fan2))
    b2 = jax.random.uniform(k4, (C2OUT,), jnp.float32,
                            -1.0 / np.sqrt(fan2), 1.0 / np.sqrt(fan2))
    return {"w1": w1, "b1": b1, "w2": w2, "b2": b2}


def _reference_forward(x_nchw, params):
    """Pure-JAX f32 reference (lax conv, HIGHEST precision) for the correctness check."""
    dn = jax.lax.conv_dimension_numbers(x_nchw.shape, params["w1"].shape,
                                        ("NCHW", "OIHW", "NCHW"))
    y = jax.lax.conv_general_dilated(x_nchw, params["w1"], (S1, S1), "VALID",
                                     dimension_numbers=dn,
                                     precision=jax.lax.Precision.HIGHEST)
    y = jax.nn.relu(y + params["b1"][None, :, None, None])
    dn2 = jax.lax.conv_dimension_numbers(y.shape, params["w2"].shape,
                                         ("NCHW", "OIHW", "NCHW"))
    y = jax.lax.conv_general_dilated(y, params["w2"], (S2, S2), "VALID",
                                     dimension_numbers=dn2,
                                     precision=jax.lax.Precision.HIGHEST)
    y = jax.nn.relu(y + params["b2"][None, :, None, None])
    return y.reshape(y.shape[0], -1)


if __name__ == "__main__":
    # Small shapes consistent with the module: spatial must be >= 20 for the two
    # strided convs to produce a positive output size; 36x36 gives H2=W2=3.
    # batch=8 exercises the batch tiling (BN=4 -> grid of 2 steps).
    N, C, H, W = 8, 4, 36, 36
    key = jax.random.PRNGKey(0)
    kx, kp = jax.random.split(key)
    x = jax.random.normal(kx, (N, C, H, W), jnp.float32)
    params = init_params(kp, C)

    out = jax.block_until_ready(simple_cnn_forward(x, params))
    ref = jax.block_until_ready(_reference_forward(x, params))
    assert out.shape == ref.shape, (out.shape, ref.shape)
    # bf16 matmul operands (f32 accumulation) -> relaxed tolerance vs f32 reference.
    np.testing.assert_allclose(np.asarray(out), np.asarray(ref), rtol=3e-2, atol=3e-2)

    print("KERNEL_OK")
</pallas_src>

<mosaic_0001>
module attributes {stable_mosaic.version = 11 : i64} {
  func.func @_fused_cnn_kernel(%arg0: i32, %arg1: memref<4x64x81xbf16, #tpu.memory_space<vmem>>, %arg2: memref<64x64xbf16, #tpu.memory_space<vmem>>, %arg3: memref<16x1xf32, #tpu.memory_space<vmem>>, %arg4: memref<4x81x64xbf16, #tpu.memory_space<vmem>>, %arg5: memref<4x128x16xbf16, #tpu.memory_space<vmem>>, %arg6: memref<32x1xf32, #tpu.memory_space<vmem>>, %arg7: memref<4x16x9xbf16, #tpu.memory_space<vmem>>, %arg8: memref<1x32x36xf32, #tpu.memory_space<vmem>>) attributes {dimension_semantics = [#tpu.dimension_semantics<parallel>], iteration_bounds = array<i64: 2>, scalar_prefetch = 0 : i64, scratch_operands = 0 : i64, tpu.core_type = #tpu.core_type<tc>, window_params = [{transform_indices = @transform_0, window_bounds = array<i64: 4, 64, 81>}, {pipeline_mode = #tpu.pipeline_mode<synchronous>, transform_indices = @transform_1, window_bounds = array<i64: 64, 64>}, {pipeline_mode = #tpu.pipeline_mode<synchronous>, transform_indices = @transform_2, window_bounds = array<i64: 16, 1>}, {pipeline_mode = #tpu.pipeline_mode<synchronous>, transform_indices = @transform_3, window_bounds = array<i64: 4, 81, 64>}, {pipeline_mode = #tpu.pipeline_mode<synchronous>, transform_indices = @transform_4, window_bounds = array<i64: 4, 128, 16>}, {pipeline_mode = #tpu.pipeline_mode<synchronous>, transform_indices = @transform_5, window_bounds = array<i64: 32, 1>}, {pipeline_mode = #tpu.pipeline_mode<synchronous>, transform_indices = @transform_6, window_bounds = array<i64: 4, 16, 9>}, {transform_indices = @transform_7, window_bounds = array<i64: 1, 32, 36>}]} {
    %c0 = arith.constant 0 : index
    %c0_0 = arith.constant 0 : index
    %0 = vector.load %arg2[%c0, %c0_0] : memref<64x64xbf16, #tpu.memory_space<vmem>>, vector<64x64xbf16>
    %c0_1 = arith.constant 0 : index
    %c0_2 = arith.constant 0 : index
    %1 = vector.load %arg3[%c0_1, %c0_2] : memref<16x1xf32, #tpu.memory_space<vmem>>, vector<16x1xf32>
    %c0_3 = arith.constant 0 : index
    %c0_4 = arith.constant 0 : index
    %2 = vector.load %arg6[%c0_3, %c0_4] : memref<32x1xf32, #tpu.memory_space<vmem>>, vector<32x1xf32>
    %c0_5 = arith.constant 0 : index
    %c0_6 = arith.constant 0 : index
    %c0_7 = arith.constant 0 : index
    %3 = vector.load %arg1[%c0_5, %c0_6, %c0_7] : memref<4x64x81xbf16, #tpu.memory_space<vmem>>, vector<1x64x81xbf16>
    %4 = vector.shape_cast %3 : vector<1x64x81xbf16> to vector<64x81xbf16>
    %cst = arith.constant dense<0.000000e+00> : vector<64x81xf32>
    %5 = tpu.matmul %0, %4, %cst {dimension_numbers = #tpu.dot_dimension_numbers<[1], [0], [0], [1], [0, 0, 1, 1], [], []>} : vector<64x64xbf16>, vector<64x81xbf16>, vector<64x81xf32> -> vector<64x81xf32>
    %6 = arith.truncf %5 : vector<64x81xf32> to vector<64x81xbf16>
    %7 = vector.extract_strided_slice %6 {offsets = [0, 0], sizes = [16, 81], strides = [1, 1]} : vector<64x81xbf16> to vector<16x81xbf16>
    %c0_8 = arith.constant 0 : index
    %c0_9 = arith.constant 0 : index
    %c0_10 = arith.constant 0 : index
    %8 = vector.load %arg4[%c0_8, %c0_9, %c0_10] : memref<4x81x64xbf16, #tpu.memory_space<vmem>>, vector<1x81x64xbf16>
    %9 = vector.shape_cast %8 : vector<1x81x64xbf16> to vector<81x64xbf16>
    %cst_11 = arith.constant dense<0.000000e+00> : vector<16x64xf32>
    %10 = tpu.matmul %7, %9, %cst_11 {dimension_numbers = #tpu.dot_dimension_numbers<[1], [0], [0], [1], [0, 0, 1, 1], [], []>} : vector<16x81xbf16>, vector<81x64xbf16>, vector<16x64xf32> -> vector<16x64xf32>
    %11 = vector.extract_strided_slice %6 {offsets = [16, 0], sizes = [16, 81], strides = [1, 1]} : vector<64x81xbf16> to vector<16x81xbf16>
    %c1 = arith.constant 1 : index
    %c0_12 = arith.constant 0 : index
    %c0_13 = arith.constant 0 : index
    %12 = vector.load %arg4[%c1, %c0_12, %c0_13] : memref<4x81x64xbf16, #tpu.memory_space<vmem>>, vector<1x81x64xbf16>
    %13 = vector.shape_cast %12 : vector<1x81x64xbf16> to vector<81x64xbf16>
    %cst_14 = arith.constant dense<0.000000e+00> : vector<16x64xf32>
    %14 = tpu.matmul %11, %13, %cst_14 {dimension_numbers = #tpu.dot_dimension_numbers<[1], [0], [0], [1], [0, 0, 1, 1], [], []>} : vector<16x81xbf16>, vector<81x64xbf16>, vector<16x64xf32> -> vector<16x64xf32>
    %15 = arith.addf %10, %14 : vector<16x64xf32>
    %16 = vector.extract_strided_slice %6 {offsets = [32, 0], sizes = [16, 81], strides = [1, 1]} : vector<64x81xbf16> to vector<16x81xbf16>
    %c2 = arith.constant 2 : index
    %c0_15 = arith.constant 0 : index
    %c0_16 = arith.constant 0 : index
    %17 = vector.load %arg4[%c2, %c0_15, %c0_16] : memref<4x81x64xbf16, #tpu.memory_space<vmem>>, vector<1x81x64xbf16>
    %18 = vector.shape_cast %17 : vector<1x81x64xbf16> to vector<81x64xbf16>
    %cst_17 = arith.constant dense<0.000000e+00> : vector<16x64xf32>
    %19 = tpu.matmul %16, %18, %cst_17 {dimension_numbers = #tpu.dot_dimension_numbers<[1], [0], [0], [1], [0, 0, 1, 1], [], []>} : vector<16x81xbf16>, vector<81x64xbf16>, vector<16x64xf32> -> vector<16x64xf32>
    %20 = arith.addf %15, %19 : vector<16x64xf32>
    %21 = vector.extract_strided_slice %6 {offsets = [48, 0], sizes = [16, 81], strides = [1, 1]} : vector<64x81xbf16> to vector<16x81xbf16>
    %c3 = arith.constant 3 : index
    %c0_18 = arith.constant 0 : index
    %c0_19 = arith.constant 0 : index
    %22 = vector.load %arg4[%c3, %c0_18, %c0_19] : memref<4x81x64xbf16, #tpu.memory_space<vmem>>, vector<1x81x64xbf16>
    %23 = vector.shape_cast %22 : vector<1x81x64xbf16> to vector<81x64xbf16>
    %cst_20 = arith.constant dense<0.000000e+00> : vector<16x64xf32>
    %24 = tpu.matmul %21, %23, %cst_20 {dimension_numbers = #tpu.dot_dimension_numbers<[1], [0], [0], [1], [0, 0, 1, 1], [], []>} : vector<16x81xbf16>, vector<81x64xbf16>, vector<16x64xf32> -> vector<16x64xf32>
    %25 = arith.addf %20, %24 : vector<16x64xf32>
    %26 = vector.broadcast %1 : vector<16x1xf32> to vector<16x64xf32>
    %27 = arith.addf %25, %26 : vector<16x64xf32>
    %cst_21 = arith.constant 0.000000e+00 : f32
    %28 = vector.broadcast %cst_21 : f32 to vector<16x64xf32>
    %29 = arith.maximumf %27, %28 : vector<16x64xf32>
    %30 = arith.truncf %29 : vector<16x64xf32> to vector<16x64xbf16>
    %c0_22 = arith.constant 0 : index
    %c0_23 = arith.constant 0 : index
    %c0_24 = arith.constant 0 : index
    %31 = vector.load %arg5[%c0_22, %c0_23, %c0_24] : memref<4x128x16xbf16, #tpu.memory_space<vmem>>, vector<1x128x16xbf16>
    %32 = vector.shape_cast %31 : vector<1x128x16xbf16> to vector<128x16xbf16>
    %33 = vector.extract_strided_slice %30 {offsets = [0, 0], sizes = [16, 16], strides = [1, 1]} : vector<16x64xbf16> to vector<16x16xbf16>
    %cst_25 = arith.constant dense<0.000000e+00> : vector<128x16xf32>
    %34 = tpu.matmul %32, %33, %cst_25 {dimension_numbers = #tpu.dot_dimension_numbers<[1], [0], [0], [1], [0, 0, 1, 1], [], []>} : vector<128x16xbf16>, vector<16x16xbf16>, vector<128x16xf32> -> vector<128x16xf32>
    %c1_26 = arith.constant 1 : index
    %c0_27 = arith.constant 0 : index
    %c0_28 = arith.constant 0 : index
    %35 = vector.load %arg5[%c1_26, %c0_27, %c0_28] : memref<4x128x16xbf16, #tpu.memory_space<vmem>>, vector<1x128x16xbf16>
    %36 = vector.shape_cast %35 : vector<1x128x16xbf16> to vector<128x16xbf16>
    %37 = vector.extract_strided_slice %30 {offsets = [0, 16], sizes = [16, 16], strides = [1, 1]} : vector<16x64xbf16> to vector<16x16xbf16>
    %cst_29 = arith.constant dense<0.000000e+00> : vector<128x16xf32>
    %38 = tpu.matmul %36, %37, %cst_29 {dimension_numbers = #tpu.dot_dimension_numbers<[1], [0], [0], [1], [0, 0, 1, 1], [], []>} : vector<128x16xbf16>, vector<16x16xbf16>, vector<128x16xf32> -> vector<128x16xf32>
    %39 = arith.addf %34, %38 : vector<128x16xf32>
    %c2_30 = arith.constant 2 : index
    %c0_31 = arith.constant 0 : index
    %c0_32 = arith.constant 0 : index
    %40 = vector.load %arg5[%c2_30, %c0_31, %c0_32] : memref<4x128x16xbf16, #tpu.memory_space<vmem>>, vector<1x128x16xbf16>
    %41 = vector.shape_cast %40 : vector<1x128x16xbf16> to vector<128x16xbf16>
    %42 = vector.extract_strided_slice %30 {offsets = [0, 32], sizes = [16, 16], strides = [1, 1]} : vector<16x64xbf16> to vector<16x16xbf16>
    %cst_33 = arith.constant dense<0.000000e+00> : vector<128x16xf32>
    %43 = tpu.matmul %41, %42, %cst_33 {dimension_numbers = #tpu.dot_dimension_numbers<[1], [0], [0], [1], [0, 0, 1, 1], [], []>} : vector<128x16xbf16>, vector<16x16xbf16>, vector<128x16xf32> -> vector<128x16xf32>
    %44 = arith.addf %39, %43 : vector<128x16xf32>
    %c3_34 = arith.constant 3 : index
    %c0_35 = arith.constant 0 : index
    %c0_36 = arith.constant 0 : index
    %45 = vector.load %arg5[%c3_34, %c0_35, %c0_36] : memref<4x128x16xbf16, #tpu.memory_space<vmem>>, vector<1x128x16xbf16>
    %46 = vector.shape_cast %45 : vector<1x128x16xbf16> to vector<128x16xbf16>
    %47 = vector.extract_strided_slice %30 {offsets = [0, 48], sizes = [16, 16], strides = [1, 1]} : vector<16x64xbf16> to vector<16x16xbf16>
    %cst_37 = arith.constant dense<0.000000e+00> : vector<128x16xf32>
    %48 = tpu.matmul %46, %47, %cst_37 {dimension_numbers = #tpu.dot_dimension_numbers<[1], [0], [0], [1], [0, 0, 1, 1], [], []>} : vector<128x16xbf16>, vector<16x16xbf16>, vector<128x16xf32> -> vector<128x16xf32>
    %49 = arith.addf %44, %48 : vector<128x16xf32>
    %50 = arith.truncf %49 : vector<128x16xf32> to vector<128x16xbf16>
    %51 = vector.extract_strided_slice %50 {offsets = [0, 0], sizes = [32, 16], strides = [1, 1]} : vector<128x16xbf16> to vector<32x16xbf16>
    %c0_38 = arith.constant 0 : index
    %c0_39 = arith.constant 0 : index
    %c0_40 = arith.constant 0 : index
    %52 = vector.load %arg7[%c0_38, %c0_39, %c0_40] : memref<4x16x9xbf16, #tpu.memory_space<vmem>>, vector<1x16x9xbf16>
    %53 = vector.shape_cast %52 : vector<1x16x9xbf16> to vector<16x9xbf16>
    %cst_41 = arith.constant dense<0.000000e+00> : vector<32x9xf32>
    %54 = tpu.matmul %51, %53, %cst_41 {dimension_numbers = #tpu.dot_dimension_numbers<[1], [0], [0], [1], [0, 0, 1, 1], [], []>} : vector<32x16xbf16>, vector<16x9xbf16>, vector<32x9xf32> -> vector<32x9xf32>
    %55 = vector.extract_strided_slice %50 {offsets = [32, 0], sizes = [32, 16], strides = [1, 1]} : vector<128x16xbf16> to vector<32x16xbf16>
    %c1_42 = arith.constant 1 : index
    %c0_43 = arith.constant 0 : index
    %c0_44 = arith.constant 0 : index
    %56 = vector.load %arg7[%c1_42, %c0_43, %c0_44] : memref<4x16x9xbf16, #tpu.memory_space<vmem>>, vector<1x16x9xbf16>
    %57 = vector.shape_cast %56 : vector<1x16x9xbf16> to vector<16x9xbf16>
    %cst_45 = arith.constant dense<0.000000e+00> : vector<32x9xf32>
    %58 = tpu.matmul %55, %57, %cst_45 {dimension_numbers = #tpu.dot_dimension_numbers<[1], [0], [0], [1], [0, 0, 1, 1], [], []>} : vector<32x16xbf16>, vector<16x9xbf16>, vector<32x9xf32> -> vector<32x9xf32>
    %59 = arith.addf %54, %58 : vector<32x9xf32>
    %60 = vector.extract_strided_slice %50 {offsets = [64, 0], sizes = [32, 16], strides = [1, 1]} : vector<128x16xbf16> to vector<32x16xbf16>
    %c2_46 = arith.constant 2 : index
    %c0_47 = arith.constant 0 : index
    %c0_48 = arith.constant 0 : index
    %61 = vector.load %arg7[%c2_46, %c0_47, %c0_48] : memref<4x16x9xbf16, #tpu.memory_space<vmem>>, vector<1x16x9xbf16>
    %62 = vector.shape_cast %61 : vector<1x16x9xbf16> to vector<16x9xbf16>
    %cst_49 = arith.constant dense<0.000000e+00> : vector<32x9xf32>
    %63 = tpu.matmul %60, %62, %cst_49 {dimension_numbers = #tpu.dot_dimension_numbers<[1], [0], [0], [1], [0, 0, 1, 1], [], []>} : vector<32x16xbf16>, vector<16x9xbf16>, vector<32x9xf32> -> vector<32x9xf32>
    %64 = arith.addf %59, %63 : vector<32x9xf32>
    %65 = vector.extract_strided_slice %50 {offsets = [96, 0], sizes = [32, 16], strides = [1, 1]} : vector<128x16xbf16> to vector<32x16xbf16>
    %c3_50 = arith.constant 3 : index
    %c0_51 = arith.constant 0 : index
    %c0_52 = arith.constant 0 : index
    %66 = vector.load %arg7[%c3_50, %c0_51, %c0_52] : memref<4x16x9xbf16, #tpu.memory_space<vmem>>, vector<1x16x9xbf16>
    %67 = vector.shape_cast %66 : vector<1x16x9xbf16> to vector<16x9xbf16>
    %cst_53 = arith.constant dense<0.000000e+00> : vector<32x9xf32>
    %68 = tpu.matmul %65, %67, %cst_53 {dimension_numbers = #tpu.dot_dimension_numbers<[1], [0], [0], [1], [0, 0, 1, 1], [], []>} : vector<32x16xbf16>, vector<16x9xbf16>, vector<32x9xf32> -> vector<32x9xf32>
    %69 = arith.addf %64, %68 : vector<32x9xf32>
    %70 = vector.broadcast %2 : vector<32x1xf32> to vector<32x9xf32>
    %71 = arith.addf %69, %70 : vector<32x9xf32>
    %cst_54 = arith.constant 0.000000e+00 : f32
    %72 = vector.broadcast %cst_54 : f32 to vector<32x9xf32>
    %73 = arith.maximumf %71, %72 : vector<32x9xf32>
    %c0_55 = arith.constant 0 : index
    %c0_56 = arith.constant 0 : index
    %c0_57 = arith.constant 0 : index
    %74 = vector.load %arg8[%c0_55, %c0_56, %c0_57] : memref<1x32x36xf32, #tpu.memory_space<vmem>>, vector<1x32x9xf32>
    %75 = vector.shape_cast %74 : vector<1x32x9xf32> to vector<32x9xf32>
    %76 = vector.shape_cast %73 : vector<32x9xf32> to vector<1x32x9xf32>
    tpu.vector_store %arg8[%c0_55, %c0_56, %c0_57], %76 {strides = array<i32>} : memref<1x32x36xf32, #tpu.memory_space<vmem>>, vector<1x32x9xf32>,
    %c1_58 = arith.constant 1 : index
    %c0_59 = arith.constant 0 : index
    %c0_60 = arith.constant 0 : index
    %77 = vector.load %arg1[%c1_58, %c0_59, %c0_60] : memref<4x64x81xbf16, #tpu.memory_space<vmem>>, vector<1x64x81xbf16>
    %78 = vector.shape_cast %77 : vector<1x64x81xbf16> to vector<64x81xbf16>
    %cst_61 = arith.constant dense<0.000000e+00> : vector<64x81xf32>
    %79 = tpu.matmul %0, %78, %cst_61 {dimension_numbers = #tpu.dot_dimension_numbers<[1], [0], [0], [1], [0, 0, 1, 1], [], []>} : vector<64x64xbf16>, vector<64x81xbf16>, vector<64x81xf32> -> vector<64x81xf32>
    %80 = arith.truncf %79 : vector<64x81xf32> to vector<64x81xbf16>
    %81 = vector.extract_strided_slice %80 {offsets = [0, 0], sizes = [16, 81], strides = [1, 1]} : vector<64x81xbf16> to vector<16x81xbf16>
    %c0_62 = arith.constant 0 : index
    %c0_63 = arith.constant 0 : index
    %c0_64 = arith.constant 0 : index
    %82 = vector.load %arg4[%c0_62, %c0_63, %c0_64] : memref<4x81x64xbf16, #tpu.memory_space<vmem>>, vector<1x81x64xbf16>
    %83 = vector.shape_cast %82 : vector<1x81x64xbf16> to vector<81x64xbf16>
    %cst_65 = arith.constant dense<0.000000e+00> : vector<16x64xf32>
    %84 = tpu.matmul %81, %83, %cst_65 {dimension_numbers = #tpu.dot_dimension_numbers<[1], [0], [0], [1], [0, 0, 1, 1], [], []>} : vector<16x81xbf16>, vector<81x64xbf16>, vector<16x64xf32> -> vector<16x64xf32>
    %85 = vector.extract_strided_slice %80 {offsets = [16, 0], sizes = [16, 81], strides = [1, 1]} : vector<64x81xbf16> to vector<16x81xbf16>
    %c1_66 = arith.constant 1 : index
    %c0_67 = arith.constant 0 : index
    %c0_68 = arith.constant 0 : index
    %86 = vector.load %arg4[%c1_66, %c0_67, %c0_68] : memref<4x81x64xbf16, #tpu.memory_space<vmem>>, vector<1x81x64xbf16>
    %87 = vector.shape_cast %86 : vector<1x81x64xbf16> to vector<81x64xbf16>
    %cst_69 = arith.constant dense<0.000000e+00> : vector<16x64xf32>
    %88 = tpu.matmul %85, %87, %cst_69 {dimension_numbers = #tpu.dot_dimension_numbers<[1], [0], [0], [1], [0, 0, 1, 1], [], []>} : vector<16x81xbf16>, vector<81x64xbf16>, vector<16x64xf32> -> vector<16x64xf32>
    %89 = arith.addf %84, %88 : vector<16x64xf32>
    %90 = vector.extract_strided_slice %80 {offsets = [32, 0], sizes = [16, 81], strides = [1, 1]} : vector<64x81xbf16> to vector<16x81xbf16>
    %c2_70 = arith.constant 2 : index
    %c0_71 = arith.constant 0 : index
    %c0_72 = arith.constant 0 : index
    %91 = vector.load %arg4[%c2_70, %c0_71, %c0_72] : memref<4x81x64xbf16, #tpu.memory_space<vmem>>, vector<1x81x64xbf16>
    %92 = vector.shape_cast %91 : vector<1x81x64xbf16> to vector<81x64xbf16>
    %cst_73 = arith.constant dense<0.000000e+00> : vector<16x64xf32>
    %93 = tpu.matmul %90, %92, %cst_73 {dimension_numbers = #tpu.dot_dimension_numbers<[1], [0], [0], [1], [0, 0, 1, 1], [], []>} : vector<16x81xbf16>, vector<81x64xbf16>, vector<16x64xf32> -> vector<16x64xf32>
    %94 = arith.addf %89, %93 : vector<16x64xf32>
    %95 = vector.extract_strided_slice %80 {offsets = [48, 0], sizes = [16, 81], strides = [1, 1]} : vector<64x81xbf16> to vector<16x81xbf16>
    %c3_74 = arith.constant 3 : index
    %c0_75 = arith.constant 0 : index
    %c0_76 = arith.constant 0 : index
    %96 = vector.load %arg4[%c3_74, %c0_75, %c0_76] : memref<4x81x64xbf16, #tpu.memory_space<vmem>>, vector<1x81x64xbf16>
    %97 = vector.shape_cast %96 : vector<1x81x64xbf16> to vector<81x64xbf16>
    %cst_77 = arith.constant dense<0.000000e+00> : vector<16x64xf32>
    %98 = tpu.matmul %95, %97, %cst_77 {dimension_numbers = #tpu.dot_dimension_numbers<[1], [0], [0], [1], [0, 0, 1, 1], [], []>} : vector<16x81xbf16>, vector<81x64xbf16>, vector<16x64xf32> -> vector<16x64xf32>
    %99 = arith.addf %94, %98 : vector<16x64xf32>
    %100 = vector.broadcast %1 : vector<16x1xf32> to vector<16x64xf32>
    %101 = arith.addf %99, %100 : vector<16x64xf32>
    %cst_78 = arith.constant 0.000000e+00 : f32
    %102 = vector.broadcast %cst_78 : f32 to vector<16x64xf32>
    %103 = arith.maximumf %101, %102 : vector<16x64xf32>
    %104 = arith.truncf %103 : vector<16x64xf32> to vector<16x64xbf16>
    %c0_79 = arith.constant 0 : index
    %c0_80 = arith.constant 0 : index
    %c0_81 = arith.constant 0 : index
    %105 = vector.load %arg5[%c0_79, %c0_80, %c0_81] : memref<4x128x16xbf16, #tpu.memory_space<vmem>>, vector<1x128x16xbf16>
    %106 = vector.shape_cast %105 : vector<1x128x16xbf16> to vector<128x16xbf16>
    %107 = vector.extract_strided_slice %104 {offsets = [0, 0], sizes = [16, 16], strides = [1, 1]} : vector<16x64xbf16> to vector<16x16xbf16>
    %cst_82 = arith.constant dense<0.000000e+00> : vector<128x16xf32>
    %108 = tpu.matmul %106, %107, %cst_82 {dimension_numbers = #tpu.dot_dimension_numbers<[1], [0], [0], [1], [0, 0, 1, 1], [], []>} : vector<128x16xbf16>, vector<16x16xbf16>, vector<128x16xf32> -> vector<128x16xf32>
    %c1_83 = arith.constant 1 : index
    %c0_84 = arith.constant 0 : index
    %c0_85 = arith.constant 0 : index
    %109 = vector.load %arg5[%c1_83, %c0_84, %c0_85] : memref<4x128x16xbf16, #tpu.memory_space<vmem>>, vector<1x128x16xbf16>
    %110 = vector.shape_cast %109 : vector<1x128x16xbf16> to vector<128x16xbf16>
    %111 = vector.extract_strided_slice %104 {offsets = [0, 16], sizes = [16, 16], strides = [1, 1]} : vector<16x64xbf16> to vector<16x16xbf16>
    %cst_86 = arith.constant dense<0.000000e+00> : vector<128x16xf32>
    %112 = tpu.matmul %110, %111, %cst_86 {dimension_numbers = #tpu.dot_dimension_numbers<[1], [0], [0], [1], [0, 0, 1, 1], [], []>} : vector<128x16xbf16>, vector<16x16xbf16>, vector<128x16xf32> -> vector<128x16xf32>
    %113 = arith.addf %108, %112 : vector<128x16xf32>
    %c2_87 = arith.constant 2 : index
    %c0_88 = arith.constant 0 : index
    %c0_89 = arith.constant 0 : index
    %114 = vector.load %arg5[%c2_87, %c0_88, %c0_89] : memref<4x128x16xbf16, #tpu.memory_space<vmem>>, vector<1x128x16xbf16>
    %115 = vector.shape_cast %114 : vector<1x128x16xbf16> to vector<128x16xbf16>
    %116 = vector.extract_strided_slice %104 {offsets = [0, 32], sizes = [16, 16], strides = [1, 1]} : vector<16x64xbf16> to vector<16x16xbf16>
    %cst_90 = arith.constant dense<0.000000e+00> : vector<128x16xf32>
    %117 = tpu.matmul %115, %116, %cst_90 {dimension_numbers = #tpu.dot_dimension_numbers<[1], [0], [0], [1], [0, 0, 1, 1], [], []>} : vector<128x16xbf16>, vector<16x16xbf16>, vector<128x16xf32> -> vector<128x16xf32>
    %118 = arith.addf %113, %117 : vector<128x16xf32>
    %c3_91 = arith.constant 3 : index
    %c0_92 = arith.constant 0 : index
    %c0_93 = arith.constant 0 : index
    %119 = vector.load %arg5[%c3_91, %c0_92, %c0_93] : memref<4x128x16xbf16, #tpu.memory_space<vmem>>, vector<1x128x16xbf16>
    %120 = vector.shape_cast %119 : vector<1x128x16xbf16> to vector<128x16xbf16>
    %121 = vector.extract_strided_slice %104 {offsets = [0, 48], sizes = [16, 16], strides = [1, 1]} : vector<16x64xbf16> to vector<16x16xbf16>
    %cst_94 = arith.constant dense<0.000000e+00> : vector<128x16xf32>
    %122 = tpu.matmul %120, %121, %cst_94 {dimension_numbers = #tpu.dot_dimension_numbers<[1], [0], [0], [1], [0, 0, 1, 1], [], []>} : vector<128x16xbf16>, vector<16x16xbf16>, vector<128x16xf32> -> vector<128x16xf32>
    %123 = arith.addf %118, %122 : vector<128x16xf32>
    %124 = arith.truncf %123 : vector<128x16xf32> to vector<128x16xbf16>
    %125 = vector.extract_strided_slice %124 {offsets = [0, 0], sizes = [32, 16], strides = [1, 1]} : vector<128x16xbf16> to vector<32x16xbf16>
    %c0_95 = arith.constant 0 : index
    %c0_96 = arith.constant 0 : index
    %c0_97 = arith.constant 0 : index
    %126 = vector.load %arg7[%c0_95, %c0_96, %c0_97] : memref<4x16x9xbf16, #tpu.memory_space<vmem>>, vector<1x16x9xbf16>
    %127 = vector.shape_cast %126 : vector<1x16x9xbf16> to vector<16x9xbf16>
    %cst_98 = arith.constant dense<0.000000e+00> : vector<32x9xf32>
    %128 = tpu.matmul %125, %127, %cst_98 {dimension_numbers = #tpu.dot_dimension_numbers<[1], [0], [0], [1], [0, 0, 1, 1], [], []>} : vector<32x16xbf16>, vector<16x9xbf16>, vector<32x9xf32> -> vector<32x9xf32>
    %129 = vector.extract_strided_slice %124 {offsets = [32, 0], sizes = [32, 16], strides = [1, 1]} : vector<128x16xbf16> to vector<32x16xbf16>
    %c1_99 = arith.constant 1 : index
    %c0_100 = arith.constant 0 : index
    %c0_101 = arith.constant 0 : index
    %130 = vector.load %arg7[%c1_99, %c0_100, %c0_101] : memref<4x16x9xbf16, #tpu.memory_space<vmem>>, vector<1x16x9xbf16>
    %131 = vector.shape_cast %130 : vector<1x16x9xbf16> to vector<16x9xbf16>
    %cst_102 = arith.constant dense<0.000000e+00> : vector<32x9xf32>
    %132 = tpu.matmul %129, %131, %cst_102 {dimension_numbers = #tpu.dot_dimension_numbers<[1], [0], [0], [1], [0, 0, 1, 1], [], []>} : vector<32x16xbf16>, vector<16x9xbf16>, vector<32x9xf32> -> vector<32x9xf32>
    %133 = arith.addf %128, %132 : vector<32x9xf32>
    %134 = vector.extract_strided_slice %124 {offsets = [64, 0], sizes = [32, 16], strides = [1, 1]} : vector<128x16xbf16> to vector<32x16xbf16>
    %c2_103 = arith.constant 2 : index
    %c0_104 = arith.constant 0 : index
    %c0_105 = arith.constant 0 : index
    %135 = vector.load %arg7[%c2_103, %c0_104, %c0_105] : memref<4x16x9xbf16, #tpu.memory_space<vmem>>, vector<1x16x9xbf16>
    %136 = vector.shape_cast %135 : vector<1x16x9xbf16> to vector<16x9xbf16>
    %cst_106 = arith.constant dense<0.000000e+00> : vector<32x9xf32>
    %137 = tpu.matmul %134, %136, %cst_106 {dimension_numbers = #tpu.dot_dimension_numbers<[1], [0], [0], [1], [0, 0, 1, 1], [], []>} : vector<32x16xbf16>, vector<16x9xbf16>, vector<32x9xf32> -> vector<32x9xf32>
    %138 = arith.addf %133, %137 : vector<32x9xf32>
    %139 = vector.extract_strided_slice %124 {offsets = [96, 0], sizes = [32, 16], strides = [1, 1]} : vector<128x16xbf16> to vector<32x16xbf16>
    %c3_107 = arith.constant 3 : index
    %c0_108 = arith.constant 0 : index
    %c0_109 = arith.constant 0 : index
    %140 = vector.load %arg7[%c3_107, %c0_108, %c0_109] : memref<4x16x9xbf16, #tpu.memory_space<vmem>>, vector<1x16x9xbf16>
    %141 = vector.shape_cast %140 : vector<1x16x9xbf16> to vector<16x9xbf16>
    %cst_110 = arith.constant dense<0.000000e+00> : vector<32x9xf32>
    %142 = tpu.matmul %139, %141, %cst_110 {dimension_numbers = #tpu.dot_dimension_numbers<[1], [0], [0], [1], [0, 0, 1, 1], [], []>} : vector<32x16xbf16>, vector<16x9xbf16>, vector<32x9xf32> -> vector<32x9xf32>
    %143 = arith.addf %138, %142 : vector<32x9xf32>
    %144 = vector.broadcast %2 : vector<32x1xf32> to vector<32x9xf32>
    %145 = arith.addf %143, %144 : vector<32x9xf32>
    %cst_111 = arith.constant 0.000000e+00 : f32
    %146 = vector.broadcast %cst_111 : f32 to vector<32x9xf32>
    %147 = arith.maximumf %145, %146 : vector<32x9xf32>
    %c0_112 = arith.constant 0 : index
    %c0_113 = arith.constant 0 : index
    %c9 = arith.constant 9 : index
    %148 = vector.load %arg8[%c0_112, %c0_113, %c9] : memref<1x32x36xf32, #tpu.memory_space<vmem>>, vector<1x32x9xf32>
    %149 = vector.shape_cast %148 : vector<1x32x9xf32> to vector<32x9xf32>
    %150 = vector.shape_cast %147 : vector<32x9xf32> to vector<1x32x9xf32>
    tpu.vector_store %arg8[%c0_112, %c0_113, %c9], %150 {strides = array<i32>} : memref<1x32x36xf32, #tpu.memory_space<vmem>>, vector<1x32x9xf32>,
    %c2_114 = arith.constant 2 : index
    %c0_115 = arith.constant 0 : index
    %c0_116 = arith.constant 0 : index
    %151 = vector.load %arg1[%c2_114, %c0_115, %c0_116] : memref<4x64x81xbf16, #tpu.memory_space<vmem>>, vector<1x64x81xbf16>
    %152 = vector.shape_cast %151 : vector<1x64x81xbf16> to vector<64x81xbf16>
    %cst_117 = arith.constant dense<0.000000e+00> : vector<64x81xf32>
    %153 = tpu.matmul %0, %152, %cst_117 {dimension_numbers = #tpu.dot_dimension_numbers<[1], [0], [0], [1], [0, 0, 1, 1], [], []>} : vector<64x64xbf16>, vector<64x81xbf16>, vector<64x81xf32> -> vector<64x81xf32>
    %154 = arith.truncf %153 : vector<64x81xf32> to vector<64x81xbf16>
    %155 = vector.extract_strided_slice %154 {offsets = [0, 0], sizes = [16, 81], strides = [1, 1]} : vector<64x81xbf16> to vector<16x81xbf16>
    %c0_118 = arith.constant 0 : index
    %c0_119 = arith.constant 0 : index
    %c0_120 = arith.constant 0 : index
    %156 = vector.load %arg4[%c0_118, %c0_119, %c0_120] : memref<4x81x64xbf16, #tpu.memory_space<vmem>>, vector<1x81x64xbf16>
    %157 = vector.shape_cast %156 : vector<1x81x64xbf16> to vector<81x64xbf16>
    %cst_121 = arith.constant dense<0.000000e+00> : vector<16x64xf32>
    %158 = tpu.matmul %155, %157, %cst_121 {dimension_numbers = #tpu.dot_dimension_numbers<[1], [0], [0], [1], [0, 0, 1, 1], [], []>} : vector<16x81xbf16>, vector<81x64xbf16>, vector<16x64xf32> -> vector<16x64xf32>
    %159 = vector.extract_strided_slice %154 {offsets = [16, 0], sizes = [16, 81], strides = [1, 1]} : vector<64x81xbf16> to vector<16x81xbf16>
    %c1_122 = arith.constant 1 : index
    %c0_123 = arith.constant 0 : index
    %c0_124 = arith.constant 0 : index
    %160 = vector.load %arg4[%c1_122, %c0_123, %c0_124] : memref<4x81x64xbf16, #tpu.memory_space<vmem>>, vector<1x81x64xbf16>
    %161 = vector.shape_cast %160 : vector<1x81x64xbf16> to vector<81x64xbf16>
    %cst_125 = arith.constant dense<0.000000e+00> : vector<16x64xf32>
    %162 = tpu.matmul %159, %161, %cst_125 {dimension_numbers = #tpu.dot_dimension_numbers<[1], [0], [0], [1], [0, 0, 1, 1], [], []>} : vector<16x81xbf16>, vector<81x64xbf16>, vector<16x64xf32> -> vector<16x64xf32>
    %163 = arith.addf %158, %162 : vector<16x64xf32>
    %164 = vector.extract_strided_slice %154 {offsets = [32, 0], sizes = [16, 81], strides = [1, 1]} : vector<64x81xbf16> to vector<16x81xbf16>
    %c2_126 = arith.constant 2 : index
    %c0_127 = arith.constant 0 : index
    %c0_128 = arith.constant 0 : index
    %165 = vector.load %arg4[%c2_126, %c0_127, %c0_128] : memref<4x81x64xbf16, #tpu.memory_space<vmem>>, vector<1x81x64xbf16>
    %166 = vector.shape_cast %165 : vector<1x81x64xbf16> to vector<81x64xbf16>
    %cst_129 = arith.constant dense<0.000000e+00> : vector<16x64xf32>
    %167 = tpu.matmul %164, %166, %cst_129 {dimension_numbers = #tpu.dot_dimension_numbers<[1], [0], [0], [1], [0, 0, 1, 1], [], []>} : vector<16x81xbf16>, vector<81x64xbf16>, vector<16x64xf32> -> vector<16x64xf32>
    %168 = arith.addf %163, %167 : vector<16x64xf32>
    %169 = vector.extract_strided_slice %154 {offsets = [48, 0], sizes = [16, 81], strides = [1, 1]} : vector<64x81xbf16> to vector<16x81xbf16>
    %c3_130 = arith.constant 3 : index
    %c0_131 = arith.constant 0 : index
    %c0_132 = arith.constant 0 : index
    %170 = vector.load %arg4[%c3_130, %c0_131, %c0_132] : memref<4x81x64xbf16, #tpu.memory_space<vmem>>, vector<1x81x64xbf16>
    %171 = vector.shape_cast %170 : vector<1x81x64xbf16> to vector<81x64xbf16>
    %cst_133 = arith.constant dense<0.000000e+00> : vector<16x64xf32>
    %172 = tpu.matmul %169, %171, %cst_133 {dimension_numbers = #tpu.dot_dimension_numbers<[1], [0], [0], [1], [0, 0, 1, 1], [], []>} : vector<16x81xbf16>, vector<81x64xbf16>, vector<16x64xf32> -> vector<16x64xf32>
    %173 = arith.addf %168, %172 : vector<16x64xf32>
    %174 = vector.broadcast %1 : vector<16x1xf32> to vector<16x64xf32>
    %175 = arith.addf %173, %174 : vector<16x64xf32>
    %cst_134 = arith.constant 0.000000e+00 : f32
    %176 = vector.broadcast %cst_134 : f32 to vector<16x64xf32>
    %177 = arith.maximumf %175, %176 : vector<16x64xf32>
    %178 = arith.truncf %177 : vector<16x64xf32> to vector<16x64xbf16>
    %c0_135 = arith.constant 0 : index
    %c0_136 = arith.constant 0 : index
    %c0_137 = arith.constant 0 : index
    %179 = vector.load %arg5[%c0_135, %c0_136, %c0_137] : memref<4x128x16xbf16, #tpu.memory_space<vmem>>, vector<1x128x16xbf16>
    %180 = vector.shape_cast %179 : vector<1x128x16xbf16> to vector<128x16xbf16>
    %181 = vector.extract_strided_slice %178 {offsets = [0, 0], sizes = [16, 16], strides = [1, 1]} : vector<16x64xbf16> to vector<16x16xbf16>
    %cst_138 = arith.constant dense<0.000000e+00> : vector<128x16xf32>
    %182 = tpu.matmul %180, %181, %cst_138 {dimension_numbers = #tpu.dot_dimension_numbers<[1], [0], [0], [1], [0, 0, 1, 1], [], []>} : vector<128x16xbf16>, vector<16x16xbf16>, vector<128x16xf32> -> vector<128x16xf32>
    %c1_139 = arith.constant 1 : index
    %c0_140 = arith.constant 0 : index
    %c0_141 = arith.constant 0 : index
    %183 = vector.load %arg5[%c1_139, %c0_140, %c0_141] : memref<4x128x16xbf16, #tpu.memory_space<vmem>>, vector<1x128x16xbf16>
    %184 = vector.shape_cast %183 : vector<1x128x16xbf16> to vector<128x16xbf16>
    %185 = vector.extract_strided_slice %178 {offsets = [0, 16], sizes = [16, 16], strides = [1, 1]} : vector<16x64xbf16> to vector<16x16xbf16>
    %cst_142 = arith.constant dense<0.000000e+00> : vector<128x16xf32>
    %186 = tpu.matmul %184, %185, %cst_142 {dimension_numbers = #tpu.dot_dimension_numbers<[1], [0], [0], [1], [0, 0, 1, 1], [], []>} : vector<128x16xbf16>, vector<16x16xbf16>, vector<128x16xf32> -> vector<128x16xf32>
    %187 = arith.addf %182, %186 : vector<128x16xf32>
    %c2_143 = arith.constant 2 : index
    %c0_144 = arith.constant 0 : index
    %c0_145 = arith.constant 0 : index
    %188 = vector.load %arg5[%c2_143, %c0_144, %c0_145] : memref<4x128x16xbf16, #tpu.memory_space<vmem>>, vector<1x128x16xbf16>
    %189 = vector.shape_cast %188 : vector<1x128x16xbf16> to vector<128x16xbf16>
    %190 = vector.extract_strided_slice %178 {offsets = [0, 32], sizes = [16, 16], strides = [1, 1]} : vector<16x64xbf16> to vector<16x16xbf16>
    %cst_146 = arith.constant dense<0.000000e+00> : vector<128x16xf32>
    %191 = tpu.matmul %189, %190, %cst_146 {dimension_numbers = #tpu.dot_dimension_numbers<[1], [0], [0], [1], [0, 0, 1, 1], [], []>} : vector<128x16xbf16>, vector<16x16xbf16>, vector<128x16xf32> -> vector<128x16xf32>
    %192 = arith.addf %187, %191 : vector<128x16xf32>
    %c3_147 = arith.constant 3 : index
    %c0_148 = arith.constant 0 : index
    %c0_149 = arith.constant 0 : index
    %193 = vector.load %arg5[%c3_147, %c0_148, %c0_149] : memref<4x128x16xbf16, #tpu.memory_space<vmem>>, vector<1x128x16xbf16>
    %194 = vector.shape_cast %193 : vector<1x128x16xbf16> to vector<128x16xbf16>
    %195 = vector.extract_strided_slice %178 {offsets = [0, 48], sizes = [16, 16], strides = [1, 1]} : vector<16x64xbf16> to vector<16x16xbf16>
    %cst_150 = arith.constant dense<0.000000e+00> : vector<128x16xf32>
    %196 = tpu.matmul %194, %195, %cst_150 {dimension_numbers = #tpu.dot_dimension_numbers<[1], [0], [0], [1], [0, 0, 1, 1], [], []>} : vector<128x16xbf16>, vector<16x16xbf16>, vector<128x16xf32> -> vector<128x16xf32>
    %197 = arith.addf %192, %196 : vector<128x16xf32>
    %198 = arith.truncf %197 : vector<128x16xf32> to vector<128x16xbf16>
    %199 = vector.extract_strided_slice %198 {offsets = [0, 0], sizes = [32, 16], strides = [1, 1]} : vector<128x16xbf16> to vector<32x16xbf16>
    %c0_151 = arith.constant 0 : index
    %c0_152 = arith.constant 0 : index
    %c0_153 = arith.constant 0 : index
    %200 = vector.load %arg7[%c0_151, %c0_152, %c0_153] : memref<4x16x9xbf16, #tpu.memory_space<vmem>>, vector<1x16x9xbf16>
    %201 = vector.shape_cast %200 : vector<1x16x9xbf16> to vector<16x9xbf16>
    %cst_154 = arith.constant dense<0.000000e+00> : vector<32x9xf32>
    %202 = tpu.matmul %199, %201, %cst_154 {dimension_numbers = #tpu.dot_dimension_numbers<[1], [0], [0], [1], [0, 0, 1, 1], [], []>} : vector<32x16xbf16>, vector<16x9xbf16>, vector<32x9xf32> -> vector<32x9xf32>
    %203 = vector.extract_strided_slice %198 {offsets = [32, 0], sizes = [32, 16], strides = [1, 1]} : vector<128x16xbf16> to vector<32x16xbf16>
    %c1_155 = arith.constant 1 : index
    %c0_156 = arith.constant 0 : index
    %c0_157 = arith.constant 0 : index
    %204 = vector.load %arg7[%c1_155, %c0_156, %c0_157] : memref<4x16x9xbf16, #tpu.memory_space<vmem>>, vector<1x16x9xbf16>
    %205 = vector.shape_cast %204 : vector<1x16x9xbf16> to vector<16x9xbf16>
    %cst_158 = arith.constant dense<0.000000e+00> : vector<32x9xf32>
    %206 = tpu.matmul %203, %205, %cst_158 {dimension_numbers = #tpu.dot_dimension_numbers<[1], [0], [0], [1], [0, 0, 1, 1], [], []>} : vector<32x16xbf16>, vector<16x9xbf16>, vector<32x9xf32> -> vector<32x9xf32>
    %207 = arith.addf %202, %206 : vector<32x9xf32>
    %208 = vector.extract_strided_slice %198 {offsets = [64, 0], sizes = [32, 16], strides = [1, 1]} : vector<128x16xbf16> to vector<32x16xbf16>
    %c2_159 = arith.constant 2 : index
    %c0_160 = arith.constant 0 : index
    %c0_161 = arith.constant 0 : index
    %209 = vector.load %arg7[%c2_159, %c0_160, %c0_161] : memref<4x16x9xbf16, #tpu.memory_space<vmem>>, vector<1x16x9xbf16>
    %210 = vector.shape_cast %209 : vector<1x16x9xbf16> to vector<16x9xbf16>
    %cst_162 = arith.constant dense<0.000000e+00> : vector<32x9xf32>
    %211 = tpu.matmul %208, %210, %cst_162 {dimension_numbers = #tpu.dot_dimension_numbers<[1], [0], [0], [1], [0, 0, 1, 1], [], []>} : vector<32x16xbf16>, vector<16x9xbf16>, vector<32x9xf32> -> vector<32x9xf32>
    %212 = arith.addf %207, %211 : vector<32x9xf32>
    %213 = vector.extract_strided_slice %198 {offsets = [96, 0], sizes = [32, 16], strides = [1, 1]} : vector<128x16xbf16> to vector<32x16xbf16>
    %c3_163 = arith.constant 3 : index
    %c0_164 = arith.constant 0 : index
    %c0_165 = arith.constant 0 : index
    %214 = vector.load %arg7[%c3_163, %c0_164, %c0_165] : memref<4x16x9xbf16, #tpu.memory_space<vmem>>, vector<1x16x9xbf16>
    %215 = vector.shape_cast %214 : vector<1x16x9xbf16> to vector<16x9xbf16>
    %cst_166 = arith.constant dense<0.000000e+00> : vector<32x9xf32>
    %216 = tpu.matmul %213, %215, %cst_166 {dimension_numbers = #tpu.dot_dimension_numbers<[1], [0], [0], [1], [0, 0, 1, 1], [], []>} : vector<32x16xbf16>, vector<16x9xbf16>, vector<32x9xf32> -> vector<32x9xf32>
    %217 = arith.addf %212, %216 : vector<32x9xf32>
    %218 = vector.broadcast %2 : vector<32x1xf32> to vector<32x9xf32>
    %219 = arith.addf %217, %218 : vector<32x9xf32>
    %cst_167 = arith.constant 0.000000e+00 : f32
    %220 = vector.broadcast %cst_167 : f32 to vector<32x9xf32>
    %221 = arith.maximumf %219, %220 : vector<32x9xf32>
    %c0_168 = arith.constant 0 : index
    %c0_169 = arith.constant 0 : index
    %c18 = arith.constant 18 : index
    %222 = vector.load %arg8[%c0_168, %c0_169, %c18] : memref<1x32x36xf32, #tpu.memory_space<vmem>>, vector<1x32x9xf32>
    %223 = vector.shape_cast %222 : vector<1x32x9xf32> to vector<32x9xf32>
    %224 = vector.shape_cast %221 : vector<32x9xf32> to vector<1x32x9xf32>
    tpu.vector_store %arg8[%c0_168, %c0_169, %c18], %224 {strides = array<i32>} : memref<1x32x36xf32, #tpu.memory_space<vmem>>, vector<1x32x9xf32>,
    %c3_170 = arith.constant 3 : index
    %c0_171 = arith.constant 0 : index
    %c0_172 = arith.constant 0 : index
    %225 = vector.load %arg1[%c3_170, %c0_171, %c0_172] : memref<4x64x81xbf16, #tpu.memory_space<vmem>>, vector<1x64x81xbf16>
    %226 = vector.shape_cast %225 : vector<1x64x81xbf16> to vector<64x81xbf16>
    %cst_173 = arith.constant dense<0.000000e+00> : vector<64x81xf32>
    %227 = tpu.matmul %0, %226, %cst_173 {dimension_numbers = #tpu.dot_dimension_numbers<[1], [0], [0], [1], [0, 0, 1, 1], [], []>} : vector<64x64xbf16>, vector<64x81xbf16>, vector<64x81xf32> -> vector<64x81xf32>
    %228 = arith.truncf %227 : vector<64x81xf32> to vector<64x81xbf16>
    %229 = vector.extract_strided_slice %228 {offsets = [0, 0], sizes = [16, 81], strides = [1, 1]} : vector<64x81xbf16> to vector<16x81xbf16>
    %c0_174 = arith.constant 0 : index
    %c0_175 = arith.constant 0 : index
    %c0_176 = arith.constant 0 : index
    %230 = vector.load %arg4[%c0_174, %c0_175, %c0_176] : memref<4x81x64xbf16, #tpu.memory_space<vmem>>, vector<1x81x64xbf16>
    %231 = vector.shape_cast %230 : vector<1x81x64xbf16> to vector<81x64xbf16>
    %cst_177 = arith.constant dense<0.000000e+00> : vector<16x64xf32>
    %232 = tpu.matmul %229, %231, %cst_177 {dimension_numbers = #tpu.dot_dimension_numbers<[1], [0], [0], [1], [0, 0, 1, 1], [], []>} : vector<16x81xbf16>, vector<81x64xbf16>, vector<16x64xf32> -> vector<16x64xf32>
    %233 = vector.extract_strided_slice %228 {offsets = [16, 0], sizes = [16, 81], strides = [1, 1]} : vector<64x81xbf16> to vector<16x81xbf16>
    %c1_178 = arith.constant 1 : index
    %c0_179 = arith.constant 0 : index
    %c0_180 = arith.constant 0 : index
    %234 = vector.load %arg4[%c1_178, %c0_179, %c0_180] : memref<4x81x64xbf16, #tpu.memory_space<vmem>>, vector<1x81x64xbf16>
    %235 = vector.shape_cast %234 : vector<1x81x64xbf16> to vector<81x64xbf16>
    %cst_181 = arith.constant dense<0.000000e+00> : vector<16x64xf32>
    %236 = tpu.matmul %233, %235, %cst_181 {dimension_numbers = #tpu.dot_dimension_numbers<[1], [0], [0], [1], [0, 0, 1, 1], [], []>} : vector<16x81xbf16>, vector<81x64xbf16>, vector<16x64xf32> -> vector<16x64xf32>
    %237 = arith.addf %232, %236 : vector<16x64xf32>
    %238 = vector.extract_strided_slice %228 {offsets = [32, 0], sizes = [16, 81], strides = [1, 1]} : vector<64x81xbf16> to vector<16x81xbf16>
    %c2_182 = arith.constant 2 : index
    %c0_183 = arith.constant 0 : index
    %c0_184 = arith.constant 0 : index
    %239 = vector.load %arg4[%c2_182, %c0_183, %c0_184] : memref<4x81x64xbf16, #tpu.memory_space<vmem>>, vector<1x81x64xbf16>
    %240 = vector.shape_cast %239 : vector<1x81x64xbf16> to vector<81x64xbf16>
    %cst_185 = arith.constant dense<0.000000e+00> : vector<16x64xf32>
    %241 = tpu.matmul %238, %240, %cst_185 {dimension_numbers = #tpu.dot_dimension_numbers<[1], [0], [0], [1], [0, 0, 1, 1], [], []>} : vector<16x81xbf16>, vector<81x64xbf16>, vector<16x64xf32> -> vector<16x64xf32>
    %242 = arith.addf %237, %241 : vector<16x64xf32>
    %243 = vector.extract_strided_slice %228 {offsets = [48, 0], sizes = [16, 81], strides = [1, 1]} : vector<64x81xbf16> to vector<16x81xbf16>
    %c3_186 = arith.constant 3 : index
    %c0_187 = arith.constant 0 : index
    %c0_188 = arith.constant 0 : index
    %244 = vector.load %arg4[%c3_186, %c0_187, %c0_188] : memref<4x81x64xbf16, #tpu.memory_space<vmem>>, vector<1x81x64xbf16>
    %245 = vector.shape_cast %244 : vector<1x81x64xbf16> to vector<81x64xbf16>
    %cst_189 = arith.constant dense<0.000000e+00> : vector<16x64xf32>
    %246 = tpu.matmul %243, %245, %cst_189 {dimension_numbers = #tpu.dot_dimension_numbers<[1], [0], [0], [1], [0, 0, 1, 1], [], []>} : vector<16x81xbf16>, vector<81x64xbf16>, vector<16x64xf32> -> vector<16x64xf32>
    %247 = arith.addf %242, %246 : vector<16x64xf32>
    %248 = vector.broadcast %1 : vector<16x1xf32> to vector<16x64xf32>
    %249 = arith.addf %247, %248 : vector<16x64xf32>
    %cst_190 = arith.constant 0.000000e+00 : f32
    %250 = vector.broadcast %cst_190 : f32 to vector<16x64xf32>
    %251 = arith.maximumf %249, %250 : vector<16x64xf32>
    %252 = arith.truncf %251 : vector<16x64xf32> to vector<16x64xbf16>
    %c0_191 = arith.constant 0 : index
    %c0_192 = arith.constant 0 : index
    %c0_193 = arith.constant 0 : index
    %253 = vector.load %arg5[%c0_191, %c0_192, %c0_193] : memref<4x128x16xbf16, #tpu.memory_space<vmem>>, vector<1x128x16xbf16>
    %254 = vector.shape_cast %253 : vector<1x128x16xbf16> to vector<128x16xbf16>
    %255 = vector.extract_strided_slice %252 {offsets = [0, 0], sizes = [16, 16], strides = [1, 1]} : vector<16x64xbf16> to vector<16x16xbf16>
    %cst_194 = arith.constant dense<0.000000e+00> : vector<128x16xf32>
    %256 = tpu.matmul %254, %255, %cst_194 {dimension_numbers = #tpu.dot_dimension_numbers<[1], [0], [0], [1], [0, 0, 1, 1], [], []>} : vector<128x16xbf16>, vector<16x16xbf16>, vector<128x16xf32> -> vector<128x16xf32>
    %c1_195 = arith.constant 1 : index
    %c0_196 = arith.constant 0 : index
    %c0_197 = arith.constant 0 : index
    %257 = vector.load %arg5[%c1_195, %c0_196, %c0_197] : memref<4x128x16xbf16, #tpu.memory_space<vmem>>, vector<1x128x16xbf16>
    %258 = vector.shape_cast %257 : vector<1x128x16xbf16> to vector<128x16xbf16>
    %259 = vector.extract_strided_slice %252 {offsets = [0, 16], sizes = [16, 16], strides = [1, 1]} : vector<16x64xbf16> to vector<16x16xbf16>
    %cst_198 = arith.constant dense<0.000000e+00> : vector<128x16xf32>
    %260 = tpu.matmul %258, %259, %cst_198 {dimension_numbers = #tpu.dot_dimension_numbers<[1], [0], [0], [1], [0, 0, 1, 1], [], []>} : vector<128x16xbf16>, vector<16x16xbf16>, vector<128x16xf32> -> vector<128x16xf32>
    %261 = arith.addf %256, %260 : vector<128x16xf32>
    %c2_199 = arith.constant 2 : index
    %c0_200 = arith.constant 0 : index
    %c0_201 = arith.constant 0 : index
    %262 = vector.load %arg5[%c2_199, %c0_200, %c0_201] : memref<4x128x16xbf16, #tpu.memory_space<vmem>>, vector<1x128x16xbf16>
    %263 = vector.shape_cast %262 : vector<1x128x16xbf16> to vector<128x16xbf16>
    %264 = vector.extract_strided_slice %252 {offsets = [0, 32], sizes = [16, 16], strides = [1, 1]} : vector<16x64xbf16> to vector<16x16xbf16>
    %cst_202 = arith.constant dense<0.000000e+00> : vector<128x16xf32>
    %265 = tpu.matmul %263, %264, %cst_202 {dimension_numbers = #tpu.dot_dimension_numbers<[1], [0], [0], [1], [0, 0, 1, 1], [], []>} : vector<128x16xbf16>, vector<16x16xbf16>, vector<128x16xf32> -> vector<128x16xf32>
    %266 = arith.addf %261, %265 : vector<128x16xf32>
    %c3_203 = arith.constant 3 : index
    %c0_204 = arith.constant 0 : index
    %c0_205 = arith.constant 0 : index
    %267 = vector.load %arg5[%c3_203, %c0_204, %c0_205] : memref<4x128x16xbf16, #tpu.memory_space<vmem>>, vector<1x128x16xbf16>
    %268 = vector.shape_cast %267 : vector<1x128x16xbf16> to vector<128x16xbf16>
    %269 = vector.extract_strided_slice %252 {offsets = [0, 48], sizes = [16, 16], strides = [1, 1]} : vector<16x64xbf16> to vector<16x16xbf16>
    %cst_206 = arith.constant dense<0.000000e+00> : vector<128x16xf32>
    %270 = tpu.matmul %268, %269, %cst_206 {dimension_numbers = #tpu.dot_dimension_numbers<[1], [0], [0], [1], [0, 0, 1, 1], [], []>} : vector<128x16xbf16>, vector<16x16xbf16>, vector<128x16xf32> -> vector<128x16xf32>
    %271 = arith.addf %266, %270 : vector<128x16xf32>
    %272 = arith.truncf %271 : vector<128x16xf32> to vector<128x16xbf16>
    %273 = vector.extract_strided_slice %272 {offsets = [0, 0], sizes = [32, 16], strides = [1, 1]} : vector<128x16xbf16> to vector<32x16xbf16>
    %c0_207 = arith.constant 0 : index
    %c0_208 = arith.constant 0 : index
    %c0_209 = arith.constant 0 : index
    %274 = vector.load %arg7[%c0_207, %c0_208, %c0_209] : memref<4x16x9xbf16, #tpu.memory_space<vmem>>, vector<1x16x9xbf16>
    %275 = vector.shape_cast %274 : vector<1x16x9xbf16> to vector<16x9xbf16>
    %cst_210 = arith.constant dense<0.000000e+00> : vector<32x9xf32>
    %276 = tpu.matmul %273, %275, %cst_210 {dimension_numbers = #tpu.dot_dimension_numbers<[1], [0], [0], [1], [0, 0, 1, 1], [], []>} : vector<32x16xbf16>, vector<16x9xbf16>, vector<32x9xf32> -> vector<32x9xf32>
    %277 = vector.extract_strided_slice %272 {offsets = [32, 0], sizes = [32, 16], strides = [1, 1]} : vector<128x16xbf16> to vector<32x16xbf16>
    %c1_211 = arith.constant 1 : index
    %c0_212 = arith.constant 0 : index
    %c0_213 = arith.constant 0 : index
    %278 = vector.load %arg7[%c1_211, %c0_212, %c0_213] : memref<4x16x9xbf16, #tpu.memory_space<vmem>>, vector<1x16x9xbf16>
    %279 = vector.shape_cast %278 : vector<1x16x9xbf16> to vector<16x9xbf16>
    %cst_214 = arith.constant dense<0.000000e+00> : vector<32x9xf32>
    %280 = tpu.matmul %277, %279, %cst_214 {dimension_numbers = #tpu.dot_dimension_numbers<[1], [0], [0], [1], [0, 0, 1, 1], [], []>} : vector<32x16xbf16>, vector<16x9xbf16>, vector<32x9xf32> -> vector<32x9xf32>
    %281 = arith.addf %276, %280 : vector<32x9xf32>
    %282 = vector.extract_strided_slice %272 {offsets = [64, 0], sizes = [32, 16], strides = [1, 1]} : vector<128x16xbf16> to vector<32x16xbf16>
    %c2_215 = arith.constant 2 : index
    %c0_216 = arith.constant 0 : index
    %c0_217 = arith.constant 0 : index
    %283 = vector.load %arg7[%c2_215, %c0_216, %c0_217] : memref<4x16x9xbf16, #tpu.memory_space<vmem>>, vector<1x16x9xbf16>
    %284 = vector.shape_cast %283 : vector<1x16x9xbf16> to vector<16x9xbf16>
    %cst_218 = arith.constant dense<0.000000e+00> : vector<32x9xf32>
    %285 = tpu.matmul %282, %284, %cst_218 {dimension_numbers = #tpu.dot_dimension_numbers<[1], [0], [0], [1], [0, 0, 1, 1], [], []>} : vector<32x16xbf16>, vector<16x9xbf16>, vector<32x9xf32> -> vector<32x9xf32>
    %286 = arith.addf %281, %285 : vector<32x9xf32>
    %287 = vector.extract_strided_slice %272 {offsets = [96, 0], sizes = [32, 16], strides = [1, 1]} : vector<128x16xbf16> to vector<32x16xbf16>
    %c3_219 = arith.constant 3 : index
    %c0_220 = arith.constant 0 : index
    %c0_221 = arith.constant 0 : index
    %288 = vector.load %arg7[%c3_219, %c0_220, %c0_221] : memref<4x16x9xbf16, #tpu.memory_space<vmem>>, vector<1x16x9xbf16>
    %289 = vector.shape_cast %288 : vector<1x16x9xbf16> to vector<16x9xbf16>
    %cst_222 = arith.constant dense<0.000000e+00> : vector<32x9xf32>
    %290 = tpu.matmul %287, %289, %cst_222 {dimension_numbers = #tpu.dot_dimension_numbers<[1], [0], [0], [1], [0, 0, 1, 1], [], []>} : vector<32x16xbf16>, vector<16x9xbf16>, vector<32x9xf32> -> vector<32x9xf32>
    %291 = arith.addf %286, %290 : vector<32x9xf32>
    %292 = vector.broadcast %2 : vector<32x1xf32> to vector<32x9xf32>
    %293 = arith.addf %291, %292 : vector<32x9xf32>
    %cst_223 = arith.constant 0.000000e+00 : f32
    %294 = vector.broadcast %cst_223 : f32 to vector<32x9xf32>
    %295 = arith.maximumf %293, %294 : vector<32x9xf32>
    %c0_224 = arith.constant 0 : index
    %c0_225 = arith.constant 0 : index
    %c27 = arith.constant 27 : index
    %296 = vector.load %arg8[%c0_224, %c0_225, %c27] : memref<1x32x36xf32, #tpu.memory_space<vmem>>, vector<1x32x9xf32>
    %297 = vector.shape_cast %296 : vector<1x32x9xf32> to vector<32x9xf32>
    %298 = vector.shape_cast %295 : vector<32x9xf32> to vector<1x32x9xf32>
    tpu.vector_store %arg8[%c0_224, %c0_225, %c27], %298 {strides = array<i32>} : memref<1x32x36xf32, #tpu.memory_space<vmem>>, vector<1x32x9xf32>,
    return
  }
  func.func @transform_0(%arg0: i32) -> (i32, i32, i32) {
    %c0_i32 = arith.constant 0 : i32
    %c0_i32_0 = arith.constant 0 : i32
    %c0_i32_1 = arith.constant 0 : i32
    return %arg0, %c0_i32, %c0_i32_0 : i32, i32, i32
  }
  func.func @transform_1(%arg0: i32) -> (i32, i32) {
    %c0_i32 = arith.constant 0 : i32
    %c0_i32_0 = arith.constant 0 : i32
    %c0_i32_1 = arith.constant 0 : i32
    return %c0_i32, %c0_i32_0 : i32, i32
  }
  func.func @transform_2(%arg0: i32) -> (i32, i32) {
    %c0_i32 = arith.constant 0 : i32
    %c0_i32_0 = arith.constant 0 : i32
    %c0_i32_1 = arith.constant 0 : i32
    return %c0_i32, %c0_i32_0 : i32, i32
  }
  func.func @transform_3(%arg0: i32) -> (i32, i32, i32) {
    %c0_i32 = arith.constant 0 : i32
    %c0_i32_0 = arith.constant 0 : i32
    %c0_i32_1 = arith.constant 0 : i32
    %c0_i32_2 = arith.constant 0 : i32
    return %c0_i32, %c0_i32_0, %c0_i32_1 : i32, i32, i32
  }
  func.func @transform_4(%arg0: i32) -> (i32, i32, i32) {
    %c0_i32 = arith.constant 0 : i32
    %c0_i32_0 = arith.constant 0 : i32
    %c0_i32_1 = arith.constant 0 : i32
    %c0_i32_2 = arith.constant 0 : i32
    return %c0_i32, %c0_i32_0, %c0_i32_1 : i32, i32, i32
  }
  func.func @transform_5(%arg0: i32) -> (i32, i32) {
    %c0_i32 = arith.constant 0 : i32
    %c0_i32_0 = arith.constant 0 : i32
    %c0_i32_1 = arith.constant 0 : i32
    return %c0_i32, %c0_i32_0 : i32, i32
  }
  func.func @transform_6(%arg0: i32) -> (i32, i32, i32) {
    %c0_i32 = arith.constant 0 : i32
    %c0_i32_0 = arith.constant 0 : i32
    %c0_i32_1 = arith.constant 0 : i32
    %c0_i32_2 = arith.constant 0 : i32
    return %c0_i32, %c0_i32_0, %c0_i32_1 : i32, i32, i32
  }
  func.func @transform_7(%arg0: i32) -> (i32, i32, i32) {
    %c0_i32 = arith.constant 0 : i32
    %c0_i32_0 = arith.constant 0 : i32
    %c0_i32_1 = arith.constant 0 : i32
    return %arg0, %c0_i32, %c0_i32_0 : i32, i32, i32
  }
}

</mosaic_0001>

<llo_original>
// kernel: simple_cnn_forward.1
$region0: #{simple_cnn_forward.1}
  #allocation0 [shape = 'u32[]', space=smem, size = 0x4, offset = 0x4, fixed_abs, tag = 'smem constant byte address 0x4 - core index']
  #allocation1 [shape = 'u32[144,128]{1,0:T(1,128)}', space=vmem, size = 0x12000, scoped, tag = 'internal scratch']
  %s0 = inlined_call_operand.vmem [shape: bf16[8,64,81], index: 0, kind: input, shape index: {}]
  %s1 = inlined_call_operand.vmem [shape: bf16[64,64], index: 1, kind: input, shape index: {}]
  %s2 = inlined_call_operand.vmem [shape: f32[16,1], index: 2, kind: input, shape index: {}]
  %s3 = inlined_call_operand.vmem [shape: bf16[4,81,64], index: 3, kind: input, shape index: {}]
  %s4 = inlined_call_operand.vmem [shape: bf16[4,128,16], index: 4, kind: input, shape index: {}]
  %s5 = inlined_call_operand.vmem [shape: f32[32,1], index: 5, kind: input, shape index: {}]
  %s6 = inlined_call_operand.vmem [shape: bf16[4,16,9], index: 6, kind: input, shape index: {}]
  %s7 = inlined_call_operand.vmem [shape: f32[2,32,36], index: 7, kind: output, shape index: {}]
  %s8 = sld [smem:[#allocation0]]
  $region61: #{simple_cnn_forward.1} parent=0
    _
  %s10 = ssub.s32 1, %s8
  %s11 = scalar_select 0, %s10, %s8
  loop: start=0, step=1, limit=4
  $region2: #{simple_cnn_forward.1} parent=0 // loop_pre_header
    _
  $region3: #{simple_cnn_forward.1} parent=0 // loop_header
    %s13 = sphi 0, %s17
    %p14 = scmp.ge.s32.totalorder %s13, 4
    %s23 = sphi 0, %s25
    %s26 = sphi 0, %s23
    %s27 = sphi 0, %s26
    %s43 = sphi 0, %s27
    %s47 = sphi 0, %s47
    %s49 = sphi 0, %s47
    %s50 = sphi 0, %s49
    %s64 = sphi 0, %s50
    %s68 = sphi 0, %s68
    %s70 = sphi 0, %s68
    %s71 = sphi 0, %s70
    %s85 = sphi 0, %s71
    %s89 = sphi 0, %s89
    %s91 = sphi 0, %s89
    %s92 = sphi 0, %s91
    %s106 = sphi 0, %s92
    %s110 = sphi 0, %s110
    %s112 = sphi 0, %s110
    %s113 = sphi 0, %s112
    %s127 = sphi 0, %s113
    %s131 = sphi 0, %s131
    %s133 = sphi 0, %s131
    %s134 = sphi 0, %s133
    %s148 = sphi 0, %s134
    %s152 = sphi 0, %s152
    %s154 = sphi 0, %s152
    %s155 = sphi 0, %s154
    %s169 = sphi 0, %s155
    %s175 = sphi 0, %s177
    %s178 = sphi 0, %s175
    %s179 = sphi 0, %s178
    %s195 = sphi 0, %s179
  $region4: #{simple_cnn_forward.1} parent=0 // loop_header_branch
    %16 = sbr.rel (%p14) target = $region8
  $region5: #{simple_cnn_forward.1} parent=0 // loop_body
    %s18 = ssub.s32 %s13, 1
    %s19 = ssub.s32 %s13, 2
    %s20 = sadd.s32 %s13, 1
    %s21 = ssub.s32 %s13, %s20
    %p22 = scmp.eq.s32.totalorder %s21, 0
    %s24 = sadd.s32 %s23, 1
    %s25 = scalar_select %p22, %s23, %s24
    %p28 = pneg %p22
    %p29 = scmp.eq.s32.totalorder %s13, 1
    %p30 = por %p28, %p29
    %p31 = scmp.ne.s32.totalorder %s23, %s26
    %p32 = scmp.eq.s32.totalorder %s13, 0
    %p33 = por %p31, %p32
    %p34 = scmp.ne.s32.totalorder %s23, %s26
    %p35 = scmp.eq.s32.totalorder %s18, 1
    %p36 = por %p34, %p35
    %p37 = scmp.ne.s32.totalorder %s26, %s27
    %p38 = scmp.eq.s32.totalorder %s18, 0
    %p39 = por %p37, %p38
    %p40 = scmp.ne.s32.totalorder %s26, %s27
    %p41 = scmp.eq.s32.totalorder %s19, 1
    %p42 = por %p40, %p41
    %p44 = scmp.ne.s32.totalorder %s27, %s43
    %p45 = scmp.eq.s32.totalorder %s19, 0
    %p46 = por %p44, %p45
    %s48 = sadd.s32 %s47, 1
    %p51 = scmp.eq.s32.totalorder %s13, 1
    %p52 = scmp.ne.s32.totalorder %s47, %s49
    %p53 = scmp.eq.s32.totalorder %s13, 0
    %p54 = por %p52, %p53
    %p55 = scmp.ne.s32.totalorder %s47, %s49
    %p56 = scmp.eq.s32.totalorder %s18, 1
    %p57 = por %p55, %p56
    %p58 = scmp.ne.s32.totalorder %s49, %s50
    %p59 = scmp.eq.s32.totalorder %s18, 0
    %p60 = por %p58, %p59
    %p61 = scmp.ne.s32.totalorder %s49, %s50
    %p62 = scmp.eq.s32.totalorder %s19, 1
    %p63 = por %p61, %p62
    %p65 = scmp.ne.s32.totalorder %s50, %s64
    %p66 = scmp.eq.s32.totalorder %s19, 0
    %p67 = por %p65, %p66
    %s69 = sadd.s32 %s68, 1
    %p72 = scmp.eq.s32.totalorder %s13, 1
    %p73 = scmp.ne.s32.totalorder %s68, %s70
    %p74 = scmp.eq.s32.totalorder %s13, 0
    %p75 = por %p73, %p74
    %p76 = scmp.ne.s32.totalorder %s68, %s70
    %p77 = scmp.eq.s32.totalorder %s18, 1
    %p78 = por %p76, %p77
    %p79 = scmp.ne.s32.totalorder %s70, %s71
    %p80 = scmp.eq.s32.totalorder %s18, 0
    %p81 = por %p79, %p80
    %p82 = scmp.ne.s32.totalorder %s70, %s71
    %p83 = scmp.eq.s32.totalorder %s19, 1
    %p84 = por %p82, %p83
    %p86 = scmp.ne.s32.totalorder %s71, %s85
    %p87 = scmp.eq.s32.totalorder %s19, 0
    %p88 = por %p86, %p87
    %s90 = sadd.s32 %s89, 1
    %p93 = scmp.eq.s32.totalorder %s13, 1
    %p94 = scmp.ne.s32.totalorder %s89, %s91
    %p95 = scmp.eq.s32.totalorder %s13, 0
    %p96 = por %p94, %p95
    %p97 = scmp.ne.s32.totalorder %s89, %s91
    %p98 = scmp.eq.s32.totalorder %s18, 1
    %p99 = por %p97, %p98
    %p100 = scmp.ne.s32.totalorder %s91, %s92
    %p101 = scmp.eq.s32.totalorder %s18, 0
    %p102 = por %p100, %p101
    %p103 = scmp.ne.s32.totalorder %s91, %s92
    %p104 = scmp.eq.s32.totalorder %s19, 1
    %p105 = por %p103, %p104
    %p107 = scmp.ne.s32.totalorder %s92, %s106
    %p108 = scmp.eq.s32.totalorder %s19, 0
    %p109 = por %p107, %p108
    %s111 = sadd.s32 %s110, 1
    %p114 = scmp.eq.s32.totalorder %s13, 1
    %p115 = scmp.ne.s32.totalorder %s110, %s112
    %p116 = scmp.eq.s32.totalorder %s13, 0
    %p117 = por %p115, %p116
    %p118 = scmp.ne.s32.totalorder %s110, %s112
    %p119 = scmp.eq.s32.totalorder %s18, 1
    %p120 = por %p118, %p119
    %p121 = scmp.ne.s32.totalorder %s112, %s113
    %p122 = scmp.eq.s32.totalorder %s18, 0
    %p123 = por %p121, %p122
    %p124 = scmp.ne.s32.totalorder %s112, %s113
    %p125 = scmp.eq.s32.totalorder %s19, 1
    %p126 = por %p124, %p125
    %p128 = scmp.ne.s32.totalorder %s113, %s127
    %p129 = scmp.eq.s32.totalorder %s19, 0
    %p130 = por %p128, %p129
    %s132 = sadd.s32 %s131, 1
    %p135 = scmp.eq.s32.totalorder %s13, 1
    %p136 = scmp.ne.s32.totalorder %s131, %s133
    %p137 = scmp.eq.s32.totalorder %s13, 0
    %p138 = por %p136, %p137
    %p139 = scmp.ne.s32.totalorder %s131, %s133
    %p140 = scmp.eq.s32.totalorder %s18, 1
    %p141 = por %p139, %p140
    %p142 = scmp.ne.s32.totalorder %s133, %s134
    %p143 = scmp.eq.s32.totalorder %s18, 0
    %p144 = por %p142, %p143
    %p145 = scmp.ne.s32.totalorder %s133, %s134
    %p146 = scmp.eq.s32.totalorder %s19, 1
    %p147 = por %p145, %p146
    %p149 = scmp.ne.s32.totalorder %s134, %s148
    %p150 = scmp.eq.s32.totalorder %s19, 0
    %p151 = por %p149, %p150
    %s153 = sadd.s32 %s152, 1
    %p156 = scmp.eq.s32.totalorder %s13, 1
    %p157 = scmp.ne.s32.totalorder %s152, %s154
    %p158 = scmp.eq.s32.totalorder %s13, 0
    %p159 = por %p157, %p158
    %p160 = scmp.ne.s32.totalorder %s152, %s154
    %p161 = scmp.eq.s32.totalorder %s18, 1
    %p162 = por %p160, %p161
    %p163 = scmp.ne.s32.totalorder %s154, %s155
    %p164 = scmp.eq.s32.totalorder %s18, 0
    %p165 = por %p163, %p164
    %p166 = scmp.ne.s32.totalorder %s154, %s155
    %p167 = scmp.eq.s32.totalorder %s19, 1
    %p168 = por %p166, %p167
    %p170 = scmp.ne.s32.totalorder %s155, %s169
    %p171 = scmp.eq.s32.totalorder %s19, 0
    %p172 = por %p170, %p171
    %s173 = ssub.s32 %s13, %s20
    %p174 = scmp.eq.s32.totalorder %s173, 0
    %s176 = sadd.s32 %s175, 1
    %s177 = scalar_select %p174, %s175, %s176
    %p180 = pneg %p174
    %p181 = scmp.eq.s32.totalorder %s13, 1
    %p182 = por %p180, %p181
    %p183 = scmp.ne.s32.totalorder %s175, %s178
    %p184 = scmp.eq.s32.totalorder %s13, 0
    %p185 = por %p183, %p184
    %p186 = scmp.ne.s32.totalorder %s175, %s178
    %p187 = scmp.eq.s32.totalorder %s18, 1
    %p188 = por %p186, %p187
    %p189 = scmp.ne.s32.totalorder %s178, %s179
    %p190 = scmp.eq.s32.totalorder %s18, 0
    %p191 = por %p189, %p190
    %p192 = scmp.ne.s32.totalorder %s178, %s179
    %p193 = scmp.eq.s32.totalorder %s19, 1
    %p194 = por %p192, %p193
    %p196 = scmp.ne.s32.totalorder %s179, %s195
    %p197 = scmp.eq.s32.totalorder %s19, 0
    %p198 = por %p196, %p197
    %p199 = scmp.le.s32.totalorder 1, %s13
    %p200 = scmp.lt.s32.totalorder %s13, 3
    %p201 = pnand %p199, %p200
    %p202 = pneg %p201
    // Predicated region
    $region9: #{simple_cnn_forward.1} parent=5 // pred_check
      _
    $region10: #{simple_cnn_forward.1} parent=5 // pred_check_branch
      %204 = sbr.rel (%p201) target = $region12
    $region11: #{simple_cnn_forward.1} parent=5 // pred_region
      %s205 = ssub.s32 %s13, 1
      // Predicated region
      $region13: #{simple_cnn_forward.1} parent=11 // pred_check
        %p206 = pneg %p60
      $region14: #{simple_cnn_forward.1} parent=11 // pred_check_branch
        %208 = sbr.rel (%p206) target = $region16
      $region15: #{simple_cnn_forward.1} parent=11 // pred_region
        _
      $region16: #{simple_cnn_forward.1} parent=11 // pred_fallthru
        _
      // Predicated region
      $region17: #{simple_cnn_forward.1} parent=11 // pred_check
        %p209 = pneg %p81
      $region18: #{simple_cnn_forward.1} parent=11 // pred_check_branch
        %211 = sbr.rel (%p209) target = $region20
      $region19: #{simple_cnn_forward.1} parent=11 // pred_region
        _
      $region20: #{simple_cnn_forward.1} parent=11 // pred_fallthru
        _
      // Predicated region
      $region21: #{simple_cnn_forward.1} parent=11 // pred_check
        %p212 = pneg %p102
      $region22: #{simple_cnn_forward.1} parent=11 // pred_check_branch
        %214 = sbr.rel (%p212) target = $region24
      $region23: #{simple_cnn_forward.1} parent=11 // pred_region
        _
      $region24: #{simple_cnn_forward.1} parent=11 // pred_fallthru
        _
      // Predicated region
      $region25: #{simple_cnn_forward.1} parent=11 // pred_check
        %p215 = pneg %p123
      $region26: #{simple_cnn_forward.1} parent=11 // pred_check_branch
        %217 = sbr.rel (%p215) target = $region28
      $region27: #{simple_cnn_forward.1} parent=11 // pred_region
        _
      $region28: #{simple_cnn_forward.1} parent=11 // pred_fallthru
        _
      // Predicated region
      $region29: #{simple_cnn_forward.1} parent=11 // pred_check
        %p218 = pneg %p144
      $region30: #{simple_cnn_forward.1} parent=11 // pred_check_branch
        %220 = sbr.rel (%p218) target = $region32
      $region31: #{simple_cnn_forward.1} parent=11 // pred_region
        _
      $region32: #{simple_cnn_forward.1} parent=11 // pred_fallthru
        _
      // Predicated region
      $region33: #{simple_cnn_forward.1} parent=11 // pred_check
        %p221 = pneg %p165
      $region34: #{simple_cnn_forward.1} parent=11 // pred_check_branch
        %223 = sbr.rel (%p221) target = $region36
      $region35: #{simple_cnn_forward.1} parent=11 // pred_region
        _
      $region36: #{simple_cnn_forward.1} parent=11 // pred_fallthru
        _
    $region12: #{simple_cnn_forward.1} parent=5 // pred_fallthru
      _
    %p224 = scmp.lt.s32.totalorder %s13, 2
    // Predicated region
    $region37: #{simple_cnn_forward.1} parent=5 // pred_check
      %p225 = pneg %p224
    $region38: #{simple_cnn_forward.1} parent=5 // pred_check_branch
      %227 = sbr.rel (%p225) target = $region40
    $region39: #{simple_cnn_forward.1} parent=5 // pred_region
      // Predicated region
      $region41: #{simple_cnn_forward.1} parent=39 // pred_check
        %p228 = pneg %p33
      $region42: #{simple_cnn_forward.1} parent=39 // pred_check_branch
        %230 = sbr.rel (%p228) target = $region44
      $region43: #{simple_cnn_forward.1} parent=39 // pred_region
        %s231 = smul.u32 4, %s13
        %p232 = scmp.lt.s32.totalorder %s231, 7
        %s233 = scalar_select %p232, %s231, 7
        %s234 = smul.addr %s233, 8
        %s235 = smul.addr %s234, 4
        %s236 = scalar_lea.vmem %s0, %s235
        %s237 = smul.u32 4, %s13
      $region44: #{simple_cnn_forward.1} parent=39 // pred_fallthru
        _
    $region40: #{simple_cnn_forward.1} parent=5 // pred_fallthru
      _
    %p238 = scmp.le.s32.totalorder 1, %s13
    %p239 = scmp.lt.s32.totalorder %s13, 3
    %p240 = pnand %p238, %p239
    %p241 = pneg %p240
    // Predicated region
    $region45: #{simple_cnn_forward.1} parent=5 // pred_check
      _
    $region46: #{simple_cnn_forward.1} parent=5 // pred_check_branch
      %243 = sbr.rel (%p240) target = $region48
    $region47: #{simple_cnn_forward.1} parent=5 // pred_region
      %s244 = ssub.s32 %s13, 1
      %s245 = smul.u32 4, %s18
      %p246 = scmp.lt.s32.totalorder %s245, 7
      %s247 = scalar_select %p246, %s245, 7
      %s248 = smul.addr %s247, 8
      %s249 = smul.addr %s248, 4
      %s250 = scalar_lea.vmem %s0, %s249
      %p251 = pneg %p39
      %p252 = pneg %p36
      %p253 = pneg %p60
      %p254 = pneg %p57
      %p255 = pneg %p81
      %p256 = pneg %p78
      %p257 = pneg %p102
      %p258 = pneg %p99
      %p259 = pneg %p123
      %p260 = pneg %p120
      %p261 = pneg %p144
      %p262 = pneg %p141
      %p263 = pneg %p165
      %p264 = pneg %p162
      %p265 = pneg %p191
      %p266 = pneg %p188
      %p267 = scmp.lt.s32.totalorder %s18, 1
      %s268 = scalar_select %p267, %s18, 1
      %s269 = smul.addr %s268, 4
      %s270 = smul.addr %s269, 8
      %s271 = scalar_lea.vmem %s7, %s270
      %s272 = smul.u32 4, %s18
      %p273 = scmp.lt.s32.totalorder %s272, 7
      %s274 = scalar_select %p273, %s272, 7
      %s275 = smul.addr %s274, 8
      %s276 = smul.addr %s275, 4
      %s277 = scalar_lea.vmem %s0, %s276
      %s278 = smul.u32 4, %s18
      %p279 = scmp.lt.s32.totalorder %s18, 1
      %s280 = scalar_select %p279, %s18, 1
      %s281 = smul.addr %s280, 4
      %s282 = smul.addr %s281, 8
      %s283 = scalar_lea.vmem %s7, %s282
      %v285 = vld [vmem:[%s1] sm:$0xf]
      %v286 = vld [vmem:[%s1 + $0x4] sm:$0xf]
      %v287 = vld [vmem:[%s1 + $0x8] sm:$0xf]
      %v288 = vld [vmem:[%s1 + $0xc] sm:$0xf]
      %v289 = vld [vmem:[%s1 + $0x10] sm:$0xf]
      %v290 = vld [vmem:[%s1 + $0x14] sm:$0xf]
      %v291 = vld [vmem:[%s1 + $0x18] sm:$0xf]
      %v292 = vld [vmem:[%s1 + $0x1c] sm:$0xf]
      %v293 = vld [vmem:[%s2] sm:$0xff]
      %v294 = vld [vmem:[%s2 + $0x8] sm:$0xff]
      %v295 = vld [vmem:[%s5] sm:$0xff]
      %v296 = vld [vmem:[%s5 + $0x8] sm:$0xff]
      %v297 = vld [vmem:[%s5 + $0x10] sm:$0xff]
      %v298 = vld [vmem:[%s5 + $0x18] sm:$0xff]
      %v299 = vld [vmem:[%s277] sm:$0xf]
      %v300 = vld [vmem:[%s277 + $0x4] sm:$0xf]
      %v301 = vld [vmem:[%s277 + $0x8] sm:$0xf]
      %v302 = vld [vmem:[%s277 + $0xc] sm:$0xf]
      %v303 = vld [vmem:[%s277 + $0x10] sm:$0xf]
      %v304 = vld [vmem:[%s277 + $0x14] sm:$0xf]
      %v305 = vld [vmem:[%s277 + $0x18] sm:$0xf]
      %v306 = vld [vmem:[%s277 + $0x1c] sm:$0xf]
      %v315 = vunpack.c.l.b16 %v285
      %v316 = vunpack.c.l.b16 %v286
      %v317 = vunpack.c.l.b16 %v287
      %v318 = vunpack.c.l.b16 %v288
      %v319 = vunpack.c.l.b16 %v289
      %v320 = vunpack.c.l.b16 %v290
      %v321 = vunpack.c.l.b16 %v291
      %v322 = vunpack.c.l.b16 %v292
      %v323 = vpack.c.b16 %v316, %v315
      %v324 = vpack.c.b16 %v318, %v317
      %v325 = vpack.c.b16 %v320, %v319
      %v326 = vpack.c.b16 %v322, %v321
      %v335 = vunpack.c.l.b16 %v299
      %v336 = vunpack.c.l.b16 %v300
      %v337 = vunpack.c.l.b16 %v301
      %v338 = vunpack.c.l.b16 %v302
      %v339 = vunpack.c.l.b16 %v303
      %v340 = vunpack.c.l.b16 %v304
      %v341 = vunpack.c.l.b16 %v305
      %v342 = vunpack.c.l.b16 %v306
      %v343 = vpack.c.b16 %v336, %v335
      %v344 = vpack.c.b16 %v338, %v337
      %v345 = vpack.c.b16 %v340, %v339
      %v346 = vpack.c.b16 %v342, %v341
      %vm351 = vcmask 523264
      %v353 = vsel %vm351, %v323, 0
      %v356 = vsel %vm351, %v324, 0
      %v359 = vsel %vm351, %v325, 0
      %v362 = vsel %vm351, %v326, 0
      %364 = vmatprep.subr.bf16.mxu0 0
      %365 = vmatpush1.bf16.msra.mxu0 %v343
      %366 = vmatprep.subr.bf16.mxu0 0
      %367 = vmatpush1.bf16.msra.mxu0 %v344
      %368 = vmatprep.subr.bf16.mxu0 0
      %369 = vmatpush1.bf16.msra.mxu0 %v345
      %370 = vmatprep.subr.bf16.mxu0 0
      %371 = vmatpush1.bf16.msra.mxu0 %v346
      %372 = vmatprep.subr.bf16.mxu0 0
      %373 = vmatpush1.bf16.msra.mxu0 0
      %374 = vmatprep.subr.bf16.mxu0 0
      %375 = vmatpush1.bf16.msra.mxu0 0
      %376 = vmatprep.subr.bf16.mxu0 0
      %377 = vmatpush1.bf16.msra.mxu0 0
      %378 = vmatprep.subr.bf16.mxu0 0
      %379 = vmatpush1.bf16.msra.mxu0 0
      %380 = vmatprep.subr.bf16.mxu0 0
      %381 = vmatpush1.bf16.msra.mxu0 0
      %382 = vmatprep.subr.bf16.mxu0 0
      %383 = vmatpush1.bf16.msra.mxu0 0
      %384 = vmatprep.subr.bf16.mxu0 0
      %385 = vmatpush1.bf16.msra.mxu0 0
      %386 = vmatprep.subr.bf16.mxu0 0
      %387 = vmatpush1.bf16.msra.mxu0 0
      %388 = vmatprep.subr.bf16.mxu0 0
      %389 = vmatpush1.bf16.msra.mxu0 0
      %390 = vmatprep.subr.bf16.mxu0 0
      %391 = vmatpush1.bf16.msra.mxu0 0
      %392 = vmatprep.subr.bf16.mxu0 0
      %393 = vmatpush1.bf16.msra.mxu0 0
      %394 = vmatprep.subr.bf16.mxu0 0
      %395 = vmatpush1.bf16.msra.mxu0 0
      %396 = vmatprep.mubr.bf16.mxu0 0
      %397 = vmatmul.mubr.bf16.gmra.mrb[0].mxu0 %v353
      %v398 = vpop.f32.mrb[0].mxu0
      %v399 = vadd.f32 0.0, %v398
      %v400 = vpop.f32.mrb[0].mxu0
      %v401 = vpop.f32.mrb[0].mxu0
      %v402 = vadd.f32 0.0, %v401
      %v403 = vpop.f32.mrb[0].mxu0
      %404 = vmatprep.mubr.bf16.mxu0 0
      %405 = vmatmul.mubr.bf16.gmra.mrb[0].mxu0 %v356
      %v406 = vpop.f32.mrb[0].mxu0
      %v407 = vadd.f32 0.0, %v406
      %v408 = vpop.f32.mrb[0].mxu0
      %v409 = vpop.f32.mrb[0].mxu0
      %v410 = vadd.f32 0.0, %v409
      %v411 = vpop.f32.mrb[0].mxu0
      %412 = vmatprep.mubr.bf16.mxu0 0
      %413 = vmatmul.mubr.bf16.gmra.mrb[0].mxu0 %v359
      %v414 = vpop.f32.mrb[0].mxu0
      %v415 = vadd.f32 0.0, %v414
      %v416 = vpop.f32.mrb[0].mxu0
      %v417 = vpop.f32.mrb[0].mxu0
      %v418 = vadd.f32 0.0, %v417
      %v419 = vpop.f32.mrb[0].mxu0
      %420 = vmatprep.mubr.bf16.mxu0 0
      %421 = vmatmul.mubr.bf16.gmra.mrb[0].mxu0 %v362
      %v422 = vpop.f32.mrb[0].mxu0
      %v423 = vadd.f32 0.0, %v422
      %v424 = vpop.f32.mrb[0].mxu0
      %v425 = vpop.f32.mrb[0].mxu0
      %v426 = vadd.f32 0.0, %v425
      %v427 = vpop.f32.mrb[0].mxu0
      %428 = vdwg.mxu0
      %v429 = vpack.c.bf16 %v402, %v399
      %v430 = vpack.c.bf16 %v410, %v407
      %v431 = vpack.c.bf16 %v418, %v415
      %v432 = vpack.c.bf16 %v426, %v423
      %v433 = vld [vmem:[%s3] sm:$0xf]
      %v434 = vld [vmem:[%s3 + $0x4] sm:$0xf]
      %v435 = vld [vmem:[%s3 + $0x8] sm:$0xf]
      %v436 = vld [vmem:[%s3 + $0xc] sm:$0xf]
      %v437 = vld [vmem:[%s3 + $0x10] sm:$0xf]
      %v438 = vld [vmem:[%s3 + $0x14] sm:$0xf]
      %v439 = vld [vmem:[%s3 + $0x18] sm:$0xf]
      %v440 = vld [vmem:[%s3 + $0x1c] sm:$0xf]
      %v441 = vld [vmem:[%s3 + $0x20] sm:$0xf]
      %v442 = vld [vmem:[%s3 + $0x24] sm:$0xf]
      %v443 = vld [vmem:[%s3 + $0x28] sm:$0x1]
      %s444 = scalar_lea.vmem %s3, 44
      %v445 = vld [vmem:[%s444] sm:$0xf]
      %v446 = vld [vmem:[%s444 + $0x4] sm:$0xf]
      %v447 = vld [vmem:[%s444 + $0x8] sm:$0xf]
      %v448 = vld [vmem:[%s444 + $0xc] sm:$0xf]
      %v449 = vld [vmem:[%s444 + $0x10] sm:$0xf]
      %v450 = vld [vmem:[%s444 + $0x14] sm:$0xf]
      %v451 = vld [vmem:[%s444 + $0x18] sm:$0xf]
      %v452 = vld [vmem:[%s444 + $0x1c] sm:$0xf]
      %v453 = vld [vmem:[%s444 + $0x20] sm:$0xf]
      %v454 = vld [vmem:[%s444 + $0x24] sm:$0xf]
      %v455 = vld [vmem:[%s444 + $0x28] sm:$0x1]
      %v467 = vunpack.c.l.b16 %v445
      %v468 = vunpack.c.l.b16 %v446
      %v469 = vunpack.c.l.b16 %v447
      %v470 = vunpack.c.l.b16 %v448
      %v471 = vunpack.c.l.b16 %v449
      %v472 = vunpack.c.l.b16 %v450
      %v473 = vunpack.c.l.b16 %v451
      %v474 = vunpack.c.l.b16 %v452
      %v475 = vunpack.c.l.b16 %v453
      %v476 = vunpack.c.l.b16 %v454
      %v477 = vunpack.c.l.b16 %v455
      %v478 = vpack.c.b16 %v468, %v467
      %v479 = vpack.c.b16 %v470, %v469
      %v480 = vpack.c.b16 %v472, %v471
      %v481 = vpack.c.b16 %v474, %v473
      %v482 = vpack.c.b16 %v476, %v475
      %v483 = vpack.c.b16 %v477, %v477
      %vm489 = vcmask 662528
      %v491 = vsel %vm489, %v430, 0
      %vm493 = vcmask 1040384
      %v494 = vsel 0, 4294967295, 65535
      %v495 = vsel %vm493, %v494, 0
      %v497 = vand.u32 %v483, %v495
      %499 = vmatprep.subr.bf16.mxu0 0
      %500 = vmatpush1.bf16.msra.mxu0 %v478
      %501 = vmatprep.subr.bf16.mxu0 0
      %502 = vmatpush1.bf16.msra.mxu0 %v479
      %503 = vmatprep.subr.bf16.mxu0 0
      %504 = vmatpush1.bf16.msra.mxu0 %v480
      %505 = vmatprep.subr.bf16.mxu0 0
      %506 = vmatpush1.bf16.msra.mxu0 %v481
      %507 = vmatprep.subr.bf16.mxu0 0
      %508 = vmatpush1.bf16.msra.mxu0 %v482
      %509 = vmatprep.subr.bf16.mxu0 0
      %510 = vmatpush1.bf16.msra.mxu0 %v497
      %511 = vmatprep.subr.bf16.mxu0 0
      %512 = vmatpush1.bf16.msra.mxu0 0
      %513 = vmatprep.subr.bf16.mxu0 0
      %514 = vmatpush1.bf16.msra.mxu0 0
      %515 = vmatprep.subr.bf16.mxu0 0
      %516 = vmatpush1.bf16.msra.mxu0 0
      %517 = vmatprep.subr.bf16.mxu0 0
      %518 = vmatpush1.bf16.msra.mxu0 0
      %519 = vmatprep.subr.bf16.mxu0 0
      %520 = vmatpush1.bf16.msra.mxu0 0
      %521 = vmatprep.subr.bf16.mxu0 0
      %522 = vmatpush1.bf16.msra.mxu0 0
      %523 = vmatprep.subr.bf16.mxu0 0
      %524 = vmatpush1.bf16.msra.mxu0 0
      %525 = vmatprep.subr.bf16.mxu0 0
      %526 = vmatpush1.bf16.msra.mxu0 0
      %527 = vmatprep.subr.bf16.mxu0 0
      %528 = vmatpush1.bf16.msra.mxu0 0
      %529 = vmatprep.subr.bf16.mxu0 0
      %530 = vmatpush1.bf16.msra.mxu0 0
      %531 = vmatprep.mubr.bf16.mxu0 0
      %532 = vmatmul.mubr.bf16.gmra.mrb[0].mxu0 %v491
      %v533 = vpop.f32.mrb[0].mxu0
      %v534 = vadd.f32 0.0, %v533
      %v535 = vpop.f32.mrb[0].mxu0
      %v536 = vpop.f32.mrb[0].mxu0
      %v537 = vadd.f32 0.0, %v536
      %v538 = vpop.f32.mrb[0].mxu0
      %539 = vdwg.mxu0
      %v551 = vunpack.c.l.b16 %v433
      %v552 = vunpack.c.l.b16 %v434
      %v553 = vunpack.c.l.b16 %v435
      %v554 = vunpack.c.l.b16 %v436
      %v555 = vunpack.c.l.b16 %v437
      %v556 = vunpack.c.l.b16 %v438
      %v557 = vunpack.c.l.b16 %v439
      %v558 = vunpack.c.l.b16 %v440
      %v559 = vunpack.c.l.b16 %v441
      %v560 = vunpack.c.l.b16 %v442
      %v561 = vunpack.c.l.b16 %v443
      %v562 = vpack.c.b16 %v552, %v551
      %v563 = vpack.c.b16 %v554, %v553
      %v564 = vpack.c.b16 %v556, %v555
      %v565 = vpack.c.b16 %v558, %v557
      %v566 = vpack.c.b16 %v560, %v559
      %v567 = vpack.c.b16 %v561, %v561
      %v574 = vsel %vm489, %v429, 0
      %v577 = vand.u32 %v567, %v495
      %579 = vmatprep.subr.bf16.mxu0 0
      %580 = vmatpush1.bf16.msra.mxu0 %v562
      %581 = vmatprep.subr.bf16.mxu0 0
      %582 = vmatpush1.bf16.msra.mxu0 %v563
      %583 = vmatprep.subr.bf16.mxu0 0
      %584 = vmatpush1.bf16.msra.mxu0 %v564
      %585 = vmatprep.subr.bf16.mxu0 0
      %586 = vmatpush1.bf16.msra.mxu0 %v565
      %587 = vmatprep.subr.bf16.mxu0 0
      %588 = vmatpush1.bf16.msra.mxu0 %v566
      %589 = vmatprep.subr.bf16.mxu0 0
      %590 = vmatpush1.bf16.msra.mxu0 %v577
      %591 = vmatprep.subr.bf16.mxu0 0
      %592 = vmatpush1.bf16.msra.mxu0 0
      %593 = vmatprep.subr.bf16.mxu0 0
      %594 = vmatpush1.bf16.msra.mxu0 0
      %595 = vmatprep.subr.bf16.mxu0 0
      %596 = vmatpush1.bf16.msra.mxu0 0
      %597 = vmatprep.subr.bf16.mxu0 0
      %598 = vmatpush1.bf16.msra.mxu0 0
      %599 = vmatprep.subr.bf16.mxu0 0
      %600 = vmatpush1.bf16.msra.mxu0 0
      %601 = vmatprep.subr.bf16.mxu0 0
      %602 = vmatpush1.bf16.msra.mxu0 0
      %603 = vmatprep.subr.bf16.mxu0 0
      %604 = vmatpush1.bf16.msra.mxu0 0
      %605 = vmatprep.subr.bf16.mxu0 0
      %606 = vmatpush1.bf16.msra.mxu0 0
      %607 = vmatprep.subr.bf16.mxu0 0
      %608 = vmatpush1.bf16.msra.mxu0 0
      %609 = vmatprep.subr.bf16.mxu0 0
      %610 = vmatpush1.bf16.msra.mxu0 0
      %611 = vmatprep.mubr.bf16.mxu0 0
      %612 = vmatmul.mubr.bf16.gmra.mrb[0].mxu0 %v574
      %v613 = vpop.f32.mrb[0].mxu0
      %v614 = vadd.f32 %v534, %v613
      %v615 = vpop.f32.mrb[0].mxu0
      %v616 = vpop.f32.mrb[0].mxu0
      %v617 = vadd.f32 %v537, %v616
      %v618 = vpop.f32.mrb[0].mxu0
      %619 = vdwg.mxu0
      %s620 = scalar_lea.vmem %s3, 88
      %v621 = vld [vmem:[%s620] sm:$0xf]
      %v622 = vld [vmem:[%s620 + $0x4] sm:$0xf]
      %v623 = vld [vmem:[%s620 + $0x8] sm:$0xf]
      %v624 = vld [vmem:[%s620 + $0xc] sm:$0xf]
      %v625 = vld [vmem:[%s620 + $0x10] sm:$0xf]
      %v626 = vld [vmem:[%s620 + $0x14] sm:$0xf]
      %v627 = vld [vmem:[%s620 + $0x18] sm:$0xf]
      %v628 = vld [vmem:[%s620 + $0x1c] sm:$0xf]
      %v629 = vld [vmem:[%s620 + $0x20] sm:$0xf]
      %v630 = vld [vmem:[%s620 + $0x24] sm:$0xf]
      %v631 = vld [vmem:[%s620 + $0x28] sm:$0x1]
      %v643 = vunpack.c.l.b16 %v621
      %v644 = vunpack.c.l.b16 %v622
      %v645 = vunpack.c.l.b16 %v623
      %v646 = vunpack.c.l.b16 %v624
      %v647 = vunpack.c.l.b16 %v625
      %v648 = vunpack.c.l.b16 %v626
      %v649 = vunpack.c.l.b16 %v627
      %v650 = vunpack.c.l.b16 %v628
      %v651 = vunpack.c.l.b16 %v629
      %v652 = vunpack.c.l.b16 %v630
      %v653 = vunpack.c.l.b16 %v631
      %v654 = vpack.c.b16 %v644, %v643
      %v655 = vpack.c.b16 %v646, %v645
      %v656 = vpack.c.b16 %v648, %v647
      %v657 = vpack.c.b16 %v650, %v649
      %v658 = vpack.c.b16 %v652, %v651
      %v659 = vpack.c.b16 %v653, %v653
      %v666 = vsel %vm489, %v431, 0
      %v669 = vand.u32 %v659, %v495
      %671 = vmatprep.subr.bf16.mxu0 0
      %672 = vmatpush1.bf16.msra.mxu0 %v654
      %673 = vmatprep.subr.bf16.mxu0 0
      %674 = vmatpush1.bf16.msra.mxu0 %v655
      %675 = vmatprep.subr.bf16.mxu0 0
      %676 = vmatpush1.bf16.msra.mxu0 %v656
      %677 = vmatprep.subr.bf16.mxu0 0
      %678 = vmatpush1.bf16.msra.mxu0 %v657
      %679 = vmatprep.subr.bf16.mxu0 0
      %680 = vmatpush1.bf16.msra.mxu0 %v658
      %681 = vmatprep.subr.bf16.mxu0 0
      %682 = vmatpush1.bf16.msra.mxu0 %v669
      %683 = vmatprep.subr.bf16.mxu0 0
      %684 = vmatpush1.bf16.msra.mxu0 0
      %685 = vmatprep.subr.bf16.mxu0 0
      %686 = vmatpush1.bf16.msra.mxu0 0
      %687 = vmatprep.subr.bf16.mxu0 0
      %688 = vmatpush1.bf16.msra.mxu0 0
      %689 = vmatprep.subr.bf16.mxu0 0
      %690 = vmatpush1.bf16.msra.mxu0 0
      %691 = vmatprep.subr.bf16.mxu0 0
      %692 = vmatpush1.bf16.msra.mxu0 0
      %693 = vmatprep.subr.bf16.mxu0 0
      %694 = vmatpush1.bf16.msra.mxu0 0
      %695 = vmatprep.subr.bf16.mxu0 0
      %696 = vmatpush1.bf16.msra.mxu0 0
      %697 = vmatprep.subr.bf16.mxu0 0
      %698 = vmatpush1.bf16.msra.mxu0 0
      %699 = vmatprep.subr.bf16.mxu0 0
      %700 = vmatpush1.bf16.msra.mxu0 0
      %701 = vmatprep.subr.bf16.mxu0 0
      %702 = vmatpush1.bf16.msra.mxu0 0
      %703 = vmatprep.mubr.bf16.mxu0 0
      %704 = vmatmul.mubr.bf16.gmra.mrb[0].mxu0 %v666
      %v705 = vpop.f32.mrb[0].mxu0
      %v706 = vadd.f32 0.0, %v705
      %v707 = vpop.f32.mrb[0].mxu0
      %v708 = vpop.f32.mrb[0].mxu0
      %v709 = vadd.f32 0.0, %v708
      %v710 = vpop.f32.mrb[0].mxu0
      %711 = vdwg.mxu0
      %v712 = vadd.f32 %v614, %v706
      %v713 = vadd.f32 %v617, %v709
      %s714 = scalar_lea.vmem %s3, 132
      %v715 = vld [vmem:[%s714] sm:$0xf]
      %v716 = vld [vmem:[%s714 + $0x4] sm:$0xf]
      %v717 = vld [vmem:[%s714 + $0x8] sm:$0xf]
      %v718 = vld [vmem:[%s714 + $0xc] sm:$0xf]
      %v719 = vld [vmem:[%s714 + $0x10] sm:$0xf]
      %v720 = vld [vmem:[%s714 + $0x14] sm:$0xf]
      %v721 = vld [vmem:[%s714 + $0x18] sm:$0xf]
      %v722 = vld [vmem:[%s714 + $0x1c] sm:$0xf]
      %v723 = vld [vmem:[%s714 + $0x20] sm:$0xf]
      %v724 = vld [vmem:[%s714 + $0x24] sm:$0xf]
      %v725 = vld [vmem:[%s714 + $0x28] sm:$0x1]
      %v737 = vunpack.c.l.b16 %v715
      %v738 = vunpack.c.l.b16 %v716
      %v739 = vunpack.c.l.b16 %v717
      %v740 = vunpack.c.l.b16 %v718
      %v741 = vunpack.c.l.b16 %v719
      %v742 = vunpack.c.l.b16 %v720
      %v743 = vunpack.c.l.b16 %v721
      %v744 = vunpack.c.l.b16 %v722
      %v745 = vunpack.c.l.b16 %v723
      %v746 = vunpack.c.l.b16 %v724
      %v747 = vunpack.c.l.b16 %v725
      %v748 = vpack.c.b16 %v738, %v737
      %v749 = vpack.c.b16 %v740, %v739
      %v750 = vpack.c.b16 %v742, %v741
      %v751 = vpack.c.b16 %v744, %v743
      %v752 = vpack.c.b16 %v746, %v745
      %v753 = vpack.c.b16 %v747, %v747
      %v760 = vsel %vm489, %v432, 0
      %v763 = vand.u32 %v753, %v495
      %765 = vmatprep.subr.bf16.mxu0 0
      %766 = vmatpush1.bf16.msra.mxu0 %v748
      %767 = vmatprep.subr.bf16.mxu0 0
      %768 = vmatpush1.bf16.msra.mxu0 %v749
      %769 = vmatprep.subr.bf16.mxu0 0
      %770 = vmatpush1.bf16.msra.mxu0 %v750
      %771 = vmatprep.subr.bf16.mxu0 0
      %772 = vmatpush1.bf16.msra.mxu0 %v751
      %773 = vmatprep.subr.bf16.mxu0 0
      %774 = vmatpush1.bf16.msra.mxu0 %v752
      %775 = vmatprep.subr.bf16.mxu0 0
      %776 = vmatpush1.bf16.msra.mxu0 %v763
      %777 = vmatprep.subr.bf16.mxu0 0
      %778 = vmatpush1.bf16.msra.mxu0 0
      %779 = vmatprep.subr.bf16.mxu0 0
      %780 = vmatpush1.bf16.msra.mxu0 0
      %781 = vmatprep.subr.bf16.mxu0 0
      %782 = vmatpush1.bf16.msra.mxu0 0
      %783 = vmatprep.subr.bf16.mxu0 0
      %784 = vmatpush1.bf16.msra.mxu0 0
      %785 = vmatprep.subr.bf16.mxu0 0
      %786 = vmatpush1.bf16.msra.mxu0 0
      %787 = vmatprep.subr.bf16.mxu0 0
      %788 = vmatpush1.bf16.msra.mxu0 0
      %789 = vmatprep.subr.bf16.mxu0 0
      %790 = vmatpush1.bf16.msra.mxu0 0
      %791 = vmatprep.subr.bf16.mxu0 0
      %792 = vmatpush1.bf16.msra.mxu0 0
      %793 = vmatprep.subr.bf16.mxu0 0
      %794 = vmatpush1.bf16.msra.mxu0 0
      %795 = vmatprep.subr.bf16.mxu0 0
      %796 = vmatpush1.bf16.msra.mxu0 0
      %797 = vmatprep.mubr.bf16.mxu0 0
      %798 = vmatmul.mubr.bf16.gmra.mrb[0].mxu0 %v760
      %v799 = vpop.f32.mrb[0].mxu0
      %v800 = vadd.f32 0.0, %v799
      %v801 = vpop.f32.mrb[0].mxu0
      %v802 = vpop.f32.mrb[0].mxu0
      %v803 = vadd.f32 0.0, %v802
      %v804 = vpop.f32.mrb[0].mxu0
      %805 = vdwg.mxu0
      %v806 = vadd.f32 %v712, %v800
      %v807 = vadd.f32 %v713, %v803
      %809 = vset.pattern.permute.xlu0 0
      %810 = vperm.xlu0 %809, %v293
      %v811 = vpop.permute.xlu0 %810
      %814 = vset.pattern.permute.xlu0 0
      %815 = vperm.xlu0 %814, %v294
      %v816 = vpop.permute.xlu0 %815
      %v818 = vadd.f32 %v806, %v811
      %v819 = vadd.f32 %v807, %v816
      %v820 = vmax.f32 %v818, 0.0
      %v821 = vmax.f32 %v819, 0.0
      %v822 = vpack.c.bf16 %v821, %v820
      %v823 = vld [vmem:[%s4] sm:$0xf]
      %v824 = vld [vmem:[%s4 + $0x4] sm:$0xf]
      %v825 = vld [vmem:[%s4 + $0x8] sm:$0xf]
      %v826 = vld [vmem:[%s4 + $0xc] sm:$0xf]
      %v827 = vld [vmem:[%s4 + $0x10] sm:$0xf]
      %v828 = vld [vmem:[%s4 + $0x14] sm:$0xf]
      %v829 = vld [vmem:[%s4 + $0x18] sm:$0xf]
      %v830 = vld [vmem:[%s4 + $0x1c] sm:$0xf]
      %v831 = vld [vmem:[%s4 + $0x20] sm:$0xf]
      %v832 = vld [vmem:[%s4 + $0x24] sm:$0xf]
      %v833 = vld [vmem:[%s4 + $0x28] sm:$0xf]
      %v834 = vld [vmem:[%s4 + $0x2c] sm:$0xf]
      %v835 = vld [vmem:[%s4 + $0x30] sm:$0xf]
      %v836 = vld [vmem:[%s4 + $0x34] sm:$0xf]
      %v837 = vld [vmem:[%s4 + $0x38] sm:$0xf]
      %v838 = vld [vmem:[%s4 + $0x3c] sm:$0xf]
      %s839 = scalar_lea.vmem %s4, 64
      %v840 = vld [vmem:[%s839] sm:$0xf]
      %v841 = vld [vmem:[%s839 + $0x4] sm:$0xf]
      %v842 = vld [vmem:[%s839 + $0x8] sm:$0xf]
      %v843 = vld [vmem:[%s839 + $0xc] sm:$0xf]
      %v844 = vld [vmem:[%s839 + $0x10] sm:$0xf]
      %v845 = vld [vmem:[%s839 + $0x14] sm:$0xf]
      %v846 = vld [vmem:[%s839 + $0x18] sm:$0xf]
      %v847 = vld [vmem:[%s839 + $0x1c] sm:$0xf]
      %v848 = vld [vmem:[%s839 + $0x20] sm:$0xf]
      %v849 = vld [vmem:[%s839 + $0x24] sm:$0xf]
      %v850 = vld [vmem:[%s839 + $0x28] sm:$0xf]
      %v851 = vld [vmem:[%s839 + $0x2c] sm:$0xf]
      %v852 = vld [vmem:[%s839 + $0x30] sm:$0xf]
      %v853 = vld [vmem:[%s839 + $0x34] sm:$0xf]
      %v854 = vld [vmem:[%s839 + $0x38] sm:$0xf]
      %v855 = vld [vmem:[%s839 + $0x3c] sm:$0xf]
      %v872 = vunpack.c.l.b16 %v840
      %v873 = vunpack.c.l.b16 %v841
      %v874 = vunpack.c.l.b16 %v842
      %v875 = vunpack.c.l.b16 %v843
      %v876 = vunpack.c.l.b16 %v844
      %v877 = vunpack.c.l.b16 %v845
      %v878 = vunpack.c.l.b16 %v846
      %v879 = vunpack.c.l.b16 %v847
      %v880 = vunpack.c.l.b16 %v848
      %v881 = vunpack.c.l.b16 %v849
      %v882 = vunpack.c.l.b16 %v850
      %v883 = vunpack.c.l.b16 %v851
      %v884 = vunpack.c.l.b16 %v852
      %v885 = vunpack.c.l.b16 %v853
      %v886 = vunpack.c.l.b16 %v854
      %v887 = vunpack.c.l.b16 %v855
      %v888 = vpack.c.b16 %v873, %v872
      %v889 = vpack.c.b16 %v875, %v874
      %v890 = vpack.c.b16 %v877, %v876
      %v891 = vpack.c.b16 %v879, %v878
      %v892 = vpack.c.b16 %v881, %v880
      %v893 = vpack.c.b16 %v883, %v882
      %v894 = vpack.c.b16 %v885, %v884
      %v895 = vpack.c.b16 %v887, %v886
      %897 = vrot.lane.b32.xlu0 %v822, 112
      %v898 = vpop.permute.xlu0 %897
      %vm900 = vcmask 130048
      %v902 = vsel %vm900, %v888, 0
      %v905 = vsel %vm900, %v889, 0
      %v908 = vsel %vm900, %v890, 0
      %v911 = vsel %vm900, %v891, 0
      %v914 = vsel %vm900, %v892, 0
      %v917 = vsel %vm900, %v893, 0
      %v920 = vsel %vm900, %v894, 0
      %v923 = vsel %vm900, %v895, 0
      %925 = vmatprep.subr.bf16.mxu0 0
      %926 = vmatpush1.bf16.msra.mxu0 %v898
      %927 = vmatprep.subr.bf16.mxu0 0
      %928 = vmatpush1.bf16.msra.mxu0 0
      %929 = vmatprep.subr.bf16.mxu0 0
      %930 = vmatpush1.bf16.msra.mxu0 0
      %931 = vmatprep.subr.bf16.mxu0 0
      %932 = vmatpush1.bf16.msra.mxu0 0
      %933 = vmatprep.subr.bf16.mxu0 0
      %934 = vmatpush1.bf16.msra.mxu0 0
      %935 = vmatprep.subr.bf16.mxu0 0
      %936 = vmatpush1.bf16.msra.mxu0 0
      %937 = vmatprep.subr.bf16.mxu0 0
      %938 = vmatpush1.bf16.msra.mxu0 0
      %939 = vmatprep.subr.bf16.mxu0 0
      %940 = vmatpush1.bf16.msra.mxu0 0
      %941 = vmatprep.subr.bf16.mxu0 0
      %942 = vmatpush1.bf16.msra.mxu0 0
      %943 = vmatprep.subr.bf16.mxu0 0
      %944 = vmatpush1.bf16.msra.mxu0 0
      %945 = vmatprep.subr.bf16.mxu0 0
      %946 = vmatpush1.bf16.msra.mxu0 0
      %947 = vmatprep.subr.bf16.mxu0 0
      %948 = vmatpush1.bf16.msra.mxu0 0
      %949 = vmatprep.subr.bf16.mxu0 0
      %950 = vmatpush1.bf16.msra.mxu0 0
      %951 = vmatprep.subr.bf16.mxu0 0
      %952 = vmatpush1.bf16.msra.mxu0 0
      %953 = vmatprep.subr.bf16.mxu0 0
      %954 = vmatpush1.bf16.msra.mxu0 0
      %955 = vmatprep.subr.bf16.mxu0 0
      %956 = vmatpush1.bf16.msra.mxu0 0
      %957 = vmatprep.mubr.bf16.mxu0 0
      %958 = vmatmul.mubr.bf16.gmra.mrb[0].mxu0 %v902
      %v959 = vpop.f32.mrb[0].mxu0
      %v960 = vadd.f32 0.0, %v959
      %v961 = vpop.f32.mrb[0].mxu0
      %v962 = vpop.f32.mrb[0].mxu0
      %v963 = vadd.f32 0.0, %v962
      %v964 = vpop.f32.mrb[0].mxu0
      %965 = vmatprep.mubr.bf16.mxu0 0
      %966 = vmatmul.mubr.bf16.gmra.mrb[0].mxu0 %v905
      %v967 = vpop.f32.mrb[0].mxu0
      %v968 = vadd.f32 0.0, %v967
      %v969 = vpop.f32.mrb[0].mxu0
      %v970 = vpop.f32.mrb[0].mxu0
      %v971 = vadd.f32 0.0, %v970
      %v972 = vpop.f32.mrb[0].mxu0
      %973 = vmatprep.mubr.bf16.mxu0 0
      %974 = vmatmul.mubr.bf16.gmra.mrb[0].mxu0 %v908
      %v975 = vpop.f32.mrb[0].mxu0
      %v976 = vadd.f32 0.0, %v975
      %v977 = vpop.f32.mrb[0].mxu0
      %v978 = vpop.f32.mrb[0].mxu0
      %v979 = vadd.f32 0.0, %v978
      %v980 = vpop.f32.mrb[0].mxu0
      %981 = vmatprep.mubr.bf16.mxu0 0
      %982 = vmatmul.mubr.bf16.gmra.mrb[0].mxu0 %v911
      %v983 = vpop.f32.mrb[0].mxu0
      %v984 = vadd.f32 0.0, %v983
      %v985 = vpop.f32.mrb[0].mxu0
      %v986 = vpop.f32.mrb[0].mxu0
      %v987 = vadd.f32 0.0, %v986
      %v988 = vpop.f32.mrb[0].mxu0
      %989 = vmatprep.mubr.bf16.mxu0 0
      %990 = vmatmul.mubr.bf16.gmra.mrb[0].mxu0 %v914
      %v991 = vpop.f32.mrb[0].mxu0
      %v992 = vadd.f32 0.0, %v991
      %v993 = vpop.f32.mrb[0].mxu0
      %v994 = vpop.f32.mrb[0].mxu0
      %v995 = vadd.f32 0.0, %v994
      %v996 = vpop.f32.mrb[0].mxu0
      %997 = vmatprep.mubr.bf16.mxu0 0
      %998 = vmatmul.mubr.bf16.gmra.mrb[0].mxu0 %v917
      %v999 = vpop.f32.mrb[0].mxu0
      %v1000 = vadd.f32 0.0, %v999
      %v1001 = vpop.f32.mrb[0].mxu0
      %v1002 = vpop.f32.mrb[0].mxu0
      %v1003 = vadd.f32 0.0, %v1002
      %v1004 = vpop.f32.mrb[0].mxu0
      %1005 = vmatprep.mubr.bf16.mxu0 0
      %1006 = vmatmul.mubr.bf16.gmra.mrb[0].mxu0 %v920
      %v1007 = vpop.f32.mrb[0].mxu0
      %v1008 = vadd.f32 0.0, %v1007
      %v1009 = vpop.f32.mrb[0].mxu0
      %v1010 = vpop.f32.mrb[0].mxu0
      %v1011 = vadd.f32 0.0, %v1010
      %v1012 = vpop.f32.mrb[0].mxu0
      %1013 = vmatprep.mubr.bf16.mxu0 0
      %1014 = vmatmul.mubr.bf16.gmra.mrb[0].mxu0 %v923
      %v1015 = vpop.f32.mrb[0].mxu0
      %v1016 = vadd.f32 0.0, %v1015
      %v1017 = vpop.f32.mrb[0].mxu0
      %v1018 = vpop.f32.mrb[0].mxu0
      %v1019 = vadd.f32 0.0, %v1018
      %v1020 = vpop.f32.mrb[0].mxu0
      %1021 = vdwg.mxu0
      %v1038 = vunpack.c.l.b16 %v823
      %v1039 = vunpack.c.l.b16 %v824
      %v1040 = vunpack.c.l.b16 %v825
      %v1041 = vunpack.c.l.b16 %v826
      %v1042 = vunpack.c.l.b16 %v827
      %v1043 = vunpack.c.l.b16 %v828
      %v1044 = vunpack.c.l.b16 %v829
      %v1045 = vunpack.c.l.b16 %v830
      %v1046 = vunpack.c.l.b16 %v831
      %v1047 = vunpack.c.l.b16 %v832
      %v1048 = vunpack.c.l.b16 %v833
      %v1049 = vunpack.c.l.b16 %v834
      %v1050 = vunpack.c.l.b16 %v835
      %v1051 = vunpack.c.l.b16 %v836
      %v1052 = vunpack.c.l.b16 %v837
      %v1053 = vunpack.c.l.b16 %v838
      %v1054 = vpack.c.b16 %v1039, %v1038
      %v1055 = vpack.c.b16 %v1041, %v1040
      %v1056 = vpack.c.b16 %v1043, %v1042
      %v1057 = vpack.c.b16 %v1045, %v1044
      %v1058 = vpack.c.b16 %v1047, %v1046
      %v1059 = vpack.c.b16 %v1049, %v1048
      %v1060 = vpack.c.b16 %v1051, %v1050
      %v1061 = vpack.c.b16 %v1053, %v1052
      %v1063 = vsel %vm900, %v1054, 0
      %v1066 = vsel %vm900, %v1055, 0
      %v1069 = vsel %vm900, %v1056, 0
      %v1072 = vsel %vm900, %v1057, 0
      %v1075 = vsel %vm900, %v1058, 0
      %v1078 = vsel %vm900, %v1059, 0
      %v1081 = vsel %vm900, %v1060, 0
      %v1084 = vsel %vm900, %v1061, 0
      %1086 = vmatprep.subr.bf16.mxu0 0
      %1087 = vmatpush1.bf16.msra.mxu0 %v822
      %1088 = vmatprep.subr.bf16.mxu0 0
      %1089 = vmatpush1.bf16.msra.mxu0 0
      %1090 = vmatprep.subr.bf16.mxu0 0
      %1091 = vmatpush1.bf16.msra.mxu0 0
      %1092 = vmatprep.subr.bf16.mxu0 0
      %1093 = vmatpush1.bf16.msra.mxu0 0
      %1094 = vmatprep.subr.bf16.mxu0 0
      %1095 = vmatpush1.bf16.msra.mxu0 0
      %1096 = vmatprep.subr.bf16.mxu0 0
      %1097 = vmatpush1.bf16.msra.mxu0 0
      %1098 = vmatprep.subr.bf16.mxu0 0
      %1099 = vmatpush1.bf16.msra.mxu0 0
      %1100 = vmatprep.subr.bf16.mxu0 0
      %1101 = vmatpush1.bf16.msra.mxu0 0
      %1102 = vmatprep.subr.bf16.mxu0 0
      %1103 = vmatpush1.bf16.msra.mxu0 0
      %1104 = vmatprep.subr.bf16.mxu0 0
      %1105 = vmatpush1.bf16.msra.mxu0 0
      %1106 = vmatprep.subr.bf16.mxu0 0
      %1107 = vmatpush1.bf16.msra.mxu0 0
      %1108 = vmatprep.subr.bf16.mxu0 0
      %1109 = vmatpush1.bf16.msra.mxu0 0
      %1110 = vmatprep.subr.bf16.mxu0 0
      %1111 = vmatpush1.bf16.msra.mxu0 0
      %1112 = vmatprep.subr.bf16.mxu0 0
      %1113 = vmatpush1.bf16.msra.mxu0 0
      %1114 = vmatprep.subr.bf16.mxu0 0
      %1115 = vmatpush1.bf16.msra.mxu0 0
      %1116 = vmatprep.subr.bf16.mxu0 0
      %1117 = vmatpush1.bf16.msra.mxu0 0
      %1118 = vmatprep.mubr.bf16.mxu0 0
      %1119 = vmatmul.mubr.bf16.gmra.mrb[0].mxu0 %v1063
      %v1120 = vpop.f32.mrb[0].mxu0
      %v1121 = vadd.f32 %v960, %v1120
      %v1122 = vpop.f32.mrb[0].mxu0
      %v1123 = vpop.f32.mrb[0].mxu0
      %v1124 = vadd.f32 %v963, %v1123
      %v1125 = vpop.f32.mrb[0].mxu0
      %1126 = vmatprep.mubr.bf16.mxu0 0
      %1127 = vmatmul.mubr.bf16.gmra.mrb[0].mxu0 %v1066
      %v1128 = vpop.f32.mrb[0].mxu0
      %v1129 = vadd.f32 %v968, %v1128
      %v1130 = vpop.f32.mrb[0].mxu0
      %v1131 = vpop.f32.mrb[0].mxu0
      %v1132 = vadd.f32 %v971, %v1131
      %v1133 = vpop.f32.mrb[0].mxu0
      %1134 = vmatprep.mubr.bf16.mxu0 0
      %1135 = vmatmul.mubr.bf16.gmra.mrb[0].mxu0 %v1069
      %v1136 = vpop.f32.mrb[0].mxu0
      %v1137 = vadd.f32 %v976, %v1136
      %v1138 = vpop.f32.mrb[0].mxu0
      %v1139 = vpop.f32.mrb[0].mxu0
      %v1140 = vadd.f32 %v979, %v1139
      %v1141 = vpop.f32.mrb[0].mxu0
      %1142 = vmatprep.mubr.bf16.mxu0 0
      %1143 = vmatmul.mubr.bf16.gmra.mrb[0].mxu0 %v1072
      %v1144 = vpop.f32.mrb[0].mxu0
      %v1145 = vadd.f32 %v984, %v1144
      %v1146 = vpop.f32.mrb[0].mxu0
      %v1147 = vpop.f32.mrb[0].mxu0
      %v1148 = vadd.f32 %v987, %v1147
      %v1149 = vpop.f32.mrb[0].mxu0
      %1150 = vmatprep.mubr.bf16.mxu0 0
      %1151 = vmatmul.mubr.bf16.gmra.mrb[0].mxu0 %v1075
      %v1152 = vpop.f32.mrb[0].mxu0
      %v1153 = vadd.f32 %v992, %v1152
      %v1154 = vpop.f32.mrb[0].mxu0
      %v1155 = vpop.f32.mrb[0].mxu0
      %v1156 = vadd.f32 %v995, %v1155
      %v1157 = vpop.f32.mrb[0].mxu0
      %1158 = vmatprep.mubr.bf16.mxu0 0
      %1159 = vmatmul.mubr.bf16.gmra.mrb[0].mxu0 %v1078
      %v1160 = vpop.f32.mrb[0].mxu0
      %v1161 = vadd.f32 %v1000, %v1160
      %v1162 = vpop.f32.mrb[0].mxu0
      %v1163 = vpop.f32.mrb[0].mxu0
      %v1164 = vadd.f32 %v1003, %v1163
      %v1165 = vpop.f32.mrb[0].mxu0
      %1166 = vmatprep.mubr.bf16.mxu0 0
      %1167 = vmatmul.mubr.bf16.gmra.mrb[0].mxu0 %v1081
      %v1168 = vpop.f32.mrb[0].mxu0
      %v1169 = vadd.f32 %v1008, %v1168
      %v1170 = vpop.f32.mrb[0].mxu0
      %v1171 = vpop.f32.mrb[0].mxu0
      %v1172 = vadd.f32 %v1011, %v1171
      %v1173 = vpop.f32.mrb[0].mxu0
      %1174 = vmatprep.mubr.bf16.mxu0 0
      %1175 = vmatmul.mubr.bf16.gmra.mrb[0].mxu0 %v1084
      %v1176 = vpop.f32.mrb[0].mxu0
      %v1177 = vadd.f32 %v1016, %v1176
      %v1178 = vpop.f32.mrb[0].mxu0
      %v1179 = vpop.f32.mrb[0].mxu0
      %v1180 = vadd.f32 %v1019, %v1179
      %v1181 = vpop.f32.mrb[0].mxu0
      %1182 = vdwg.mxu0
      %s1183 = scalar_lea.vmem %s4, 128
      %v1184 = vld [vmem:[%s1183] sm:$0xf]
      %v1185 = vld [vmem:[%s1183 + $0x4] sm:$0xf]
      %v1186 = vld [vmem:[%s1183 + $0x8] sm:$0xf]
      %v1187 = vld [vmem:[%s1183 + $0xc] sm:$0xf]
      %v1188 = vld [vmem:[%s1183 + $0x10] sm:$0xf]
      %v1189 = vld [vmem:[%s1183 + $0x14] sm:$0xf]
      %v1190 = vld [vmem:[%s1183 + $0x18] sm:$0xf]
      %v1191 = vld [vmem:[%s1183 + $0x1c] sm:$0xf]
      %v1192 = vld [vmem:[%s1183 + $0x20] sm:$0xf]
      %v1193 = vld [vmem:[%s1183 + $0x24] sm:$0xf]
      %v1194 = vld [vmem:[%s1183 + $0x28] sm:$0xf]
      %v1195 = vld [vmem:[%s1183 + $0x2c] sm:$0xf]
      %v1196 = vld [vmem:[%s1183 + $0x30] sm:$0xf]
      %v1197 = vld [vmem:[%s1183 + $0x34] sm:$0xf]
      %v1198 = vld [vmem:[%s1183 + $0x38] sm:$0xf]
      %v1199 = vld [vmem:[%s1183 + $0x3c] sm:$0xf]
      %v1216 = vunpack.c.l.b16 %v1184
      %v1217 = vunpack.c.l.b16 %v1185
      %v1218 = vunpack.c.l.b16 %v1186
      %v1219 = vunpack.c.l.b16 %v1187
      %v1220 = vunpack.c.l.b16 %v1188
      %v1221 = vunpack.c.l.b16 %v1189
      %v1222 = vunpack.c.l.b16 %v1190
      %v1223 = vunpack.c.l.b16 %v1191
      %v1224 = vunpack.c.l.b16 %v1192
      %v1225 = vunpack.c.l.b16 %v1193
      %v1226 = vunpack.c.l.b16 %v1194
      %v1227 = vunpack.c.l.b16 %v1195
      %v1228 = vunpack.c.l.b16 %v1196
      %v1229 = vunpack.c.l.b16 %v1197
      %v1230 = vunpack.c.l.b16 %v1198
      %v1231 = vunpack.c.l.b16 %v1199
      %v1232 = vpack.c.b16 %v1217, %v1216
      %v1233 = vpack.c.b16 %v1219, %v1218
      %v1234 = vpack.c.b16 %v1221, %v1220
      %v1235 = vpack.c.b16 %v1223, %v1222
      %v1236 = vpack.c.b16 %v1225, %v1224
      %v1237 = vpack.c.b16 %v1227, %v1226
      %v1238 = vpack.c.b16 %v1229, %v1228
      %v1239 = vpack.c.b16 %v1231, %v1230
      %1240 = vrot.lane.b32.xlu0 %v822, 96
      %v1241 = vpop.permute.xlu0 %1240
      %v1244 = vsel %vm900, %v1232, 0
      %v1247 = vsel %vm900, %v1233, 0
      %v1250 = vsel %vm900, %v1234, 0
      %v1253 = vsel %vm900, %v1235, 0
      %v1256 = vsel %vm900, %v1236, 0
      %v1259 = vsel %vm900, %v1237, 0
      %v1262 = vsel %vm900, %v1238, 0
      %v1265 = vsel %vm900, %v1239, 0
      %1267 = vmatprep.subr.bf16.mxu0 0
      %1268 = vmatpush1.bf16.msra.mxu0 %v1241
      %1269 = vmatprep.subr.bf16.mxu0 0
      %1270 = vmatpush1.bf16.msra.mxu0 0
      %1271 = vmatprep.subr.bf16.mxu0 0
      %1272 = vmatpush1.bf16.msra.mxu0 0
      %1273 = vmatprep.subr.bf16.mxu0 0
      %1274 = vmatpush1.bf16.msra.mxu0 0
      %1275 = vmatprep.subr.bf16.mxu0 0
      %1276 = vmatpush1.bf16.msra.mxu0 0
      %1277 = vmatprep.subr.bf16.mxu0 0
      %1278 = vmatpush1.bf16.msra.mxu0 0
      %1279 = vmatprep.subr.bf16.mxu0 0
      %1280 = vmatpush1.bf16.msra.mxu0 0
      %1281 = vmatprep.subr.bf16.mxu0 0
      %1282 = vmatpush1.bf16.msra.mxu0 0
      %1283 = vmatprep.subr.bf16.mxu0 0
      %1284 = vmatpush1.bf16.msra.mxu0 0
      %1285 = vmatprep.subr.bf16.mxu0 0
      %1286 = vmatpush1.bf16.msra.mxu0 0
      %1287 = vmatprep.subr.bf16.mxu0 0
      %1288 = vmatpush1.bf16.msra.mxu0 0
      %1289 = vmatprep.subr.bf16.mxu0 0
      %1290 = vmatpush1.bf16.msra.mxu0 0
      %1291 = vmatprep.subr.bf16.mxu0 0
      %1292 = vmatpush1.bf16.msra.mxu0 0
      %1293 = vmatprep.subr.bf16.mxu0 0
      %1294 = vmatpush1.bf16.msra.mxu0 0
      %1295 = vmatprep.subr.bf16.mxu0 0
      %1296 = vmatpush1.bf16.msra.mxu0 0
      %1297 = vmatprep.subr.bf16.mxu0 0
      %1298 = vmatpush1.bf16.msra.mxu0 0
      %1299 = vmatprep.mubr.bf16.mxu0 0
      %1300 = vmatmul.mubr.bf16.gmra.mrb[0].mxu0 %v1244
      %v1301 = vpop.f32.mrb[0].mxu0
      %v1302 = vadd.f32 0.0, %v1301
      %v1303 = vpop.f32.mrb[0].mxu0
      %v1304 = vpop.f32.mrb[0].mxu0
      %v1305 = vadd.f32 0.0, %v1304
      %v1306 = vpop.f32.mrb[0].mxu0
      %1307 = vmatprep.mubr.bf16.mxu0 0
      %1308 = vmatmul.mubr.bf16.gmra.mrb[0].mxu0 %v1247
      %v1309 = vpop.f32.mrb[0].mxu0
      %v1310 = vadd.f32 0.0, %v1309
      %v1311 = vpop.f32.mrb[0].mxu0
      %v1312 = vpop.f32.mrb[0].mxu0
      %v1313 = vadd.f32 0.0, %v1312
      %v1314 = vpop.f32.mrb[0].mxu0
      %1315 = vmatprep.mubr.bf16.mxu0 0
      %1316 = vmatmul.mubr.bf16.gmra.mrb[0].mxu0 %v1250
      %v1317 = vpop.f32.mrb[0].mxu0
      %v1318 = vadd.f32 0.0, %v1317
      %v1319 = vpop.f32.mrb[0].mxu0
      %v1320 = vpop.f32.mrb[0].mxu0
      %v1321 = vadd.f32 0.0, %v1320
      %v1322 = vpop.f32.mrb[0].mxu0
      %1323 = vmatprep.mubr.bf16.mxu0 0
      %1324 = vmatmul.mubr.bf16.gmra.mrb[0].mxu0 %v1253
      %v1325 = vpop.f32.mrb[0].mxu0
      %v1326 = vadd.f32 0.0, %v1325
      %v1327 = vpop.f32.mrb[0].mxu0
      %v1328 = vpop.f32.mrb[0].mxu0
      %v1329 = vadd.f32 0.0, %v1328
      %v1330 = vpop.f32.mrb[0].mxu0
      %1331 = vmatprep.mubr.bf16.mxu0 0
      %1332 = vmatmul.mubr.bf16.gmra.mrb[0].mxu0 %v1256
      %v1333 = vpop.f32.mrb[0].mxu0
      %v1334 = vadd.f32 0.0, %v1333
      %v1335 = vpop.f32.mrb[0].mxu0
      %v1336 = vpop.f32.mrb[0].mxu0
      %v1337 = vadd.f32 0.0, %v1336
      %v1338 = vpop.f32.mrb[0].mxu0
      %1339 = vmatprep.mubr.bf16.mxu0 0
      %1340 = vmatmul.mubr.bf16.gmra.mrb[0].mxu0 %v1259
      %v1341 = vpop.f32.mrb[0].mxu0
      %v1342 = vadd.f32 0.0, %v1341
      %v1343 = vpop.f32.mrb[0].mxu0
      %v1344 = vpop.f32.mrb[0].mxu0
      %v1345 = vadd.f32 0.0, %v1344
      %v1346 = vpop.f32.mrb[0].mxu0
      %1347 = vmatprep.mubr.bf16.mxu0 0
      %1348 = vmatmul.mubr.bf16.gmra.mrb[0].mxu0 %v1262
      %v1349 = vpop.f32.mrb[0].mxu0
      %v1350 = vadd.f32 0.0, %v1349
      %v1351 = vpop.f32.mrb[0].mxu0
      %v1352 = vpop.f32.mrb[0].mxu0
      %v1353 = vadd.f32 0.0, %v1352
      %v1354 = vpop.f32.mrb[0].mxu0
      %1355 = vmatprep.mubr.bf16.mxu0 0
      %1356 = vmatmul.mubr.bf16.gmra.mrb[0].mxu0 %v1265
      %v1357 = vpop.f32.mrb[0].mxu0
      %v1358 = vadd.f32 0.0, %v1357
      %v1359 = vpop.f32.mrb[0].mxu0
      %v1360 = vpop.f32.mrb[0].mxu0
      %v1361 = vadd.f32 0.0, %v1360
      %v1362 = vpop.f32.mrb[0].mxu0
      %1363 = vdwg.mxu0
      %v1364 = vadd.f32 %v1121, %v1302
      %v1365 = vadd.f32 %v1124, %v1305
      %v1366 = vadd.f32 %v1129, %v1310
      %v1367 = vadd.f32 %v1132, %v1313
      %v1368 = vadd.f32 %v1137, %v1318
      %v1369 = vadd.f32 %v1140, %v1321
      %v1370 = vadd.f32 %v1145, %v1326
      %v1371 = vadd.f32 %v1148, %v1329
      %v1372 = vadd.f32 %v1153, %v1334
      %v1373 = vadd.f32 %v1156, %v1337
      %v1374 = vadd.f32 %v1161, %v1342
      %v1375 = vadd.f32 %v1164, %v1345
      %v1376 = vadd.f32 %v1169, %v1350
      %v1377 = vadd.f32 %v1172, %v1353
      %v1378 = vadd.f32 %v1177, %v1358
      %v1379 = vadd.f32 %v1180, %v1361
      %s1380 = scalar_lea.vmem %s4, 192
      %v1381 = vld [vmem:[%s1380] sm:$0xf]
      %v1382 = vld [vmem:[%s1380 + $0x4] sm:$0xf]
      %v1383 = vld [vmem:[%s1380 + $0x8] sm:$0xf]
      %v1384 = vld [vmem:[%s1380 + $0xc] sm:$0xf]
      %v1385 = vld [vmem:[%s1380 + $0x10] sm:$0xf]
      %v1386 = vld [vmem:[%s1380 + $0x14] sm:$0xf]
      %v1387 = vld [vmem:[%s1380 + $0x18] sm:$0xf]
      %v1388 = vld [vmem:[%s1380 + $0x1c] sm:$0xf]
      %v1389 = vld [vmem:[%s1380 + $0x20] sm:$0xf]
      %v1390 = vld [vmem:[%s1380 + $0x24] sm:$0xf]
      %v1391 = vld [vmem:[%s1380 + $0x28] sm:$0xf]
      %v1392 = vld [vmem:[%s1380 + $0x2c] sm:$0xf]
      %v1393 = vld [vmem:[%s1380 + $0x30] sm:$0xf]
      %v1394 = vld [vmem:[%s1380 + $0x34] sm:$0xf]
      %v1395 = vld [vmem:[%s1380 + $0x38] sm:$0xf]
      %v1396 = vld [vmem:[%s1380 + $0x3c] sm:$0xf]
      %v1413 = vunpack.c.l.b16 %v1381
      %v1414 = vunpack.c.l.b16 %v1382
      %v1415 = vunpack.c.l.b16 %v1383
      %v1416 = vunpack.c.l.b16 %v1384
      %v1417 = vunpack.c.l.b16 %v1385
      %v1418 = vunpack.c.l.b16 %v1386
      %v1419 = vunpack.c.l.b16 %v1387
      %v1420 = vunpack.c.l.b16 %v1388
      %v1421 = vunpack.c.l.b16 %v1389
      %v1422 = vunpack.c.l.b16 %v1390
      %v1423 = vunpack.c.l.b16 %v1391
      %v1424 = vunpack.c.l.b16 %v1392
      %v1425 = vunpack.c.l.b16 %v1393
      %v1426 = vunpack.c.l.b16 %v1394
      %v1427 = vunpack.c.l.b16 %v1395
      %v1428 = vunpack.c.l.b16 %v1396
      %v1429 = vpack.c.b16 %v1414, %v1413
      %v1430 = vpack.c.b16 %v1416, %v1415
      %v1431 = vpack.c.b16 %v1418, %v1417
      %v1432 = vpack.c.b16 %v1420, %v1419
      %v1433 = vpack.c.b16 %v1422, %v1421
      %v1434 = vpack.c.b16 %v1424, %v1423
      %v1435 = vpack.c.b16 %v1426, %v1425
      %v1436 = vpack.c.b16 %v1428, %v1427
      %1437 = vrot.lane.b32.xlu0 %v822, 80
      %v1438 = vpop.permute.xlu0 %1437
      %v1441 = vsel %vm900, %v1429, 0
      %v1444 = vsel %vm900, %v1430, 0
      %v1447 = vsel %vm900, %v1431, 0
      %v1450 = vsel %vm900, %v1432, 0
      %v1453 = vsel %vm900, %v1433, 0
      %v1456 = vsel %vm900, %v1434, 0
      %v1459 = vsel %vm900, %v1435, 0
      %v1462 = vsel %vm900, %v1436, 0
      %1464 = vmatprep.subr.bf16.mxu0 0
      %1465 = vmatpush1.bf16.msra.mxu0 %v1438
      %1466 = vmatprep.subr.bf16.mxu0 0
      %1467 = vmatpush1.bf16.msra.mxu0 0
      %1468 = vmatprep.subr.bf16.mxu0 0
      %1469 = vmatpush1.bf16.msra.mxu0 0
      %1470 = vmatprep.subr.bf16.mxu0 0
      %1471 = vmatpush1.bf16.msra.mxu0 0
      %1472 = vmatprep.subr.bf16.mxu0 0
      %1473 = vmatpush1.bf16.msra.mxu0 0
      %1474 = vmatprep.subr.bf16.mxu0 0
      %1475 = vmatpush1.bf16.msra.mxu0 0
      %1476 = vmatprep.subr.bf16.mxu0 0
      %1477 = vmatpush1.bf16.msra.mxu0 0
      %1478 = vmatprep.subr.bf16.mxu0 0
      %1479 = vmatpush1.bf16.msra.mxu0 0
      %1480 = vmatprep.subr.bf16.mxu0 0
      %1481 = vmatpush1.bf16.msra.mxu0 0
      %1482 = vmatprep.subr.bf16.mxu0 0
      %1483 = vmatpush1.bf16.msra.mxu0 0
      %1484 = vmatprep.subr.bf16.mxu0 0
      %1485 = vmatpush1.bf16.msra.mxu0 0
      %1486 = vmatprep.subr.bf16.mxu0 0
      %1487 = vmatpush1.bf16.msra.mxu0 0
      %1488 = vmatprep.subr.bf16.mxu0 0
      %1489 = vmatpush1.bf16.msra.mxu0 0
      %1490 = vmatprep.subr.bf16.mxu0 0
      %1491 = vmatpush1.bf16.msra.mxu0 0
      %1492 = vmatprep.subr.bf16.mxu0 0
      %1493 = vmatpush1.bf16.msra.mxu0 0
      %1494 = vmatprep.subr.bf16.mxu0 0
      %1495 = vmatpush1.bf16.msra.mxu0 0
      %1496 = vmatprep.mubr.bf16.mxu0 0
      %1497 = vmatmul.mubr.bf16.gmra.mrb[0].mxu0 %v1441
      %v1498 = vpop.f32.mrb[0].mxu0
      %v1499 = vadd.f32 0.0, %v1498
      %v1500 = vpop.f32.mrb[0].mxu0
      %v1501 = vpop.f32.mrb[0].mxu0
      %v1502 = vadd.f32 0.0, %v1501
      %v1503 = vpop.f32.mrb[0].mxu0
      %1504 = vmatprep.mubr.bf16.mxu0 0
      %1505 = vmatmul.mubr.bf16.gmra.mrb[0].mxu0 %v1444
      %v1506 = vpop.f32.mrb[0].mxu0
      %v1507 = vadd.f32 0.0, %v1506
      %v1508 = vpop.f32.mrb[0].mxu0
      %v1509 = vpop.f32.mrb[0].mxu0
      %v1510 = vadd.f32 0.0, %v1509
      %v1511 = vpop.f32.mrb[0].mxu0
      %1512 = vmatprep.mubr.bf16.mxu0 0
      %1513 = vmatmul.mubr.bf16.gmra.mrb[0].mxu0 %v1447
      %v1514 = vpop.f32.mrb[0].mxu0
      %v1515 = vadd.f32 0.0, %v1514
      %v1516 = vpop.f32.mrb[0].mxu0
      %v1517 = vpop.f32.mrb[0].mxu0
      %v1518 = vadd.f32 0.0, %v1517
      %v1519 = vpop.f32.mrb[0].mxu0
      %1520 = vmatprep.mubr.bf16.mxu0 0
      %1521 = vmatmul.mubr.bf16.gmra.mrb[0].mxu0 %v1450
      %v1522 = vpop.f32.mrb[0].mxu0
      %v1523 = vadd.f32 0.0, %v1522
      %v1524 = vpop.f32.mrb[0].mxu0
      %v1525 = vpop.f32.mrb[0].mxu0
      %v1526 = vadd.f32 0.0, %v1525
      %v1527 = vpop.f32.mrb[0].mxu0
      %1528 = vmatprep.mubr.bf16.mxu0 0
      %1529 = vmatmul.mubr.bf16.gmra.mrb[0].mxu0 %v1453
      %v1530 = vpop.f32.mrb[0].mxu0
      %v1531 = vadd.f32 0.0, %v1530
      %v1532 = vpop.f32.mrb[0].mxu0
      %v1533 = vpop.f32.mrb[0].mxu0
      %v1534 = vadd.f32 0.0, %v1533
      %v1535 = vpop.f32.mrb[0].mxu0
      %1536 = vmatprep.mubr.bf16.mxu0 0
      %1537 = vmatmul.mubr.bf16.gmra.mrb[0].mxu0 %v1456
      %v1538 = vpop.f32.mrb[0].mxu0
      %v1539 = vadd.f32 0.0, %v1538
      %v1540 = vpop.f32.mrb[0].mxu0
      %v1541 = vpop.f32.mrb[0].mxu0
      %v1542 = vadd.f32 0.0, %v1541
      %v1543 = vpop.f32.mrb[0].mxu0
      %1544 = vmatprep.mubr.bf16.mxu0 0
      %1545 = vmatmul.mubr.bf16.gmra.mrb[0].mxu0 %v1459
      %v1546 = vpop.f32.mrb[0].mxu0
      %v1547 = vadd.f32 0.0, %v1546
      %v1548 = vpop.f32.mrb[0].mxu0
      %v1549 = vpop.f32.mrb[0].mxu0
      %v1550 = vadd.f32 0.0, %v1549
      %v1551 = vpop.f32.mrb[0].mxu0
      %1552 = vmatprep.mubr.bf16.mxu0 0
      %1553 = vmatmul.mubr.bf16.gmra.mrb[0].mxu0 %v1462
      %v1554 = vpop.f32.mrb[0].mxu0
      %v1555 = vadd.f32 0.0, %v1554
      %v1556 = vpop.f32.mrb[0].mxu0
      %v1557 = vpop.f32.mrb[0].mxu0
      %v1558 = vadd.f32 0.0, %v1557
      %v1559 = vpop.f32.mrb[0].mxu0
      %1560 = vdwg.mxu0
      %v1561 = vadd.f32 %v1364, %v1499
      %v1562 = vadd.f32 %v1365, %v1502
      %v1563 = vadd.f32 %v1366, %v1507
      %v1564 = vadd.f32 %v1367, %v1510
      %v1565 = vadd.f32 %v1368, %v1515
      %v1566 = vadd.f32 %v1369, %v1518
      %v1567 = vadd.f32 %v1370, %v1523
      %v1568 = vadd.f32 %v1371, %v1526
      %v1569 = vadd.f32 %v1372, %v1531
      %v1570 = vadd.f32 %v1373, %v1534
      %v1571 = vadd.f32 %v1374, %v1539
      %v1572 = vadd.f32 %v1375, %v1542
      %v1573 = vadd.f32 %v1376, %v1547
      %v1574 = vadd.f32 %v1377, %v1550
      %v1575 = vadd.f32 %v1378, %v1555
      %v1576 = vadd.f32 %v1379, %v1558
      %v1577 = vpack.c.bf16 %v1562, %v1561
      %v1578 = vpack.c.bf16 %v1564, %v1563
      %v1579 = vpack.c.bf16 %v1566, %v1565
      %v1580 = vpack.c.bf16 %v1568, %v1567
      %v1581 = vpack.c.bf16 %v1570, %v1569
      %v1582 = vpack.c.bf16 %v1572, %v1571
      %v1583 = vpack.c.bf16 %v1574, %v1573
      %v1584 = vpack.c.bf16 %v1576, %v1575
      %v1585 = vld [vmem:[%s6] sm:$0xf]
      %v1586 = vld [vmem:[%s6 + $0x4] sm:$0xf]
      %s1587 = scalar_lea.vmem %s6, 8
      %v1588 = vld [vmem:[%s1587] sm:$0xf]
      %v1589 = vld [vmem:[%s1587 + $0x4] sm:$0xf]
      %v1592 = vunpack.c.l.b16 %v1588
      %v1593 = vunpack.c.l.b16 %v1589
      %v1594 = vpack.c.b16 %v1593, %v1592
      %v1597 = vsel %vm900, %v1579, 0
      %v1600 = vsel %vm900, %v1580, 0
      %1602 = vmatprep.subr.bf16.mxu0 0
      %1603 = vmatpush1.bf16.msra.mxu0 %v1594
      %1604 = vmatprep.subr.bf16.mxu0 0
      %1605 = vmatpush1.bf16.msra.mxu0 0
      %1606 = vmatprep.subr.bf16.mxu0 0
      %1607 = vmatpush1.bf16.msra.mxu0 0
      %1608 = vmatprep.subr.bf16.mxu0 0
      %1609 = vmatpush1.bf16.msra.mxu0 0
      %1610 = vmatprep.subr.bf16.mxu0 0
      %1611 = vmatpush1.bf16.msra.mxu0 0
      %1612 = vmatprep.subr.bf16.mxu0 0
      %1613 = vmatpush1.bf16.msra.mxu0 0
      %1614 = vmatprep.subr.bf16.mxu0 0
      %1615 = vmatpush1.bf16.msra.mxu0 0
      %1616 = vmatprep.subr.bf16.mxu0 0
      %1617 = vmatpush1.bf16.msra.mxu0 0
      %1618 = vmatprep.subr.bf16.mxu0 0
      %1619 = vmatpush1.bf16.msra.mxu0 0
      %1620 = vmatprep.subr.bf16.mxu0 0
      %1621 = vmatpush1.bf16.msra.mxu0 0
      %1622 = vmatprep.subr.bf16.mxu0 0
      %1623 = vmatpush1.bf16.msra.mxu0 0
      %1624 = vmatprep.subr.bf16.mxu0 0
      %1625 = vmatpush1.bf16.msra.mxu0 0
      %1626 = vmatprep.subr.bf16.mxu0 0
      %1627 = vmatpush1.bf16.msra.mxu0 0
      %1628 = vmatprep.subr.bf16.mxu0 0
      %1629 = vmatpush1.bf16.msra.mxu0 0
      %1630 = vmatprep.subr.bf16.mxu0 0
      %1631 = vmatpush1.bf16.msra.mxu0 0
      %1632 = vmatprep.subr.bf16.mxu0 0
      %1633 = vmatpush1.bf16.msra.mxu0 0
      %1634 = vmatprep.mubr.bf16.mxu0 0
      %1635 = vmatmul.mubr.bf16.gmra.mrb[0].mxu0 %v1597
      %v1636 = vpop.f32.mrb[0].mxu0
      %v1637 = vadd.f32 0.0, %v1636
      %v1638 = vpop.f32.mrb[0].mxu0
      %v1639 = vpop.f32.mrb[0].mxu0
      %v1640 = vadd.f32 0.0, %v1639
      %v1641 = vpop.f32.mrb[0].mxu0
      %1642 = vmatprep.mubr.bf16.mxu0 0
      %1643 = vmatmul.mubr.bf16.gmra.mrb[0].mxu0 %v1600
      %v1644 = vpop.f32.mrb[0].mxu0
      %v1645 = vadd.f32 0.0, %v1644
      %v1646 = vpop.f32.mrb[0].mxu0
      %v1647 = vpop.f32.mrb[0].mxu0
      %v1648 = vadd.f32 0.0, %v1647
      %v1649 = vpop.f32.mrb[0].mxu0
      %1650 = vdwg.mxu0
      %v1653 = vunpack.c.l.b16 %v1585
      %v1654 = vunpack.c.l.b16 %v1586
      %v1655 = vpack.c.b16 %v1654, %v1653
      %v1658 = vsel %vm900, %v1577, 0
      %v1661 = vsel %vm900, %v1578, 0
      %1663 = vmatprep.subr.bf16.mxu0 0
      %1664 = vmatpush1.bf16.msra.mxu0 %v1655
      %1665 = vmatprep.subr.bf16.mxu0 0
      %1666 = vmatpush1.bf16.msra.mxu0 0
      %1667 = vmatprep.subr.bf16.mxu0 0
      %1668 = vmatpush1.bf16.msra.mxu0 0
      %1669 = vmatprep.subr.bf16.mxu0 0
      %1670 = vmatpush1.bf16.msra.mxu0 0
      %1671 = vmatprep.subr.bf16.mxu0 0
      %1672 = vmatpush1.bf16.msra.mxu0 0
      %1673 = vmatprep.subr.bf16.mxu0 0
      %1674 = vmatpush1.bf16.msra.mxu0 0
      %1675 = vmatprep.subr.bf16.mxu0 0
      %1676 = vmatpush1.bf16.msra.mxu0 0
      %1677 = vmatprep.subr.bf16.mxu0 0
      %1678 = vmatpush1.bf16.msra.mxu0 0
      %1679 = vmatprep.subr.bf16.mxu0 0
      %1680 = vmatpush1.bf16.msra.mxu0 0
      %1681 = vmatprep.subr.bf16.mxu0 0
      %1682 = vmatpush1.bf16.msra.mxu0 0
      %1683 = vmatprep.subr.bf16.mxu0 0
      %1684 = vmatpush1.bf16.msra.mxu0 0
      %1685 = vmatprep.subr.bf16.mxu0 0
      %1686 = vmatpush1.bf16.msra.mxu0 0
      %1687 = vmatprep.subr.bf16.mxu0 0
      %1688 = vmatpush1.bf16.msra.mxu0 0
      %1689 = vmatprep.subr.bf16.mxu0 0
      %1690 = vmatpush1.bf16.msra.mxu0 0
      %1691 = vmatprep.subr.bf16.mxu0 0
      %1692 = vmatpush1.bf16.msra.mxu0 0
      %1693 = vmatprep.subr.bf16.mxu0 0
      %1694 = vmatpush1.bf16.msra.mxu0 0
      %1695 = vmatprep.mubr.bf16.mxu0 0
      %1696 = vmatmul.mubr.bf16.gmra.mrb[0].mxu0 %v1658
      %v1697 = vpop.f32.mrb[0].mxu0
      %v1698 = vadd.f32 %v1637, %v1697
      %v1699 = vpop.f32.mrb[0].mxu0
      %v1700 = vpop.f32.mrb[0].mxu0
      %v1701 = vadd.f32 %v1640, %v1700
      %v1702 = vpop.f32.mrb[0].mxu0
      %1703 = vmatprep.mubr.bf16.mxu0 0
      %1704 = vmatmul.mubr.bf16.gmra.mrb[0].mxu0 %v1661
      %v1705 = vpop.f32.mrb[0].mxu0
      %v1706 = vadd.f32 %v1645, %v1705
      %v1707 = vpop.f32.mrb[0].mxu0
      %v1708 = vpop.f32.mrb[0].mxu0
      %v1709 = vadd.f32 %v1648, %v1708
      %v1710 = vpop.f32.mrb[0].mxu0
      %1711 = vdwg.mxu0
      %s1712 = scalar_lea.vmem %s6, 16
      %v1713 = vld [vmem:[%s1712] sm:$0xf]
      %v1714 = vld [vmem:[%s1712 + $0x4] sm:$0xf]
      %v1717 = vunpack.c.l.b16 %v1713
      %v1718 = vunpack.c.l.b16 %v1714
      %v1719 = vpack.c.b16 %v1718, %v1717
      %v1722 = vsel %vm900, %v1581, 0
      %v1725 = vsel %vm900, %v1582, 0
      %1727 = vmatprep.subr.bf16.mxu0 0
      %1728 = vmatpush1.bf16.msra.mxu0 %v1719
      %1729 = vmatprep.subr.bf16.mxu0 0
      %1730 = vmatpush1.bf16.msra.mxu0 0
      %1731 = vmatprep.subr.bf16.mxu0 0
      %1732 = vmatpush1.bf16.msra.mxu0 0
      %1733 = vmatprep.subr.bf16.mxu0 0
      %1734 = vmatpush1.bf16.msra.mxu0 0
      %1735 = vmatprep.subr.bf16.mxu0 0
      %1736 = vmatpush1.bf16.msra.mxu0 0
      %1737 = vmatprep.subr.bf16.mxu0 0
      %1738 = vmatpush1.bf16.msra.mxu0 0
      %1739 = vmatprep.subr.bf16.mxu0 0
      %1740 = vmatpush1.bf16.msra.mxu0 0
      %1741 = vmatprep.subr.bf16.mxu0 0
      %1742 = vmatpush1.bf16.msra.mxu0 0
      %1743 = vmatprep.subr.bf16.mxu0 0
      %1744 = vmatpush1.bf16.msra.mxu0 0
      %1745 = vmatprep.subr.bf16.mxu0 0
      %1746 = vmatpush1.bf16.msra.mxu0 0
      %1747 = vmatprep.subr.bf16.mxu0 0
      %1748 = vmatpush1.bf16.msra.mxu0 0
      %1749 = vmatprep.subr.bf16.mxu0 0
      %1750 = vmatpush1.bf16.msra.mxu0 0
      %1751 = vmatprep.subr.bf16.mxu0 0
      %1752 = vmatpush1.bf16.msra.mxu0 0
      %1753 = vmatprep.subr.bf16.mxu0 0
      %1754 = vmatpush1.bf16.msra.mxu0 0
      %1755 = vmatprep.subr.bf16.mxu0 0
      %1756 = vmatpush1.bf16.msra.mxu0 0
      %1757 = vmatprep.subr.bf16.mxu0 0
      %1758 = vmatpush1.bf16.msra.mxu0 0
      %1759 = vmatprep.mubr.bf16.mxu0 0
      %1760 = vmatmul.mubr.bf16.gmra.mrb[0].mxu0 %v1722
      %v1761 = vpop.f32.mrb[0].mxu0
      %v1762 = vadd.f32 0.0, %v1761
      %v1763 = vpop.f32.mrb[0].mxu0
      %v1764 = vpop.f32.mrb[0].mxu0
      %v1765 = vadd.f32 0.0, %v1764
      %v1766 = vpop.f32.mrb[0].mxu0
      %1767 = vmatprep.mubr.bf16.mxu0 0
      %1768 = vmatmul.mubr.bf16.gmra.mrb[0].mxu0 %v1725
      %v1769 = vpop.f32.mrb[0].mxu0
      %v1770 = vadd.f32 0.0, %v1769
      %v1771 = vpop.f32.mrb[0].mxu0
      %v1772 = vpop.f32.mrb[0].mxu0
      %v1773 = vadd.f32 0.0, %v1772
      %v1774 = vpop.f32.mrb[0].mxu0
      %1775 = vdwg.mxu0
      %v1776 = vadd.f32 %v1698, %v1762
      %v1777 = vadd.f32 %v1701, %v1765
      %v1778 = vadd.f32 %v1706, %v1770
      %v1779 = vadd.f32 %v1709, %v1773
      %s1780 = scalar_lea.vmem %s6, 24
      %v1781 = vld [vmem:[%s1780] sm:$0xf]
      %v1782 = vld [vmem:[%s1780 + $0x4] sm:$0xf]
      %v1785 = vunpack.c.l.b16 %v1781
      %v1786 = vunpack.c.l.b16 %v1782
      %v1787 = vpack.c.b16 %v1786, %v1785
      %v1790 = vsel %vm900, %v1583, 0
      %v1793 = vsel %vm900, %v1584, 0
      %1795 = vmatprep.subr.bf16.mxu0 0
      %1796 = vmatpush1.bf16.msra.mxu0 %v1787
      %1797 = vmatprep.subr.bf16.mxu0 0
      %1798 = vmatpush1.bf16.msra.mxu0 0
      %1799 = vmatprep.subr.bf16.mxu0 0
      %1800 = vmatpush1.bf16.msra.mxu0 0
      %1801 = vmatprep.subr.bf16.mxu0 0
      %1802 = vmatpush1.bf16.msra.mxu0 0
      %1803 = vmatprep.subr.bf16.mxu0 0
      %1804 = vmatpush1.bf16.msra.mxu0 0
      %1805 = vmatprep.subr.bf16.mxu0 0
      %1806 = vmatpush1.bf16.msra.mxu0 0
      %1807 = vmatprep.subr.bf16.mxu0 0
      %1808 = vmatpush1.bf16.msra.mxu0 0
      %1809 = vmatprep.subr.bf16.mxu0 0
      %1810 = vmatpush1.bf16.msra.mxu0 0
      %1811 = vmatprep.subr.bf16.mxu0 0
      %1812 = vmatpush1.bf16.msra.mxu0 0
      %1813 = vmatprep.subr.bf16.mxu0 0
      %1814 = vmatpush1.bf16.msra.mxu0 0
      %1815 = vmatprep.subr.bf16.mxu0 0
      %1816 = vmatpush1.bf16.msra.mxu0 0
      %1817 = vmatprep.subr.bf16.mxu0 0
      %1818 = vmatpush1.bf16.msra.mxu0 0
      %1819 = vmatprep.subr.bf16.mxu0 0
      %1820 = vmatpush1.bf16.msra.mxu0 0
      %1821 = vmatprep.subr.bf16.mxu0 0
      %1822 = vmatpush1.bf16.msra.mxu0 0
      %1823 = vmatprep.subr.bf16.mxu0 0
      %1824 = vmatpush1.bf16.msra.mxu0 0
      %1825 = vmatprep.subr.bf16.mxu0 0
      %1826 = vmatpush1.bf16.msra.mxu0 0
      %1827 = vmatprep.mubr.bf16.mxu0 0
      %1828 = vmatmul.mubr.bf16.gmra.mrb[0].mxu0 %v1790
      %v1829 = vpop.f32.mrb[0].mxu0
      %v1830 = vadd.f32 0.0, %v1829
      %v1831 = vpop.f32.mrb[0].mxu0
      %v1832 = vpop.f32.mrb[0].mxu0
      %v1833 = vadd.f32 0.0, %v1832
      %v1834 = vpop.f32.mrb[0].mxu0
      %1835 = vmatprep.mubr.bf16.mxu0 0
      %1836 = vmatmul.mubr.bf16.gmra.mrb[0].mxu0 %v1793
      %v1837 = vpop.f32.mrb[0].mxu0
      %v1838 = vadd.f32 0.0, %v1837
      %v1839 = vpop.f32.mrb[0].mxu0
      %v1840 = vpop.f32.mrb[0].mxu0
      %v1841 = vadd.f32 0.0, %v1840
      %v1842 = vpop.f32.mrb[0].mxu0
      %1843 = vdwg.mxu0
      %v1844 = vadd.f32 %v1776, %v1830
      %v1845 = vadd.f32 %v1777, %v1833
      %v1846 = vadd.f32 %v1778, %v1838
      %v1847 = vadd.f32 %v1779, %v1841
      %1849 = vset.pattern.permute.xlu0 0
      %1850 = vperm.xlu0 %1849, %v295
      %v1851 = vpop.permute.xlu0 %1850
      %1854 = vset.pattern.permute.xlu0 0
      %1855 = vperm.xlu0 %1854, %v296
      %v1856 = vpop.permute.xlu0 %1855
      %1859 = vset.pattern.permute.xlu0 0
      %1860 = vperm.xlu0 %1859, %v297
      %v1861 = vpop.permute.xlu0 %1860
      %1864 = vset.pattern.permute.xlu0 0
      %1865 = vperm.xlu0 %1864, %v298
      %v1866 = vpop.permute.xlu0 %1865
      %v1868 = vadd.f32 %v1844, %v1851
      %v1869 = vadd.f32 %v1845, %v1856
      %v1870 = vadd.f32 %v1846, %v1861
      %v1871 = vadd.f32 %v1847, %v1866
      %v1872 = vmax.f32 %v1868, 0.0
      %v1873 = vmax.f32 %v1869, 0.0
      %v1874 = vmax.f32 %v1870, 0.0
      %v1875 = vmax.f32 %v1871, 0.0
      %vm1876 = vcmask 72704
      %1877 = vst.msk [vmem:[%s283] sm:$0xff] %vm1876, %v1872
      %1878 = vst.msk [vmem:[%s283 + $0x8] sm:$0xff] %vm1876, %v1873
      %1879 = vst.msk [vmem:[%s283 + $0x10] sm:$0xff] %vm1876, %v1874
      %1880 = vst.msk [vmem:[%s283 + $0x18] sm:$0xff] %vm1876, %v1875
      %s1881 = scalar_lea.vmem %s277, 32
      %v1882 = vld [vmem:[%s1881] sm:$0xf]
      %v1883 = vld [vmem:[%s1881 + $0x4] sm:$0xf]
      %v1884 = vld [vmem:[%s1881 + $0x8] sm:$0xf]
      %v1885 = vld [vmem:[%s1881 + $0xc] sm:$0xf]
      %v1886 = vld [vmem:[%s1881 + $0x10] sm:$0xf]
      %v1887 = vld [vmem:[%s1881 + $0x14] sm:$0xf]
      %v1888 = vld [vmem:[%s1881 + $0x18] sm:$0xf]
      %v1889 = vld [vmem:[%s1881 + $0x1c] sm:$0xf]
      %v1898 = vunpack.c.l.b16 %v1882
      %v1899 = vunpack.c.l.b16 %v1883
      %v1900 = vunpack.c.l.b16 %v1884
      %v1901 = vunpack.c.l.b16 %v1885
      %v1902 = vunpack.c.l.b16 %v1886
      %v1903 = vunpack.c.l.b16 %v1887
      %v1904 = vunpack.c.l.b16 %v1888
      %v1905 = vunpack.c.l.b16 %v1889
      %v1906 = vpack.c.b16 %v1899, %v1898
      %v1907 = vpack.c.b16 %v1901, %v1900
      %v1908 = vpack.c.b16 %v1903, %v1902
      %v1909 = vpack.c.b16 %v1905, %v1904
      %1914 = vmatprep.subr.bf16.mxu0 0
      %1915 = vmatpush1.bf16.msra.mxu0 %v1906
      %1916 = vmatprep.subr.bf16.mxu0 0
      %1917 = vmatpush1.bf16.msra.mxu0 %v1907
      %1918 = vmatprep.subr.bf16.mxu0 0
      %1919 = vmatpush1.bf16.msra.mxu0 %v1908
      %1920 = vmatprep.subr.bf16.mxu0 0
      %1921 = vmatpush1.bf16.msra.mxu0 %v1909
      %1922 = vmatprep.subr.bf16.mxu0 0
      %1923 = vmatpush1.bf16.msra.mxu0 0
      %1924 = vmatprep.subr.bf16.mxu0 0
      %1925 = vmatpush1.bf16.msra.mxu0 0
      %1926 = vmatprep.subr.bf16.mxu0 0
      %1927 = vmatpush1.bf16.msra.mxu0 0
      %1928 = vmatprep.subr.bf16.mxu0 0
      %1929 = vmatpush1.bf16.msra.mxu0 0
      %1930 = vmatprep.subr.bf16.mxu0 0
      %1931 = vmatpush1.bf16.msra.mxu0 0
      %1932 = vmatprep.subr.bf16.mxu0 0
      %1933 = vmatpush1.bf16.msra.mxu0 0
      %1934 = vmatprep.subr.bf16.mxu0 0
      %1935 = vmatpush1.bf16.msra.mxu0 0
      %1936 = vmatprep.subr.bf16.mxu0 0
      %1937 = vmatpush1.bf16.msra.mxu0 0
      %1938 = vmatprep.subr.bf16.mxu0 0
      %1939 = vmatpush1.bf16.msra.mxu0 0
      %1940 = vmatprep.subr.bf16.mxu0 0
      %1941 = vmatpush1.bf16.msra.mxu0 0
      %1942 = vmatprep.subr.bf16.mxu0 0
      %1943 = vmatpush1.bf16.msra.mxu0 0
      %1944 = vmatprep.subr.bf16.mxu0 0
      %1945 = vmatpush1.bf16.msra.mxu0 0
      %1946 = vmatprep.mubr.bf16.mxu0 0
      %1947 = vmatmul.mubr.bf16.gmra.mrb[0].mxu0 %v353
      %v1948 = vpop.f32.mrb[0].mxu0
      %v1949 = vadd.f32 0.0, %v1948
      %v1950 = vpop.f32.mrb[0].mxu0
      %v1951 = vpop.f32.mrb[0].mxu0
      %v1952 = vadd.f32 0.0, %v1951
      %v1953 = vpop.f32.mrb[0].mxu0
      %1954 = vmatprep.mubr.bf16.mxu0 0
      %1955 = vmatmul.mubr.bf16.gmra.mrb[0].mxu0 %v356
      %v1956 = vpop.f32.mrb[0].mxu0
      %v1957 = vadd.f32 0.0, %v1956
      %v1958 = vpop.f32.mrb[0].mxu0
      %v1959 = vpop.f32.mrb[0].mxu0
      %v1960 = vadd.f32 0.0, %v1959
      %v1961 = vpop.f32.mrb[0].mxu0
      %1962 = vmatprep.mubr.bf16.mxu0 0
      %1963 = vmatmul.mubr.bf16.gmra.mrb[0].mxu0 %v359
      %v1964 = vpop.f32.mrb[0].mxu0
      %v1965 = vadd.f32 0.0, %v1964
      %v1966 = vpop.f32.mrb[0].mxu0
      %v1967 = vpop.f32.mrb[0].mxu0
      %v1968 = vadd.f32 0.0, %v1967
      %v1969 = vpop.f32.mrb[0].mxu0
      %1970 = vmatprep.mubr.bf16.mxu0 0
      %1971 = vmatmul.mubr.bf16.gmra.mrb[0].mxu0 %v362
      %v1972 = vpop.f32.mrb[0].mxu0
      %v1973 = vadd.f32 0.0, %v1972
      %v1974 = vpop.f32.mrb[0].mxu0
      %v1975 = vpop.f32.mrb[0].mxu0
      %v1976 = vadd.f32 0.0, %v1975
      %v1977 = vpop.f32.mrb[0].mxu0
      %1978 = vdwg.mxu0
      %v1979 = vpack.c.bf16 %v1952, %v1949
      %v1980 = vpack.c.bf16 %v1960, %v1957
      %v1981 = vpack.c.bf16 %v1968, %v1965
      %v1982 = vpack.c.bf16 %v1976, %v1973
      %v1983 = vld [vmem:[%s3] sm:$0xf]
      %v1984 = vld [vmem:[%s3 + $0x4] sm:$0xf]
      %v1985 = vld [vmem:[%s3 + $0x8] sm:$0xf]
      %v1986 = vld [vmem:[%s3 + $0xc] sm:$0xf]
      %v1987 = vld [vmem:[%s3 + $0x10] sm:$0xf]
      %v1988 = vld [vmem:[%s3 + $0x14] sm:$0xf]
      %v1989 = vld [vmem:[%s3 + $0x18] sm:$0xf]
      %v1990 = vld [vmem:[%s3 + $0x1c] sm:$0xf]
      %v1991 = vld [vmem:[%s3 + $0x20] sm:$0xf]
      %v1992 = vld [vmem:[%s3 + $0x24] sm:$0xf]
      %v1993 = vld [vmem:[%s3 + $0x28] sm:$0x1]
      %v1994 = vld [vmem:[%s444] sm:$0xf]
      %v1995 = vld [vmem:[%s444 + $0x4] sm:$0xf]
      %v1996 = vld [vmem:[%s444 + $0x8] sm:$0xf]
      %v1997 = vld [vmem:[%s444 + $0xc] sm:$0xf]
      %v1998 = vld [vmem:[%s444 + $0x10] sm:$0xf]
      %v1999 = vld [vmem:[%s444 + $0x14] sm:$0xf]
      %v2000 = vld [vmem:[%s444 + $0x18] sm:$0xf]
      %v2001 = vld [vmem:[%s444 + $0x1c] sm:$0xf]
      %v2002 = vld [vmem:[%s444 + $0x20] sm:$0xf]
      %v2003 = vld [vmem:[%s444 + $0x24] sm:$0xf]
      %v2004 = vld [vmem:[%s444 + $0x28] sm:$0x1]
      %v2016 = vunpack.c.l.b16 %v1994
      %v2017 = vunpack.c.l.b16 %v1995
      %v2018 = vunpack.c.l.b16 %v1996
      %v2019 = vunpack.c.l.b16 %v1997
      %v2020 = vunpack.c.l.b16 %v1998
      %v2021 = vunpack.c.l.b16 %v1999
      %v2022 = vunpack.c.l.b16 %v2000
      %v2023 = vunpack.c.l.b16 %v2001
      %v2024 = vunpack.c.l.b16 %v2002
      %v2025 = vunpack.c.l.b16 %v2003
      %v2026 = vunpack.c.l.b16 %v2004
      %v2027 = vpack.c.b16 %v2017, %v2016
      %v2028 = vpack.c.b16 %v2019, %v2018
      %v2029 = vpack.c.b16 %v2021, %v2020
      %v2030 = vpack.c.b16 %v2023, %v2022
      %v2031 = vpack.c.b16 %v2025, %v2024
      %v2032 = vpack.c.b16 %v2026, %v2026
      %v2039 = vsel %vm489, %v1980, 0
      %v2042 = vand.u32 %v2032, %v495
      %2044 = vmatprep.subr.bf16.mxu0 0
      %2045 = vmatpush1.bf16.msra.mxu0 %v2027
      %2046 = vmatprep.subr.bf16.mxu0 0
      %2047 = vmatpush1.bf16.msra.mxu0 %v2028
      %2048 = vmatprep.subr.bf16.mxu0 0
      %2049 = vmatpush1.bf16.msra.mxu0 %v2029
      %2050 = vmatprep.subr.bf16.mxu0 0
      %2051 = vmatpush1.bf16.msra.mxu0 %v2030
      %2052 = vmatprep.subr.bf16.mxu0 0
      %2053 = vmatpush1.bf16.msra.mxu0 %v2031
      %2054 = vmatprep.subr.bf16.mxu0 0
      %2055 = vmatpush1.bf16.msra.mxu0 %v2042
      %2056 = vmatprep.subr.bf16.mxu0 0
      %2057 = vmatpush1.bf16.msra.mxu0 0
      %2058 = vmatprep.subr.bf16.mxu0 0
      %2059 = vmatpush1.bf16.msra.mxu0 0
      %2060 = vmatprep.subr.bf16.mxu0 0
      %2061 = vmatpush1.bf16.msra.mxu0 0
      %2062 = vmatprep.subr.bf16.mxu0 0
      %2063 = vmatpush1.bf16.msra.mxu0 0
      %2064 = vmatprep.subr.bf16.mxu0 0
      %2065 = vmatpush1.bf16.msra.mxu0 0
      %2066 = vmatprep.subr.bf16.mxu0 0
      %2067 = vmatpush1.bf16.msra.mxu0 0
      %2068 = vmatprep.subr.bf16.mxu0 0
      %2069 = vmatpush1.bf16.msra.mxu0 0
      %2070 = vmatprep.subr.bf16.mxu0 0
      %2071 = vmatpush1.bf16.msra.mxu0 0
      %2072 = vmatprep.subr.bf16.mxu0 0
      %2073 = vmatpush1.bf16.msra.mxu0 0
      %2074 = vmatprep.subr.bf16.mxu0 0
      %2075 = vmatpush1.bf16.msra.mxu0 0
      %2076 = vmatprep.mubr.bf16.mxu0 0
      %2077 = vmatmul.mubr.bf16.gmra.mrb[0].mxu0 %v2039
      %v2078 = vpop.f32.mrb[0].mxu0
      %v2079 = vadd.f32 0.0, %v2078
      %v2080 = vpop.f32.mrb[0].mxu0
      %v2081 = vpop.f32.mrb[0].mxu0
      %v2082 = vadd.f32 0.0, %v2081
      %v2083 = vpop.f32.mrb[0].mxu0
      %2084 = vdwg.mxu0
      %v2096 = vunpack.c.l.b16 %v1983
      %v2097 = vunpack.c.l.b16 %v1984
      %v2098 = vunpack.c.l.b16 %v1985
      %v2099 = vunpack.c.l.b16 %v1986
      %v2100 = vunpack.c.l.b16 %v1987
      %v2101 = vunpack.c.l.b16 %v1988
      %v2102 = vunpack.c.l.b16 %v1989
      %v2103 = vunpack.c.l.b16 %v1990
      %v2104 = vunpack.c.l.b16 %v1991
      %v2105 = vunpack.c.l.b16 %v1992
      %v2106 = vunpack.c.l.b16 %v1993
      %v2107 = vpack.c.b16 %v2097, %v2096
      %v2108 = vpack.c.b16 %v2099, %v2098
      %v2109 = vpack.c.b16 %v2101, %v2100
      %v2110 = vpack.c.b16 %v2103, %v2102
      %v2111 = vpack.c.b16 %v2105, %v2104
      %v2112 = vpack.c.b16 %v2106, %v2106
      %v2119 = vsel %vm489, %v1979, 0
      %v2122 = vand.u32 %v2112, %v495
      %2124 = vmatprep.subr.bf16.mxu0 0
      %2125 = vmatpush1.bf16.msra.mxu0 %v2107
      %2126 = vmatprep.subr.bf16.mxu0 0
      %2127 = vmatpush1.bf16.msra.mxu0 %v2108
      %2128 = vmatprep.subr.bf16.mxu0 0
      %2129 = vmatpush1.bf16.msra.mxu0 %v2109
      %2130 = vmatprep.subr.bf16.mxu0 0
      %2131 = vmatpush1.bf16.msra.mxu0 %v2110
      %2132 = vmatprep.subr.bf16.mxu0 0
      %2133 = vmatpush1.bf16.msra.mxu0 %v2111
      %2134 = vmatprep.subr.bf16.mxu0 0
      %2135 = vmatpush1.bf16.msra.mxu0 %v2122
      %2136 = vmatprep.subr.bf16.mxu0 0
      %2137 = vmatpush1.bf16.msra.mxu0 0
      %2138 = vmatprep.subr.bf16.mxu0 0
      %2139 = vmatpush1.bf16.msra.mxu0 0
      %2140 = vmatprep.subr.bf16.mxu0 0
      %2141 = vmatpush1.bf16.msra.mxu0 0
      %2142 = vmatprep.subr.bf16.mxu0 0
      %2143 = vmatpush1.bf16.msra.mxu0 0
      %2144 = vmatprep.subr.bf16.mxu0 0
      %2145 = vmatpush1.bf16.msra.mxu0 0
      %2146 = vmatprep.subr.bf16.mxu0 0
      %2147 = vmatpush1.bf16.msra.mxu0 0
      %2148 = vmatprep.subr.bf16.mxu0 0
      %2149 = vmatpush1.bf16.msra.mxu0 0
      %2150 = vmatprep.subr.bf16.mxu0 0
      %2151 = vmatpush1.bf16.msra.mxu0 0
      %2152 = vmatprep.subr.bf16.mxu0 0
      %2153 = vmatpush1.bf16.msra.mxu0 0
      %2154 = vmatprep.subr.bf16.mxu0 0
      %2155 = vmatpush1.bf16.msra.mxu0 0
      %2156 = vmatprep.mubr.bf16.mxu0 0
      %2157 = vmatmul.mubr.bf16.gmra.mrb[0].mxu0 %v2119
      %v2158 = vpop.f32.mrb[0].mxu0
      %v2159 = vadd.f32 %v2079, %v2158
      %v2160 = vpop.f32.mrb[0].mxu0
      %v2161 = vpop.f32.mrb[0].mxu0
      %v2162 = vadd.f32 %v2082, %v2161
      %v2163 = vpop.f32.mrb[0].mxu0
      %2164 = vdwg.mxu0
      %v2165 = vld [vmem:[%s620] sm:$0xf]
      %v2166 = vld [vmem:[%s620 + $0x4] sm:$0xf]
      %v2167 = vld [vmem:[%s620 + $0x8] sm:$0xf]
      %v2168 = vld [vmem:[%s620 + $0xc] sm:$0xf]
      %v2169 = vld [vmem:[%s620 + $0x10] sm:$0xf]
      %v2170 = vld [vmem:[%s620 + $0x14] sm:$0xf]
      %v2171 = vld [vmem:[%s620 + $0x18] sm:$0xf]
      %v2172 = vld [vmem:[%s620 + $0x1c] sm:$0xf]
      %v2173 = vld [vmem:[%s620 + $0x20] sm:$0xf]
      %v2174 = vld [vmem:[%s620 + $0x24] sm:$0xf]
      %v2175 = vld [vmem:[%s620 + $0x28] sm:$0x1]
      %v2187 = vunpack.c.l.b16 %v2165
      %v2188 = vunpack.c.l.b16 %v2166
      %v2189 = vunpack.c.l.b16 %v2167
      %v2190 = vunpack.c.l.b16 %v2168
      %v2191 = vunpack.c.l.b16 %v2169
      %v2192 = vunpack.c.l.b16 %v2170
      %v2193 = vunpack.c.l.b16 %v2171
      %v2194 = vunpack.c.l.b16 %v2172
      %v2195 = vunpack.c.l.b16 %v2173
      %v2196 = vunpack.c.l.b16 %v2174
      %v2197 = vunpack.c.l.b16 %v2175
      %v2198 = vpack.c.b16 %v2188, %v2187
      %v2199 = vpack.c.b16 %v2190, %v2189
      %v2200 = vpack.c.b16 %v2192, %v2191
      %v2201 = vpack.c.b16 %v2194, %v2193
      %v2202 = vpack.c.b16 %v2196, %v2195
      %v2203 = vpack.c.b16 %v2197, %v2197
      %v2210 = vsel %vm489, %v1981, 0
      %v2213 = vand.u32 %v2203, %v495
      %2215 = vmatprep.subr.bf16.mxu0 0
      %2216 = vmatpush1.bf16.msra.mxu0 %v2198
      %2217 = vmatprep.subr.bf16.mxu0 0
      %2218 = vmatpush1.bf16.msra.mxu0 %v2199
      %2219 = vmatprep.subr.bf16.mxu0 0
      %2220 = vmatpush1.bf16.msra.mxu0 %v2200
      %2221 = vmatprep.subr.bf16.mxu0 0
      %2222 = vmatpush1.bf16.msra.mxu0 %v2201
      %2223 = vmatprep.subr.bf16.mxu0 0
      %2224 = vmatpush1.bf16.msra.mxu0 %v2202
      %2225 = vmatprep.subr.bf16.mxu0 0
      %2226 = vmatpush1.bf16.msra.mxu0 %v2213
      %2227 = vmatprep.subr.bf16.mxu0 0
      %2228 = vmatpush1.bf16.msra.mxu0 0
      %2229 = vmatprep.subr.bf16.mxu0 0
      %2230 = vmatpush1.bf16.msra.mxu0 0
      %2231 = vmatprep.subr.bf16.mxu0 0
      %2232 = vmatpush1.bf16.msra.mxu0 0
      %2233 = vmatprep.subr.bf16.mxu0 0
      %2234 = vmatpush1.bf16.msra.mxu0 0
      %2235 = vmatprep.subr.bf16.mxu0 0
      %2236 = vmatpush1.bf16.msra.mxu0 0
      %2237 = vmatprep.subr.bf16.mxu0 0
      %2238 = vmatpush1.bf16.msra.mxu0 0
      %2239 = vmatprep.subr.bf16.mxu0 0
      %2240 = vmatpush1.bf16.msra.mxu0 0
      %2241 = vmatprep.subr.bf16.mxu0 0
      %2242 = vmatpush1.bf16.msra.mxu0 0
      %2243 = vmatprep.subr.bf16.mxu0 0
      %2244 = vmatpush1.bf16.msra.mxu0 0
      %2245 = vmatprep.subr.bf16.mxu0 0
      %2246 = vmatpush1.bf16.msra.mxu0 0
      %2247 = vmatprep.mubr.bf16.mxu0 0
      %2248 = vmatmul.mubr.bf16.gmra.mrb[0].mxu0 %v2210
      %v2249 = vpop.f32.mrb[0].mxu0
      %v2250 = vadd.f32 0.0, %v2249
      %v2251 = vpop.f32.mrb[0].mxu0
      %v2252 = vpop.f32.mrb[0].mxu0
      %v2253 = vadd.f32 0.0, %v2252
      %v2254 = vpop.f32.mrb[0].mxu0
      %2255 = vdwg.mxu0
      %v2256 = vadd.f32 %v2159, %v2250
      %v2257 = vadd.f32 %v2162, %v2253
      %v2258 = vld [vmem:[%s714] sm:$0xf]
      %v2259 = vld [vmem:[%s714 + $0x4] sm:$0xf]
      %v2260 = vld [vmem:[%s714 + $0x8] sm:$0xf]
      %v2261 = vld [vmem:[%s714 + $0xc] sm:$0xf]
      %v2262 = vld [vmem:[%s714 + $0x10] sm:$0xf]
      %v2263 = vld [vmem:[%s714 + $0x14] sm:$0xf]
      %v2264 = vld [vmem:[%s714 + $0x18] sm:$0xf]
      %v2265 = vld [vmem:[%s714 + $0x1c] sm:$0xf]
      %v2266 = vld [vmem:[%s714 + $0x20] sm:$0xf]
      %v2267 = vld [vmem:[%s714 + $0x24] sm:$0xf]
      %v2268 = vld [vmem:[%s714 + $0x28] sm:$0x1]
      %v2280 = vunpack.c.l.b16 %v2258
      %v2281 = vunpack.c.l.b16 %v2259
      %v2282 = vunpack.c.l.b16 %v2260
      %v2283 = vunpack.c.l.b16 %v2261
      %v2284 = vunpack.c.l.b16 %v2262
      %v2285 = vunpack.c.l.b16 %v2263
      %v2286 = vunpack.c.l.b16 %v2264
      %v2287 = vunpack.c.l.b16 %v2265
      %v2288 = vunpack.c.l.b16 %v2266
      %v2289 = vunpack.c.l.b16 %v2267
      %v2290 = vunpack.c.l.b16 %v2268
      %v2291 = vpack.c.b16 %v2281, %v2280
      %v2292 = vpack.c.b16 %v2283, %v2282
      %v2293 = vpack.c.b16 %v2285, %v2284
      %v2294 = vpack.c.b16 %v2287, %v2286
      %v2295 = vpack.c.b16 %v2289, %v2288
      %v2296 = vpack.c.b16 %v2290, %v2290
      %v2303 = vsel %vm489, %v1982, 0
      %v2306 = vand.u32 %v2296, %v495
      %2308 = vmatprep.subr.bf16.mxu0 0
      %2309 = vmatpush1.bf16.msra.mxu0 %v2291
      %2310 = vmatprep.subr.bf16.mxu0 0
      %2311 = vmatpush1.bf16.msra.mxu0 %v2292
      %2312 = vmatprep.subr.bf16.mxu0 0
      %2313 = vmatpush1.bf16.msra.mxu0 %v2293
      %2314 = vmatprep.subr.bf16.mxu0 0
      %2315 = vmatpush1.bf16.msra.mxu0 %v2294
      %2316 = vmatprep.subr.bf16.mxu0 0
      %2317 = vmatpush1.bf16.msra.mxu0 %v2295
      %2318 = vmatprep.subr.bf16.mxu0 0
      %2319 = vmatpush1.bf16.msra.mxu0 %v2306
      %2320 = vmatprep.subr.bf16.mxu0 0
      %2321 = vmatpush1.bf16.msra.mxu0 0
      %2322 = vmatprep.subr.bf16.mxu0 0
      %2323 = vmatpush1.bf16.msra.mxu0 0
      %2324 = vmatprep.subr.bf16.mxu0 0
      %2325 = vmatpush1.bf16.msra.mxu0 0
      %2326 = vmatprep.subr.bf16.mxu0 0
      %2327 = vmatpush1.bf16.msra.mxu0 0
      %2328 = vmatprep.subr.bf16.mxu0 0
      %2329 = vmatpush1.bf16.msra.mxu0 0
      %2330 = vmatprep.subr.bf16.mxu0 0
      %2331 = vmatpush1.bf16.msra.mxu0 0
      %2332 = vmatprep.subr.bf16.mxu0 0
      %2333 = vmatpush1.bf16.msra.mxu0 0
      %2334 = vmatprep.subr.bf16.mxu0 0
      %2335 = vmatpush1.bf16.msra.mxu0 0
      %2336 = vmatprep.subr.bf16.mxu0 0
      %2337 = vmatpush1.bf16.msra.mxu0 0
      %2338 = vmatprep.subr.bf16.mxu0 0
      %2339 = vmatpush1.bf16.msra.mxu0 0
      %2340 = vmatprep.mubr.bf16.mxu0 0
      %2341 = vmatmul.mubr.bf16.gmra.mrb[0].mxu0 %v2303
      %v2342 = vpop.f32.mrb[0].mxu0
      %v2343 = vadd.f32 0.0, %v2342
      %v2344 = vpop.f32.mrb[0].mxu0
      %v2345 = vpop.f32.mrb[0].mxu0
      %v2346 = vadd.f32 0.0, %v2345
      %v2347 = vpop.f32.mrb[0].mxu0
      %2348 = vdwg.mxu0
      %v2349 = vadd.f32 %v2256, %v2343
      %v2350 = vadd.f32 %v2257, %v2346
      %v2351 = vadd.f32 %v2349, %v811
      %v2352 = vadd.f32 %v2350, %v816
      %v2353 = vmax.f32 %v2351, 0.0
      %v2354 = vmax.f32 %v2352, 0.0
      %v2355 = vpack.c.bf16 %v2354, %v2353
      %v2356 = vld [vmem:[%s4] sm:$0xf]
      %v2357 = vld [vmem:[%s4 + $0x4] sm:$0xf]
      %v2358 = vld [vmem:[%s4 + $0x8] sm:$0xf]
      %v2359 = vld [vmem:[%s4 + $0xc] sm:$0xf]
      %v2360 = vld [vmem:[%s4 + $0x10] sm:$0xf]
      %v2361 = vld [vmem:[%s4 + $0x14] sm:$0xf]
      %v2362 = vld [vmem:[%s4 + $0x18] sm:$0xf]
      %v2363 = vld [vmem:[%s4 + $0x1c] sm:$0xf]
      %v2364 = vld [vmem:[%s4 + $0x20] sm:$0xf]
      %v2365 = vld [vmem:[%s4 + $0x24] sm:$0xf]
      %v2366 = vld [vmem:[%s4 + $0x28] sm:$0xf]
      %v2367 = vld [vmem:[%s4 + $0x2c] sm:$0xf]
      %v2368 = vld [vmem:[%s4 + $0x30] sm:$0xf]
      %v2369 = vld [vmem:[%s4 + $0x34] sm:$0xf]
      %v2370 = vld [vmem:[%s4 + $0x38] sm:$0xf]
      %v2371 = vld [vmem:[%s4 + $0x3c] sm:$0xf]
      %v2372 = vld [vmem:[%s839] sm:$0xf]
      %v2373 = vld [vmem:[%s839 + $0x4] sm:$0xf]
      %v2374 = vld [vmem:[%s839 + $0x8] sm:$0xf]
      %v2375 = vld [vmem:[%s839 + $0xc] sm:$0xf]
      %v2376 = vld [vmem:[%s839 + $0x10] sm:$0xf]
      %v2377 = vld [vmem:[%s839 + $0x14] sm:$0xf]
      %v2378 = vld [vmem:[%s839 + $0x18] sm:$0xf]
      %v2379 = vld [vmem:[%s839 + $0x1c] sm:$0xf]
      %v2380 = vld [vmem:[%s839 + $0x20] sm:$0xf]
      %v2381 = vld [vmem:[%s839 + $0x24] sm:$0xf]
      %v2382 = vld [vmem:[%s839 + $0x28] sm:$0xf]
      %v2383 = vld [vmem:[%s839 + $0x2c] sm:$0xf]
      %v2384 = vld [vmem:[%s839 + $0x30] sm:$0xf]
      %v2385 = vld [vmem:[%s839 + $0x34] sm:$0xf]
      %v2386 = vld [vmem:[%s839 + $0x38] sm:$0xf]
      %v2387 = vld [vmem:[%s839 + $0x3c] sm:$0xf]
      %v2404 = vunpack.c.l.b16 %v2372
      %v2405 = vunpack.c.l.b16 %v2373
      %v2406 = vunpack.c.l.b16 %v2374
      %v2407 = vunpack.c.l.b16 %v2375
      %v2408 = vunpack.c.l.b16 %v2376
      %v2409 = vunpack.c.l.b16 %v2377
      %v2410 = vunpack.c.l.b16 %v2378
      %v2411 = vunpack.c.l.b16 %v2379
      %v2412 = vunpack.c.l.b16 %v2380
      %v2413 = vunpack.c.l.b16 %v2381
      %v2414 = vunpack.c.l.b16 %v2382
      %v2415 = vunpack.c.l.b16 %v2383
      %v2416 = vunpack.c.l.b16 %v2384
      %v2417 = vunpack.c.l.b16 %v2385
      %v2418 = vunpack.c.l.b16 %v2386
      %v2419 = vunpack.c.l.b16 %v2387
      %v2420 = vpack.c.b16 %v2405, %v2404
      %v2421 = vpack.c.b16 %v2407, %v2406
      %v2422 = vpack.c.b16 %v2409, %v2408
      %v2423 = vpack.c.b16 %v2411, %v2410
      %v2424 = vpack.c.b16 %v2413, %v2412
      %v2425 = vpack.c.b16 %v2415, %v2414
      %v2426 = vpack.c.b16 %v2417, %v2416
      %v2427 = vpack.c.b16 %v2419, %v2418
      %2429 = vrot.lane.b32.xlu0 %v2355, 112
      %v2430 = vpop.permute.xlu0 %2429
      %v2433 = vsel %vm900, %v2420, 0
      %v2436 = vsel %vm900, %v2421, 0
      %v2439 = vsel %vm900, %v2422, 0
      %v2442 = vsel %vm900, %v2423, 0
      %v2445 = vsel %vm900, %v2424, 0
      %v2448 = vsel %vm900, %v2425, 0
      %v2451 = vsel %vm900, %v2426, 0
      %v2454 = vsel %vm900, %v2427, 0
      %2456 = vmatprep.subr.bf16.mxu0 0
      %2457 = vmatpush1.bf16.msra.mxu0 %v2430
      %2458 = vmatprep.subr.bf16.mxu0 0
      %2459 = vmatpush1.bf16.msra.mxu0 0
      %2460 = vmatprep.subr.bf16.mxu0 0
      %2461 = vmatpush1.bf16.msra.mxu0 0
      %2462 = vmatprep.subr.bf16.mxu0 0
      %2463 = vmatpush1.bf16.msra.mxu0 0
      %2464 = vmatprep.subr.bf16.mxu0 0
      %2465 = vmatpush1.bf16.msra.mxu0 0
      %2466 = vmatprep.subr.bf16.mxu0 0
      %2467 = vmatpush1.bf16.msra.mxu0 0
      %2468 = vmatprep.subr.bf16.mxu0 0
      %2469 = vmatpush1.bf16.msra.mxu0 0
      %2470 = vmatprep.subr.bf16.mxu0 0
      %2471 = vmatpush1.bf16.msra.mxu0 0
      %2472 = vmatprep.subr.bf16.mxu0 0
      %2473 = vmatpush1.bf16.msra.mxu0 0
      %2474 = vmatprep.subr.bf16.mxu0 0
      %2475 = vmatpush1.bf16.msra.mxu0 0
      %2476 = vmatprep.subr.bf16.mxu0 0
      %2477 = vmatpush1.bf16.msra.mxu0 0
      %2478 = vmatprep.subr.bf16.mxu0 0
      %2479 = vmatpush1.bf16.msra.mxu0 0
      %2480 = vmatprep.subr.bf16.mxu0 0
      %2481 = vmatpush1.bf16.msra.mxu0 0
      %2482 = vmatprep.subr.bf16.mxu0 0
      %2483 = vmatpush1.bf16.msra.mxu0 0
      %2484 = vmatprep.subr.bf16.mxu0 0
      %2485 = vmatpush1.bf16.msra.mxu0 0
      %2486 = vmatprep.subr.bf16.mxu0 0
      %2487 = vmatpush1.bf16.msra.mxu0 0
      %2488 = vmatprep.mubr.bf16.mxu0 0
      %2489 = vmatmul.mubr.bf16.gmra.mrb[0].mxu0 %v2433
      %v2490 = vpop.f32.mrb[0].mxu0
      %v2491 = vadd.f32 0.0, %v2490
      %v2492 = vpop.f32.mrb[0].mxu0
      %v2493 = vpop.f32.mrb[0].mxu0
      %v2494 = vadd.f32 0.0, %v2493
      %v2495 = vpop.f32.mrb[0].mxu0
      %2496 = vmatprep.mubr.bf16.mxu0 0
      %2497 = vmatmul.mubr.bf16.gmra.mrb[0].mxu0 %v2436
      %v2498 = vpop.f32.mrb[0].mxu0
      %v2499 = vadd.f32 0.0, %v2498
      %v2500 = vpop.f32.mrb[0].mxu0
      %v2501 = vpop.f32.mrb[0].mxu0
      %v2502 = vadd.f32 0.0, %v2501
      %v2503 = vpop.f32.mrb[0].mxu0
      %2504 = vmatprep.mubr.bf16.mxu0 0
      %2505 = vmatmul.mubr.bf16.gmra.mrb[0].mxu0 %v2439
      %v2506 = vpop.f32.mrb[0].mxu0
      %v2507 = vadd.f32 0.0, %v2506
      %v2508 = vpop.f32.mrb[0].mxu0
      %v2509 = vpop.f32.mrb[0].mxu0
      %v2510 = vadd.f32 0.0, %v2509
      %v2511 = vpop.f32.mrb[0].mxu0
      %2512 = vmatprep.mubr.bf16.mxu0 0
      %2513 = vmatmul.mubr.bf16.gmra.mrb[0].mxu0 %v2442
      %v2514 = vpop.f32.mrb[0].mxu0
      %v2515 = vadd.f32 0.0, %v2514
      %v2516 = vpop.f32.mrb[0].mxu0
      %v2517 = vpop.f32.mrb[0].mxu0
      %v2518 = vadd.f32 0.0, %v2517
      %v2519 = vpop.f32.mrb[0].mxu0
      %2520 = vmatprep.mubr.bf16.mxu0 0
      %2521 = vmatmul.mubr.bf16.gmra.mrb[0].mxu0 %v2445
      %v2522 = vpop.f32.mrb[0].mxu0
      %v2523 = vadd.f32 0.0, %v2522
      %v2524 = vpop.f32.mrb[0].mxu0
      %v2525 = vpop.f32.mrb[0].mxu0
      %v2526 = vadd.f32 0.0, %v2525
      %v2527 = vpop.f32.mrb[0].mxu0
      %2528 = vmatprep.mubr.bf16.mxu0 0
      %2529 = vmatmul.mubr.bf16.gmra.mrb[0].mxu0 %v2448
      %v2530 = vpop.f32.mrb[0].mxu0
      %v2531 = vadd.f32 0.0, %v2530
      %v2532 = vpop.f32.mrb[0].mxu0
      %v2533 = vpop.f32.mrb[0].mxu0
      %v2534 = vadd.f32 0.0, %v2533
      %v2535 = vpop.f32.mrb[0].mxu0
      %2536 = vmatprep.mubr.bf16.mxu0 0
      %2537 = vmatmul.mubr.bf16.gmra.mrb[0].mxu0 %v2451
      %v2538 = vpop.f32.mrb[0].mxu0
      %v2539 = vadd.f32 0.0, %v2538
      %v2540 = vpop.f32.mrb[0].mxu0
      %v2541 = vpop.f32.mrb[0].mxu0
      %v2542 = vadd.f32 0.0, %v2541
      %v2543 = vpop.f32.mrb[0].mxu0
      %2544 = vmatprep.mubr.bf16.mxu0 0
      %2545 = vmatmul.mubr.bf16.gmra.mrb[0].mxu0 %v2454
      %v2546 = vpop.f32.mrb[0].mxu0
      %v2547 = vadd.f32 0.0, %v2546
      %v2548 = vpop.f32.mrb[0].mxu0
      %v2549 = vpop.f32.mrb[0].mxu0
      %v2550 = vadd.f32 0.0, %v2549
      %v2551 = vpop.f32.mrb[0].mxu0
      %2552 = vdwg.mxu0
      %v2569 = vunpack.c.l.b16 %v2356
      %v2570 = vunpack.c.l.b16 %v2357
      %v2571 = vunpack.c.l.b16 %v2358
      %v2572 = vunpack.c.l.b16 %v2359
      %v2573 = vunpack.c.l.b16 %v2360
      %v2574 = vunpack.c.l.b16 %v2361
      %v2575 = vunpack.c.l.b16 %v2362
      %v2576 = vunpack.c.l.b16 %v2363
      %v2577 = vunpack.c.l.b16 %v2364
      %v2578 = vunpack.c.l.b16 %v2365
      %v2579 = vunpack.c.l.b16 %v2366
      %v2580 = vunpack.c.l.b16 %v2367
      %v2581 = vunpack.c.l.b16 %v2368
      %v2582 = vunpack.c.l.b16 %v2369
      %v2583 = vunpack.c.l.b16 %v2370
      %v2584 = vunpack.c.l.b16 %v2371
      %v2585 = vpack.c.b16 %v2570, %v2569
      %v2586 = vpack.c.b16 %v2572, %v2571
      %v2587 = vpack.c.b16 %v2574, %v2573
      %v2588 = vpack.c.b16 %v2576, %v2575
      %v2589 = vpack.c.b16 %v2578, %v2577
      %v2590 = vpack.c.b16 %v2580, %v2579
      %v2591 = vpack.c.b16 %v2582, %v2581
      %v2592 = vpack.c.b16 %v2584, %v2583
      %v2594 = vsel %vm900, %v2585, 0
      %v2597 = vsel %vm900, %v2586, 0
      %v2600 = vsel %vm900, %v2587, 0
      %v2603 = vsel %vm900, %v2588, 0
      %v2606 = vsel %vm900, %v2589, 0
      %v2609 = vsel %vm900, %v2590, 0
      %v2612 = vsel %vm900, %v2591, 0
      %v2615 = vsel %vm900, %v2592, 0
      %2617 = vmatprep.subr.bf16.mxu0 0
      %2618 = vmatpush1.bf16.msra.mxu0 %v2355
      %2619 = vmatprep.subr.bf16.mxu0 0
      %2620 = vmatpush1.bf16.msra.mxu0 0
      %2621 = vmatprep.subr.bf16.mxu0 0
      %2622 = vmatpush1.bf16.msra.mxu0 0
      %2623 = vmatprep.subr.bf16.mxu0 0
      %2624 = vmatpush1.bf16.msra.mxu0 0
      %2625 = vmatprep.subr.bf16.mxu0 0
      %2626 = vmatpush1.bf16.msra.mxu0 0
      %2627 = vmatprep.subr.bf16.mxu0 0
      %2628 = vmatpush1.bf16.msra.mxu0 0
      %2629 = vmatprep.subr.bf16.mxu0 0
      %2630 = vmatpush1.bf16.msra.mxu0 0
      %2631 = vmatprep.subr.bf16.mxu0 0
      %2632 = vmatpush1.bf16.msra.mxu0 0
      %2633 = vmatprep.subr.bf16.mxu0 0
      %2634 = vmatpush1.bf16.msra.mxu0 0
      %2635 = vmatprep.subr.bf16.mxu0 0
      %2636 = vmatpush1.bf16.msra.mxu0 0
      %2637 = vmatprep.subr.bf16.mxu0 0
      %2638 = vmatpush1.bf16.msra.mxu0 0
      %2639 = vmatprep.subr.bf16.mxu0 0
      %2640 = vmatpush1.bf16.msra.mxu0 0
      %2641 = vmatprep.subr.bf16.mxu0 0
      %2642 = vmatpush1.bf16.msra.mxu0 0
      %2643 = vmatprep.subr.bf16.mxu0 0
      %2644 = vmatpush1.bf16.msra.mxu0 0
      %2645 = vmatprep.subr.bf16.mxu0 0
      %2646 = vmatpush1.bf16.msra.mxu0 0
      %2647 = vmatprep.subr.bf16.mxu0 0
      %2648 = vmatpush1.bf16.msra.mxu0 0
      %2649 = vmatprep.mubr.bf16.mxu0 0
      %2650 = vmatmul.mubr.bf16.gmra.mrb[0].mxu0 %v2594
      %v2651 = vpop.f32.mrb[0].mxu0
      %v2652 = vadd.f32 %v2491, %v2651
      %v2653 = vpop.f32.mrb[0].mxu0
      %v2654 = vpop.f32.mrb[0].mxu0
      %v2655 = vadd.f32 %v2494, %v2654
      %v2656 = vpop.f32.mrb[0].mxu0
      %2657 = vmatprep.mubr.bf16.mxu0 0
      %2658 = vmatmul.mubr.bf16.gmra.mrb[0].mxu0 %v2597
      %v2659 = vpop.f32.mrb[0].mxu0
      %v2660 = vadd.f32 %v2499, %v2659
      %v2661 = vpop.f32.mrb[0].mxu0
      %v2662 = vpop.f32.mrb[0].mxu0
      %v2663 = vadd.f32 %v2502, %v2662
      %v2664 = vpop.f32.mrb[0].mxu0
      %2665 = vmatprep.mubr.bf16.mxu0 0
      %2666 = vmatmul.mubr.bf16.gmra.mrb[0].mxu0 %v2600
      %v2667 = vpop.f32.mrb[0].mxu0
      %v2668 = vadd.f32 %v2507, %v2667
      %v2669 = vpop.f32.mrb[0].mxu0
      %v2670 = vpop.f32.mrb[0].mxu0
      %v2671 = vadd.f32 %v2510, %v2670
      %v2672 = vpop.f32.mrb[0].mxu0
      %2673 = vmatprep.mubr.bf16.mxu0 0
      %2674 = vmatmul.mubr.bf16.gmra.mrb[0].mxu0 %v2603
      %v2675 = vpop.f32.mrb[0].mxu0
      %v2676 = vadd.f32 %v2515, %v2675
      %v2677 = vpop.f32.mrb[0].mxu0
      %v2678 = vpop.f32.mrb[0].mxu0
      %v2679 = vadd.f32 %v2518, %v2678
      %v2680 = vpop.f32.mrb[0].mxu0
      %2681 = vmatprep.mubr.bf16.mxu0 0
      %2682 = vmatmul.mubr.bf16.gmra.mrb[0].mxu0 %v2606
      %v2683 = vpop.f32.mrb[0].mxu0
      %v2684 = vadd.f32 %v2523, %v2683
      %v2685 = vpop.f32.mrb[0].mxu0
      %v2686 = vpop.f32.mrb[0].mxu0
      %v2687 = vadd.f32 %v2526, %v2686
      %v2688 = vpop.f32.mrb[0].mxu0
      %2689 = vmatprep.mubr.bf16.mxu0 0
      %2690 = vmatmul.mubr.bf16.gmra.mrb[0].mxu0 %v2609
      %v2691 = vpop.f32.mrb[0].mxu0
      %v2692 = vadd.f32 %v2531, %v2691
      %v2693 = vpop.f32.mrb[0].mxu0
      %v2694 = vpop.f32.mrb[0].mxu0
      %v2695 = vadd.f32 %v2534, %v2694
      %v2696 = vpop.f32.mrb[0].mxu0
      %2697 = vmatprep.mubr.bf16.mxu0 0
      %2698 = vmatmul.mubr.bf16.gmra.mrb[0].mxu0 %v2612
      %v2699 = vpop.f32.mrb[0].mxu0
      %v2700 = vadd.f32 %v2539, %v2699
      %v2701 = vpop.f32.mrb[0].mxu0
      %v2702 = vpop.f32.mrb[0].mxu0
      %v2703 = vadd.f32 %v2542, %v2702
      %v2704 = vpop.f32.mrb[0].mxu0
      %2705 = vmatprep.mubr.bf16.mxu0 0
      %2706 = vmatmul.mubr.bf16.gmra.mrb[0].mxu0 %v2615
      %v2707 = vpop.f32.mrb[0].mxu0
      %v2708 = vadd.f32 %v2547, %v2707
      %v2709 = vpop.f32.mrb[0].mxu0
      %v2710 = vpop.f32.mrb[0].mxu0
      %v2711 = vadd.f32 %v2550, %v2710
      %v2712 = vpop.f32.mrb[0].mxu0
      %2713 = vdwg.mxu0
      %v2714 = vld [vmem:[%s1183] sm:$0xf]
      %v2715 = vld [vmem:[%s1183 + $0x4] sm:$0xf]
      %v2716 = vld [vmem:[%s1183 + $0x8] sm:$0xf]
      %v2717 = vld [vmem:[%s1183 + $0xc] sm:$0xf]
      %v2718 = vld [vmem:[%s1183 + $0x10] sm:$0xf]
      %v2719 = vld [vmem:[%s1183 + $0x14] sm:$0xf]
      %v2720 = vld [vmem:[%s1183 + $0x18] sm:$0xf]
      %v2721 = vld [vmem:[%s1183 + $0x1c] sm:$0xf]
      %v2722 = vld [vmem:[%s1183 + $0x20] sm:$0xf]
      %v2723 = vld [vmem:[%s1183 + $0x24] sm:$0xf]
      %v2724 = vld [vmem:[%s1183 + $0x28] sm:$0xf]
      %v2725 = vld [vmem:[%s1183 + $0x2c] sm:$0xf]
      %v2726 = vld [vmem:[%s1183 + $0x30] sm:$0xf]
      %v2727 = vld [vmem:[%s1183 + $0x34] sm:$0xf]
      %v2728 = vld [vmem:[%s1183 + $0x38] sm:$0xf]
      %v2729 = vld [vmem:[%s1183 + $0x3c] sm:$0xf]
      %v2746 = vunpack.c.l.b16 %v2714
      %v2747 = vunpack.c.l.b16 %v2715
      %v2748 = vunpack.c.l.b16 %v2716
      %v2749 = vunpack.c.l.b16 %v2717
      %v2750 = vunpack.c.l.b16 %v2718
      %v2751 = vunpack.c.l.b16 %v2719
      %v2752 = vunpack.c.l.b16 %v2720
      %v2753 = vunpack.c.l.b16 %v2721
      %v2754 = vunpack.c.l.b16 %v2722
      %v2755 = vunpack.c.l.b16 %v2723
      %v2756 = vunpack.c.l.b16 %v2724
      %v2757 = vunpack.c.l.b16 %v2725
      %v2758 = vunpack.c.l.b16 %v2726
      %v2759 = vunpack.c.l.b16 %v2727
      %v2760 = vunpack.c.l.b16 %v2728
      %v2761 = vunpack.c.l.b16 %v2729
      %v2762 = vpack.c.b16 %v2747, %v2746
      %v2763 = vpack.c.b16 %v2749, %v2748
      %v2764 = vpack.c.b16 %v2751, %v2750
      %v2765 = vpack.c.b16 %v2753, %v2752
      %v2766 = vpack.c.b16 %v2755, %v2754
      %v2767 = vpack.c.b16 %v2757, %v2756
      %v2768 = vpack.c.b16 %v2759, %v2758
      %v2769 = vpack.c.b16 %v2761, %v2760
      %2770 = vrot.lane.b32.xlu0 %v2355, 96
      %v2771 = vpop.permute.xlu0 %2770
      %v2774 = vsel %vm900, %v2762, 0
      %v2777 = vsel %vm900, %v2763, 0
      %v2780 = vsel %vm900, %v2764, 0
      %v2783 = vsel %vm900, %v2765, 0
      %v2786 = vsel %vm900, %v2766, 0
      %v2789 = vsel %vm900, %v2767, 0
      %v2792 = vsel %vm900, %v2768, 0
      %v2795 = vsel %vm900, %v2769, 0
      %2797 = vmatprep.subr.bf16.mxu0 0
      %2798 = vmatpush1.bf16.msra.mxu0 %v2771
      %2799 = vmatprep.subr.bf16.mxu0 0
      %2800 = vmatpush1.bf16.msra.mxu0 0
      %2801 = vmatprep.subr.bf16.mxu0 0
      %2802 = vmatpush1.bf16.msra.mxu0 0
      %2803 = vmatprep.subr.bf16.mxu0 0
      %2804 = vmatpush1.bf16.msra.mxu0 0
      %2805 = vmatprep.subr.bf16.mxu0 0
      %2806 = vmatpush1.bf16.msra.mxu0 0
      %2807 = vmatprep.subr.bf16.mxu0 0
      %2808 = vmatpush1.bf16.msra.mxu0 0
      %2809 = vmatprep.subr.bf16.mxu0 0
      %2810 = vmatpush1.bf16.msra.mxu0 0
      %2811 = vmatprep.subr.bf16.mxu0 0
      %2812 = vmatpush1.bf16.msra.mxu0 0
      %2813 = vmatprep.subr.bf16.mxu0 0
      %2814 = vmatpush1.bf16.msra.mxu0 0
      %2815 = vmatprep.subr.bf16.mxu0 0
      %2816 = vmatpush1.bf16.msra.mxu0 0
      %2817 = vmatprep.subr.bf16.mxu0 0
      %2818 = vmatpush1.bf16.msra.mxu0 0
      %2819 = vmatprep.subr.bf16.mxu0 0
      %2820 = vmatpush1.bf16.msra.mxu0 0
      %2821 = vmatprep.subr.bf16.mxu0 0
      %2822 = vmatpush1.bf16.msra.mxu0 0
      %2823 = vmatprep.subr.bf16.mxu0 0
      %2824 = vmatpush1.bf16.msra.mxu0 0
      %2825 = vmatprep.subr.bf16.mxu0 0
      %2826 = vmatpush1.bf16.msra.mxu0 0
      %2827 = vmatprep.subr.bf16.mxu0 0
      %2828 = vmatpush1.bf16.msra.mxu0 0
      %2829 = vmatprep.mubr.bf16.mxu0 0
      %2830 = vmatmul.mubr.bf16.gmra.mrb[0].mxu0 %v2774
      %v2831 = vpop.f32.mrb[0].mxu0
      %v2832 = vadd.f32 0.0, %v2831
      %v2833 = vpop.f32.mrb[0].mxu0
      %v2834 = vpop.f32.mrb[0].mxu0
      %v2835 = vadd.f32 0.0, %v2834
      %v2836 = vpop.f32.mrb[0].mxu0
      %2837 = vmatprep.mubr.bf16.mxu0 0
      %2838 = vmatmul.mubr.bf16.gmra.mrb[0].mxu0 %v2777
      %v2839 = vpop.f32.mrb[0].mxu0
      %v2840 = vadd.f32 0.0, %v2839
      %v2841 = vpop.f32.mrb[0].mxu0
      %v2842 = vpop.f32.mrb[0].mxu0
      %v2843 = vadd.f32 0.0, %v2842
      %v2844 = vpop.f32.mrb[0].mxu0
      %2845 = vmatprep.mubr.bf16.mxu0 0
      %2846 = vmatmul.mubr.bf16.gmra.mrb[0].mxu0 %v2780
      %v2847 = vpop.f32.mrb[0].mxu0
      %v2848 = vadd.f32 0.0, %v2847
      %v2849 = vpop.f32.mrb[0].mxu0
      %v2850 = vpop.f32.mrb[0].mxu0
      %v2851 = vadd.f32 0.0, %v2850
      %v2852 = vpop.f32.mrb[0].mxu0
      %2853 = vmatprep.mubr.bf16.mxu0 0
      %2854 = vmatmul.mubr.bf16.gmra.mrb[0].mxu0 %v2783
      %v2855 = vpop.f32.mrb[0].mxu0
      %v2856 = vadd.f32 0.0, %v2855
      %v2857 = vpop.f32.mrb[0].mxu0
      %v2858 = vpop.f32.mrb[0].mxu0
      %v2859 = vadd.f32 0.0, %v2858
      %v2860 = vpop.f32.mrb[0].mxu0
      %2861 = vmatprep.mubr.bf16.mxu0 0
      %2862 = vmatmul.mubr.bf16.gmra.mrb[0].mxu0 %v2786
      %v2863 = vpop.f32.mrb[0].mxu0
      %v2864 = vadd.f32 0.0, %v2863
      %v2865 = vpop.f32.mrb[0].mxu0
      %v2866 = vpop.f32.mrb[0].mxu0
      %v2867 = vadd.f32 0.0, %v2866
      %v2868 = vpop.f32.mrb[0].mxu0
      %2869 = vmatprep.mubr.bf16.mxu0 0
      %2870 = vmatmul.mubr.bf16.gmra.mrb[0].mxu0 %v2789
      %v2871 = vpop.f32.mrb[0].mxu0
      %v2872 = vadd.f32 0.0, %v2871
      %v2873 = vpop.f32.mrb[0].mxu0
      %v2874 = vpop.f32.mrb[0].mxu0
      %v2875 = vadd.f32 0.0, %v2874
      %v2876 = vpop.f32.mrb[0].mxu0
      %2877 = vmatprep.mubr.bf16.mxu0 0
      %2878 = vmatmul.mubr.bf16.gmra.mrb[0].mxu0 %v2792
      %v2879 = vpop.f32.mrb[0].mxu0
      %v2880 = vadd.f32 0.0, %v2879
      %v2881 = vpop.f32.mrb[0].mxu0
      %v2882 = vpop.f32.mrb[0].mxu0
      %v2883 = vadd.f32 0.0, %v2882
      %v2884 = vpop.f32.mrb[0].mxu0
      %2885 = vmatprep.mubr.bf16.mxu0 0
      %2886 = vmatmul.mubr.bf16.gmra.mrb[0].mxu0 %v2795
      %v2887 = vpop.f32.mrb[0].mxu0
      %v2888 = vadd.f32 0.0, %v2887
      %v2889 = vpop.f32.mrb[0].mxu0
      %v2890 = vpop.f32.mrb[0].mxu0
      %v2891 = vadd.f32 0.0, %v2890
      %v2892 = vpop.f32.mrb[0].mxu0
      %2893 = vdwg.mxu0
      %v2894 = vadd.f32 %v2652, %v2832
      %v2895 = vadd.f32 %v2655, %v2835
      %v2896 = vadd.f32 %v2660, %v2840
      %v2897 = vadd.f32 %v2663, %v2843
      %v2898 = vadd.f32 %v2668, %v2848
      %v2899 = vadd.f32 %v2671, %v2851
      %v2900 = vadd.f32 %v2676, %v2856
      %v2901 = vadd.f32 %v2679, %v2859
      %v2902 = vadd.f32 %v2684, %v2864
      %v2903 = vadd.f32 %v2687, %v2867
      %v2904 = vadd.f32 %v2692, %v2872
      %v2905 = vadd.f32 %v2695, %v2875
      %v2906 = vadd.f32 %v2700, %v2880
      %v2907 = vadd.f32 %v2703, %v2883
      %v2908 = vadd.f32 %v2708, %v2888
      %v2909 = vadd.f32 %v2711, %v2891
      %v2910 = vld [vmem:[%s1380] sm:$0xf]
      %v2911 = vld [vmem:[%s1380 + $0x4] sm:$0xf]
      %v2912 = vld [vmem:[%s1380 + $0x8] sm:$0xf]
      %v2913 = vld [vmem:[%s1380 + $0xc] sm:$0xf]
      %v2914 = vld [vmem:[%s1380 + $0x10] sm:$0xf]
      %v2915 = vld [vmem:[%s1380 + $0x14] sm:$0xf]
      %v2916 = vld [vmem:[%s1380 + $0x18] sm:$0xf]
      %v2917 = vld [vmem:[%s1380 + $0x1c] sm:$0xf]
      %v2918 = vld [vmem:[%s1380 + $0x20] sm:$0xf]
      %v2919 = vld [vmem:[%s1380 + $0x24] sm:$0xf]
      %v2920 = vld [vmem:[%s1380 + $0x28] sm:$0xf]
      %v2921 = vld [vmem:[%s1380 + $0x2c] sm:$0xf]
      %v2922 = vld [vmem:[%s1380 + $0x30] sm:$0xf]
      %v2923 = vld [vmem:[%s1380 + $0x34] sm:$0xf]
      %v2924 = vld [vmem:[%s1380 + $0x38] sm:$0xf]
      %v2925 = vld [vmem:[%s1380 + $0x3c] sm:$0xf]
      %v2942 = vunpack.c.l.b16 %v2910
      %v2943 = vunpack.c.l.b16 %v2911
      %v2944 = vunpack.c.l.b16 %v2912
      %v2945 = vunpack.c.l.b16 %v2913
      %v2946 = vunpack.c.l.b16 %v2914
      %v2947 = vunpack.c.l.b16 %v2915
      %v2948 = vunpack.c.l.b16 %v2916
      %v2949 = vunpack.c.l.b16 %v2917
      %v2950 = vunpack.c.l.b16 %v2918
      %v2951 = vunpack.c.l.b16 %v2919
      %v2952 = vunpack.c.l.b16 %v2920
      %v2953 = vunpack.c.l.b16 %v2921
      %v2954 = vunpack.c.l.b16 %v2922
      %v2955 = vunpack.c.l.b16 %v2923
      %v2956 = vunpack.c.l.b16 %v2924
      %v2957 = vunpack.c.l.b16 %v2925
      %v2958 = vpack.c.b16 %v2943, %v2942
      %v2959 = vpack.c.b16 %v2945, %v2944
      %v2960 = vpack.c.b16 %v2947, %v2946
      %v2961 = vpack.c.b16 %v2949, %v2948
      %v2962 = vpack.c.b16 %v2951, %v2950
      %v2963 = vpack.c.b16 %v2953, %v2952
      %v2964 = vpack.c.b16 %v2955, %v2954
      %v2965 = vpack.c.b16 %v2957, %v2956
      %2966 = vrot.lane.b32.xlu0 %v2355, 80
      %v2967 = vpop.permute.xlu0 %2966
      %v2970 = vsel %vm900, %v2958, 0
      %v2973 = vsel %vm900, %v2959, 0
      %v2976 = vsel %vm900, %v2960, 0
      %v2979 = vsel %vm900, %v2961, 0
      %v2982 = vsel %vm900, %v2962, 0
      %v2985 = vsel %vm900, %v2963, 0
      %v2988 = vsel %vm900, %v2964, 0
      %v2991 = vsel %vm900, %v2965, 0
      %2993 = vmatprep.subr.bf16.mxu0 0
      %2994 = vmatpush1.bf16.msra.mxu0 %v2967
      %2995 = vmatprep.subr.bf16.mxu0 0
      %2996 = vmatpush1.bf16.msra.mxu0 0
      %2997 = vmatprep.subr.bf16.mxu0 0
      %2998 = vmatpush1.bf16.msra.mxu0 0
      %2999 = vmatprep.subr.bf16.mxu0 0
      %3000 = vmatpush1.bf16.msra.mxu0 0
      %3001 = vmatprep.subr.bf16.mxu0 0
      %3002 = vmatpush1.bf16.msra.mxu0 0
      %3003 = vmatprep.subr.bf16.mxu0 0
      %3004 = vmatpush1.bf16.msra.mxu0 0
      %3005 = vmatprep.subr.bf16.mxu0 0
      %3006 = vmatpush1.bf16.msra.mxu0 0
      %3007 = vmatprep.subr.bf16.mxu0 0
      %3008 = vmatpush1.bf16.msra.mxu0 0
      %3009 = vmatprep.subr.bf16.mxu0 0
      %3010 = vmatpush1.bf16.msra.mxu0 0
      %3011 = vmatprep.subr.bf16.mxu0 0
      %3012 = vmatpush1.bf16.msra.mxu0 0
      %3013 = vmatprep.subr.bf16.mxu0 0
      %3014 = vmatpush1.bf16.msra.mxu0 0
      %3015 = vmatprep.subr.bf16.mxu0 0
      %3016 = vmatpush1.bf16.msra.mxu0 0
      %3017 = vmatprep.subr.bf16.mxu0 0
      %3018 = vmatpush1.bf16.msra.mxu0 0
      %3019 = vmatprep.subr.bf16.mxu0 0
      %3020 = vmatpush1.bf16.msra.mxu0 0
      %3021 = vmatprep.subr.bf16.mxu0 0
      %3022 = vmatpush1.bf16.msra.mxu0 0
      %3023 = vmatprep.subr.bf16.mxu0 0
      %3024 = vmatpush1.bf16.msra.mxu0 0
      %3025 = vmatprep.mubr.bf16.mxu0 0
      %3026 = vmatmul.mubr.bf16.gmra.mrb[0].mxu0 %v2970
      %v3027 = vpop.f32.mrb[0].mxu0
      %v3028 = vadd.f32 0.0, %v3027
      %v3029 = vpop.f32.mrb[0].mxu0
      %v3030 = vpop.f32.mrb[0].mxu0
      %v3031 = vadd.f32 0.0, %v3030
      %v3032 = vpop.f32.mrb[0].mxu0
      %3033 = vmatprep.mubr.bf16.mxu0 0
      %3034 = vmatmul.mubr.bf16.gmra.mrb[0].mxu0 %v2973
      %v3035 = vpop.f32.mrb[0].mxu0
      %v3036 = vadd.f32 0.0, %v3035
      %v3037 = vpop.f32.mrb[0].mxu0
      %v3038 = vpop.f32.mrb[0].mxu0
      %v3039 = vadd.f32 0.0, %v3038
      %v3040 = vpop.f32.mrb[0].mxu0
      %3041 = vmatprep.mubr.bf16.mxu0 0
      %3042 = vmatmul.mubr.bf16.gmra.mrb[0].mxu0 %v2976
      %v3043 = vpop.f32.mrb[0].mxu0
      %v3044 = vadd.f32 0.0, %v3043
      %v3045 = vpop.f32.mrb[0].mxu0
      %v3046 = vpop.f32.mrb[0].mxu0
      %v3047 = vadd.f32 0.0, %v3046
      %v3048 = vpop.f32.mrb[0].mxu0
      %3049 = vmatprep.mubr.bf16.mxu0 0
      %3050 = vmatmul.mubr.bf16.gmra.mrb[0].mxu0 %v2979
      %v3051 = vpop.f32.mrb[0].mxu0
      %v3052 = vadd.f32 0.0, %v3051
      %v3053 = vpop.f32.mrb[0].mxu0
      %v3054 = vpop.f32.mrb[0].mxu0
      %v3055 = vadd.f32 0.0, %v3054
      %v3056 = vpop.f32.mrb[0].mxu0
      %3057 = vmatprep.mubr.bf16.mxu0 0
      %3058 = vmatmul.mubr.bf16.gmra.mrb[0].mxu0 %v2982
      %v3059 = vpop.f32.mrb[0].mxu0
      %v3060 = vadd.f32 0.0, %v3059
      %v3061 = vpop.f32.mrb[0].mxu0
      %v3062 = vpop.f32.mrb[0].mxu0
      %v3063 = vadd.f32 0.0, %v3062
      %v3064 = vpop.f32.mrb[0].mxu0
      %3065 = vmatprep.mubr.bf16.mxu0 0
      %3066 = vmatmul.mubr.bf16.gmra.mrb[0].mxu0 %v2985
      %v3067 = vpop.f32.mrb[0].mxu0
      %v3068 = vadd.f32 0.0, %v3067
      %v3069 = vpop.f32.mrb[0].mxu0
      %v3070 = vpop.f32.mrb[0].mxu0
      %v3071 = vadd.f32 0.0, %v3070
      %v3072 = vpop.f32.mrb[0].mxu0
      %3073 = vmatprep.mubr.bf16.mxu0 0
      %3074 = vmatmul.mubr.bf16.gmra.mrb[0].mxu0 %v2988
      %v3075 = vpop.f32.mrb[0].mxu0
      %v3076 = vadd.f32 0.0, %v3075
      %v3077 = vpop.f32.mrb[0].mxu0
      %v3078 = vpop.f32.mrb[0].mxu0
      %v3079 = vadd.f32 0.0, %v3078
      %v3080 = vpop.f32.mrb[0].mxu0
      %3081 = vmatprep.mubr.bf16.mxu0 0
      %3082 = vmatmul.mubr.bf16.gmra.mrb[0].mxu0 %v2991
      %v3083 = vpop.f32.mrb[0].mxu0
      %v3084 = vadd.f32 0.0, %v3083
      %v3085 = vpop.f32.mrb[0].mxu0
      %v3086 = vpop.f32.mrb[0].mxu0
      %v3087 = vadd.f32 0.0, %v3086
      %v3088 = vpop.f32.mrb[0].mxu0
      %3089 = vdwg.mxu0
      %v3090 = vadd.f32 %v2894, %v3028
      %v3091 = vadd.f32 %v2895, %v3031
      %v3092 = vadd.f32 %v2896, %v3036
      %v3093 = vadd.f32 %v2897, %v3039
      %v3094 = vadd.f32 %v2898, %v3044
      %v3095 = vadd.f32 %v2899, %v3047
      %v3096 = vadd.f32 %v2900, %v3052
      %v3097 = vadd.f32 %v2901, %v3055
      %v3098 = vadd.f32 %v2902, %v3060
      %v3099 = vadd.f32 %v2903, %v3063
      %v3100 = vadd.f32 %v2904, %v3068
      %v3101 = vadd.f32 %v2905, %v3071
      %v3102 = vadd.f32 %v2906, %v3076
      %v3103 = vadd.f32 %v2907, %v3079
      %v3104 = vadd.f32 %v2908, %v3084
      %v3105 = vadd.f32 %v2909, %v3087
      %v3106 = vpack.c.bf16 %v3091, %v3090
      %v3107 = vpack.c.bf16 %v3093, %v3092
      %v3108 = vpack.c.bf16 %v3095, %v3094
      %v3109 = vpack.c.bf16 %v3097, %v3096
      %v3110 = vpack.c.bf16 %v3099, %v3098
      %v3111 = vpack.c.bf16 %v3101, %v3100
      %v3112 = vpack.c.bf16 %v3103, %v3102
      %v3113 = vpack.c.bf16 %v3105, %v3104
      %v3114 = vld [vmem:[%s6] sm:$0xf]
      %v3115 = vld [vmem:[%s6 + $0x4] sm:$0xf]
      %v3116 = vld [vmem:[%s1587] sm:$0xf]
      %v3117 = vld [vmem:[%s1587 + $0x4] sm:$0xf]
      %v3120 = vunpack.c.l.b16 %v3116
      %v3121 = vunpack.c.l.b16 %v3117
      %v3122 = vpack.c.b16 %v3121, %v3120
      %v3125 = vsel %vm900, %v3108, 0
      %v3128 = vsel %vm900, %v3109, 0
      %3130 = vmatprep.subr.bf16.mxu0 0
      %3131 = vmatpush1.bf16.msra.mxu0 %v3122
      %3132 = vmatprep.subr.bf16.mxu0 0
      %3133 = vmatpush1.bf16.msra.mxu0 0
      %3134 = vmatprep.subr.bf16.mxu0 0
      %3135 = vmatpush1.bf16.msra.mxu0 0
      %3136 = vmatprep.subr.bf16.mxu0 0
      %3137 = vmatpush1.bf16.msra.mxu0 0
      %3138 = vmatprep.subr.bf16.mxu0 0
      %3139 = vmatpush1.bf16.msra.mxu0 0
      %3140 = vmatprep.subr.bf16.mxu0 0
      %3141 = vmatpush1.bf16.msra.mxu0 0
      %3142 = vmatprep.subr.bf16.mxu0 0
      %3143 = vmatpush1.bf16.msra.mxu0 0
      %3144 = vmatprep.subr.bf16.mxu0 0
      %3145 = vmatpush1.bf16.msra.mxu0 0
      %3146 = vmatprep.subr.bf16.mxu0 0
      %3147 = vmatpush1.bf16.msra.mxu0 0
      %3148 = vmatprep.subr.bf16.mxu0 0
      %3149 = vmatpush1.bf16.msra.mxu0 0
      %3150 = vmatprep.subr.bf16.mxu0 0
      %3151 = vmatpush1.bf16.msra.mxu0 0
      %3152 = vmatprep.subr.bf16.mxu0 0
      %3153 = vmatpush1.bf16.msra.mxu0 0
      %3154 = vmatprep.subr.bf16.mxu0 0
      %3155 = vmatpush1.bf16.msra.mxu0 0
      %3156 = vmatprep.subr.bf16.mxu0 0
      %3157 = vmatpush1.bf16.msra.mxu0 0
      %3158 = vmatprep.subr.bf16.mxu0 0
      %3159 = vmatpush1.bf16.msra.mxu0 0
      %3160 = vmatprep.subr.bf16.mxu0 0
      %3161 = vmatpush1.bf16.msra.mxu0 0
      %3162 = vmatprep.mubr.bf16.mxu0 0
      %3163 = vmatmul.mubr.bf16.gmra.mrb[0].mxu0 %v3125
      %v3164 = vpop.f32.mrb[0].mxu0
      %v3165 = vadd.f32 0.0, %v3164
      %v3166 = vpop.f32.mrb[0].mxu0
      %v3167 = vpop.f32.mrb[0].mxu0
      %v3168 = vadd.f32 0.0, %v3167
      %v3169 = vpop.f32.mrb[0].mxu0
      %3170 = vmatprep.mubr.bf16.mxu0 0
      %3171 = vmatmul.mubr.bf16.gmra.mrb[0].mxu0 %v3128
      %v3172 = vpop.f32.mrb[0].mxu0
      %v3173 = vadd.f32 0.0, %v3172
      %v3174 = vpop.f32.mrb[0].mxu0
      %v3175 = vpop.f32.mrb[0].mxu0
      %v3176 = vadd.f32 0.0, %v3175
      %v3177 = vpop.f32.mrb[0].mxu0
      %3178 = vdwg.mxu0
      %v3181 = vunpack.c.l.b16 %v3114
      %v3182 = vunpack.c.l.b16 %v3115
      %v3183 = vpack.c.b16 %v3182, %v3181
      %v3186 = vsel %vm900, %v3106, 0
      %v3189 = vsel %vm900, %v3107, 0
      %3191 = vmatprep.subr.bf16.mxu0 0
      %3192 = vmatpush1.bf16.msra.mxu0 %v3183
      %3193 = vmatprep.subr.bf16.mxu0 0
      %3194 = vmatpush1.bf16.msra.mxu0 0
      %3195 = vmatprep.subr.bf16.mxu0 0
      %3196 = vmatpush1.bf16.msra.mxu0 0
      %3197 = vmatprep.subr.bf16.mxu0 0
      %3198 = vmatpush1.bf16.msra.mxu0 0
      %3199 = vmatprep.subr.bf16.mxu0 0
      %3200 = vmatpush1.bf16.msra.mxu0 0
      %3201 = vmatprep.subr.bf16.mxu0 0
      %3202 = vmatpush1.bf16.msra.mxu0 0
      %3203 = vmatprep.subr.bf16.mxu0 0
      %3204 = vmatpush1.bf16.msra.mxu0 0
      %3205 = vmatprep.subr.bf16.mxu0 0
      %3206 = vmatpush1.bf16.msra.mxu0 0
      %3207 = vmatprep.subr.bf16.mxu0 0
      %3208 = vmatpush1.bf16.msra.mxu0 0
      %3209 = vmatprep.subr.bf16.mxu0 0
      %3210 = vmatpush1.bf16.msra.mxu0 0
      %3211 = vmatprep.subr.bf16.mxu0 0
      %3212 = vmatpush1.bf16.msra.mxu0 0
      %3213 = vmatprep.subr.bf16.mxu0 0
      %3214 = vmatpush1.bf16.msra.mxu0 0
      %3215 = vmatprep.subr.bf16.mxu0 0
      %3216 = vmatpush1.bf16.msra.mxu0 0
      %3217 = vmatprep.subr.bf16.mxu0 0
      %3218 = vmatpush1.bf16.msra.mxu0 0
      %3219 = vmatprep.subr.bf16.mxu0 0
      %3220 = vmatpush1.bf16.msra.mxu0 0
      %3221 = vmatprep.subr.bf16.mxu0 0
      %3222 = vmatpush1.bf16.msra.mxu0 0
      %3223 = vmatprep.mubr.bf16.mxu0 0
      %3224 = vmatmul.mubr.bf16.gmra.mrb[0].mxu0 %v3186
      %v3225 = vpop.f32.mrb[0].mxu0
      %v3226 = vadd.f32 %v3165, %v3225
      %v3227 = vpop.f32.mrb[0].mxu0
      %v3228 = vpop.f32.mrb[0].mxu0
      %v3229 = vadd.f32 %v3168, %v3228
      %v3230 = vpop.f32.mrb[0].mxu0
      %3231 = vmatprep.mubr.bf16.mxu0 0
      %3232 = vmatmul.mubr.bf16.gmra.mrb[0].mxu0 %v3189
      %v3233 = vpop.f32.mrb[0].mxu0
      %v3234 = vadd.f32 %v3173, %v3233
      %v3235 = vpop.f32.mrb[0].mxu0
      %v3236 = vpop.f32.mrb[0].mxu0
      %v3237 = vadd.f32 %v3176, %v3236
      %v3238 = vpop.f32.mrb[0].mxu0
      %3239 = vdwg.mxu0
      %v3240 = vld [vmem:[%s1712] sm:$0xf]
      %v3241 = vld [vmem:[%s1712 + $0x4] sm:$0xf]
      %v3244 = vunpack.c.l.b16 %v3240
      %v3245 = vunpack.c.l.b16 %v3241
      %v3246 = vpack.c.b16 %v3245, %v3244
      %v3249 = vsel %vm900, %v3110, 0
      %v3252 = vsel %vm900, %v3111, 0
      %3254 = vmatprep.subr.bf16.mxu0 0
      %3255 = vmatpush1.bf16.msra.mxu0 %v3246
      %3256 = vmatprep.subr.bf16.mxu0 0
      %3257 = vmatpush1.bf16.msra.mxu0 0
      %3258 = vmatprep.subr.bf16.mxu0 0
      %3259 = vmatpush1.bf16.msra.mxu0 0
      %3260 = vmatprep.subr.bf16.mxu0 0
      %3261 = vmatpush1.bf16.msra.mxu0 0
      %3262 = vmatprep.subr.bf16.mxu0 0
      %3263 = vmatpush1.bf16.msra.mxu0 0
      %3264 = vmatprep.subr.bf16.mxu0 0
      %3265 = vmatpush1.bf16.msra.mxu0 0
      %3266 = vmatprep.subr.bf16.mxu0 0
      %3267 = vmatpush1.bf16.msra.mxu0 0
      %3268 = vmatprep.subr.bf16.mxu0 0
      %3269 = vmatpush1.bf16.msra.mxu0 0
      %3270 = vmatprep.subr.bf16.mxu0 0
      %3271 = vmatpush1.bf16.msra.mxu0 0
      %3272 = vmatprep.subr.bf16.mxu0 0
      %3273 = vmatpush1.bf16.msra.mxu0 0
      %3274 = vmatprep.subr.bf16.mxu0 0
      %3275 = vmatpush1.bf16.msra.mxu0 0
      %3276 = vmatprep.subr.bf16.mxu0 0
      %3277 = vmatpush1.bf16.msra.mxu0 0
      %3278 = vmatprep.subr.bf16.mxu0 0
      %3279 = vmatpush1.bf16.msra.mxu0 0
      %3280 = vmatprep.subr.bf16.mxu0 0
      %3281 = vmatpush1.bf16.msra.mxu0 0
      %3282 = vmatprep.subr.bf16.mxu0 0
      %3283 = vmatpush1.bf16.msra.mxu0 0
      %3284 = vmatprep.subr.bf16.mxu0 0
      %3285 = vmatpush1.bf16.msra.mxu0 0
      %3286 = vmatprep.mubr.bf16.mxu0 0
      %3287 = vmatmul.mubr.bf16.gmra.mrb[0].mxu0 %v3249
      %v3288 = vpop.f32.mrb[0].mxu0
      %v3289 = vadd.f32 0.0, %v3288
      %v3290 = vpop.f32.mrb[0].mxu0
      %v3291 = vpop.f32.mrb[0].mxu0
      %v3292 = vadd.f32 0.0, %v3291
      %v3293 = vpop.f32.mrb[0].mxu0
      %3294 = vmatprep.mubr.bf16.mxu0 0
      %3295 = vmatmul.mubr.bf16.gmra.mrb[0].mxu0 %v3252
      %v3296 = vpop.f32.mrb[0].mxu0
      %v3297 = vadd.f32 0.0, %v3296
      %v3298 = vpop.f32.mrb[0].mxu0
      %v3299 = vpop.f32.mrb[0].mxu0
      %v3300 = vadd.f32 0.0, %v3299
      %v3301 = vpop.f32.mrb[0].mxu0
      %3302 = vdwg.mxu0
      %v3303 = vadd.f32 %v3226, %v3289
      %v3304 = vadd.f32 %v3229, %v3292
      %v3305 = vadd.f32 %v3234, %v3297
      %v3306 = vadd.f32 %v3237, %v3300
      %v3307 = vld [vmem:[%s1780] sm:$0xf]
      %v3308 = vld [vmem:[%s1780 + $0x4] sm:$0xf]
      %v3311 = vunpack.c.l.b16 %v3307
      %v3312 = vunpack.c.l.b16 %v3308
      %v3313 = vpack.c.b16 %v3312, %v3311
      %v3316 = vsel %vm900, %v3112, 0
      %v3319 = vsel %vm900, %v3113, 0
      %3321 = vmatprep.subr.bf16.mxu0 0
      %3322 = vmatpush1.bf16.msra.mxu0 %v3313
      %3323 = vmatprep.subr.bf16.mxu0 0
      %3324 = vmatpush1.bf16.msra.mxu0 0
      %3325 = vmatprep.subr.bf16.mxu0 0
      %3326 = vmatpush1.bf16.msra.mxu0 0
      %3327 = vmatprep.subr.bf16.mxu0 0
      %3328 = vmatpush1.bf16.msra.mxu0 0
      %3329 = vmatprep.subr.bf16.mxu0 0
      %3330 = vmatpush1.bf16.msra.mxu0 0
      %3331 = vmatprep.subr.bf16.mxu0 0
      %3332 = vmatpush1.bf16.msra.mxu0 0
      %3333 = vmatprep.subr.bf16.mxu0 0
      %3334 = vmatpush1.bf16.msra.mxu0 0
      %3335 = vmatprep.subr.bf16.mxu0 0
      %3336 = vmatpush1.bf16.msra.mxu0 0
      %3337 = vmatprep.subr.bf16.mxu0 0
      %3338 = vmatpush1.bf16.msra.mxu0 0
      %3339 = vmatprep.subr.bf16.mxu0 0
      %3340 = vmatpush1.bf16.msra.mxu0 0
      %3341 = vmatprep.subr.bf16.mxu0 0
      %3342 = vmatpush1.bf16.msra.mxu0 0
      %3343 = vmatprep.subr.bf16.mxu0 0
      %3344 = vmatpush1.bf16.msra.mxu0 0
      %3345 = vmatprep.subr.bf16.mxu0 0
      %3346 = vmatpush1.bf16.msra.mxu0 0
      %3347 = vmatprep.subr.bf16.mxu0 0
      %3348 = vmatpush1.bf16.msra.mxu0 0
      %3349 = vmatprep.subr.bf16.mxu0 0
      %3350 = vmatpush1.bf16.msra.mxu0 0
      %3351 = vmatprep.subr.bf16.mxu0 0
      %3352 = vmatpush1.bf16.msra.mxu0 0
      %3353 = vmatprep.mubr.bf16.mxu0 0
      %3354 = vmatmul.mubr.bf16.gmra.mrb[0].mxu0 %v3316
      %v3355 = vpop.f32.mrb[0].mxu0
      %v3356 = vadd.f32 0.0, %v3355
      %v3357 = vpop.f32.mrb[0].mxu0
      %v3358 = vpop.f32.mrb[0].mxu0
      %v3359 = vadd.f32 0.0, %v3358
      %v3360 = vpop.f32.mrb[0].mxu0
      %3361 = vmatprep.mubr.bf16.mxu0 0
      %3362 = vmatmul.mubr.bf16.gmra.mrb[0].mxu0 %v3319
      %v3363 = vpop.f32.mrb[0].mxu0
      %v3364 = vadd.f32 0.0, %v3363
      %v3365 = vpop.f32.mrb[0].mxu0
      %v3366 = vpop.f32.mrb[0].mxu0
      %v3367 = vadd.f32 0.0, %v3366
      %v3368 = vpop.f32.mrb[0].mxu0
      %3369 = vdwg.mxu0
      %v3370 = vadd.f32 %v3303, %v3356
      %v3371 = vadd.f32 %v3304, %v3359
      %v3372 = vadd.f32 %v3305, %v3364
      %v3373 = vadd.f32 %v3306, %v3367
      %v3374 = vadd.f32 %v3370, %v1851
      %v3375 = vadd.f32 %v3371, %v1856
      %v3376 = vadd.f32 %v3372, %v1861
      %v3377 = vadd.f32 %v3373, %v1866
      %v3378 = vmax.f32 %v3374, 0.0
      %v3379 = vmax.f32 %v3375, 0.0
      %v3380 = vmax.f32 %v3376, 0.0
      %v3381 = vmax.f32 %v3377, 0.0
      %3386 = vrot.lane.b32.xlu0 %v3378, 9
      %v3387 = vpop.permute.xlu0 %3386
      %3388 = vrot.lane.b32.xlu0 %v3379, 9
      %v3389 = vpop.permute.xlu0 %3388
      %3390 = vrot.lane.b32.xlu0 %v3380, 9
      %v3391 = vpop.permute.xlu0 %3390
      %3392 = vrot.lane.b32.xlu0 %v3381, 9
      %v3393 = vpop.permute.xlu0 %3392
      %vm3398 = vcmask 146504
      %3399 = vst.msk [vmem:[%s283] sm:$0xff] %vm3398, %v3387
      %3400 = vst.msk [vmem:[%s283 + $0x8] sm:$0xff] %vm3398, %v3389
      %3401 = vst.msk [vmem:[%s283 + $0x10] sm:$0xff] %vm3398, %v3391
      %3402 = vst.msk [vmem:[%s283 + $0x18] sm:$0xff] %vm3398, %v3393
      %s3403 = scalar_lea.vmem %s277, 64
      %v3404 = vld [vmem:[%s3403] sm:$0xf]
      %v3405 = vld [vmem:[%s3403 + $0x4] sm:$0xf]
      %v3406 = vld [vmem:[%s3403 + $0x8] sm:$0xf]
      %v3407 = vld [vmem:[%s3403 + $0xc] sm:$0xf]
      %v3408 = vld [vmem:[%s3403 + $0x10] sm:$0xf]
      %v3409 = vld [vmem:[%s3403 + $0x14] sm:$0xf]
      %v3410 = vld [vmem:[%s3403 + $0x18] sm:$0xf]
      %v3411 = vld [vmem:[%s3403 + $0x1c] sm:$0xf]
      %v3420 = vunpack.c.l.b16 %v3404
      %v3421 = vunpack.c.l.b16 %v3405
      %v3422 = vunpack.c.l.b16 %v3406
      %v3423 = vunpack.c.l.b16 %v3407
      %v3424 = vunpack.c.l.b16 %v3408
      %v3425 = vunpack.c.l.b16 %v3409
      %v3426 = vunpack.c.l.b16 %v3410
      %v3427 = vunpack.c.l.b16 %v3411
      %v3428 = vpack.c.b16 %v3421, %v3420
      %v3429 = vpack.c.b16 %v3423, %v3422
      %v3430 = vpack.c.b16 %v3425, %v3424
      %v3431 = vpack.c.b16 %v3427, %v3426
      %3436 = vmatprep.subr.bf16.mxu0 0
      %3437 = vmatpush1.bf16.msra.mxu0 %v3428
      %3438 = vmatprep.subr.bf16.mxu0 0
      %3439 = vmatpush1.bf16.msra.mxu0 %v3429
      %3440 = vmatprep.subr.bf16.mxu0 0
      %3441 = vmatpush1.bf16.msra.mxu0 %v3430
      %3442 = vmatprep.subr.bf16.mxu0 0
      %3443 = vmatpush1.bf16.msra.mxu0 %v3431
      %3444 = vmatprep.subr.bf16.mxu0 0
      %3445 = vmatpush1.bf16.msra.mxu0 0
      %3446 = vmatprep.subr.bf16.mxu0 0
      %3447 = vmatpush1.bf16.msra.mxu0 0
      %3448 = vmatprep.subr.bf16.mxu0 0
      %3449 = vmatpush1.bf16.msra.mxu0 0
      %3450 = vmatprep.subr.bf16.mxu0 0
      %3451 = vmatpush1.bf16.msra.mxu0 0
      %3452 = vmatprep.subr.bf16.mxu0 0
      %3453 = vmatpush1.bf16.msra.mxu0 0
      %3454 = vmatprep.subr.bf16.mxu0 0
      %3455 = vmatpush1.bf16.msra.mxu0 0
      %3456 = vmatprep.subr.bf16.mxu0 0
      %3457 = vmatpush1.bf16.msra.mxu0 0
      %3458 = vmatprep.subr.bf16.mxu0 0
      %3459 = vmatpush1.bf16.msra.mxu0 0
      %3460 = vmatprep.subr.bf16.mxu0 0
      %3461 = vmatpush1.bf16.msra.mxu0 0
      %3462 = vmatprep.subr.bf16.mxu0 0
      %3463 = vmatpush1.bf16.msra.mxu0 0
      %3464 = vmatprep.subr.bf16.mxu0 0
      %3465 = vmatpush1.bf16.msra.mxu0 0
      %3466 = vmatprep.subr.bf16.mxu0 0
      %3467 = vmatpush1.bf16.msra.mxu0 0
      %3468 = vmatprep.mubr.bf16.mxu0 0
      %3469 = vmatmul.mubr.bf16.gmra.mrb[0].mxu0 %v353
      %v3470 = vpop.f32.mrb[0].mxu0
      %v3471 = vadd.f32 0.0, %v3470
      %v3472 = vpop.f32.mrb[0].mxu0
      %v3473 = vpop.f32.mrb[0].mxu0
      %v3474 = vadd.f32 0.0, %v3473
      %v3475 = vpop.f32.mrb[0].mxu0
      %3476 = vmatprep.mubr.bf16.mxu0 0
      %3477 = vmatmul.mubr.bf16.gmra.mrb[0].mxu0 %v356
      %v3478 = vpop.f32.mrb[0].mxu0
      %v3479 = vadd.f32 0.0, %v3478
      %v3480 = vpop.f32.mrb[0].mxu0
      %v3481 = vpop.f32.mrb[0].mxu0
      %v3482 = vadd.f32 0.0, %v3481
      %v3483 = vpop.f32.mrb[0].mxu0
      %3484 = vmatprep.mubr.bf16.mxu0 0
      %3485 = vmatmul.mubr.bf16.gmra.mrb[0].mxu0 %v359
      %v3486 = vpop.f32.mrb[0].mxu0
      %v3487 = vadd.f32 0.0, %v3486
      %v3488 = vpop.f32.mrb[0].mxu0
      %v3489 = vpop.f32.mrb[0].mxu0
      %v3490 = vadd.f32 0.0, %v3489
      %v3491 = vpop.f32.mrb[0].mxu0
      %3492 = vmatprep.mubr.bf16.mxu0 0
      %3493 = vmatmul.mubr.bf16.gmra.mrb[0].mxu0 %v362
      %v3494 = vpop.f32.mrb[0].mxu0
      %v3495 = vadd.f32 0.0, %v3494
      %v3496 = vpop.f32.mrb[0].mxu0
      %v3497 = vpop.f32.mrb[0].mxu0
      %v3498 = vadd.f32 0.0, %v3497
      %v3499 = vpop.f32.mrb[0].mxu0
      %3500 = vdwg.mxu0
      %v3501 = vpack.c.bf16 %v3474, %v3471
      %v3502 = vpack.c.bf16 %v3482, %v3479
      %v3503 = vpack.c.bf16 %v3490, %v3487
      %v3504 = vpack.c.bf16 %v3498, %v3495
      %v3505 = vld [vmem:[%s3] sm:$0xf]
      %v3506 = vld [vmem:[%s3 + $0x4] sm:$0xf]
      %v3507 = vld [vmem:[%s3 + $0x8] sm:$0xf]
      %v3508 = vld [vmem:[%s3 + $0xc] sm:$0xf]
      %v3509 = vld [vmem:[%s3 + $0x10] sm:$0xf]
      %v3510 = vld [vmem:[%s3 + $0x14] sm:$0xf]
      %v3511 = vld [vmem:[%s3 + $0x18] sm:$0xf]
      %v3512 = vld [vmem:[%s3 + $0x1c] sm:$0xf]
      %v3513 = vld [vmem:[%s3 + $0x20] sm:$0xf]
      %v3514 = vld [vmem:[%s3 + $0x24] sm:$0xf]
      %v3515 = vld [vmem:[%s3 + $0x28] sm:$0x1]
      %v3516 = vld [vmem:[%s444] sm:$0xf]
      %v3517 = vld [vmem:[%s444 + $0x4] sm:$0xf]
      %v3518 = vld [vmem:[%s444 + $0x8] sm:$0xf]
      %v3519 = vld [vmem:[%s444 + $0xc] sm:$0xf]
      %v3520 = vld [vmem:[%s444 + $0x10] sm:$0xf]
      %v3521 = vld [vmem:[%s444 + $0x14] sm:$0xf]
      %v3522 = vld [vmem:[%s444 + $0x18] sm:$0xf]
      %v3523 = vld [vmem:[%s444 + $0x1c] sm:$0xf]
      %v3524 = vld [vmem:[%s444 + $0x20] sm:$0xf]
      %v3525 = vld [vmem:[%s444 + $0x24] sm:$0xf]
      %v3526 = vld [vmem:[%s444 + $0x28] sm:$0x1]
      %v3538 = vunpack.c.l.b16 %v3516
      %v3539 = vunpack.c.l.b16 %v3517
      %v3540 = vunpack.c.l.b16 %v3518
      %v3541 = vunpack.c.l.b16 %v3519
      %v3542 = vunpack.c.l.b16 %v3520
      %v3543 = vunpack.c.l.b16 %v3521
      %v3544 = vunpack.c.l.b16 %v3522
      %v3545 = vunpack.c.l.b16 %v3523
      %v3546 = vunpack.c.l.b16 %v3524
      %v3547 = vunpack.c.l.b16 %v3525
      %v3548 = vunpack.c.l.b16 %v3526
      %v3549 = vpack.c.b16 %v3539, %v3538
      %v3550 = vpack.c.b16 %v3541, %v3540
      %v3551 = vpack.c.b16 %v3543, %v3542
      %v3552 = vpack.c.b16 %v3545, %v3544
      %v3553 = vpack.c.b16 %v3547, %v3546
      %v3554 = vpack.c.b16 %v3548, %v3548
      %v3561 = vsel %vm489, %v3502, 0
      %v3564 = vand.u32 %v3554, %v495
      %3566 = vmatprep.subr.bf16.mxu0 0
      %3567 = vmatpush1.bf16.msra.mxu0 %v3549
      %3568 = vmatprep.subr.bf16.mxu0 0
      %3569 = vmatpush1.bf16.msra.mxu0 %v3550
      %3570 = vmatprep.subr.bf16.mxu0 0
      %3571 = vmatpush1.bf16.msra.mxu0 %v3551
      %3572 = vmatprep.subr.bf16.mxu0 0
      %3573 = vmatpush1.bf16.msra.mxu0 %v3552
      %3574 = vmatprep.subr.bf16.mxu0 0
      %3575 = vmatpush1.bf16.msra.mxu0 %v3553
      %3576 = vmatprep.subr.bf16.mxu0 0
      %3577 = vmatpush1.bf16.msra.mxu0 %v3564
      %3578 = vmatprep.subr.bf16.mxu0 0
      %3579 = vmatpush1.bf16.msra.mxu0 0
      %3580 = vmatprep.subr.bf16.mxu0 0
      %3581 = vmatpush1.bf16.msra.mxu0 0
      %3582 = vmatprep.subr.bf16.mxu0 0
      %3583 = vmatpush1.bf16.msra.mxu0 0
      %3584 = vmatprep.subr.bf16.mxu0 0
      %3585 = vmatpush1.bf16.msra.mxu0 0
      %3586 = vmatprep.subr.bf16.mxu0 0
      %3587 = vmatpush1.bf16.msra.mxu0 0
      %3588 = vmatprep.subr.bf16.mxu0 0
      %3589 = vmatpush1.bf16.msra.mxu0 0
      %3590 = vmatprep.subr.bf16.mxu0 0
      %3591 = vmatpush1.bf16.msra.mxu0 0
      %3592 = vmatprep.subr.bf16.mxu0 0
      %3593 = vmatpush1.bf16.msra.mxu0 0
      %3594 = vmatprep.subr.bf16.mxu0 0
      %3595 = vmatpush1.bf16.msra.mxu0 0
      %3596 = vmatprep.subr.bf16.mxu0 0
      %3597 = vmatpush1.bf16.msra.mxu0 0
      %3598 = vmatprep.mubr.bf16.mxu0 0
      %3599 = vmatmul.mubr.bf16.gmra.mrb[0].mxu0 %v3561
      %v3600 = vpop.f32.mrb[0].mxu0
      %v3601 = vadd.f32 0.0, %v3600
      %v3602 = vpop.f32.mrb[0].mxu0
      %v3603 = vpop.f32.mrb[0].mxu0
      %v3604 = vadd.f32 0.0, %v3603
      %v3605 = vpop.f32.mrb[0].mxu0
      %3606 = vdwg.mxu0
      %v3618 = vunpack.c.l.b16 %v3505
      %v3619 = vunpack.c.l.b16 %v3506
      %v3620 = vunpack.c.l.b16 %v3507
      %v3621 = vunpack.c.l.b16 %v3508
      %v3622 = vunpack.c.l.b16 %v3509
      %v3623 = vunpack.c.l.b16 %v3510
      %v3624 = vunpack.c.l.b16 %v3511
      %v3625 = vunpack.c.l.b16 %v3512
      %v3626 = vunpack.c.l.b16 %v3513
      %v3627 = vunpack.c.l.b16 %v3514
      %v3628 = vunpack.c.l.b16 %v3515
      %v3629 = vpack.c.b16 %v3619, %v3618
      %v3630 = vpack.c.b16 %v3621, %v3620
      %v3631 = vpack.c.b16 %v3623, %v3622
      %v3632 = vpack.c.b16 %v3625, %v3624
      %v3633 = vpack.c.b16 %v3627, %v3626
      %v3634 = vpack.c.b16 %v3628, %v3628
      %v3641 = vsel %vm489, %v3501, 0
      %v3644 = vand.u32 %v3634, %v495
      %3646 = vmatprep.subr.bf16.mxu0 0
      %3647 = vmatpush1.bf16.msra.mxu0 %v3629
      %3648 = vmatprep.subr.bf16.mxu0 0
      %3649 = vmatpush1.bf16.msra.mxu0 %v3630
      %3650 = vmatprep.subr.bf16.mxu0 0
      %3651 = vmatpush1.bf16.msra.mxu0 %v3631
      %3652 = vmatprep.subr.bf16.mxu0 0
      %3653 = vmatpush1.bf16.msra.mxu0 %v3632
      %3654 = vmatprep.subr.bf16.mxu0 0
      %3655 = vmatpush1.bf16.msra.mxu0 %v3633
      %3656 = vmatprep.subr.bf16.mxu0 0
      %3657 = vmatpush1.bf16.msra.mxu0 %v3644
      %3658 = vmatprep.subr.bf16.mxu0 0
      %3659 = vmatpush1.bf16.msra.mxu0 0
      %3660 = vmatprep.subr.bf16.mxu0 0
      %3661 = vmatpush1.bf16.msra.mxu0 0
      %3662 = vmatprep.subr.bf16.mxu0 0
      %3663 = vmatpush1.bf16.msra.mxu0 0
      %3664 = vmatprep.subr.bf16.mxu0 0
      %3665 = vmatpush1.bf16.msra.mxu0 0
      %3666 = vmatprep.subr.bf16.mxu0 0
      %3667 = vmatpush1.bf16.msra.mxu0 0
      %3668 = vmatprep.subr.bf16.mxu0 0
      %3669 = vmatpush1.bf16.msra.mxu0 0
      %3670 = vmatprep.subr.bf16.mxu0 0
      %3671 = vmatpush1.bf16.msra.mxu0 0
      %3672 = vmatprep.subr.bf16.mxu0 0
      %3673 = vmatpush1.bf16.msra.mxu0 0
      %3674 = vmatprep.subr.bf16.mxu0 0
      %3675 = vmatpush1.bf16.msra.mxu0 0
      %3676 = vmatprep.subr.bf16.mxu0 0
      %3677 = vmatpush1.bf16.msra.mxu0 0
      %3678 = vmatprep.mubr.bf16.mxu0 0
      %3679 = vmatmul.mubr.bf16.gmra.mrb[0].mxu0 %v3641
      %v3680 = vpop.f32.mrb[0].mxu0
      %v3681 = vadd.f32 %v3601, %v3680
      %v3682 = vpop.f32.mrb[0].mxu0
      %v3683 = vpop.f32.mrb[0].mxu0
      %v3684 = vadd.f32 %v3604, %v3683
      %v3685 = vpop.f32.mrb[0].mxu0
      %3686 = vdwg.mxu0
      %v3687 = vld [vmem:[%s620] sm:$0xf]
      %v3688 = vld [vmem:[%s620 + $0x4] sm:$0xf]
      %v3689 = vld [vmem:[%s620 + $0x8] sm:$0xf]
      %v3690 = vld [vmem:[%s620 + $0xc] sm:$0xf]
      %v3691 = vld [vmem:[%s620 + $0x10] sm:$0xf]
      %v3692 = vld [vmem:[%s620 + $0x14] sm:$0xf]
      %v3693 = vld [vmem:[%s620 + $0x18] sm:$0xf]
      %v3694 = vld [vmem:[%s620 + $0x1c] sm:$0xf]
      %v3695 = vld [vmem:[%s620 + $0x20] sm:$0xf]
      %v3696 = vld [vmem:[%s620 + $0x24] sm:$0xf]
      %v3697 = vld [vmem:[%s620 + $0x28] sm:$0x1]
      %v3709 = vunpack.c.l.b16 %v3687
      %v3710 = vunpack.c.l.b16 %v3688
      %v3711 = vunpack.c.l.b16 %v3689
      %v3712 = vunpack.c.l.b16 %v3690
      %v3713 = vunpack.c.l.b16 %v3691
      %v3714 = vunpack.c.l.b16 %v3692
      %v3715 = vunpack.c.l.b16 %v3693
      %v3716 = vunpack.c.l.b16 %v3694
      %v3717 = vunpack.c.l.b16 %v3695
      %v3718 = vunpack.c.l.b16 %v3696
      %v3719 = vunpack.c.l.b16 %v3697
      %v3720 = vpack.c.b16 %v3710, %v3709
      %v3721 = vpack.c.b16 %v3712, %v3711
      %v3722 = vpack.c.b16 %v3714, %v3713
      %v3723 = vpack.c.b16 %v3716, %v3715
      %v3724 = vpack.c.b16 %v3718, %v3717
      %v3725 = vpack.c.b16 %v3719, %v3719
      %v3732 = vsel %vm489, %v3503, 0
      %v3735 = vand.u32 %v3725, %v495
      %3737 = vmatprep.subr.bf16.mxu0 0
      %3738 = vmatpush1.bf16.msra.mxu0 %v3720
      %3739 = vmatprep.subr.bf16.mxu0 0
      %3740 = vmatpush1.bf16.msra.mxu0 %v3721
      %3741 = vmatprep.subr.bf16.mxu0 0
      %3742 = vmatpush1.bf16.msra.mxu0 %v3722
      %3743 = vmatprep.subr.bf16.mxu0 0
      %3744 = vmatpush1.bf16.msra.mxu0 %v3723
      %3745 = vmatprep.subr.bf16.mxu0 0
      %3746 = vmatpush1.bf16.msra.mxu0 %v3724
      %3747 = vmatprep.subr.bf16.mxu0 0
      %3748 = vmatpush1.bf16.msra.mxu0 %v3735
      %3749 = vmatprep.subr.bf16.mxu0 0
      %3750 = vmatpush1.bf16.msra.mxu0 0
      %3751 = vmatprep.subr.bf16.mxu0 0
      %3752 = vmatpush1.bf16.msra.mxu0 0
      %3753 = vmatprep.subr.bf16.mxu0 0
      %3754 = vmatpush1.bf16.msra.mxu0 0
      %3755 = vmatprep.subr.bf16.mxu0 0
      %3756 = vmatpush1.bf16.msra.mxu0 0
      %3757 = vmatprep.subr.bf16.mxu0 0
      %3758 = vmatpush1.bf16.msra.mxu0 0
      %3759 = vmatprep.subr.bf16.mxu0 0
      %3760 = vmatpush1.bf16.msra.mxu0 0
      %3761 = vmatprep.subr.bf16.mxu0 0
      %3762 = vmatpush1.bf16.msra.mxu0 0
      %3763 = vmatprep.subr.bf16.mxu0 0
      %3764 = vmatpush1.bf16.msra.mxu0 0
      %3765 = vmatprep.subr.bf16.mxu0 0
      %3766 = vmatpush1.bf16.msra.mxu0 0
      %3767 = vmatprep.subr.bf16.mxu0 0
      %3768 = vmatpush1.bf16.msra.mxu0 0
      %3769 = vmatprep.mubr.bf16.mxu0 0
      %3770 = vmatmul.mubr.bf16.gmra.mrb[0].mxu0 %v3732
      %v3771 = vpop.f32.mrb[0].mxu0
      %v3772 = vadd.f32 0.0, %v3771
      %v3773 = vpop.f32.mrb[0].mxu0
      %v3774 = vpop.f32.mrb[0].mxu0
      %v3775 = vadd.f32 0.0, %v3774
      %v3776 = vpop.f32.mrb[0].mxu0
      %3777 = vdwg.mxu0
      %v3778 = vadd.f32 %v3681, %v3772
      %v3779 = vadd.f32 %v3684, %v3775
      %v3780 = vld [vmem:[%s714] sm:$0xf]
      %v3781 = vld [vmem:[%s714 + $0x4] sm:$0xf]
      %v3782 = vld [vmem:[%s714 + $0x8] sm:$0xf]
      %v3783 = vld [vmem:[%s714 + $0xc] sm:$0xf]
      %v3784 = vld [vmem:[%s714 + $0x10] sm:$0xf]
      %v3785 = vld [vmem:[%s714 + $0x14] sm:$0xf]
      %v3786 = vld [vmem:[%s714 + $0x18] sm:$0xf]
      %v3787 = vld [vmem:[%s714 + $0x1c] sm:$0xf]
      %v3788 = vld [vmem:[%s714 + $0x20] sm:$0xf]
      %v3789 = vld [vmem:[%s714 + $0x24] sm:$0xf]
      %v3790 = vld [vmem:[%s714 + $0x28] sm:$0x1]
      %v3802 = vunpack.c.l.b16 %v3780
      %v3803 = vunpack.c.l.b16 %v3781
      %v3804 = vunpack.c.l.b16 %v3782
      %v3805 = vunpack.c.l.b16 %v3783
      %v3806 = vunpack.c.l.b16 %v3784
      %v3807 = vunpack.c.l.b16 %v3785
      %v3808 = vunpack.c.l.b16 %v3786
      %v3809 = vunpack.c.l.b16 %v3787
      %v3810 = vunpack.c.l.b16 %v3788
      %v3811 = vunpack.c.l.b16 %v3789
      %v3812 = vunpack.c.l.b16 %v3790
      %v3813 = vpack.c.b16 %v3803, %v3802
      %v3814 = vpack.c.b16 %v3805, %v3804
      %v3815 = vpack.c.b16 %v3807, %v3806
      %v3816 = vpack.c.b16 %v3809, %v3808
      %v3817 = vpack.c.b16 %v3811, %v3810
      %v3818 = vpack.c.b16 %v3812, %v3812
      %v3825 = vsel %vm489, %v3504, 0
      %v3828 = vand.u32 %v3818, %v495
      %3830 = vmatprep.subr.bf16.mxu0 0
      %3831 = vmatpush1.bf16.msra.mxu0 %v3813
      %3832 = vmatprep.subr.bf16.mxu0 0
      %3833 = vmatpush1.bf16.msra.mxu0 %v3814
      %3834 = vmatprep.subr.bf16.mxu0 0
      %3835 = vmatpush1.bf16.msra.mxu0 %v3815
      %3836 = vmatprep.subr.bf16.mxu0 0
      %3837 = vmatpush1.bf16.msra.mxu0 %v3816
      %3838 = vmatprep.subr.bf16.mxu0 0
      %3839 = vmatpush1.bf16.msra.mxu0 %v3817
      %3840 = vmatprep.subr.bf16.mxu0 0
      %3841 = vmatpush1.bf16.msra.mxu0 %v3828
      %3842 = vmatprep.subr.bf16.mxu0 0
      %3843 = vmatpush1.bf16.msra.mxu0 0
      %3844 = vmatprep.subr.bf16.mxu0 0
      %3845 = vmatpush1.bf16.msra.mxu0 0
      %3846 = vmatprep.subr.bf16.mxu0 0
      %3847 = vmatpush1.bf16.msra.mxu0 0
      %3848 = vmatprep.subr.bf16.mxu0 0
      %3849 = vmatpush1.bf16.msra.mxu0 0
      %3850 = vmatprep.subr.bf16.mxu0 0
      %3851 = vmatpush1.bf16.msra.mxu0 0
      %3852 = vmatprep.subr.bf16.mxu0 0
      %3853 = vmatpush1.bf16.msra.mxu0 0
      %3854 = vmatprep.subr.bf16.mxu0 0
      %3855 = vmatpush1.bf16.msra.mxu0 0
      %3856 = vmatprep.subr.bf16.mxu0 0
      %3857 = vmatpush1.bf16.msra.mxu0 0
      %3858 = vmatprep.subr.bf16.mxu0 0
      %3859 = vmatpush1.bf16.msra.mxu0 0
      %3860 = vmatprep.subr.bf16.mxu0 0
      %3861 = vmatpush1.bf16.msra.mxu0 0
      %3862 = vmatprep.mubr.bf16.mxu0 0
      %3863 = vmatmul.mubr.bf16.gmra.mrb[0].mxu0 %v3825
      %v3864 = vpop.f32.mrb[0].mxu0
      %v3865 = vadd.f32 0.0, %v3864
      %v3866 = vpop.f32.mrb[0].mxu0
      %v3867 = vpop.f32.mrb[0].mxu0
      %v3868 = vadd.f32 0.0, %v3867
      %v3869 = vpop.f32.mrb[0].mxu0
      %3870 = vdwg.mxu0
      %v3871 = vadd.f32 %v3778, %v3865
      %v3872 = vadd.f32 %v3779, %v3868
      %v3873 = vadd.f32 %v3871, %v811
      %v3874 = vadd.f32 %v3872, %v816
      %v3875 = vmax.f32 %v3873, 0.0
      %v3876 = vmax.f32 %v3874, 0.0
      %v3877 = vpack.c.bf16 %v3876, %v3875
      %v3878 = vld [vmem:[%s4] sm:$0xf]
      %v3879 = vld [vmem:[%s4 + $0x4] sm:$0xf]
      %v3880 = vld [vmem:[%s4 + $0x8] sm:$0xf]
      %v3881 = vld [vmem:[%s4 + $0xc] sm:$0xf]
      %v3882 = vld [vmem:[%s4 + $0x10] sm:$0xf]
      %v3883 = vld [vmem:[%s4 + $0x14] sm:$0xf]
      %v3884 = vld [vmem:[%s4 + $0x18] sm:$0xf]
      %v3885 = vld [vmem:[%s4 + $0x1c] sm:$0xf]
      %v3886 = vld [vmem:[%s4 + $0x20] sm:$0xf]
      %v3887 = vld [vmem:[%s4 + $0x24] sm:$0xf]
      %v3888 = vld [vmem:[%s4 + $0x28] sm:$0xf]
      %v3889 = vld [vmem:[%s4 + $0x2c] sm:$0xf]
      %v3890 = vld [vmem:[%s4 + $0x30] sm:$0xf]
      %v3891 = vld [vmem:[%s4 + $0x34] sm:$0xf]
      %v3892 = vld [vmem:[%s4 + $0x38] sm:$0xf]
      %v3893 = vld [vmem:[%s4 + $0x3c] sm:$0xf]
      %v3894 = vld [vmem:[%s839] sm:$0xf]
      %v3895 = vld [vmem:[%s839 + $0x4] sm:$0xf]
      %v3896 = vld [vmem:[%s839 + $0x8] sm:$0xf]
      %v3897 = vld [vmem:[%s839 + $0xc] sm:$0xf]
      %v3898 = vld [vmem:[%s839 + $0x10] sm:$0xf]
      %v3899 = vld [vmem:[%s839 + $0x14] sm:$0xf]
      %v3900 = vld [vmem:[%s839 + $0x18] sm:$0xf]
      %v3901 = vld [vmem:[%s839 + $0x1c] sm:$0xf]
      %v3902 = vld [vmem:[%s839 + $0x20] sm:$0xf]
      %v3903 = vld [vmem:[%s839 + $0x24] sm:$0xf]
      %v3904 = vld [vmem:[%s839 + $0x28] sm:$0xf]
      %v3905 = vld [vmem:[%s839 + $0x2c] sm:$0xf]
      %v3906 = vld [vmem:[%s839 + $0x30] sm:$0xf]
      %v3907 = vld [vmem:[%s839 + $0x34] sm:$0xf]
      %v3908 = vld [vmem:[%s839 + $0x38] sm:$0xf]
      %v3909 = vld [vmem:[%s839 + $0x3c] sm:$0xf]
      %v3926 = vunpack.c.l.b16 %v3894
      %v3927 = vunpack.c.l.b16 %v3895
      %v3928 = vunpack.c.l.b16 %v3896
      %v3929 = vunpack.c.l.b16 %v3897
      %v3930 = vunpack.c.l.b16 %v3898
      %v3931 = vunpack.c.l.b16 %v3899
      %v3932 = vunpack.c.l.b16 %v3900
      %v3933 = vunpack.c.l.b16 %v3901
      %v3934 = vunpack.c.l.b16 %v3902
      %v3935 = vunpack.c.l.b16 %v3903
      %v3936 = vunpack.c.l.b16 %v3904
      %v3937 = vunpack.c.l.b16 %v3905
      %v3938 = vunpack.c.l.b16 %v3906
      %v3939 = vunpack.c.l.b16 %v3907
      %v3940 = vunpack.c.l.b16 %v3908
      %v3941 = vunpack.c.l.b16 %v3909
      %v3942 = vpack.c.b16 %v3927, %v3926
      %v3943 = vpack.c.b16 %v3929, %v3928
      %v3944 = vpack.c.b16 %v3931, %v3930
      %v3945 = vpack.c.b16 %v3933, %v3932
      %v3946 = vpack.c.b16 %v3935, %v3934
      %v3947 = vpack.c.b16 %v3937, %v3936
      %v3948 = vpack.c.b16 %v3939, %v3938
      %v3949 = vpack.c.b16 %v3941, %v3940
      %3951 = vrot.lane.b32.xlu0 %v3877, 112
      %v3952 = vpop.permute.xlu0 %3951
      %v3955 = vsel %vm900, %v3942, 0
      %v3958 = vsel %vm900, %v3943, 0
      %v3961 = vsel %vm900, %v3944, 0
      %v3964 = vsel %vm900, %v3945, 0
      %v3967 = vsel %vm900, %v3946, 0
      %v3970 = vsel %vm900, %v3947, 0
      %v3973 = vsel %vm900, %v3948, 0
      %v3976 = vsel %vm900, %v3949, 0
      %3978 = vmatprep.subr.bf16.mxu0 0
      %3979 = vmatpush1.bf16.msra.mxu0 %v3952
      %3980 = vmatprep.subr.bf16.mxu0 0
      %3981 = vmatpush1.bf16.msra.mxu0 0
      %3982 = vmatprep.subr.bf16.mxu0 0
      %3983 = vmatpush1.bf16.msra.mxu0 0
      %3984 = vmatprep.subr.bf16.mxu0 0
      %3985 = vmatpush1.bf16.msra.mxu0 0
      %3986 = vmatprep.subr.bf16.mxu0 0
      %3987 = vmatpush1.bf16.msra.mxu0 0
      %3988 = vmatprep.subr.bf16.mxu0 0
      %3989 = vmatpush1.bf16.msra.mxu0 0
      %3990 = vmatprep.subr.bf16.mxu0 0
      %3991 = vmatpush1.bf16.msra.mxu0 0
      %3992 = vmatprep.subr.bf16.mxu0 0
      %3993 = vmatpush1.bf16.msra.mxu0 0
      %3994 = vmatprep.subr.bf16.mxu0 0
      %3995 = vmatpush1.bf16.msra.mxu0 0
      %3996 = vmatprep.subr.bf16.mxu0 0
      %3997 = vmatpush1.bf16.msra.mxu0 0
      %3998 = vmatprep.subr.bf16.mxu0 0
      %3999 = vmatpush1.bf16.msra.mxu0 0
      %4000 = vmatprep.subr.bf16.mxu0 0
      %4001 = vmatpush1.bf16.msra.mxu0 0
      %4002 = vmatprep.subr.bf16.mxu0 0
      %4003 = vmatpush1.bf16.msra.mxu0 0
      %4004 = vmatprep.subr.bf16.mxu0 0
      %4005 = vmatpush1.bf16.msra.mxu0 0
      %4006 = vmatprep.subr.bf16.mxu0 0
      %4007 = vmatpush1.bf16.msra.mxu0 0
      %4008 = vmatprep.subr.bf16.mxu0 0
      %4009 = vmatpush1.bf16.msra.mxu0 0
      %4010 = vmatprep.mubr.bf16.mxu0 0
      %4011 = vmatmul.mubr.bf16.gmra.mrb[0].mxu0 %v3955
      %v4012 = vpop.f32.mrb[0].mxu0
      %v4013 = vadd.f32 0.0, %v4012
      %v4014 = vpop.f32.mrb[0].mxu0
      %v4015 = vpop.f32.mrb[0].mxu0
      %v4016 = vadd.f32 0.0, %v4015
      %v4017 = vpop.f32.mrb[0].mxu0
      %4018 = vmatprep.mubr.bf16.mxu0 0
      %4019 = vmatmul.mubr.bf16.gmra.mrb[0].mxu0 %v3958
      %v4020 = vpop.f32.mrb[0].mxu0
      %v4021 = vadd.f32 0.0, %v4020
      %v4022 = vpop.f32.mrb[0].mxu0
      %v4023 = vpop.f32.mrb[0].mxu0
      %v4024 = vadd.f32 0.0, %v4023
      %v4025 = vpop.f32.mrb[0].mxu0
      %4026 = vmatprep.mubr.bf16.mxu0 0
      %4027 = vmatmul.mubr.bf16.gmra.mrb[0].mxu0 %v3961
      %v4028 = vpop.f32.mrb[0].mxu0
      %v4029 = vadd.f32 0.0, %v4028
      %v4030 = vpop.f32.mrb[0].mxu0
      %v4031 = vpop.f32.mrb[0].mxu0
      %v4032 = vadd.f32 0.0, %v4031
      %v4033 = vpop.f32.mrb[0].mxu0
      %4034 = vmatprep.mubr.bf16.mxu0 0
      %4035 = vmatmul.mubr.bf16.gmra.mrb[0].mxu0 %v3964
      %v4036 = vpop.f32.mrb[0].mxu0
      %v4037 = vadd.f32 0.0, %v4036
      %v4038 = vpop.f32.mrb[0].mxu0
      %v4039 = vpop.f32.mrb[0].mxu0
      %v4040 = vadd.f32 0.0, %v4039
      %v4041 = vpop.f32.mrb[0].mxu0
      %4042 = vmatprep.mubr.bf16.mxu0 0
      %4043 = vmatmul.mubr.bf16.gmra.mrb[0].mxu0 %v3967
      %v4044 = vpop.f32.mrb[0].mxu0
      %v4045 = vadd.f32 0.0, %v4044
      %v4046 = vpop.f32.mrb[0].mxu0
      %v4047 = vpop.f32.mrb[0].mxu0
      %v4048 = vadd.f32 0.0, %v4047
      %v4049 = vpop.f32.mrb[0].mxu0
      %4050 = vmatprep.mubr.bf16.mxu0 0
      %4051 = vmatmul.mubr.bf16.gmra.mrb[0].mxu0 %v3970
      %v4052 = vpop.f32.mrb[0].mxu0
      %v4053 = vadd.f32 0.0, %v4052
      %v4054 = vpop.f32.mrb[0].mxu0
      %v4055 = vpop.f32.mrb[0].mxu0
      %v4056 = vadd.f32 0.0, %v4055
      %v4057 = vpop.f32.mrb[0].mxu0
      %4058 = vmatprep.mubr.bf16.mxu0 0
      %4059 = vmatmul.mubr.bf16.gmra.mrb[0].mxu0 %v3973
      %v4060 = vpop.f32.mrb[0].mxu0
      %v4061 = vadd.f32 0.0, %v4060
      %v4062 = vpop.f32.mrb[0].mxu0
      %v4063 = vpop.f32.mrb[0].mxu0
      %v4064 = vadd.f32 0.0, %v4063
      %v4065 = vpop.f32.mrb[0].mxu0
      %4066 = vmatprep.mubr.bf16.mxu0 0
      %4067 = vmatmul.mubr.bf16.gmra.mrb[0].mxu0 %v3976
      %v4068 = vpop.f32.mrb[0].mxu0
      %v4069 = vadd.f32 0.0, %v4068
      %v4070 = vpop.f32.mrb[0].mxu0
      %v4071 = vpop.f32.mrb[0].mxu0
      %v4072 = vadd.f32 0.0, %v4071
      %v4073 = vpop.f32.mrb[0].mxu0
      %4074 = vdwg.mxu0
      %v4091 = vunpack.c.l.b16 %v3878
      %v4092 = vunpack.c.l.b16 %v3879
      %v4093 = vunpack.c.l.b16 %v3880
      %v4094 = vunpack.c.l.b16 %v3881
      %v4095 = vunpack.c.l.b16 %v3882
      %v4096 = vunpack.c.l.b16 %v3883
      %v4097 = vunpack.c.l.b16 %v3884
      %v4098 = vunpack.c.l.b16 %v3885
      %v4099 = vunpack.c.l.b16 %v3886
      %v4100 = vunpack.c.l.b16 %v3887
      %v4101 = vunpack.c.l.b16 %v3888
      %v4102 = vunpack.c.l.b16 %v3889
      %v4103 = vunpack.c.l.b16 %v3890
      %v4104 = vunpack.c.l.b16 %v3891
      %v4105 = vunpack.c.l.b16 %v3892
      %v4106 = vunpack.c.l.b16 %v3893
      %v4107 = vpack.c.b16 %v4092, %v4091
      %v4108 = vpack.c.b16 %v4094, %v4093
      %v4109 = vpack.c.b16 %v4096, %v4095
      %v4110 = vpack.c.b16 %v4098, %v4097
      %v4111 = vpack.c.b16 %v4100, %v4099
      %v4112 = vpack.c.b16 %v4102, %v4101
      %v4113 = vpack.c.b16 %v4104, %v4103
      %v4114 = vpack.c.b16 %v4106, %v4105
      %v4116 = vsel %vm900, %v4107, 0
      %v4119 = vsel %vm900, %v4108, 0
      %v4122 = vsel %vm900, %v4109, 0
      %v4125 = vsel %vm900, %v4110, 0
      %v4128 = vsel %vm900, %v4111, 0
      %v4131 = vsel %vm900, %v4112, 0
      %v4134 = vsel %vm900, %v4113, 0
      %v4137 = vsel %vm900, %v4114, 0
      %4139 = vmatprep.subr.bf16.mxu0 0
      %4140 = vmatpush1.bf16.msra.mxu0 %v3877
      %4141 = vmatprep.subr.bf16.mxu0 0
      %4142 = vmatpush1.bf16.msra.mxu0 0
      %4143 = vmatprep.subr.bf16.mxu0 0
      %4144 = vmatpush1.bf16.msra.mxu0 0
      %4145 = vmatprep.subr.bf16.mxu0 0
      %4146 = vmatpush1.bf16.msra.mxu0 0
      %4147 = vmatprep.subr.bf16.mxu0 0
      %4148 = vmatpush1.bf16.msra.mxu0 0
      %4149 = vmatprep.subr.bf16.mxu0 0
      %4150 = vmatpush1.bf16.msra.mxu0 0
      %4151 = vmatprep.subr.bf16.mxu0 0
      %4152 = vmatpush1.bf16.msra.mxu0 0
      %4153 = vmatprep.subr.bf16.mxu0 0
      %4154 = vmatpush1.bf16.msra.mxu0 0
      %4155 = vmatprep.subr.bf16.mxu0 0
      %4156 = vmatpush1.bf16.msra.mxu0 0
      %4157 = vmatprep.subr.bf16.mxu0 0
      %4158 = vmatpush1.bf16.msra.mxu0 0
      %4159 = vmatprep.subr.bf16.mxu0 0
      %4160 = vmatpush1.bf16.msra.mxu0 0
      %4161 = vmatprep.subr.bf16.mxu0 0
      %4162 = vmatpush1.bf16.msra.mxu0 0
      %4163 = vmatprep.subr.bf16.mxu0 0
      %4164 = vmatpush1.bf16.msra.mxu0 0
      %4165 = vmatprep.subr.bf16.mxu0 0
      %4166 = vmatpush1.bf16.msra.mxu0 0
      %4167 = vmatprep.subr.bf16.mxu0 0
      %4168 = vmatpush1.bf16.msra.mxu0 0
      %4169 = vmatprep.subr.bf16.mxu0 0
      %4170 = vmatpush1.bf16.msra.mxu0 0
      %4171 = vmatprep.mubr.bf16.mxu0 0
      %4172 = vmatmul.mubr.bf16.gmra.mrb[0].mxu0 %v4116
      %v4173 = vpop.f32.mrb[0].mxu0
      %v4174 = vadd.f32 %v4013, %v4173
      %v4175 = vpop.f32.mrb[0].mxu0
      %v4176 = vpop.f32.mrb[0].mxu0
      %v4177 = vadd.f32 %v4016, %v4176
      %v4178 = vpop.f32.mrb[0].mxu0
      %4179 = vmatprep.mubr.bf16.mxu0 0
      %4180 = vmatmul.mubr.bf16.gmra.mrb[0].mxu0 %v4119
      %v4181 = vpop.f32.mrb[0].mxu0
      %v4182 = vadd.f32 %v4021, %v4181
      %v4183 = vpop.f32.mrb[0].mxu0
      %v4184 = vpop.f32.mrb[0].mxu0
      %v4185 = vadd.f32 %v4024, %v4184
      %v4186 = vpop.f32.mrb[0].mxu0
      %4187 = vmatprep.mubr.bf16.mxu0 0
      %4188 = vmatmul.mubr.bf16.gmra.mrb[0].mxu0 %v4122
      %v4189 = vpop.f32.mrb[0].mxu0
      %v4190 = vadd.f32 %v4029, %v4189
      %v4191 = vpop.f32.mrb[0].mxu0
      %v4192 = vpop.f32.mrb[0].mxu0
      %v4193 = vadd.f32 %v4032, %v4192
      %v4194 = vpop.f32.mrb[0].mxu0
      %4195 = vmatprep.mubr.bf16.mxu0 0
      %4196 = vmatmul.mubr.bf16.gmra.mrb[0].mxu0 %v4125
      %v4197 = vpop.f32.mrb[0].mxu0
      %v4198 = vadd.f32 %v4037, %v4197
      %v4199 = vpop.f32.mrb[0].mxu0
      %v4200 = vpop.f32.mrb[0].mxu0
      %v4201 = vadd.f32 %v4040, %v4200
      %v4202 = vpop.f32.mrb[0].mxu0
      %4203 = vmatprep.mubr.bf16.mxu0 0
      %4204 = vmatmul.mubr.bf16.gmra.mrb[0].mxu0 %v4128
      %v4205 = vpop.f32.mrb[0].mxu0
      %v4206 = vadd.f32 %v4045, %v4205
      %v4207 = vpop.f32.mrb[0].mxu0
      %v4208 = vpop.f32.mrb[0].mxu0
      %v4209 = vadd.f32 %v4048, %v4208
      %v4210 = vpop.f32.mrb[0].mxu0
      %4211 = vmatprep.mubr.bf16.mxu0 0
      %4212 = vmatmul.mubr.bf16.gmra.mrb[0].mxu0 %v4131
      %v4213 = vpop.f32.mrb[0].mxu0
      %v4214 = vadd.f32 %v4053, %v4213
      %v4215 = vpop.f32.mrb[0].mxu0
      %v4216 = vpop.f32.mrb[0].mxu0
      %v4217 = vadd.f32 %v4056, %v4216
      %v4218 = vpop.f32.mrb[0].mxu0
      %4219 = vmatprep.mubr.bf16.mxu0 0
      %4220 = vmatmul.mubr.bf16.gmra.mrb[0].mxu0 %v4134
      %v4221 = vpop.f32.mrb[0].mxu0
      %v4222 = vadd.f32 %v4061, %v4221
      %v4223 = vpop.f32.mrb[0].mxu0
      %v4224 = vpop.f32.mrb[0].mxu0
      %v4225 = vadd.f32 %v4064, %v4224
      %v4226 = vpop.f32.mrb[0].mxu0
      %4227 = vmatprep.mubr.bf16.mxu0 0
      %4228 = vmatmul.mubr.bf16.gmra.mrb[0].mxu0 %v4137
      %v4229 = vpop.f32.mrb[0].mxu0
      %v4230 = vadd.f32 %v4069, %v4229
      %v4231 = vpop.f32.mrb[0].mxu0
      %v4232 = vpop.f32.mrb[0].mxu0
      %v4233 = vadd.f32 %v4072, %v4232
      %v4234 = vpop.f32.mrb[0].mxu0
      %4235 = vdwg.mxu0
      %v4236 = vld [vmem:[%s1183] sm:$0xf]
      %v4237 = vld [vmem:[%s1183 + $0x4] sm:$0xf]
      %v4238 = vld [vmem:[%s1183 + $0x8] sm:$0xf]
      %v4239 = vld [vmem:[%s1183 + $0xc] sm:$0xf]
      %v4240 = vld [vmem:[%s1183 + $0x10] sm:$0xf]
      %v4241 = vld [vmem:[%s1183 + $0x14] sm:$0xf]
      %v4242 = vld [vmem:[%s1183 + $0x18] sm:$0xf]
      %v4243 = vld [vmem:[%s1183 + $0x1c] sm:$0xf]
      %v4244 = vld [vmem:[%s1183 + $0x20] sm:$0xf]
      %v4245 = vld [vmem:[%s1183 + $0x24] sm:$0xf]
      %v4246 = vld [vmem:[%s1183 + $0x28] sm:$0xf]
      %v4247 = vld [vmem:[%s1183 + $0x2c] sm:$0xf]
      %v4248 = vld [vmem:[%s1183 + $0x30] sm:$0xf]
      %v4249 = vld [vmem:[%s1183 + $0x34] sm:$0xf]
      %v4250 = vld [vmem:[%s1183 + $0x38] sm:$0xf]
      %v4251 = vld [vmem:[%s1183 + $0x3c] sm:$0xf]
      %v4268 = vunpack.c.l.b16 %v4236
      %v4269 = vunpack.c.l.b16 %v4237
      %v4270 = vunpack.c.l.b16 %v4238
      %v4271 = vunpack.c.l.b16 %v4239
      %v4272 = vunpack.c.l.b16 %v4240
      %v4273 = vunpack.c.l.b16 %v4241
      %v4274 = vunpack.c.l.b16 %v4242
      %v4275 = vunpack.c.l.b16 %v4243
      %v4276 = vunpack.c.l.b16 %v4244
      %v4277 = vunpack.c.l.b16 %v4245
      %v4278 = vunpack.c.l.b16 %v4246
      %v4279 = vunpack.c.l.b16 %v4247
      %v4280 = vunpack.c.l.b16 %v4248
      %v4281 = vunpack.c.l.b16 %v4249
      %v4282 = vunpack.c.l.b16 %v4250
      %v4283 = vunpack.c.l.b16 %v4251
      %v4284 = vpack.c.b16 %v4269, %v4268
      %v4285 = vpack.c.b16 %v4271, %v4270
      %v4286 = vpack.c.b16 %v4273, %v4272
      %v4287 = vpack.c.b16 %v4275, %v4274
      %v4288 = vpack.c.b16 %v4277, %v4276
      %v4289 = vpack.c.b16 %v4279, %v4278
      %v4290 = vpack.c.b16 %v4281, %v4280
      %v4291 = vpack.c.b16 %v4283, %v4282
      %4292 = vrot.lane.b32.xlu0 %v3877, 96
      %v4293 = vpop.permute.xlu0 %4292
      %v4296 = vsel %vm900, %v4284, 0
      %v4299 = vsel %vm900, %v4285, 0
      %v4302 = vsel %vm900, %v4286, 0
      %v4305 = vsel %vm900, %v4287, 0
      %v4308 = vsel %vm900, %v4288, 0
      %v4311 = vsel %vm900, %v4289, 0
      %v4314 = vsel %vm900, %v4290, 0
      %v4317 = vsel %vm900, %v4291, 0
      %4319 = vmatprep.subr.bf16.mxu0 0
      %4320 = vmatpush1.bf16.msra.mxu0 %v4293
      %4321 = vmatprep.subr.bf16.mxu0 0
      %4322 = vmatpush1.bf16.msra.mxu0 0
      %4323 = vmatprep.subr.bf16.mxu0 0
      %4324 = vmatpush1.bf16.msra.mxu0 0
      %4325 = vmatprep.subr.bf16.mxu0 0
      %4326 = vmatpush1.bf16.msra.mxu0 0
      %4327 = vmatprep.subr.bf16.mxu0 0
      %4328 = vmatpush1.bf16.msra.mxu0 0
      %4329 = vmatprep.subr.bf16.mxu0 0
      %4330 = vmatpush1.bf16.msra.mxu0 0
      %4331 = vmatprep.subr.bf16.mxu0 0
      %4332 = vmatpush1.bf16.msra.mxu0 0
      %4333 = vmatprep.subr.bf16.mxu0 0
      %4334 = vmatpush1.bf16.msra.mxu0 0
      %4335 = vmatprep.subr.bf16.mxu0 0
      %4336 = vmatpush1.bf16.msra.mxu0 0
      %4337 = vmatprep.subr.bf16.mxu0 0
      %4338 = vmatpush1.bf16.msra.mxu0 0
      %4339 = vmatprep.subr.bf16.mxu0 0
      %4340 = vmatpush1.bf16.msra.mxu0 0
      %4341 = vmatprep.subr.bf16.mxu0 0
      %4342 = vmatpush1.bf16.msra.mxu0 0
      %4343 = vmatprep.subr.bf16.mxu0 0
      %4344 = vmatpush1.bf16.msra.mxu0 0
      %4345 = vmatprep.subr.bf16.mxu0 0
      %4346 = vmatpush1.bf16.msra.mxu0 0
      %4347 = vmatprep.subr.bf16.mxu0 0
      %4348 = vmatpush1.bf16.msra.mxu0 0
      %4349 = vmatprep.subr.bf16.mxu0 0
      %4350 = vmatpush1.bf16.msra.mxu0 0
      %4351 = vmatprep.mubr.bf16.mxu0 0
      %4352 = vmatmul.mubr.bf16.gmra.mrb[0].mxu0 %v4296
      %v4353 = vpop.f32.mrb[0].mxu0
      %v4354 = vadd.f32 0.0, %v4353
      %v4355 = vpop.f32.mrb[0].mxu0
      %v4356 = vpop.f32.mrb[0].mxu0
      %v4357 = vadd.f32 0.0, %v4356
      %v4358 = vpop.f32.mrb[0].mxu0
      %4359 = vmatprep.mubr.bf16.mxu0 0
      %4360 = vmatmul.mubr.bf16.gmra.mrb[0].mxu0 %v4299
      %v4361 = vpop.f32.mrb[0].mxu0
      %v4362 = vadd.f32 0.0, %v4361
      %v4363 = vpop.f32.mrb[0].mxu0
      %v4364 = vpop.f32.mrb[0].mxu0
      %v4365 = vadd.f32 0.0, %v4364
      %v4366 = vpop.f32.mrb[0].mxu0
      %4367 = vmatprep.mubr.bf16.mxu0 0
      %4368 = vmatmul.mubr.bf16.gmra.mrb[0].mxu0 %v4302
      %v4369 = vpop.f32.mrb[0].mxu0
      %v4370 = vadd.f32 0.0, %v4369
      %v4371 = vpop.f32.mrb[0].mxu0
      %v4372 = vpop.f32.mrb[0].mxu0
      %v4373 = vadd.f32 0.0, %v4372
      %v4374 = vpop.f32.mrb[0].mxu0
      %4375 = vmatprep.mubr.bf16.mxu0 0
      %4376 = vmatmul.mubr.bf16.gmra.mrb[0].mxu0 %v4305
      %v4377 = vpop.f32.mrb[0].mxu0
      %v4378 = vadd.f32 0.0, %v4377
      %v4379 = vpop.f32.mrb[0].mxu0
      %v4380 = vpop.f32.mrb[0].mxu0
      %v4381 = vadd.f32 0.0, %v4380
      %v4382 = vpop.f32.mrb[0].mxu0
      %4383 = vmatprep.mubr.bf16.mxu0 0
      %4384 = vmatmul.mubr.bf16.gmra.mrb[0].mxu0 %v4308
      %v4385 = vpop.f32.mrb[0].mxu0
      %v4386 = vadd.f32 0.0, %v4385
      %v4387 = vpop.f32.mrb[0].mxu0
      %v4388 = vpop.f32.mrb[0].mxu0
      %v4389 = vadd.f32 0.0, %v4388
      %v4390 = vpop.f32.mrb[0].mxu0
      %4391 = vmatprep.mubr.bf16.mxu0 0
      %4392 = vmatmul.mubr.bf16.gmra.mrb[0].mxu0 %v4311
      %v4393 = vpop.f32.mrb[0].mxu0
      %v4394 = vadd.f32 0.0, %v4393
      %v4395 = vpop.f32.mrb[0].mxu0
      %v4396 = vpop.f32.mrb[0].mxu0
      %v4397 = vadd.f32 0.0, %v4396
      %v4398 = vpop.f32.mrb[0].mxu0
      %4399 = vmatprep.mubr.bf16.mxu0 0
      %4400 = vmatmul.mubr.bf16.gmra.mrb[0].mxu0 %v4314
      %v4401 = vpop.f32.mrb[0].mxu0
      %v4402 = vadd.f32 0.0, %v4401
      %v4403 = vpop.f32.mrb[0].mxu0
      %v4404 = vpop.f32.mrb[0].mxu0
      %v4405 = vadd.f32 0.0, %v4404
      %v4406 = vpop.f32.mrb[0].mxu0
      %4407 = vmatprep.mubr.bf16.mxu0 0
      %4408 = vmatmul.mubr.bf16.gmra.mrb[0].mxu0 %v4317
      %v4409 = vpop.f32.mrb[0].mxu0
      %v4410 = vadd.f32 0.0, %v4409
      %v4411 = vpop.f32.mrb[0].mxu0
      %v4412 = vpop.f32.mrb[0].mxu0
      %v4413 = vadd.f32 0.0, %v4412
      %v4414 = vpop.f32.mrb[0].mxu0
      %4415 = vdwg.mxu0
      %v4416 = vadd.f32 %v4174, %v4354
      %v4417 = vadd.f32 %v4177, %v4357
      %v4418 = vadd.f32 %v4182, %v4362
      %v4419 = vadd.f32 %v4185, %v4365
      %v4420 = vadd.f32 %v4190, %v4370
      %v4421 = vadd.f32 %v4193, %v4373
      %v4422 = vadd.f32 %v4198, %v4378
      %v4423 = vadd.f32 %v4201, %v4381
      %v4424 = vadd.f32 %v4206, %v4386
      %v4425 = vadd.f32 %v4209, %v4389
      %v4426 = vadd.f32 %v4214, %v4394
      %v4427 = vadd.f32 %v4217, %v4397
      %v4428 = vadd.f32 %v4222, %v4402
      %v4429 = vadd.f32 %v4225, %v4405
      %v4430 = vadd.f32 %v4230, %v4410
      %v4431 = vadd.f32 %v4233, %v4413
      %v4432 = vld [vmem:[%s1380] sm:$0xf]
      %v4433 = vld [vmem:[%s1380 + $0x4] sm:$0xf]
      %v4434 = vld [vmem:[%s1380 + $0x8] sm:$0xf]
      %v4435 = vld [vmem:[%s1380 + $0xc] sm:$0xf]
      %v4436 = vld [vmem:[%s1380 + $0x10] sm:$0xf]
      %v4437 = vld [vmem:[%s1380 + $0x14] sm:$0xf]
      %v4438 = vld [vmem:[%s1380 + $0x18] sm:$0xf]
      %v4439 = vld [vmem:[%s1380 + $0x1c] sm:$0xf]
      %v4440 = vld [vmem:[%s1380 + $0x20] sm:$0xf]
      %v4441 = vld [vmem:[%s1380 + $0x24] sm:$0xf]
      %v4442 = vld [vmem:[%s1380 + $0x28] sm:$0xf]
      %v4443 = vld [vmem:[%s1380 + $0x2c] sm:$0xf]
      %v4444 = vld [vmem:[%s1380 + $0x30] sm:$0xf]
      %v4445 = vld [vmem:[%s1380 + $0x34] sm:$0xf]
      %v4446 = vld [vmem:[%s1380 + $0x38] sm:$0xf]
      %v4447 = vld [vmem:[%s1380 + $0x3c] sm:$0xf]
      %v4464 = vunpack.c.l.b16 %v4432
      %v4465 = vunpack.c.l.b16 %v4433
      %v4466 = vunpack.c.l.b16 %v4434
      %v4467 = vunpack.c.l.b16 %v4435
      %v4468 = vunpack.c.l.b16 %v4436
      %v4469 = vunpack.c.l.b16 %v4437
      %v4470 = vunpack.c.l.b16 %v4438
      %v4471 = vunpack.c.l.b16 %v4439
      %v4472 = vunpack.c.l.b16 %v4440
      %v4473 = vunpack.c.l.b16 %v4441
      %v4474 = vunpack.c.l.b16 %v4442
      %v4475 = vunpack.c.l.b16 %v4443
      %v4476 = vunpack.c.l.b16 %v4444
      %v4477 = vunpack.c.l.b16 %v4445
      %v4478 = vunpack.c.l.b16 %v4446
      %v4479 = vunpack.c.l.b16 %v4447
      %v4480 = vpack.c.b16 %v4465, %v4464
      %v4481 = vpack.c.b16 %v4467, %v4466
      %v4482 = vpack.c.b16 %v4469, %v4468
      %v4483 = vpack.c.b16 %v4471, %v4470
      %v4484 = vpack.c.b16 %v4473, %v4472
      %v4485 = vpack.c.b16 %v4475, %v4474
      %v4486 = vpack.c.b16 %v4477, %v4476
      %v4487 = vpack.c.b16 %v4479, %v4478
      %4488 = vrot.lane.b32.xlu0 %v3877, 80
      %v4489 = vpop.permute.xlu0 %4488
      %v4492 = vsel %vm900, %v4480, 0
      %v4495 = vsel %vm900, %v4481, 0
      %v4498 = vsel %vm900, %v4482, 0
      %v4501 = vsel %vm900, %v4483, 0
      %v4504 = vsel %vm900, %v4484, 0
      %v4507 = vsel %vm900, %v4485, 0
      %v4510 = vsel %vm900, %v4486, 0
      %v4513 = vsel %vm900, %v4487, 0
      %4515 = vmatprep.subr.bf16.mxu0 0
      %4516 = vmatpush1.bf16.msra.mxu0 %v4489
      %4517 = vmatprep.subr.bf16.mxu0 0
      %4518 = vmatpush1.bf16.msra.mxu0 0
      %4519 = vmatprep.subr.bf16.mxu0 0
      %4520 = vmatpush1.bf16.msra.mxu0 0
      %4521 = vmatprep.subr.bf16.mxu0 0
      %4522 = vmatpush1.bf16.msra.mxu0 0
      %4523 = vmatprep.subr.bf16.mxu0 0
      %4524 = vmatpush1.bf16.msra.mxu0 0
      %4525 = vmatprep.subr.bf16.mxu0 0
      %4526 = vmatpush1.bf16.msra.mxu0 0
      %4527 = vmatprep.subr.bf16.mxu0 0
      %4528 = vmatpush1.bf16.msra.mxu0 0
      %4529 = vmatprep.subr.bf16.mxu0 0
      %4530 = vmatpush1.bf16.msra.mxu0 0
      %4531 = vmatprep.subr.bf16.mxu0 0
      %4532 = vmatpush1.bf16.msra.mxu0 0
      %4533 = vmatprep.subr.bf16.mxu0 0
      %4534 = vmatpush1.bf16.msra.mxu0 0
      %4535 = vmatprep.subr.bf16.mxu0 0
      %4536 = vmatpush1.bf16.msra.mxu0 0
      %4537 = vmatprep.subr.bf16.mxu0 0
      %4538 = vmatpush1.bf16.msra.mxu0 0
      %4539 = vmatprep.subr.bf16.mxu0 0
      %4540 = vmatpush1.bf16.msra.mxu0 0
      %4541 = vmatprep.subr.bf16.mxu0 0
      %4542 = vmatpush1.bf16.msra.mxu0 0
      %4543 = vmatprep.subr.bf16.mxu0 0
      %4544 = vmatpush1.bf16.msra.mxu0 0
      %4545 = vmatprep.subr.bf16.mxu0 0
      %4546 = vmatpush1.bf16.msra.mxu0 0
      %4547 = vmatprep.mubr.bf16.mxu0 0
      %4548 = vmatmul.mubr.bf16.gmra.mrb[0].mxu0 %v4492
      %v4549 = vpop.f32.mrb[0].mxu0
      %v4550 = vadd.f32 0.0, %v4549
      %v4551 = vpop.f32.mrb[0].mxu0
      %v4552 = vpop.f32.mrb[0].mxu0
      %v4553 = vadd.f32 0.0, %v4552
      %v4554 = vpop.f32.mrb[0].mxu0
      %4555 = vmatprep.mubr.bf16.mxu0 0
      %4556 = vmatmul.mubr.bf16.gmra.mrb[0].mxu0 %v4495
      %v4557 = vpop.f32.mrb[0].mxu0
      %v4558 = vadd.f32 0.0, %v4557
      %v4559 = vpop.f32.mrb[0].mxu0
      %v4560 = vpop.f32.mrb[0].mxu0
      %v4561 = vadd.f32 0.0, %v4560
      %v4562 = vpop.f32.mrb[0].mxu0
      %4563 = vmatprep.mubr.bf16.mxu0 0
      %4564 = vmatmul.mubr.bf16.gmra.mrb[0].mxu0 %v4498
      %v4565 = vpop.f32.mrb[0].mxu0
      %v4566 = vadd.f32 0.0, %v4565
      %v4567 = vpop.f32.mrb[0].mxu0
      %v4568 = vpop.f32.mrb[0].mxu0
      %v4569 = vadd.f32 0.0, %v4568
      %v4570 = vpop.f32.mrb[0].mxu0
      %4571 = vmatprep.mubr.bf16.mxu0 0
      %4572 = vmatmul.mubr.bf16.gmra.mrb[0].mxu0 %v4501
      %v4573 = vpop.f32.mrb[0].mxu0
      %v4574 = vadd.f32 0.0, %v4573
      %v4575 = vpop.f32.mrb[0].mxu0
      %v4576 = vpop.f32.mrb[0].mxu0
      %v4577 = vadd.f32 0.0, %v4576
      %v4578 = vpop.f32.mrb[0].mxu0
      %4579 = vmatprep.mubr.bf16.mxu0 0
      %4580 = vmatmul.mubr.bf16.gmra.mrb[0].mxu0 %v4504
      %v4581 = vpop.f32.mrb[0].mxu0
      %v4582 = vadd.f32 0.0, %v4581
      %v4583 = vpop.f32.mrb[0].mxu0
      %v4584 = vpop.f32.mrb[0].mxu0
      %v4585 = vadd.f32 0.0, %v4584
      %v4586 = vpop.f32.mrb[0].mxu0
      %4587 = vmatprep.mubr.bf16.mxu0 0
      %4588 = vmatmul.mubr.bf16.gmra.mrb[0].mxu0 %v4507
      %v4589 = vpop.f32.mrb[0].mxu0
      %v4590 = vadd.f32 0.0, %v4589
      %v4591 = vpop.f32.mrb[0].mxu0
      %v4592 = vpop.f32.mrb[0].mxu0
      %v4593 = vadd.f32 0.0, %v4592
      %v4594 = vpop.f32.mrb[0].mxu0
      %4595 = vmatprep.mubr.bf16.mxu0 0
      %4596 = vmatmul.mubr.bf16.gmra.mrb[0].mxu0 %v4510
      %v4597 = vpop.f32.mrb[0].mxu0
      %v4598 = vadd.f32 0.0, %v4597
      %v4599 = vpop.f32.mrb[0].mxu0
      %v4600 = vpop.f32.mrb[0].mxu0
      %v4601 = vadd.f32 0.0, %v4600
      %v4602 = vpop.f32.mrb[0].mxu0
      %4603 = vmatprep.mubr.bf16.mxu0 0
      %4604 = vmatmul.mubr.bf16.gmra.mrb[0].mxu0 %v4513
      %v4605 = vpop.f32.mrb[0].mxu0
      %v4606 = vadd.f32 0.0, %v4605
      %v4607 = vpop.f32.mrb[0].mxu0
      %v4608 = vpop.f32.mrb[0].mxu0
      %v4609 = vadd.f32 0.0, %v4608
      %v4610 = vpop.f32.mrb[0].mxu0
      %4611 = vdwg.mxu0
      %v4612 = vadd.f32 %v4416, %v4550
      %v4613 = vadd.f32 %v4417, %v4553
      %v4614 = vadd.f32 %v4418, %v4558
      %v4615 = vadd.f32 %v4419, %v4561
      %v4616 = vadd.f32 %v4420, %v4566
      %v4617 = vadd.f32 %v4421, %v4569
      %v4618 = vadd.f32 %v4422, %v4574
      %v4619 = vadd.f32 %v4423, %v4577
      %v4620 = vadd.f32 %v4424, %v4582
      %v4621 = vadd.f32 %v4425, %v4585
      %v4622 = vadd.f32 %v4426, %v4590
      %v4623 = vadd.f32 %v4427, %v4593
      %v4624 = vadd.f32 %v4428, %v4598
      %v4625 = vadd.f32 %v4429, %v4601
      %v4626 = vadd.f32 %v4430, %v4606
      %v4627 = vadd.f32 %v4431, %v4609
      %v4628 = vpack.c.bf16 %v4613, %v4612
      %v4629 = vpack.c.bf16 %v4615, %v4614
      %v4630 = vpack.c.bf16 %v4617, %v4616
      %v4631 = vpack.c.bf16 %v4619, %v4618
      %v4632 = vpack.c.bf16 %v4621, %v4620
      %v4633 = vpack.c.bf16 %v4623, %v4622
      %v4634 = vpack.c.bf16 %v4625, %v4624
      %v4635 = vpack.c.bf16 %v4627, %v4626
      %v4636 = vld [vmem:[%s6] sm:$0xf]
      %v4637 = vld [vmem:[%s6 + $0x4] sm:$0xf]
      %v4638 = vld [vmem:[%s1587] sm:$0xf]
      %v4639 = vld [vmem:[%s1587 + $0x4] sm:$0xf]
      %v4642 = vunpack.c.l.b16 %v4638
      %v4643 = vunpack.c.l.b16 %v4639
      %v4644 = vpack.c.b16 %v4643, %v4642
      %v4647 = vsel %vm900, %v4630, 0
      %v4650 = vsel %vm900, %v4631, 0
      %4652 = vmatprep.subr.bf16.mxu0 0
      %4653 = vmatpush1.bf16.msra.mxu0 %v4644
      %4654 = vmatprep.subr.bf16.mxu0 0
      %4655 = vmatpush1.bf16.msra.mxu0 0
      %4656 = vmatprep.subr.bf16.mxu0 0
      %4657 = vmatpush1.bf16.msra.mxu0 0
      %4658 = vmatprep.subr.bf16.mxu0 0
      %4659 = vmatpush1.bf16.msra.mxu0 0
      %4660 = vmatprep.subr.bf16.mxu0 0
      %4661 = vmatpush1.bf16.msra.mxu0 0
      %4662 = vmatprep.subr.bf16.mxu0 0
      %4663 = vmatpush1.bf16.msra.mxu0 0
      %4664 = vmatprep.subr.bf16.mxu0 0
      %4665 = vmatpush1.bf16.msra.mxu0 0
      %4666 = vmatprep.subr.bf16.mxu0 0
      %4667 = vmatpush1.bf16.msra.mxu0 0
      %4668 = vmatprep.subr.bf16.mxu0 0
      %4669 = vmatpush1.bf16.msra.mxu0 0
      %4670 = vmatprep.subr.bf16.mxu0 0
      %4671 = vmatpush1.bf16.msra.mxu0 0
      %4672 = vmatprep.subr.bf16.mxu0 0
      %4673 = vmatpush1.bf16.msra.mxu0 0
      %4674 = vmatprep.subr.bf16.mxu0 0
      %4675 = vmatpush1.bf16.msra.mxu0 0
      %4676 = vmatprep.subr.bf16.mxu0 0
      %4677 = vmatpush1.bf16.msra.mxu0 0
      %4678 = vmatprep.subr.bf16.mxu0 0
      %4679 = vmatpush1.bf16.msra.mxu0 0
      %4680 = vmatprep.subr.bf16.mxu0 0
      %4681 = vmatpush1.bf16.msra.mxu0 0
      %4682 = vmatprep.subr.bf16.mxu0 0
      %4683 = vmatpush1.bf16.msra.mxu0 0
      %4684 = vmatprep.mubr.bf16.mxu0 0
      %4685 = vmatmul.mubr.bf16.gmra.mrb[0].mxu0 %v4647
      %v4686 = vpop.f32.mrb[0].mxu0
      %v4687 = vadd.f32 0.0, %v4686
      %v4688 = vpop.f32.mrb[0].mxu0
      %v4689 = vpop.f32.mrb[0].mxu0
      %v4690 = vadd.f32 0.0, %v4689
      %v4691 = vpop.f32.mrb[0].mxu0
      %4692 = vmatprep.mubr.bf16.mxu0 0
      %4693 = vmatmul.mubr.bf16.gmra.mrb[0].mxu0 %v4650
      %v4694 = vpop.f32.mrb[0].mxu0
      %v4695 = vadd.f32 0.0, %v4694
      %v4696 = vpop.f32.mrb[0].mxu0
      %v4697 = vpop.f32.mrb[0].mxu0
      %v4698 = vadd.f32 0.0, %v4697
      %v4699 = vpop.f32.mrb[0].mxu0
      %4700 = vdwg.mxu0
      %v4703 = vunpack.c.l.b16 %v4636
      %v4704 = vunpack.c.l.b16 %v4637
      %v4705 = vpack.c.b16 %v4704, %v4703
      %v4708 = vsel %vm900, %v4628, 0
      %v4711 = vsel %vm900, %v4629, 0
      %4713 = vmatprep.subr.bf16.mxu0 0
      %4714 = vmatpush1.bf16.msra.mxu0 %v4705
      %4715 = vmatprep.subr.bf16.mxu0 0
      %4716 = vmatpush1.bf16.msra.mxu0 0
      %4717 = vmatprep.subr.bf16.mxu0 0
      %4718 = vmatpush1.bf16.msra.mxu0 0
      %4719 = vmatprep.subr.bf16.mxu0 0
      %4720 = vmatpush1.bf16.msra.mxu0 0
      %4721 = vmatprep.subr.bf16.mxu0 0
      %4722 = vmatpush1.bf16.msra.mxu0 0
      %4723 = vmatprep.subr.bf16.mxu0 0
      %4724 = vmatpush1.bf16.msra.mxu0 0
      %4725 = vmatprep.subr.bf16.mxu0 0
      %4726 = vmatpush1.bf16.msra.mxu0 0
      %4727 = vmatprep.subr.bf16.mxu0 0
      %4728 = vmatpush1.bf16.msra.mxu0 0
      %4729 = vmatprep.subr.bf16.mxu0 0
      %4730 = vmatpush1.bf16.msra.mxu0 0
      %4731 = vmatprep.subr.bf16.mxu0 0
      %4732 = vmatpush1.bf16.msra.mxu0 0
      %4733 = vmatprep.subr.bf16.mxu0 0
      %4734 = vmatpush1.bf16.msra.mxu0 0
      %4735 = vmatprep.subr.bf16.mxu0 0
      %4736 = vmatpush1.bf16.msra.mxu0 0
      %4737 = vmatprep.subr.bf16.mxu0 0
      %4738 = vmatpush1.bf16.msra.mxu0 0
      %4739 = vmatprep.subr.bf16.mxu0 0
      %4740 = vmatpush1.bf16.msra.mxu0 0
      %4741 = vmatprep.subr.bf16.mxu0 0
      %4742 = vmatpush1.bf16.msra.mxu0 0
      %4743 = vmatprep.subr.bf16.mxu0 0
      %4744 = vmatpush1.bf16.msra.mxu0 0
      %4745 = vmatprep.mubr.bf16.mxu0 0
      %4746 = vmatmul.mubr.bf16.gmra.mrb[0].mxu0 %v4708
      %v4747 = vpop.f32.mrb[0].mxu0
      %v4748 = vadd.f32 %v4687, %v4747
      %v4749 = vpop.f32.mrb[0].mxu0
      %v4750 = vpop.f32.mrb[0].mxu0
      %v4751 = vadd.f32 %v4690, %v4750
      %v4752 = vpop.f32.mrb[0].mxu0
      %4753 = vmatprep.mubr.bf16.mxu0 0
      %4754 = vmatmul.mubr.bf16.gmra.mrb[0].mxu0 %v4711
      %v4755 = vpop.f32.mrb[0].mxu0
      %v4756 = vadd.f32 %v4695, %v4755
      %v4757 = vpop.f32.mrb[0].mxu0
      %v4758 = vpop.f32.mrb[0].mxu0
      %v4759 = vadd.f32 %v4698, %v4758
      %v4760 = vpop.f32.mrb[0].mxu0
      %4761 = vdwg.mxu0
      %v4762 = vld [vmem:[%s1712] sm:$0xf]
      %v4763 = vld [vmem:[%s1712 + $0x4] sm:$0xf]
      %v4766 = vunpack.c.l.b16 %v4762
      %v4767 = vunpack.c.l.b16 %v4763
      %v4768 = vpack.c.b16 %v4767, %v4766
      %v4771 = vsel %vm900, %v4632, 0
      %v4774 = vsel %vm900, %v4633, 0
      %4776 = vmatprep.subr.bf16.mxu0 0
      %4777 = vmatpush1.bf16.msra.mxu0 %v4768
      %4778 = vmatprep.subr.bf16.mxu0 0
      %4779 = vmatpush1.bf16.msra.mxu0 0
      %4780 = vmatprep.subr.bf16.mxu0 0
      %4781 = vmatpush1.bf16.msra.mxu0 0
      %4782 = vmatprep.subr.bf16.mxu0 0
      %4783 = vmatpush1.bf16.msra.mxu0 0
      %4784 = vmatprep.subr.bf16.mxu0 0
      %4785 = vmatpush1.bf16.msra.mxu0 0
      %4786 = vmatprep.subr.bf16.mxu0 0
      %4787 = vmatpush1.bf16.msra.mxu0 0
      %4788 = vmatprep.subr.bf16.mxu0 0
      %4789 = vmatpush1.bf16.msra.mxu0 0
      %4790 = vmatprep.subr.bf16.mxu0 0
      %4791 = vmatpush1.bf16.msra.mxu0 0
      %4792 = vmatprep.subr.bf16.mxu0 0
      %4793 = vmatpush1.bf16.msra.mxu0 0
      %4794 = vmatprep.subr.bf16.mxu0 0
      %4795 = vmatpush1.bf16.msra.mxu0 0
      %4796 = vmatprep.subr.bf16.mxu0 0
      %4797 = vmatpush1.bf16.msra.mxu0 0
      %4798 = vmatprep.subr.bf16.mxu0 0
      %4799 = vmatpush1.bf16.msra.mxu0 0
      %4800 = vmatprep.subr.bf16.mxu0 0
      %4801 = vmatpush1.bf16.msra.mxu0 0
      %4802 = vmatprep.subr.bf16.mxu0 0
      %4803 = vmatpush1.bf16.msra.mxu0 0
      %4804 = vmatprep.subr.bf16.mxu0 0
      %4805 = vmatpush1.bf16.msra.mxu0 0
      %4806 = vmatprep.subr.bf16.mxu0 0
      %4807 = vmatpush1.bf16.msra.mxu0 0
      %4808 = vmatprep.mubr.bf16.mxu0 0
      %4809 = vmatmul.mubr.bf16.gmra.mrb[0].mxu0 %v4771
      %v4810 = vpop.f32.mrb[0].mxu0
      %v4811 = vadd.f32 0.0, %v4810
      %v4812 = vpop.f32.mrb[0].mxu0
      %v4813 = vpop.f32.mrb[0].mxu0
      %v4814 = vadd.f32 0.0, %v4813
      %v4815 = vpop.f32.mrb[0].mxu0
      %4816 = vmatprep.mubr.bf16.mxu0 0
      %4817 = vmatmul.mubr.bf16.gmra.mrb[0].mxu0 %v4774
      %v4818 = vpop.f32.mrb[0].mxu0
      %v4819 = vadd.f32 0.0, %v4818
      %v4820 = vpop.f32.mrb[0].mxu0
      %v4821 = vpop.f32.mrb[0].mxu0
      %v4822 = vadd.f32 0.0, %v4821
      %v4823 = vpop.f32.mrb[0].mxu0
      %4824 = vdwg.mxu0
      %v4825 = vadd.f32 %v4748, %v4811
      %v4826 = vadd.f32 %v4751, %v4814
      %v4827 = vadd.f32 %v4756, %v4819
      %v4828 = vadd.f32 %v4759, %v4822
      %v4829 = vld [vmem:[%s1780] sm:$0xf]
      %v4830 = vld [vmem:[%s1780 + $0x4] sm:$0xf]
      %v4833 = vunpack.c.l.b16 %v4829
      %v4834 = vunpack.c.l.b16 %v4830
      %v4835 = vpack.c.b16 %v4834, %v4833
      %v4838 = vsel %vm900, %v4634, 0
      %v4841 = vsel %vm900, %v4635, 0
      %4843 = vmatprep.subr.bf16.mxu0 0
      %4844 = vmatpush1.bf16.msra.mxu0 %v4835
      %4845 = vmatprep.subr.bf16.mxu0 0
      %4846 = vmatpush1.bf16.msra.mxu0 0
      %4847 = vmatprep.subr.bf16.mxu0 0
      %4848 = vmatpush1.bf16.msra.mxu0 0
      %4849 = vmatprep.subr.bf16.mxu0 0
      %4850 = vmatpush1.bf16.msra.mxu0 0
      %4851 = vmatprep.subr.bf16.mxu0 0
      %4852 = vmatpush1.bf16.msra.mxu0 0
      %4853 = vmatprep.subr.bf16.mxu0 0
      %4854 = vmatpush1.bf16.msra.mxu0 0
      %4855 = vmatprep.subr.bf16.mxu0 0
      %4856 = vmatpush1.bf16.msra.mxu0 0
      %4857 = vmatprep.subr.bf16.mxu0 0
      %4858 = vmatpush1.bf16.msra.mxu0 0
      %4859 = vmatprep.subr.bf16.mxu0 0
      %4860 = vmatpush1.bf16.msra.mxu0 0
      %4861 = vmatprep.subr.bf16.mxu0 0
      %4862 = vmatpush1.bf16.msra.mxu0 0
      %4863 = vmatprep.subr.bf16.mxu0 0
      %4864 = vmatpush1.bf16.msra.mxu0 0
      %4865 = vmatprep.subr.bf16.mxu0 0
      %4866 = vmatpush1.bf16.msra.mxu0 0
      %4867 = vmatprep.subr.bf16.mxu0 0
      %4868 = vmatpush1.bf16.msra.mxu0 0
      %4869 = vmatprep.subr.bf16.mxu0 0
      %4870 = vmatpush1.bf16.msra.mxu0 0
      %4871 = vmatprep.subr.bf16.mxu0 0
      %4872 = vmatpush1.bf16.msra.mxu0 0
      %4873 = vmatprep.subr.bf16.mxu0 0
      %4874 = vmatpush1.bf16.msra.mxu0 0
      %4875 = vmatprep.mubr.bf16.mxu0 0
      %4876 = vmatmul.mubr.bf16.gmra.mrb[0].mxu0 %v4838
      %v4877 = vpop.f32.mrb[0].mxu0
      %v4878 = vadd.f32 0.0, %v4877
      %v4879 = vpop.f32.mrb[0].mxu0
      %v4880 = vpop.f32.mrb[0].mxu0
      %v4881 = vadd.f32 0.0, %v4880
      %v4882 = vpop.f32.mrb[0].mxu0
      %4883 = vmatprep.mubr.bf16.mxu0 0
      %4884 = vmatmul.mubr.bf16.gmra.mrb[0].mxu0 %v4841
      %v4885 = vpop.f32.mrb[0].mxu0
      %v4886 = vadd.f32 0.0, %v4885
      %v4887 = vpop.f32.mrb[0].mxu0
      %v4888 = vpop.f32.mrb[0].mxu0
      %v4889 = vadd.f32 0.0, %v4888
      %v4890 = vpop.f32.mrb[0].mxu0
      %4891 = vdwg.mxu0
      %v4892 = vadd.f32 %v4825, %v4878
      %v4893 = vadd.f32 %v4826, %v4881
      %v4894 = vadd.f32 %v4827, %v4886
      %v4895 = vadd.f32 %v4828, %v4889
      %v4896 = vadd.f32 %v4892, %v1851
      %v4897 = vadd.f32 %v4893, %v1856
      %v4898 = vadd.f32 %v4894, %v1861
      %v4899 = vadd.f32 %v4895, %v1866
      %v4900 = vmax.f32 %v4896, 0.0
      %v4901 = vmax.f32 %v4897, 0.0
      %v4902 = vmax.f32 %v4898, 0.0
      %v4903 = vmax.f32 %v4899, 0.0
      %4908 = vrot.lane.b32.xlu0 %v4900, 18
      %v4909 = vpop.permute.xlu0 %4908
      %4910 = vrot.lane.b32.xlu0 %v4901, 18
      %v4911 = vpop.permute.xlu0 %4910
      %4912 = vrot.lane.b32.xlu0 %v4902, 18
      %v4913 = vpop.permute.xlu0 %4912
      %4914 = vrot.lane.b32.xlu0 %v4903, 18
      %v4915 = vpop.permute.xlu0 %4914
      %vm4920 = vcmask 220304
      %4921 = vst.msk [vmem:[%s283] sm:$0xff] %vm4920, %v4909
      %4922 = vst.msk [vmem:[%s283 + $0x8] sm:$0xff] %vm4920, %v4911
      %4923 = vst.msk [vmem:[%s283 + $0x10] sm:$0xff] %vm4920, %v4913
      %4924 = vst.msk [vmem:[%s283 + $0x18] sm:$0xff] %vm4920, %v4915
      %s4925 = scalar_lea.vmem %s277, 96
      %v4926 = vld [vmem:[%s4925] sm:$0xf]
      %v4927 = vld [vmem:[%s4925 + $0x4] sm:$0xf]
      %v4928 = vld [vmem:[%s4925 + $0x8] sm:$0xf]
      %v4929 = vld [vmem:[%s4925 + $0xc] sm:$0xf]
      %v4930 = vld [vmem:[%s4925 + $0x10] sm:$0xf]
      %v4931 = vld [vmem:[%s4925 + $0x14] sm:$0xf]
      %v4932 = vld [vmem:[%s4925 + $0x18] sm:$0xf]
      %v4933 = vld [vmem:[%s4925 + $0x1c] sm:$0xf]
      %v4942 = vunpack.c.l.b16 %v4926
      %v4943 = vunpack.c.l.b16 %v4927
      %v4944 = vunpack.c.l.b16 %v4928
      %v4945 = vunpack.c.l.b16 %v4929
      %v4946 = vunpack.c.l.b16 %v4930
      %v4947 = vunpack.c.l.b16 %v4931
      %v4948 = vunpack.c.l.b16 %v4932
      %v4949 = vunpack.c.l.b16 %v4933
      %v4950 = vpack.c.b16 %v4943, %v4942
      %v4951 = vpack.c.b16 %v4945, %v4944
      %v4952 = vpack.c.b16 %v4947, %v4946
      %v4953 = vpack.c.b16 %v4949, %v4948
      %4958 = vmatprep.subr.bf16.mxu0 0
      %4959 = vmatpush1.bf16.msra.mxu0 %v4950
      %4960 = vmatprep.subr.bf16.mxu0 0
      %4961 = vmatpush1.bf16.msra.mxu0 %v4951
      %4962 = vmatprep.subr.bf16.mxu0 0
      %4963 = vmatpush1.bf16.msra.mxu0 %v4952
      %4964 = vmatprep.subr.bf16.mxu0 0
      %4965 = vmatpush1.bf16.msra.mxu0 %v4953
      %4966 = vmatprep.subr.bf16.mxu0 0
      %4967 = vmatpush1.bf16.msra.mxu0 0
      %4968 = vmatprep.subr.bf16.mxu0 0
      %4969 = vmatpush1.bf16.msra.mxu0 0
      %4970 = vmatprep.subr.bf16.mxu0 0
      %4971 = vmatpush1.bf16.msra.mxu0 0
      %4972 = vmatprep.subr.bf16.mxu0 0
      %4973 = vmatpush1.bf16.msra.mxu0 0
      %4974 = vmatprep.subr.bf16.mxu0 0
      %4975 = vmatpush1.bf16.msra.mxu0 0
      %4976 = vmatprep.subr.bf16.mxu0 0
      %4977 = vmatpush1.bf16.msra.mxu0 0
      %4978 = vmatprep.subr.bf16.mxu0 0
      %4979 = vmatpush1.bf16.msra.mxu0 0
      %4980 = vmatprep.subr.bf16.mxu0 0
      %4981 = vmatpush1.bf16.msra.mxu0 0
      %4982 = vmatprep.subr.bf16.mxu0 0
      %4983 = vmatpush1.bf16.msra.mxu0 0
      %4984 = vmatprep.subr.bf16.mxu0 0
      %4985 = vmatpush1.bf16.msra.mxu0 0
      %4986 = vmatprep.subr.bf16.mxu0 0
      %4987 = vmatpush1.bf16.msra.mxu0 0
      %4988 = vmatprep.subr.bf16.mxu0 0
      %4989 = vmatpush1.bf16.msra.mxu0 0
      %4990 = vmatprep.mubr.bf16.mxu0 0
      %4991 = vmatmul.mubr.bf16.gmra.mrb[0].mxu0 %v353
      %v4992 = vpop.f32.mrb[0].mxu0
      %v4993 = vadd.f32 0.0, %v4992
      %v4994 = vpop.f32.mrb[0].mxu0
      %v4995 = vpop.f32.mrb[0].mxu0
      %v4996 = vadd.f32 0.0, %v4995
      %v4997 = vpop.f32.mrb[0].mxu0
      %4998 = vmatprep.mubr.bf16.mxu0 0
      %4999 = vmatmul.mubr.bf16.gmra.mrb[0].mxu0 %v356
      %v5000 = vpop.f32.mrb[0].mxu0
      %v5001 = vadd.f32 0.0, %v5000
      %v5002 = vpop.f32.mrb[0].mxu0
      %v5003 = vpop.f32.mrb[0].mxu0
      %v5004 = vadd.f32 0.0, %v5003
      %v5005 = vpop.f32.mrb[0].mxu0
      %5006 = vmatprep.mubr.bf16.mxu0 0
      %5007 = vmatmul.mubr.bf16.gmra.mrb[0].mxu0 %v359
      %v5008 = vpop.f32.mrb[0].mxu0
      %v5009 = vadd.f32 0.0, %v5008
      %v5010 = vpop.f32.mrb[0].mxu0
      %v5011 = vpop.f32.mrb[0].mxu0
      %v5012 = vadd.f32 0.0, %v5011
      %v5013 = vpop.f32.mrb[0].mxu0
      %5014 = vmatprep.mubr.bf16.mxu0 0
      %5015 = vmatmul.mubr.bf16.gmra.mrb[0].mxu0 %v362
      %v5016 = vpop.f32.mrb[0].mxu0
      %v5017 = vadd.f32 0.0, %v5016
      %v5018 = vpop.f32.mrb[0].mxu0
      %v5019 = vpop.f32.mrb[0].mxu0
      %v5020 = vadd.f32 0.0, %v5019
      %v5021 = vpop.f32.mrb[0].mxu0
      %5022 = vdwg.mxu0
      %v5023 = vpack.c.bf16 %v4996, %v4993
      %v5024 = vpack.c.bf16 %v5004, %v5001
      %v5025 = vpack.c.bf16 %v5012, %v5009
      %v5026 = vpack.c.bf16 %v5020, %v5017
      %v5027 = vld [vmem:[%s3] sm:$0xf]
      %v5028 = vld [vmem:[%s3 + $0x4] sm:$0xf]
      %v5029 = vld [vmem:[%s3 + $0x8] sm:$0xf]
      %v5030 = vld [vmem:[%s3 + $0xc] sm:$0xf]
      %v5031 = vld [vmem:[%s3 + $0x10] sm:$0xf]
      %v5032 = vld [vmem:[%s3 + $0x14] sm:$0xf]
      %v5033 = vld [vmem:[%s3 + $0x18] sm:$0xf]
      %v5034 = vld [vmem:[%s3 + $0x1c] sm:$0xf]
      %v5035 = vld [vmem:[%s3 + $0x20] sm:$0xf]
      %v5036 = vld [vmem:[%s3 + $0x24] sm:$0xf]
      %v5037 = vld [vmem:[%s3 + $0x28] sm:$0x1]
      %v5038 = vld [vmem:[%s444] sm:$0xf]
      %v5039 = vld [vmem:[%s444 + $0x4] sm:$0xf]
      %v5040 = vld [vmem:[%s444 + $0x8] sm:$0xf]
      %v5041 = vld [vmem:[%s444 + $0xc] sm:$0xf]
      %v5042 = vld [vmem:[%s444 + $0x10] sm:$0xf]
      %v5043 = vld [vmem:[%s444 + $0x14] sm:$0xf]
      %v5044 = vld [vmem:[%s444 + $0x18] sm:$0xf]
      %v5045 = vld [vmem:[%s444 + $0x1c] sm:$0xf]
      %v5046 = vld [vmem:[%s444 + $0x20] sm:$0xf]
      %v5047 = vld [vmem:[%s444 + $0x24] sm:$0xf]
      %v5048 = vld [vmem:[%s444 + $0x28] sm:$0x1]
      %v5060 = vunpack.c.l.b16 %v5038
      %v5061 = vunpack.c.l.b16 %v5039
      %v5062 = vunpack.c.l.b16 %v5040
      %v5063 = vunpack.c.l.b16 %v5041
      %v5064 = vunpack.c.l.b16 %v5042
      %v5065 = vunpack.c.l.b16 %v5043
      %v5066 = vunpack.c.l.b16 %v5044
      %v5067 = vunpack.c.l.b16 %v5045
      %v5068 = vunpack.c.l.b16 %v5046
      %v5069 = vunpack.c.l.b16 %v5047
      %v5070 = vunpack.c.l.b16 %v5048
      %v5071 = vpack.c.b16 %v5061, %v5060
      %v5072 = vpack.c.b16 %v5063, %v5062
      %v5073 = vpack.c.b16 %v5065, %v5064
      %v5074 = vpack.c.b16 %v5067, %v5066
      %v5075 = vpack.c.b16 %v5069, %v5068
      %v5076 = vpack.c.b16 %v5070, %v5070
      %v5083 = vsel %vm489, %v5024, 0
      %v5086 = vand.u32 %v5076, %v495
      %5088 = vmatprep.subr.bf16.mxu0 0
      %5089 = vmatpush1.bf16.msra.mxu0 %v5071
      %5090 = vmatprep.subr.bf16.mxu0 0
      %5091 = vmatpush1.bf16.msra.mxu0 %v5072
      %5092 = vmatprep.subr.bf16.mxu0 0
      %5093 = vmatpush1.bf16.msra.mxu0 %v5073
      %5094 = vmatprep.subr.bf16.mxu0 0
      %5095 = vmatpush1.bf16.msra.mxu0 %v5074
      %5096 = vmatprep.subr.bf16.mxu0 0
      %5097 = vmatpush1.bf16.msra.mxu0 %v5075
      %5098 = vmatprep.subr.bf16.mxu0 0
      %5099 = vmatpush1.bf16.msra.mxu0 %v5086
      %5100 = vmatprep.subr.bf16.mxu0 0
      %5101 = vmatpush1.bf16.msra.mxu0 0
      %5102 = vmatprep.subr.bf16.mxu0 0
      %5103 = vmatpush1.bf16.msra.mxu0 0
      %5104 = vmatprep.subr.bf16.mxu0 0
      %5105 = vmatpush1.bf16.msra.mxu0 0
      %5106 = vmatprep.subr.bf16.mxu0 0
      %5107 = vmatpush1.bf16.msra.mxu0 0
      %5108 = vmatprep.subr.bf16.mxu0 0
      %5109 = vmatpush1.bf16.msra.mxu0 0
      %5110 = vmatprep.subr.bf16.mxu0 0
      %5111 = vmatpush1.bf16.msra.mxu0 0
      %5112 = vmatprep.subr.bf16.mxu0 0
      %5113 = vmatpush1.bf16.msra.mxu0 0
      %5114 = vmatprep.subr.bf16.mxu0 0
      %5115 = vmatpush1.bf16.msra.mxu0 0
      %5116 = vmatprep.subr.bf16.mxu0 0
      %5117 = vmatpush1.bf16.msra.mxu0 0
      %5118 = vmatprep.subr.bf16.mxu0 0
      %5119 = vmatpush1.bf16.msra.mxu0 0
      %5120 = vmatprep.mubr.bf16.mxu0 0
      %5121 = vmatmul.mubr.bf16.gmra.mrb[0].mxu0 %v5083
      %v5122 = vpop.f32.mrb[0].mxu0
      %v5123 = vadd.f32 0.0, %v5122
      %v5124 = vpop.f32.mrb[0].mxu0
      %v5125 = vpop.f32.mrb[0].mxu0
      %v5126 = vadd.f32 0.0, %v5125
      %v5127 = vpop.f32.mrb[0].mxu0
      %5128 = vdwg.mxu0
      %v5140 = vunpack.c.l.b16 %v5027
      %v5141 = vunpack.c.l.b16 %v5028
      %v5142 = vunpack.c.l.b16 %v5029
      %v5143 = vunpack.c.l.b16 %v5030
      %v5144 = vunpack.c.l.b16 %v5031
      %v5145 = vunpack.c.l.b16 %v5032
      %v5146 = vunpack.c.l.b16 %v5033
      %v5147 = vunpack.c.l.b16 %v5034
      %v5148 = vunpack.c.l.b16 %v5035
      %v5149 = vunpack.c.l.b16 %v5036
      %v5150 = vunpack.c.l.b16 %v5037
      %v5151 = vpack.c.b16 %v5141, %v5140
      %v5152 = vpack.c.b16 %v5143, %v5142
      %v5153 = vpack.c.b16 %v5145, %v5144
      %v5154 = vpack.c.b16 %v5147, %v5146
      %v5155 = vpack.c.b16 %v5149, %v5148
      %v5156 = vpack.c.b16 %v5150, %v5150
      %v5163 = vsel %vm489, %v5023, 0
      %v5166 = vand.u32 %v5156, %v495
      %5168 = vmatprep.subr.bf16.mxu0 0
      %5169 = vmatpush1.bf16.msra.mxu0 %v5151
      %5170 = vmatprep.subr.bf16.mxu0 0
      %5171 = vmatpush1.bf16.msra.mxu0 %v5152
      %5172 = vmatprep.subr.bf16.mxu0 0
      %5173 = vmatpush1.bf16.msra.mxu0 %v5153
      %5174 = vmatprep.subr.bf16.mxu0 0
      %5175 = vmatpush1.bf16.msra.mxu0 %v5154
      %5176 = vmatprep.subr.bf16.mxu0 0
      %5177 = vmatpush1.bf16.msra.mxu0 %v5155
      %5178 = vmatprep.subr.bf16.mxu0 0
      %5179 = vmatpush1.bf16.msra.mxu0 %v5166
      %5180 = vmatprep.subr.bf16.mxu0 0
      %5181 = vmatpush1.bf16.msra.mxu0 0
      %5182 = vmatprep.subr.bf16.mxu0 0
      %5183 = vmatpush1.bf16.msra.mxu0 0
      %5184 = vmatprep.subr.bf16.mxu0 0
      %5185 = vmatpush1.bf16.msra.mxu0 0
      %5186 = vmatprep.subr.bf16.mxu0 0
      %5187 = vmatpush1.bf16.msra.mxu0 0
      %5188 = vmatprep.subr.bf16.mxu0 0
      %5189 = vmatpush1.bf16.msra.mxu0 0
      %5190 = vmatprep.subr.bf16.mxu0 0
      %5191 = vmatpush1.bf16.msra.mxu0 0
      %5192 = vmatprep.subr.bf16.mxu0 0
      %5193 = vmatpush1.bf16.msra.mxu0 0
      %5194 = vmatprep.subr.bf16.mxu0 0
      %5195 = vmatpush1.bf16.msra.mxu0 0
      %5196 = vmatprep.subr.bf16.mxu0 0
      %5197 = vmatpush1.bf16.msra.mxu0 0
      %5198 = vmatprep.subr.bf16.mxu0 0
      %5199 = vmatpush1.bf16.msra.mxu0 0
      %5200 = vmatprep.mubr.bf16.mxu0 0
      %5201 = vmatmul.mubr.bf16.gmra.mrb[0].mxu0 %v5163
      %v5202 = vpop.f32.mrb[0].mxu0
      %v5203 = vadd.f32 %v5123, %v5202
      %v5204 = vpop.f32.mrb[0].mxu0
      %v5205 = vpop.f32.mrb[0].mxu0
      %v5206 = vadd.f32 %v5126, %v5205
      %v5207 = vpop.f32.mrb[0].mxu0
      %5208 = vdwg.mxu0
      %v5209 = vld [vmem:[%s620] sm:$0xf]
      %v5210 = vld [vmem:[%s620 + $0x4] sm:$0xf]
      %v5211 = vld [vmem:[%s620 + $0x8] sm:$0xf]
      %v5212 = vld [vmem:[%s620 + $0xc] sm:$0xf]
      %v5213 = vld [vmem:[%s620 + $0x10] sm:$0xf]
      %v5214 = vld [vmem:[%s620 + $0x14] sm:$0xf]
      %v5215 = vld [vmem:[%s620 + $0x18] sm:$0xf]
      %v5216 = vld [vmem:[%s620 + $0x1c] sm:$0xf]
      %v5217 = vld [vmem:[%s620 + $0x20] sm:$0xf]
      %v5218 = vld [vmem:[%s620 + $0x24] sm:$0xf]
      %v5219 = vld [vmem:[%s620 + $0x28] sm:$0x1]
      %v5231 = vunpack.c.l.b16 %v5209
      %v5232 = vunpack.c.l.b16 %v5210
      %v5233 = vunpack.c.l.b16 %v5211
      %v5234 = vunpack.c.l.b16 %v5212
      %v5235 = vunpack.c.l.b16 %v5213
      %v5236 = vunpack.c.l.b16 %v5214
      %v5237 = vunpack.c.l.b16 %v5215
      %v5238 = vunpack.c.l.b16 %v5216
      %v5239 = vunpack.c.l.b16 %v5217
      %v5240 = vunpack.c.l.b16 %v5218
      %v5241 = vunpack.c.l.b16 %v5219
      %v5242 = vpack.c.b16 %v5232, %v5231
      %v5243 = vpack.c.b16 %v5234, %v5233
      %v5244 = vpack.c.b16 %v5236, %v5235
      %v5245 = vpack.c.b16 %v5238, %v5237
      %v5246 = vpack.c.b16 %v5240, %v5239
      %v5247 = vpack.c.b16 %v5241, %v5241
      %v5254 = vsel %vm489, %v5025, 0
      %v5257 = vand.u32 %v5247, %v495
      %5259 = vmatprep.subr.bf16.mxu0 0
      %5260 = vmatpush1.bf16.msra.mxu0 %v5242
      %5261 = vmatprep.subr.bf16.mxu0 0
      %5262 = vmatpush1.bf16.msra.mxu0 %v5243
      %5263 = vmatprep.subr.bf16.mxu0 0
      %5264 = vmatpush1.bf16.msra.mxu0 %v5244
      %5265 = vmatprep.subr.bf16.mxu0 0
      %5266 = vmatpush1.bf16.msra.mxu0 %v5245
      %5267 = vmatprep.subr.bf16.mxu0 0
      %5268 = vmatpush1.bf16.msra.mxu0 %v5246
      %5269 = vmatprep.subr.bf16.mxu0 0
      %5270 = vmatpush1.bf16.msra.mxu0 %v5257
      %5271 = vmatprep.subr.bf16.mxu0 0
      %5272 = vmatpush1.bf16.msra.mxu0 0
      %5273 = vmatprep.subr.bf16.mxu0 0
      %5274 = vmatpush1.bf16.msra.mxu0 0
      %5275 = vmatprep.subr.bf16.mxu0 0
      %5276 = vmatpush1.bf16.msra.mxu0 0
      %5277 = vmatprep.subr.bf16.mxu0 0
      %5278 = vmatpush1.bf16.msra.mxu0 0
      %5279 = vmatprep.subr.bf16.mxu0 0
      %5280 = vmatpush1.bf16.msra.mxu0 0
      %5281 = vmatprep.subr.bf16.mxu0 0
      %5282 = vmatpush1.bf16.msra.mxu0 0
      %5283 = vmatprep.subr.bf16.mxu0 0
      %5284 = vmatpush1.bf16.msra.mxu0 0
      %5285 = vmatprep.subr.bf16.mxu0 0
      %5286 = vmatpush1.bf16.msra.mxu0 0
      %5287 = vmatprep.subr.bf16.mxu0 0
      %5288 = vmatpush1.bf16.msra.mxu0 0
      %5289 = vmatprep.subr.bf16.mxu0 0
      %5290 = vmatpush1.bf16.msra.mxu0 0
      %5291 = vmatprep.mubr.bf16.mxu0 0
      %5292 = vmatmul.mubr.bf16.gmra.mrb[0].mxu0 %v5254
      %v5293 = vpop.f32.mrb[0].mxu0
      %v5294 = vadd.f32 0.0, %v5293
      %v5295 = vpop.f32.mrb[0].mxu0
      %v5296 = vpop.f32.mrb[0].mxu0
      %v5297 = vadd.f32 0.0, %v5296
      %v5298 = vpop.f32.mrb[0].mxu0
      %5299 = vdwg.mxu0
      %v5300 = vadd.f32 %v5203, %v5294
      %v5301 = vadd.f32 %v5206, %v5297
      %v5302 = vld [vmem:[%s714] sm:$0xf]
      %v5303 = vld [vmem:[%s714 + $0x4] sm:$0xf]
      %v5304 = vld [vmem:[%s714 + $0x8] sm:$0xf]
      %v5305 = vld [vmem:[%s714 + $0xc] sm:$0xf]
      %v5306 = vld [vmem:[%s714 + $0x10] sm:$0xf]
      %v5307 = vld [vmem:[%s714 + $0x14] sm:$0xf]
      %v5308 = vld [vmem:[%s714 + $0x18] sm:$0xf]
      %v5309 = vld [vmem:[%s714 + $0x1c] sm:$0xf]
      %v5310 = vld [vmem:[%s714 + $0x20] sm:$0xf]
      %v5311 = vld [vmem:[%s714 + $0x24] sm:$0xf]
      %v5312 = vld [vmem:[%s714 + $0x28] sm:$0x1]
      %v5324 = vunpack.c.l.b16 %v5302
      %v5325 = vunpack.c.l.b16 %v5303
      %v5326 = vunpack.c.l.b16 %v5304
      %v5327 = vunpack.c.l.b16 %v5305
      %v5328 = vunpack.c.l.b16 %v5306
      %v5329 = vunpack.c.l.b16 %v5307
      %v5330 = vunpack.c.l.b16 %v5308
      %v5331 = vunpack.c.l.b16 %v5309
      %v5332 = vunpack.c.l.b16 %v5310
      %v5333 = vunpack.c.l.b16 %v5311
      %v5334 = vunpack.c.l.b16 %v5312
      %v5335 = vpack.c.b16 %v5325, %v5324
      %v5336 = vpack.c.b16 %v5327, %v5326
      %v5337 = vpack.c.b16 %v5329, %v5328
      %v5338 = vpack.c.b16 %v5331, %v5330
      %v5339 = vpack.c.b16 %v5333, %v5332
      %v5340 = vpack.c.b16 %v5334, %v5334
      %v5347 = vsel %vm489, %v5026, 0
      %v5350 = vand.u32 %v5340, %v495
      %5352 = vmatprep.subr.bf16.mxu0 0
      %5353 = vmatpush1.bf16.msra.mxu0 %v5335
      %5354 = vmatprep.subr.bf16.mxu0 0
      %5355 = vmatpush1.bf16.msra.mxu0 %v5336
      %5356 = vmatprep.subr.bf16.mxu0 0
      %5357 = vmatpush1.bf16.msra.mxu0 %v5337
      %5358 = vmatprep.subr.bf16.mxu0 0
      %5359 = vmatpush1.bf16.msra.mxu0 %v5338
      %5360 = vmatprep.subr.bf16.mxu0 0
      %5361 = vmatpush1.bf16.msra.mxu0 %v5339
      %5362 = vmatprep.subr.bf16.mxu0 0
      %5363 = vmatpush1.bf16.msra.mxu0 %v5350
      %5364 = vmatprep.subr.bf16.mxu0 0
      %5365 = vmatpush1.bf16.msra.mxu0 0
      %5366 = vmatprep.subr.bf16.mxu0 0
      %5367 = vmatpush1.bf16.msra.mxu0 0
      %5368 = vmatprep.subr.bf16.mxu0 0
      %5369 = vmatpush1.bf16.msra.mxu0 0
      %5370 = vmatprep.subr.bf16.mxu0 0
      %5371 = vmatpush1.bf16.msra.mxu0 0
      %5372 = vmatprep.subr.bf16.mxu0 0
      %5373 = vmatpush1.bf16.msra.mxu0 0
      %5374 = vmatprep.subr.bf16.mxu0 0
      %5375 = vmatpush1.bf16.msra.mxu0 0
      %5376 = vmatprep.subr.bf16.mxu0 0
      %5377 = vmatpush1.bf16.msra.mxu0 0
      %5378 = vmatprep.subr.bf16.mxu0 0
      %5379 = vmatpush1.bf16.msra.mxu0 0
      %5380 = vmatprep.subr.bf16.mxu0 0
      %5381 = vmatpush1.bf16.msra.mxu0 0
      %5382 = vmatprep.subr.bf16.mxu0 0
      %5383 = vmatpush1.bf16.msra.mxu0 0
      %5384 = vmatprep.mubr.bf16.mxu0 0
      %5385 = vmatmul.mubr.bf16.gmra.mrb[0].mxu0 %v5347
      %v5386 = vpop.f32.mrb[0].mxu0
      %v5387 = vadd.f32 0.0, %v5386
      %v5388 = vpop.f32.mrb[0].mxu0
      %v5389 = vpop.f32.mrb[0].mxu0
      %v5390 = vadd.f32 0.0, %v5389
      %v5391 = vpop.f32.mrb[0].mxu0
      %5392 = vdwg.mxu0
      %v5393 = vadd.f32 %v5300, %v5387
      %v5394 = vadd.f32 %v5301, %v5390
      %v5395 = vadd.f32 %v5393, %v811
      %v5396 = vadd.f32 %v5394, %v816
      %v5397 = vmax.f32 %v5395, 0.0
      %v5398 = vmax.f32 %v5396, 0.0
      %v5399 = vpack.c.bf16 %v5398, %v5397
      %v5400 = vld [vmem:[%s4] sm:$0xf]
      %v5401 = vld [vmem:[%s4 + $0x4] sm:$0xf]
      %v5402 = vld [vmem:[%s4 + $0x8] sm:$0xf]
      %v5403 = vld [vmem:[%s4 + $0xc] sm:$0xf]
      %v5404 = vld [vmem:[%s4 + $0x10] sm:$0xf]
      %v5405 = vld [vmem:[%s4 + $0x14] sm:$0xf]
      %v5406 = vld [vmem:[%s4 + $0x18] sm:$0xf]
      %v5407 = vld [vmem:[%s4 + $0x1c] sm:$0xf]
      %v5408 = vld [vmem:[%s4 + $0x20] sm:$0xf]
      %v5409 = vld [vmem:[%s4 + $0x24] sm:$0xf]
      %v5410 = vld [vmem:[%s4 + $0x28] sm:$0xf]
      %v5411 = vld [vmem:[%s4 + $0x2c] sm:$0xf]
      %v5412 = vld [vmem:[%s4 + $0x30] sm:$0xf]
      %v5413 = vld [vmem:[%s4 + $0x34] sm:$0xf]
      %v5414 = vld [vmem:[%s4 + $0x38] sm:$0xf]
      %v5415 = vld [vmem:[%s4 + $0x3c] sm:$0xf]
      %v5416 = vld [vmem:[%s839] sm:$0xf]
      %v5417 = vld [vmem:[%s839 + $0x4] sm:$0xf]
      %v5418 = vld [vmem:[%s839 + $0x8] sm:$0xf]
      %v5419 = vld [vmem:[%s839 + $0xc] sm:$0xf]
      %v5420 = vld [vmem:[%s839 + $0x10] sm:$0xf]
      %v5421 = vld [vmem:[%s839 + $0x14] sm:$0xf]
      %v5422 = vld [vmem:[%s839 + $0x18] sm:$0xf]
      %v5423 = vld [vmem:[%s839 + $0x1c] sm:$0xf]
      %v5424 = vld [vmem:[%s839 + $0x20] sm:$0xf]
      %v5425 = vld [vmem:[%s839 + $0x24] sm:$0xf]
      %v5426 = vld [vmem:[%s839 + $0x28] sm:$0xf]
      %v5427 = vld [vmem:[%s839 + $0x2c] sm:$0xf]
      %v5428 = vld [vmem:[%s839 + $0x30] sm:$0xf]
      %v5429 = vld [vmem:[%s839 + $0x34] sm:$0xf]
      %v5430 = vld [vmem:[%s839 + $0x38] sm:$0xf]
      %v5431 = vld [vmem:[%s839 + $0x3c] sm:$0xf]
      %v5448 = vunpack.c.l.b16 %v5416
      %v5449 = vunpack.c.l.b16 %v5417
      %v5450 = vunpack.c.l.b16 %v5418
      %v5451 = vunpack.c.l.b16 %v5419
      %v5452 = vunpack.c.l.b16 %v5420
      %v5453 = vunpack.c.l.b16 %v5421
      %v5454 = vunpack.c.l.b16 %v5422
      %v5455 = vunpack.c.l.b16 %v5423
      %v5456 = vunpack.c.l.b16 %v5424
      %v5457 = vunpack.c.l.b16 %v5425
      %v5458 = vunpack.c.l.b16 %v5426
      %v5459 = vunpack.c.l.b16 %v5427
      %v5460 = vunpack.c.l.b16 %v5428
      %v5461 = vunpack.c.l.b16 %v5429
      %v5462 = vunpack.c.l.b16 %v5430
      %v5463 = vunpack.c.l.b16 %v5431
      %v5464 = vpack.c.b16 %v5449, %v5448
      %v5465 = vpack.c.b16 %v5451, %v5450
      %v5466 = vpack.c.b16 %v5453, %v5452
      %v5467 = vpack.c.b16 %v5455, %v5454
      %v5468 = vpack.c.b16 %v5457, %v5456
      %v5469 = vpack.c.b16 %v5459, %v5458
      %v5470 = vpack.c.b16 %v5461, %v5460
      %v5471 = vpack.c.b16 %v5463, %v5462
      %5473 = vrot.lane.b32.xlu0 %v5399, 112
      %v5474 = vpop.permute.xlu0 %5473
      %v5477 = vsel %vm900, %v5464, 0
      %v5480 = vsel %vm900, %v5465, 0
      %v5483 = vsel %vm900, %v5466, 0
      %v5486 = vsel %vm900, %v5467, 0
      %v5489 = vsel %vm900, %v5468, 0
      %v5492 = vsel %vm900, %v5469, 0
      %v5495 = vsel %vm900, %v5470, 0
      %v5498 = vsel %vm900, %v5471, 0
      %5500 = vmatprep.subr.bf16.mxu0 0
      %5501 = vmatpush1.bf16.msra.mxu0 %v5474
      %5502 = vmatprep.subr.bf16.mxu0 0
      %5503 = vmatpush1.bf16.msra.mxu0 0
      %5504 = vmatprep.subr.bf16.mxu0 0
      %5505 = vmatpush1.bf16.msra.mxu0 0
      %5506 = vmatprep.subr.bf16.mxu0 0
      %5507 = vmatpush1.bf16.msra.mxu0 0
      %5508 = vmatprep.subr.bf16.mxu0 0
      %5509 = vmatpush1.bf16.msra.mxu0 0
      %5510 = vmatprep.subr.bf16.mxu0 0
      %5511 = vmatpush1.bf16.msra.mxu0 0
      %5512 = vmatprep.subr.bf16.mxu0 0
      %5513 = vmatpush1.bf16.msra.mxu0 0
      %5514 = vmatprep.subr.bf16.mxu0 0
      %5515 = vmatpush1.bf16.msra.mxu0 0
      %5516 = vmatprep.subr.bf16.mxu0 0
      %5517 = vmatpush1.bf16.msra.mxu0 0
      %5518 = vmatprep.subr.bf16.mxu0 0
      %5519 = vmatpush1.bf16.msra.mxu0 0
      %5520 = vmatprep.subr.bf16.mxu0 0
      %5521 = vmatpush1.bf16.msra.mxu0 0
      %5522 = vmatprep.subr.bf16.mxu0 0
      %5523 = vmatpush1.bf16.msra.mxu0 0
      %5524 = vmatprep.subr.bf16.mxu0 0
      %5525 = vmatpush1.bf16.msra.mxu0 0
      %5526 = vmatprep.subr.bf16.mxu0 0
      %5527 = vmatpush1.bf16.msra.mxu0 0
      %5528 = vmatprep.subr.bf16.mxu0 0
      %5529 = vmatpush1.bf16.msra.mxu0 0
      %5530 = vmatprep.subr.bf16.mxu0 0
      %5531 = vmatpush1.bf16.msra.mxu0 0
      %5532 = vmatprep.mubr.bf16.mxu0 0
      %5533 = vmatmul.mubr.bf16.gmra.mrb[0].mxu0 %v5477
      %v5534 = vpop.f32.mrb[0].mxu0
      %v5535 = vadd.f32 0.0, %v5534
      %v5536 = vpop.f32.mrb[0].mxu0
      %v5537 = vpop.f32.mrb[0].mxu0
      %v5538 = vadd.f32 0.0, %v5537
      %v5539 = vpop.f32.mrb[0].mxu0
      %5540 = vmatprep.mubr.bf16.mxu0 0
      %5541 = vmatmul.mubr.bf16.gmra.mrb[0].mxu0 %v5480
      %v5542 = vpop.f32.mrb[0].mxu0
      %v5543 = vadd.f32 0.0, %v5542
      %v5544 = vpop.f32.mrb[0].mxu0
      %v5545 = vpop.f32.mrb[0].mxu0
      %v5546 = vadd.f32 0.0, %v5545
      %v5547 = vpop.f32.mrb[0].mxu0
      %5548 = vmatprep.mubr.bf16.mxu0 0
      %5549 = vmatmul.mubr.bf16.gmra.mrb[0].mxu0 %v5483
      %v5550 = vpop.f32.mrb[0].mxu0
      %v5551 = vadd.f32 0.0, %v5550
      %v5552 = vpop.f32.mrb[0].mxu0
      %v5553 = vpop.f32.mrb[0].mxu0
      %v5554 = vadd.f32 0.0, %v5553
      %v5555 = vpop.f32.mrb[0].mxu0
      %5556 = vmatprep.mubr.bf16.mxu0 0
      %5557 = vmatmul.mubr.bf16.gmra.mrb[0].mxu0 %v5486
      %v5558 = vpop.f32.mrb[0].mxu0
      %v5559 = vadd.f32 0.0, %v5558
      %v5560 = vpop.f32.mrb[0].mxu0
      %v5561 = vpop.f32.mrb[0].mxu0
      %v5562 = vadd.f32 0.0, %v5561
      %v5563 = vpop.f32.mrb[0].mxu0
      %5564 = vmatprep.mubr.bf16.mxu0 0
      %5565 = vmatmul.mubr.bf16.gmra.mrb[0].mxu0 %v5489
      %v5566 = vpop.f32.mrb[0].mxu0
      %v5567 = vadd.f32 0.0, %v5566
      %v5568 = vpop.f32.mrb[0].mxu0
      %v5569 = vpop.f32.mrb[0].mxu0
      %v5570 = vadd.f32 0.0, %v5569
      %v5571 = vpop.f32.mrb[0].mxu0
      %5572 = vmatprep.mubr.bf16.mxu0 0
      %5573 = vmatmul.mubr.bf16.gmra.mrb[0].mxu0 %v5492
      %v5574 = vpop.f32.mrb[0].mxu0
      %v5575 = vadd.f32 0.0, %v5574
      %v5576 = vpop.f32.mrb[0].mxu0
      %v5577 = vpop.f32.mrb[0].mxu0
      %v5578 = vadd.f32 0.0, %v5577
      %v5579 = vpop.f32.mrb[0].mxu0
      %5580 = vmatprep.mubr.bf16.mxu0 0
      %5581 = vmatmul.mubr.bf16.gmra.mrb[0].mxu0 %v5495
      %v5582 = vpop.f32.mrb[0].mxu0
      %v5583 = vadd.f32 0.0, %v5582
      %v5584 = vpop.f32.mrb[0].mxu0
      %v5585 = vpop.f32.mrb[0].mxu0
      %v5586 = vadd.f32 0.0, %v5585
      %v5587 = vpop.f32.mrb[0].mxu0
      %5588 = vmatprep.mubr.bf16.mxu0 0
      %5589 = vmatmul.mubr.bf16.gmra.mrb[0].mxu0 %v5498
      %v5590 = vpop.f32.mrb[0].mxu0
      %v5591 = vadd.f32 0.0, %v5590
      %v5592 = vpop.f32.mrb[0].mxu0
      %v5593 = vpop.f32.mrb[0].mxu0
      %v5594 = vadd.f32 0.0, %v5593
      %v5595 = vpop.f32.mrb[0].mxu0
      %5596 = vdwg.mxu0
      %v5613 = vunpack.c.l.b16 %v5400
      %v5614 = vunpack.c.l.b16 %v5401
      %v5615 = vunpack.c.l.b16 %v5402
      %v5616 = vunpack.c.l.b16 %v5403
      %v5617 = vunpack.c.l.b16 %v5404
      %v5618 = vunpack.c.l.b16 %v5405
      %v5619 = vunpack.c.l.b16 %v5406
      %v5620 = vunpack.c.l.b16 %v5407
      %v5621 = vunpack.c.l.b16 %v5408
      %v5622 = vunpack.c.l.b16 %v5409
      %v5623 = vunpack.c.l.b16 %v5410
      %v5624 = vunpack.c.l.b16 %v5411
      %v5625 = vunpack.c.l.b16 %v5412
      %v5626 = vunpack.c.l.b16 %v5413
      %v5627 = vunpack.c.l.b16 %v5414
      %v5628 = vunpack.c.l.b16 %v5415
      %v5629 = vpack.c.b16 %v5614, %v5613
      %v5630 = vpack.c.b16 %v5616, %v5615
      %v5631 = vpack.c.b16 %v5618, %v5617
      %v5632 = vpack.c.b16 %v5620, %v5619
      %v5633 = vpack.c.b16 %v5622, %v5621
      %v5634 = vpack.c.b16 %v5624, %v5623
      %v5635 = vpack.c.b16 %v5626, %v5625
      %v5636 = vpack.c.b16 %v5628, %v5627
      %v5638 = vsel %vm900, %v5629, 0
      %v5641 = vsel %vm900, %v5630, 0
      %v5644 = vsel %vm900, %v5631, 0
      %v5647 = vsel %vm900, %v5632, 0
      %v5650 = vsel %vm900, %v5633, 0
      %v5653 = vsel %vm900, %v5634, 0
      %v5656 = vsel %vm900, %v5635, 0
      %v5659 = vsel %vm900, %v5636, 0
      %5661 = vmatprep.subr.bf16.mxu0 0
      %5662 = vmatpush1.bf16.msra.mxu0 %v5399
      %5663 = vmatprep.subr.bf16.mxu0 0
      %5664 = vmatpush1.bf16.msra.mxu0 0
      %5665 = vmatprep.subr.bf16.mxu0 0
      %5666 = vmatpush1.bf16.msra.mxu0 0
      %5667 = vmatprep.subr.bf16.mxu0 0
      %5668 = vmatpush1.bf16.msra.mxu0 0
      %5669 = vmatprep.subr.bf16.mxu0 0
      %5670 = vmatpush1.bf16.msra.mxu0 0
      %5671 = vmatprep.subr.bf16.mxu0 0
      %5672 = vmatpush1.bf16.msra.mxu0 0
      %5673 = vmatprep.subr.bf16.mxu0 0
      %5674 = vmatpush1.bf16.msra.mxu0 0
      %5675 = vmatprep.subr.bf16.mxu0 0
      %5676 = vmatpush1.bf16.msra.mxu0 0
      %5677 = vmatprep.subr.bf16.mxu0 0
      %5678 = vmatpush1.bf16.msra.mxu0 0
      %5679 = vmatprep.subr.bf16.mxu0 0
      %5680 = vmatpush1.bf16.msra.mxu0 0
      %5681 = vmatprep.subr.bf16.mxu0 0
      %5682 = vmatpush1.bf16.msra.mxu0 0
      %5683 = vmatprep.subr.bf16.mxu0 0
      %5684 = vmatpush1.bf16.msra.mxu0 0
      %5685 = vmatprep.subr.bf16.mxu0 0
      %5686 = vmatpush1.bf16.msra.mxu0 0
      %5687 = vmatprep.subr.bf16.mxu0 0
      %5688 = vmatpush1.bf16.msra.mxu0 0
      %5689 = vmatprep.subr.bf16.mxu0 0
      %5690 = vmatpush1.bf16.msra.mxu0 0
      %5691 = vmatprep.subr.bf16.mxu0 0
      %5692 = vmatpush1.bf16.msra.mxu0 0
      %5693 = vmatprep.mubr.bf16.mxu0 0
      %5694 = vmatmul.mubr.bf16.gmra.mrb[0].mxu0 %v5638
      %v5695 = vpop.f32.mrb[0].mxu0
      %v5696 = vadd.f32 %v5535, %v5695
      %v5697 = vpop.f32.mrb[0].mxu0
      %v5698 = vpop.f32.mrb[0].mxu0
      %v5699 = vadd.f32 %v5538, %v5698
      %v5700 = vpop.f32.mrb[0].mxu0
      %5701 = vmatprep.mubr.bf16.mxu0 0
      %5702 = vmatmul.mubr.bf16.gmra.mrb[0].mxu0 %v5641
      %v5703 = vpop.f32.mrb[0].mxu0
      %v5704 = vadd.f32 %v5543, %v5703
      %v5705 = vpop.f32.mrb[0].mxu0
      %v5706 = vpop.f32.mrb[0].mxu0
      %v5707 = vadd.f32 %v5546, %v5706
      %v5708 = vpop.f32.mrb[0].mxu0
      %5709 = vmatprep.mubr.bf16.mxu0 0
      %5710 = vmatmul.mubr.bf16.gmra.mrb[0].mxu0 %v5644
      %v5711 = vpop.f32.mrb[0].mxu0
      %v5712 = vadd.f32 %v5551, %v5711
      %v5713 = vpop.f32.mrb[0].mxu0
      %v5714 = vpop.f32.mrb[0].mxu0
      %v5715 = vadd.f32 %v5554, %v5714
      %v5716 = vpop.f32.mrb[0].mxu0
      %5717 = vmatprep.mubr.bf16.mxu0 0
      %5718 = vmatmul.mubr.bf16.gmra.mrb[0].mxu0 %v5647
      %v5719 = vpop.f32.mrb[0].mxu0
      %v5720 = vadd.f32 %v5559, %v5719
      %v5721 = vpop.f32.mrb[0].mxu0
      %v5722 = vpop.f32.mrb[0].mxu0
      %v5723 = vadd.f32 %v5562, %v5722
      %v5724 = vpop.f32.mrb[0].mxu0
      %5725 = vmatprep.mubr.bf16.mxu0 0
      %5726 = vmatmul.mubr.bf16.gmra.mrb[0].mxu0 %v5650
      %v5727 = vpop.f32.mrb[0].mxu0
      %v5728 = vadd.f32 %v5567, %v5727
      %v5729 = vpop.f32.mrb[0].mxu0
      %v5730 = vpop.f32.mrb[0].mxu0
      %v5731 = vadd.f32 %v5570, %v5730
      %v5732 = vpop.f32.mrb[0].mxu0
      %5733 = vmatprep.mubr.bf16.mxu0 0
      %5734 = vmatmul.mubr.bf16.gmra.mrb[0].mxu0 %v5653
      %v5735 = vpop.f32.mrb[0].mxu0
      %v5736 = vadd.f32 %v5575, %v5735
      %v5737 = vpop.f32.mrb[0].mxu0
      %v5738 = vpop.f32.mrb[0].mxu0
      %v5739 = vadd.f32 %v5578, %v5738
      %v5740 = vpop.f32.mrb[0].mxu0
      %5741 = vmatprep.mubr.bf16.mxu0 0
      %5742 = vmatmul.mubr.bf16.gmra.mrb[0].mxu0 %v5656
      %v5743 = vpop.f32.mrb[0].mxu0
      %v5744 = vadd.f32 %v5583, %v5743
      %v5745 = vpop.f32.mrb[0].mxu0
      %v5746 = vpop.f32.mrb[0].mxu0
      %v5747 = vadd.f32 %v5586, %v5746
      %v5748 = vpop.f32.mrb[0].mxu0
      %5749 = vmatprep.mubr.bf16.mxu0 0
      %5750 = vmatmul.mubr.bf16.gmra.mrb[0].mxu0 %v5659
      %v5751 = vpop.f32.mrb[0].mxu0
      %v5752 = vadd.f32 %v5591, %v5751
      %v5753 = vpop.f32.mrb[0].mxu0
      %v5754 = vpop.f32.mrb[0].mxu0
      %v5755 = vadd.f32 %v5594, %v5754
      %v5756 = vpop.f32.mrb[0].mxu0
      %5757 = vdwg.mxu0
      %v5758 = vld [vmem:[%s1183] sm:$0xf]
      %v5759 = vld [vmem:[%s1183 + $0x4] sm:$0xf]
      %v5760 = vld [vmem:[%s1183 + $0x8] sm:$0xf]
      %v5761 = vld [vmem:[%s1183 + $0xc] sm:$0xf]
      %v5762 = vld [vmem:[%s1183 + $0x10] sm:$0xf]
      %v5763 = vld [vmem:[%s1183 + $0x14] sm:$0xf]
      %v5764 = vld [vmem:[%s1183 + $0x18] sm:$0xf]
      %v5765 = vld [vmem:[%s1183 + $0x1c] sm:$0xf]
      %v5766 = vld [vmem:[%s1183 + $0x20] sm:$0xf]
      %v5767 = vld [vmem:[%s1183 + $0x24] sm:$0xf]
      %v5768 = vld [vmem:[%s1183 + $0x28] sm:$0xf]
      %v5769 = vld [vmem:[%s1183 + $0x2c] sm:$0xf]
      %v5770 = vld [vmem:[%s1183 + $0x30] sm:$0xf]
      %v5771 = vld [vmem:[%s1183 + $0x34] sm:$0xf]
      %v5772 = vld [vmem:[%s1183 + $0x38] sm:$0xf]
      %v5773 = vld [vmem:[%s1183 + $0x3c] sm:$0xf]
      %v5790 = vunpack.c.l.b16 %v5758
      %v5791 = vunpack.c.l.b16 %v5759
      %v5792 = vunpack.c.l.b16 %v5760
      %v5793 = vunpack.c.l.b16 %v5761
      %v5794 = vunpack.c.l.b16 %v5762
      %v5795 = vunpack.c.l.b16 %v5763
      %v5796 = vunpack.c.l.b16 %v5764
      %v5797 = vunpack.c.l.b16 %v5765
      %v5798 = vunpack.c.l.b16 %v5766
      %v5799 = vunpack.c.l.b16 %v5767
      %v5800 = vunpack.c.l.b16 %v5768
      %v5801 = vunpack.c.l.b16 %v5769
      %v5802 = vunpack.c.l.b16 %v5770
      %v5803 = vunpack.c.l.b16 %v5771
      %v5804 = vunpack.c.l.b16 %v5772
      %v5805 = vunpack.c.l.b16 %v5773
      %v5806 = vpack.c.b16 %v5791, %v5790
      %v5807 = vpack.c.b16 %v5793, %v5792
      %v5808 = vpack.c.b16 %v5795, %v5794
      %v5809 = vpack.c.b16 %v5797, %v5796
      %v5810 = vpack.c.b16 %v5799, %v5798
      %v5811 = vpack.c.b16 %v5801, %v5800
      %v5812 = vpack.c.b16 %v5803, %v5802
      %v5813 = vpack.c.b16 %v5805, %v5804
      %5814 = vrot.lane.b32.xlu0 %v5399, 96
      %v5815 = vpop.permute.xlu0 %5814
      %v5818 = vsel %vm900, %v5806, 0
      %v5821 = vsel %vm900, %v5807, 0
      %v5824 = vsel %vm900, %v5808, 0
      %v5827 = vsel %vm900, %v5809, 0
      %v5830 = vsel %vm900, %v5810, 0
      %v5833 = vsel %vm900, %v5811, 0
      %v5836 = vsel %vm900, %v5812, 0
      %v5839 = vsel %vm900, %v5813, 0
      %5841 = vmatprep.subr.bf16.mxu0 0
      %5842 = vmatpush1.bf16.msra.mxu0 %v5815
      %5843 = vmatprep.subr.bf16.mxu0 0
      %5844 = vmatpush1.bf16.msra.mxu0 0
      %5845 = vmatprep.subr.bf16.mxu0 0
      %5846 = vmatpush1.bf16.msra.mxu0 0
      %5847 = vmatprep.subr.bf16.mxu0 0
      %5848 = vmatpush1.bf16.msra.mxu0 0
      %5849 = vmatprep.subr.bf16.mxu0 0
      %5850 = vmatpush1.bf16.msra.mxu0 0
      %5851 = vmatprep.subr.bf16.mxu0 0
      %5852 = vmatpush1.bf16.msra.mxu0 0
      %5853 = vmatprep.subr.bf16.mxu0 0
      %5854 = vmatpush1.bf16.msra.mxu0 0
      %5855 = vmatprep.subr.bf16.mxu0 0
      %5856 = vmatpush1.bf16.msra.mxu0 0
      %5857 = vmatprep.subr.bf16.mxu0 0
      %5858 = vmatpush1.bf16.msra.mxu0 0
      %5859 = vmatprep.subr.bf16.mxu0 0
      %5860 = vmatpush1.bf16.msra.mxu0 0
      %5861 = vmatprep.subr.bf16.mxu0 0
      %5862 = vmatpush1.bf16.msra.mxu0 0
      %5863 = vmatprep.subr.bf16.mxu0 0
      %5864 = vmatpush1.bf16.msra.mxu0 0
      %5865 = vmatprep.subr.bf16.mxu0 0
      %5866 = vmatpush1.bf16.msra.mxu0 0
      %5867 = vmatprep.subr.bf16.mxu0 0
      %5868 = vmatpush1.bf16.msra.mxu0 0
      %5869 = vmatprep.subr.bf16.mxu0 0
      %5870 = vmatpush1.bf16.msra.mxu0 0
      %5871 = vmatprep.subr.bf16.mxu0 0
      %5872 = vmatpush1.bf16.msra.mxu0 0
      %5873 = vmatprep.mubr.bf16.mxu0 0
      %5874 = vmatmul.mubr.bf16.gmra.mrb[0].mxu0 %v5818
      %v5875 = vpop.f32.mrb[0].mxu0
      %v5876 = vadd.f32 0.0, %v5875
      %v5877 = vpop.f32.mrb[0].mxu0
      %v5878 = vpop.f32.mrb[0].mxu0
      %v5879 = vadd.f32 0.0, %v5878
      %v5880 = vpop.f32.mrb[0].mxu0
      %5881 = vmatprep.mubr.bf16.mxu0 0
      %5882 = vmatmul.mubr.bf16.gmra.mrb[0].mxu0 %v5821
      %v5883 = vpop.f32.mrb[0].mxu0
      %v5884 = vadd.f32 0.0, %v5883
      %v5885 = vpop.f32.mrb[0].mxu0
      %v5886 = vpop.f32.mrb[0].mxu0
      %v5887 = vadd.f32 0.0, %v5886
      %v5888 = vpop.f32.mrb[0].mxu0
      %5889 = vmatprep.mubr.bf16.mxu0 0
      %5890 = vmatmul.mubr.bf16.gmra.mrb[0].mxu0 %v5824
      %v5891 = vpop.f32.mrb[0].mxu0
      %v5892 = vadd.f32 0.0, %v5891
      %v5893 = vpop.f32.mrb[0].mxu0
      %v5894 = vpop.f32.mrb[0].mxu0
      %v5895 = vadd.f32 0.0, %v5894
      %v5896 = vpop.f32.mrb[0].mxu0
      %5897 = vmatprep.mubr.bf16.mxu0 0
      %5898 = vmatmul.mubr.bf16.gmra.mrb[0].mxu0 %v5827
      %v5899 = vpop.f32.mrb[0].mxu0
      %v5900 = vadd.f32 0.0, %v5899
      %v5901 = vpop.f32.mrb[0].mxu0
      %v5902 = vpop.f32.mrb[0].mxu0
      %v5903 = vadd.f32 0.0, %v5902
      %v5904 = vpop.f32.mrb[0].mxu0
      %5905 = vmatprep.mubr.bf16.mxu0 0
      %5906 = vmatmul.mubr.bf16.gmra.mrb[0].mxu0 %v5830
      %v5907 = vpop.f32.mrb[0].mxu0
      %v5908 = vadd.f32 0.0, %v5907
      %v5909 = vpop.f32.mrb[0].mxu0
      %v5910 = vpop.f32.mrb[0].mxu0
      %v5911 = vadd.f32 0.0, %v5910
      %v5912 = vpop.f32.mrb[0].mxu0
      %5913 = vmatprep.mubr.bf16.mxu0 0
      %5914 = vmatmul.mubr.bf16.gmra.mrb[0].mxu0 %v5833
      %v5915 = vpop.f32.mrb[0].mxu0
      %v5916 = vadd.f32 0.0, %v5915
      %v5917 = vpop.f32.mrb[0].mxu0
      %v5918 = vpop.f32.mrb[0].mxu0
      %v5919 = vadd.f32 0.0, %v5918
      %v5920 = vpop.f32.mrb[0].mxu0
      %5921 = vmatprep.mubr.bf16.mxu0 0
      %5922 = vmatmul.mubr.bf16.gmra.mrb[0].mxu0 %v5836
      %v5923 = vpop.f32.mrb[0].mxu0
      %v5924 = vadd.f32 0.0, %v5923
      %v5925 = vpop.f32.mrb[0].mxu0
      %v5926 = vpop.f32.mrb[0].mxu0
      %v5927 = vadd.f32 0.0, %v5926
      %v5928 = vpop.f32.mrb[0].mxu0
      %5929 = vmatprep.mubr.bf16.mxu0 0
      %5930 = vmatmul.mubr.bf16.gmra.mrb[0].mxu0 %v5839
      %v5931 = vpop.f32.mrb[0].mxu0
      %v5932 = vadd.f32 0.0, %v5931
      %v5933 = vpop.f32.mrb[0].mxu0
      %v5934 = vpop.f32.mrb[0].mxu0
      %v5935 = vadd.f32 0.0, %v5934
      %v5936 = vpop.f32.mrb[0].mxu0
      %5937 = vdwg.mxu0
      %v5938 = vadd.f32 %v5696, %v5876
      %v5939 = vadd.f32 %v5699, %v5879
      %v5940 = vadd.f32 %v5704, %v5884
      %v5941 = vadd.f32 %v5707, %v5887
      %v5942 = vadd.f32 %v5712, %v5892
      %v5943 = vadd.f32 %v5715, %v5895
      %v5944 = vadd.f32 %v5720, %v5900
      %v5945 = vadd.f32 %v5723, %v5903
      %v5946 = vadd.f32 %v5728, %v5908
      %v5947 = vadd.f32 %v5731, %v5911
      %v5948 = vadd.f32 %v5736, %v5916
      %v5949 = vadd.f32 %v5739, %v5919
      %v5950 = vadd.f32 %v5744, %v5924
      %v5951 = vadd.f32 %v5747, %v5927
      %v5952 = vadd.f32 %v5752, %v5932
      %v5953 = vadd.f32 %v5755, %v5935
      %v5954 = vld [vmem:[%s1380] sm:$0xf]
      %v5955 = vld [vmem:[%s1380 + $0x4] sm:$0xf]
      %v5956 = vld [vmem:[%s1380 + $0x8] sm:$0xf]
      %v5957 = vld [vmem:[%s1380 + $0xc] sm:$0xf]
      %v5958 = vld [vmem:[%s1380 + $0x10] sm:$0xf]
      %v5959 = vld [vmem:[%s1380 + $0x14] sm:$0xf]
      %v5960 = vld [vmem:[%s1380 + $0x18] sm:$0xf]
      %v5961 = vld [vmem:[%s1380 + $0x1c] sm:$0xf]
      %v5962 = vld [vmem:[%s1380 + $0x20] sm:$0xf]
      %v5963 = vld [vmem:[%s1380 + $0x24] sm:$0xf]
      %v5964 = vld [vmem:[%s1380 + $0x28] sm:$0xf]
      %v5965 = vld [vmem:[%s1380 + $0x2c] sm:$0xf]
      %v5966 = vld [vmem:[%s1380 + $0x30] sm:$0xf]
      %v5967 = vld [vmem:[%s1380 + $0x34] sm:$0xf]
      %v5968 = vld [vmem:[%s1380 + $0x38] sm:$0xf]
      %v5969 = vld [vmem:[%s1380 + $0x3c] sm:$0xf]
      %v5986 = vunpack.c.l.b16 %v5954
      %v5987 = vunpack.c.l.b16 %v5955
      %v5988 = vunpack.c.l.b16 %v5956
      %v5989 = vunpack.c.l.b16 %v5957
      %v5990 = vunpack.c.l.b16 %v5958
      %v5991 = vunpack.c.l.b16 %v5959
      %v5992 = vunpack.c.l.b16 %v5960
      %v5993 = vunpack.c.l.b16 %v5961
      %v5994 = vunpack.c.l.b16 %v5962
      %v5995 = vunpack.c.l.b16 %v5963
      %v5996 = vunpack.c.l.b16 %v5964
      %v5997 = vunpack.c.l.b16 %v5965
      %v5998 = vunpack.c.l.b16 %v5966
      %v5999 = vunpack.c.l.b16 %v5967
      %v6000 = vunpack.c.l.b16 %v5968
      %v6001 = vunpack.c.l.b16 %v5969
      %v6002 = vpack.c.b16 %v5987, %v5986
      %v6003 = vpack.c.b16 %v5989, %v5988
      %v6004 = vpack.c.b16 %v5991, %v5990
      %v6005 = vpack.c.b16 %v5993, %v5992
      %v6006 = vpack.c.b16 %v5995, %v5994
      %v6007 = vpack.c.b16 %v5997, %v5996
      %v6008 = vpack.c.b16 %v5999, %v5998
      %v6009 = vpack.c.b16 %v6001, %v6000
      %6010 = vrot.lane.b32.xlu0 %v5399, 80
      %v6011 = vpop.permute.xlu0 %6010
      %v6014 = vsel %vm900, %v6002, 0
      %v6017 = vsel %vm900, %v6003, 0
      %v6020 = vsel %vm900, %v6004, 0
      %v6023 = vsel %vm900, %v6005, 0
      %v6026 = vsel %vm900, %v6006, 0
      %v6029 = vsel %vm900, %v6007, 0
      %v6032 = vsel %vm900, %v6008, 0
      %v6035 = vsel %vm900, %v6009, 0
      %6037 = vmatprep.subr.bf16.mxu0 0
      %6038 = vmatpush1.bf16.msra.mxu0 %v6011
      %6039 = vmatprep.subr.bf16.mxu0 0
      %6040 = vmatpush1.bf16.msra.mxu0 0
      %6041 = vmatprep.subr.bf16.mxu0 0
      %6042 = vmatpush1.bf16.msra.mxu0 0
      %6043 = vmatprep.subr.bf16.mxu0 0
      %6044 = vmatpush1.bf16.msra.mxu0 0
      %6045 = vmatprep.subr.bf16.mxu0 0
      %6046 = vmatpush1.bf16.msra.mxu0 0
      %6047 = vmatprep.subr.bf16.mxu0 0
      %6048 = vmatpush1.bf16.msra.mxu0 0
      %6049 = vmatprep.subr.bf16.mxu0 0
      %6050 = vmatpush1.bf16.msra.mxu0 0
      %6051 = vmatprep.subr.bf16.mxu0 0
      %6052 = vmatpush1.bf16.msra.mxu0 0
      %6053 = vmatprep.subr.bf16.mxu0 0
      %6054 = vmatpush1.bf16.msra.mxu0 0
      %6055 = vmatprep.subr.bf16.mxu0 0
      %6056 = vmatpush1.bf16.msra.mxu0 0
      %6057 = vmatprep.subr.bf16.mxu0 0
      %6058 = vmatpush1.bf16.msra.mxu0 0
      %6059 = vmatprep.subr.bf16.mxu0 0
      %6060 = vmatpush1.bf16.msra.mxu0 0
      %6061 = vmatprep.subr.bf16.mxu0 0
      %6062 = vmatpush1.bf16.msra.mxu0 0
      %6063 = vmatprep.subr.bf16.mxu0 0
      %6064 = vmatpush1.bf16.msra.mxu0 0
      %6065 = vmatprep.subr.bf16.mxu0 0
      %6066 = vmatpush1.bf16.msra.mxu0 0
      %6067 = vmatprep.subr.bf16.mxu0 0
      %6068 = vmatpush1.bf16.msra.mxu0 0
      %6069 = vmatprep.mubr.bf16.mxu0 0
      %6070 = vmatmul.mubr.bf16.gmra.mrb[0].mxu0 %v6014
      %v6071 = vpop.f32.mrb[0].mxu0
      %v6072 = vadd.f32 0.0, %v6071
      %v6073 = vpop.f32.mrb[0].mxu0
      %v6074 = vpop.f32.mrb[0].mxu0
      %v6075 = vadd.f32 0.0, %v6074
      %v6076 = vpop.f32.mrb[0].mxu0
      %6077 = vmatprep.mubr.bf16.mxu0 0
      %6078 = vmatmul.mubr.bf16.gmra.mrb[0].mxu0 %v6017
      %v6079 = vpop.f32.mrb[0].mxu0
      %v6080 = vadd.f32 0.0, %v6079
      %v6081 = vpop.f32.mrb[0].mxu0
      %v6082 = vpop.f32.mrb[0].mxu0
      %v6083 = vadd.f32 0.0, %v6082
      %v6084 = vpop.f32.mrb[0].mxu0
      %6085 = vmatprep.mubr.bf16.mxu0 0
      %6086 = vmatmul.mubr.bf16.gmra.mrb[0].mxu0 %v6020
      %v6087 = vpop.f32.mrb[0].mxu0
      %v6088 = vadd.f32 0.0, %v6087
      %v6089 = vpop.f32.mrb[0].mxu0
      %v6090 = vpop.f32.mrb[0].mxu0
      %v6091 = vadd.f32 0.0, %v6090
      %v6092 = vpop.f32.mrb[0].mxu0
      %6093 = vmatprep.mubr.bf16.mxu0 0
      %6094 = vmatmul.mubr.bf16.gmra.mrb[0].mxu0 %v6023
      %v6095 = vpop.f32.mrb[0].mxu0
      %v6096 = vadd.f32 0.0, %v6095
      %v6097 = vpop.f32.mrb[0].mxu0
      %v6098 = vpop.f32.mrb[0].mxu0
      %v6099 = vadd.f32 0.0, %v6098
      %v6100 = vpop.f32.mrb[0].mxu0
      %6101 = vmatprep.mubr.bf16.mxu0 0
      %6102 = vmatmul.mubr.bf16.gmra.mrb[0].mxu0 %v6026
      %v6103 = vpop.f32.mrb[0].mxu0
      %v6104 = vadd.f32 0.0, %v6103
      %v6105 = vpop.f32.mrb[0].mxu0
      %v6106 = vpop.f32.mrb[0].mxu0
      %v6107 = vadd.f32 0.0, %v6106
      %v6108 = vpop.f32.mrb[0].mxu0
      %6109 = vmatprep.mubr.bf16.mxu0 0
      %6110 = vmatmul.mubr.bf16.gmra.mrb[0].mxu0 %v6029
      %v6111 = vpop.f32.mrb[0].mxu0
      %v6112 = vadd.f32 0.0, %v6111
      %v6113 = vpop.f32.mrb[0].mxu0
      %v6114 = vpop.f32.mrb[0].mxu0
      %v6115 = vadd.f32 0.0, %v6114
      %v6116 = vpop.f32.mrb[0].mxu0
      %6117 = vmatprep.mubr.bf16.mxu0 0
      %6118 = vmatmul.mubr.bf16.gmra.mrb[0].mxu0 %v6032
      %v6119 = vpop.f32.mrb[0].mxu0
      %v6120 = vadd.f32 0.0, %v6119
      %v6121 = vpop.f32.mrb[0].mxu0
      %v6122 = vpop.f32.mrb[0].mxu0
      %v6123 = vadd.f32 0.0, %v6122
      %v6124 = vpop.f32.mrb[0].mxu0
      %6125 = vmatprep.mubr.bf16.mxu0 0
      %6126 = vmatmul.mubr.bf16.gmra.mrb[0].mxu0 %v6035
      %v6127 = vpop.f32.mrb[0].mxu0
      %v6128 = vadd.f32 0.0, %v6127
      %v6129 = vpop.f32.mrb[0].mxu0
      %v6130 = vpop.f32.mrb[0].mxu0
      %v6131 = vadd.f32 0.0, %v6130
      %v6132 = vpop.f32.mrb[0].mxu0
      %6133 = vdwg.mxu0
      %v6134 = vadd.f32 %v5938, %v6072
      %v6135 = vadd.f32 %v5939, %v6075
      %v6136 = vadd.f32 %v5940, %v6080
      %v6137 = vadd.f32 %v5941, %v6083
      %v6138 = vadd.f32 %v5942, %v6088
      %v6139 = vadd.f32 %v5943, %v6091
      %v6140 = vadd.f32 %v5944, %v6096
      %v6141 = vadd.f32 %v5945, %v6099
      %v6142 = vadd.f32 %v5946, %v6104
      %v6143 = vadd.f32 %v5947, %v6107
      %v6144 = vadd.f32 %v5948, %v6112
      %v6145 = vadd.f32 %v5949, %v6115
      %v6146 = vadd.f32 %v5950, %v6120
      %v6147 = vadd.f32 %v5951, %v6123
      %v6148 = vadd.f32 %v5952, %v6128
      %v6149 = vadd.f32 %v5953, %v6131
      %v6150 = vpack.c.bf16 %v6135, %v6134
      %v6151 = vpack.c.bf16 %v6137, %v6136
      %v6152 = vpack.c.bf16 %v6139, %v6138
      %v6153 = vpack.c.bf16 %v6141, %v6140
      %v6154 = vpack.c.bf16 %v6143, %v6142
      %v6155 = vpack.c.bf16 %v6145, %v6144
      %v6156 = vpack.c.bf16 %v6147, %v6146
      %v6157 = vpack.c.bf16 %v6149, %v6148
      %v6158 = vld [vmem:[%s6] sm:$0xf]
      %v6159 = vld [vmem:[%s6 + $0x4] sm:$0xf]
      %v6160 = vld [vmem:[%s1587] sm:$0xf]
      %v6161 = vld [vmem:[%s1587 + $0x4] sm:$0xf]
      %v6164 = vunpack.c.l.b16 %v6160
      %v6165 = vunpack.c.l.b16 %v6161
      %v6166 = vpack.c.b16 %v6165, %v6164
      %v6169 = vsel %vm900, %v6152, 0
      %v6172 = vsel %vm900, %v6153, 0
      %6174 = vmatprep.subr.bf16.mxu0 0
      %6175 = vmatpush1.bf16.msra.mxu0 %v6166
      %6176 = vmatprep.subr.bf16.mxu0 0
      %6177 = vmatpush1.bf16.msra.mxu0 0
      %6178 = vmatprep.subr.bf16.mxu0 0
      %6179 = vmatpush1.bf16.msra.mxu0 0
      %6180 = vmatprep.subr.bf16.mxu0 0
      %6181 = vmatpush1.bf16.msra.mxu0 0
      %6182 = vmatprep.subr.bf16.mxu0 0
      %6183 = vmatpush1.bf16.msra.mxu0 0
      %6184 = vmatprep.subr.bf16.mxu0 0
      %6185 = vmatpush1.bf16.msra.mxu0 0
      %6186 = vmatprep.subr.bf16.mxu0 0
      %6187 = vmatpush1.bf16.msra.mxu0 0
      %6188 = vmatprep.subr.bf16.mxu0 0
      %6189 = vmatpush1.bf16.msra.mxu0 0
      %6190 = vmatprep.subr.bf16.mxu0 0
      %6191 = vmatpush1.bf16.msra.mxu0 0
      %6192 = vmatprep.subr.bf16.mxu0 0
      %6193 = vmatpush1.bf16.msra.mxu0 0
      %6194 = vmatprep.subr.bf16.mxu0 0
      %6195 = vmatpush1.bf16.msra.mxu0 0
      %6196 = vmatprep.subr.bf16.mxu0 0
      %6197 = vmatpush1.bf16.msra.mxu0 0
      %6198 = vmatprep.subr.bf16.mxu0 0
      %6199 = vmatpush1.bf16.msra.mxu0 0
      %6200 = vmatprep.subr.bf16.mxu0 0
      %6201 = vmatpush1.bf16.msra.mxu0 0
      %6202 = vmatprep.subr.bf16.mxu0 0
      %6203 = vmatpush1.bf16.msra.mxu0 0
      %6204 = vmatprep.subr.bf16.mxu0 0
      %6205 = vmatpush1.bf16.msra.mxu0 0
      %6206 = vmatprep.mubr.bf16.mxu0 0
      %6207 = vmatmul.mubr.bf16.gmra.mrb[0].mxu0 %v6169
      %v6208 = vpop.f32.mrb[0].mxu0
      %v6209 = vadd.f32 0.0, %v6208
      %v6210 = vpop.f32.mrb[0].mxu0
      %v6211 = vpop.f32.mrb[0].mxu0
      %v6212 = vadd.f32 0.0, %v6211
      %v6213 = vpop.f32.mrb[0].mxu0
      %6214 = vmatprep.mubr.bf16.mxu0 0
      %6215 = vmatmul.mubr.bf16.gmra.mrb[0].mxu0 %v6172
      %v6216 = vpop.f32.mrb[0].mxu0
      %v6217 = vadd.f32 0.0, %v6216
      %v6218 = vpop.f32.mrb[0].mxu0
      %v6219 = vpop.f32.mrb[0].mxu0
      %v6220 = vadd.f32 0.0, %v6219
      %v6221 = vpop.f32.mrb[0].mxu0
      %6222 = vdwg.mxu0
      %v6225 = vunpack.c.l.b16 %v6158
      %v6226 = vunpack.c.l.b16 %v6159
      %v6227 = vpack.c.b16 %v6226, %v6225
      %v6230 = vsel %vm900, %v6150, 0
      %v6233 = vsel %vm900, %v6151, 0
      %6235 = vmatprep.subr.bf16.mxu0 0
      %6236 = vmatpush1.bf16.msra.mxu0 %v6227
      %6237 = vmatprep.subr.bf16.mxu0 0
      %6238 = vmatpush1.bf16.msra.mxu0 0
      %6239 = vmatprep.subr.bf16.mxu0 0
      %6240 = vmatpush1.bf16.msra.mxu0 0
      %6241 = vmatprep.subr.bf16.mxu0 0
      %6242 = vmatpush1.bf16.msra.mxu0 0
      %6243 = vmatprep.subr.bf16.mxu0 0
      %6244 = vmatpush1.bf16.msra.mxu0 0
      %6245 = vmatprep.subr.bf16.mxu0 0
      %6246 = vmatpush1.bf16.msra.mxu0 0
      %6247 = vmatprep.subr.bf16.mxu0 0
      %6248 = vmatpush1.bf16.msra.mxu0 0
      %6249 = vmatprep.subr.bf16.mxu0 0
      %6250 = vmatpush1.bf16.msra.mxu0 0
      %6251 = vmatprep.subr.bf16.mxu0 0
      %6252 = vmatpush1.bf16.msra.mxu0 0
      %6253 = vmatprep.subr.bf16.mxu0 0
      %6254 = vmatpush1.bf16.msra.mxu0 0
      %6255 = vmatprep.subr.bf16.mxu0 0
      %6256 = vmatpush1.bf16.msra.mxu0 0
      %6257 = vmatprep.subr.bf16.mxu0 0
      %6258 = vmatpush1.bf16.msra.mxu0 0
      %6259 = vmatprep.subr.bf16.mxu0 0
      %6260 = vmatpush1.bf16.msra.mxu0 0
      %6261 = vmatprep.subr.bf16.mxu0 0
      %6262 = vmatpush1.bf16.msra.mxu0 0
      %6263 = vmatprep.subr.bf16.mxu0 0
      %6264 = vmatpush1.bf16.msra.mxu0 0
      %6265 = vmatprep.subr.bf16.mxu0 0
      %6266 = vmatpush1.bf16.msra.mxu0 0
      %6267 = vmatprep.mubr.bf16.mxu0 0
      %6268 = vmatmul.mubr.bf16.gmra.mrb[0].mxu0 %v6230
      %v6269 = vpop.f32.mrb[0].mxu0
      %v6270 = vadd.f32 %v6209, %v6269
      %v6271 = vpop.f32.mrb[0].mxu0
      %v6272 = vpop.f32.mrb[0].mxu0
      %v6273 = vadd.f32 %v6212, %v6272
      %v6274 = vpop.f32.mrb[0].mxu0
      %6275 = vmatprep.mubr.bf16.mxu0 0
      %6276 = vmatmul.mubr.bf16.gmra.mrb[0].mxu0 %v6233
      %v6277 = vpop.f32.mrb[0].mxu0
      %v6278 = vadd.f32 %v6217, %v6277
      %v6279 = vpop.f32.mrb[0].mxu0
      %v6280 = vpop.f32.mrb[0].mxu0
      %v6281 = vadd.f32 %v6220, %v6280
      %v6282 = vpop.f32.mrb[0].mxu0
      %6283 = vdwg.mxu0
      %v6284 = vld [vmem:[%s1712] sm:$0xf]
      %v6285 = vld [vmem:[%s1712 + $0x4] sm:$0xf]
      %v6288 = vunpack.c.l.b16 %v6284
      %v6289 = vunpack.c.l.b16 %v6285
      %v6290 = vpack.c.b16 %v6289, %v6288
      %v6293 = vsel %vm900, %v6154, 0
      %v6296 = vsel %vm900, %v6155, 0
      %6298 = vmatprep.subr.bf16.mxu0 0
      %6299 = vmatpush1.bf16.msra.mxu0 %v6290
      %6300 = vmatprep.subr.bf16.mxu0 0
      %6301 = vmatpush1.bf16.msra.mxu0 0
      %6302 = vmatprep.subr.bf16.mxu0 0
      %6303 = vmatpush1.bf16.msra.mxu0 0
      %6304 = vmatprep.subr.bf16.mxu0 0
      %6305 = vmatpush1.bf16.msra.mxu0 0
      %6306 = vmatprep.subr.bf16.mxu0 0
      %6307 = vmatpush1.bf16.msra.mxu0 0
      %6308 = vmatprep.subr.bf16.mxu0 0
      %6309 = vmatpush1.bf16.msra.mxu0 0
      %6310 = vmatprep.subr.bf16.mxu0 0
      %6311 = vmatpush1.bf16.msra.mxu0 0
      %6312 = vmatprep.subr.bf16.mxu0 0
      %6313 = vmatpush1.bf16.msra.mxu0 0
      %6314 = vmatprep.subr.bf16.mxu0 0
      %6315 = vmatpush1.bf16.msra.mxu0 0
      %6316 = vmatprep.subr.bf16.mxu0 0
      %6317 = vmatpush1.bf16.msra.mxu0 0
      %6318 = vmatprep.subr.bf16.mxu0 0
      %6319 = vmatpush1.bf16.msra.mxu0 0
      %6320 = vmatprep.subr.bf16.mxu0 0
      %6321 = vmatpush1.bf16.msra.mxu0 0
      %6322 = vmatprep.subr.bf16.mxu0 0
      %6323 = vmatpush1.bf16.msra.mxu0 0
      %6324 = vmatprep.subr.bf16.mxu0 0
      %6325 = vmatpush1.bf16.msra.mxu0 0
      %6326 = vmatprep.subr.bf16.mxu0 0
      %6327 = vmatpush1.bf16.msra.mxu0 0
      %6328 = vmatprep.subr.bf16.mxu0 0
      %6329 = vmatpush1.bf16.msra.mxu0 0
      %6330 = vmatprep.mubr.bf16.mxu0 0
      %6331 = vmatmul.mubr.bf16.gmra.mrb[0].mxu0 %v6293
      %v6332 = vpop.f32.mrb[0].mxu0
      %v6333 = vadd.f32 0.0, %v6332
      %v6334 = vpop.f32.mrb[0].mxu0
      %v6335 = vpop.f32.mrb[0].mxu0
      %v6336 = vadd.f32 0.0, %v6335
      %v6337 = vpop.f32.mrb[0].mxu0
      %6338 = vmatprep.mubr.bf16.mxu0 0
      %6339 = vmatmul.mubr.bf16.gmra.mrb[0].mxu0 %v6296
      %v6340 = vpop.f32.mrb[0].mxu0
      %v6341 = vadd.f32 0.0, %v6340
      %v6342 = vpop.f32.mrb[0].mxu0
      %v6343 = vpop.f32.mrb[0].mxu0
      %v6344 = vadd.f32 0.0, %v6343
      %v6345 = vpop.f32.mrb[0].mxu0
      %6346 = vdwg.mxu0
      %v6347 = vadd.f32 %v6270, %v6333
      %v6348 = vadd.f32 %v6273, %v6336
      %v6349 = vadd.f32 %v6278, %v6341
      %v6350 = vadd.f32 %v6281, %v6344
      %v6351 = vld [vmem:[%s1780] sm:$0xf]
      %v6352 = vld [vmem:[%s1780 + $0x4] sm:$0xf]
      %v6355 = vunpack.c.l.b16 %v6351
      %v6356 = vunpack.c.l.b16 %v6352
      %v6357 = vpack.c.b16 %v6356, %v6355
      %v6360 = vsel %vm900, %v6156, 0
      %v6363 = vsel %vm900, %v6157, 0
      %6365 = vmatprep.subr.bf16.mxu0 0
      %6366 = vmatpush1.bf16.msra.mxu0 %v6357
      %6367 = vmatprep.subr.bf16.mxu0 0
      %6368 = vmatpush1.bf16.msra.mxu0 0
      %6369 = vmatprep.subr.bf16.mxu0 0
      %6370 = vmatpush1.bf16.msra.mxu0 0
      %6371 = vmatprep.subr.bf16.mxu0 0
      %6372 = vmatpush1.bf16.msra.mxu0 0
      %6373 = vmatprep.subr.bf16.mxu0 0
      %6374 = vmatpush1.bf16.msra.mxu0 0
      %6375 = vmatprep.subr.bf16.mxu0 0
      %6376 = vmatpush1.bf16.msra.mxu0 0
      %6377 = vmatprep.subr.bf16.mxu0 0
      %6378 = vmatpush1.bf16.msra.mxu0 0
      %6379 = vmatprep.subr.bf16.mxu0 0
      %6380 = vmatpush1.bf16.msra.mxu0 0
      %6381 = vmatprep.subr.bf16.mxu0 0
      %6382 = vmatpush1.bf16.msra.mxu0 0
      %6383 = vmatprep.subr.bf16.mxu0 0
      %6384 = vmatpush1.bf16.msra.mxu0 0
      %6385 = vmatprep.subr.bf16.mxu0 0
      %6386 = vmatpush1.bf16.msra.mxu0 0
      %6387 = vmatprep.subr.bf16.mxu0 0
      %6388 = vmatpush1.bf16.msra.mxu0 0
      %6389 = vmatprep.subr.bf16.mxu0 0
      %6390 = vmatpush1.bf16.msra.mxu0 0
      %6391 = vmatprep.subr.bf16.mxu0 0
      %6392 = vmatpush1.bf16.msra.mxu0 0
      %6393 = vmatprep.subr.bf16.mxu0 0
      %6394 = vmatpush1.bf16.msra.mxu0 0
      %6395 = vmatprep.subr.bf16.mxu0 0
      %6396 = vmatpush1.bf16.msra.mxu0 0
      %6397 = vmatprep.mubr.bf16.mxu0 0
      %6398 = vmatmul.mubr.bf16.gmra.mrb[0].mxu0 %v6360
      %v6399 = vpop.f32.mrb[0].mxu0
      %v6400 = vadd.f32 0.0, %v6399
      %v6401 = vpop.f32.mrb[0].mxu0
      %v6402 = vpop.f32.mrb[0].mxu0
      %v6403 = vadd.f32 0.0, %v6402
      %v6404 = vpop.f32.mrb[0].mxu0
      %6405 = vmatprep.mubr.bf16.mxu0 0
      %6406 = vmatmul.mubr.bf16.gmra.mrb[0].mxu0 %v6363
      %v6407 = vpop.f32.mrb[0].mxu0
      %v6408 = vadd.f32 0.0, %v6407
      %v6409 = vpop.f32.mrb[0].mxu0
      %v6410 = vpop.f32.mrb[0].mxu0
      %v6411 = vadd.f32 0.0, %v6410
      %v6412 = vpop.f32.mrb[0].mxu0
      %6413 = vdwg.mxu0
      %v6414 = vadd.f32 %v6347, %v6400
      %v6415 = vadd.f32 %v6348, %v6403
      %v6416 = vadd.f32 %v6349, %v6408
      %v6417 = vadd.f32 %v6350, %v6411
      %v6418 = vadd.f32 %v6414, %v1851
      %v6419 = vadd.f32 %v6415, %v1856
      %v6420 = vadd.f32 %v6416, %v1861
      %v6421 = vadd.f32 %v6417, %v1866
      %v6422 = vmax.f32 %v6418, 0.0
      %v6423 = vmax.f32 %v6419, 0.0
      %v6424 = vmax.f32 %v6420, 0.0
      %v6425 = vmax.f32 %v6421, 0.0
      %6430 = vrot.lane.b32.xlu0 %v6422, 27
      %v6431 = vpop.permute.xlu0 %6430
      %6432 = vrot.lane.b32.xlu0 %v6423, 27
      %v6433 = vpop.permute.xlu0 %6432
      %6434 = vrot.lane.b32.xlu0 %v6424, 27
      %v6435 = vpop.permute.xlu0 %6434
      %6436 = vrot.lane.b32.xlu0 %v6425, 27
      %v6437 = vpop.permute.xlu0 %6436
      %vm6442 = vcmask 294104
      %6443 = vst.msk [vmem:[%s283] sm:$0xff] %vm6442, %v6431
      %6444 = vst.msk [vmem:[%s283 + $0x8] sm:$0xff] %vm6442, %v6433
      %6445 = vst.msk [vmem:[%s283 + $0x10] sm:$0xff] %vm6442, %v6435
      %6446 = vst.msk [vmem:[%s283 + $0x18] sm:$0xff] %vm6442, %v6437
      %p6447 = scmp.lt.s32.totalorder %s18, 1
      %s6448 = scalar_select %p6447, %s18, 1
      %s6449 = smul.addr %s6448, 4
      %s6450 = smul.addr %s6449, 8
      %s6451 = scalar_lea.vmem %s7, %s6450
      // Predicated region
      $region49: #{simple_cnn_forward.1} parent=47 // pred_check
        %p6452 = pneg %p188
      $region50: #{simple_cnn_forward.1} parent=47 // pred_check_branch
        %6454 = sbr.rel (%p6452) target = $region52
      $region51: #{simple_cnn_forward.1} parent=47 // pred_region
        _
      $region52: #{simple_cnn_forward.1} parent=47 // pred_fallthru
        _
    $region48: #{simple_cnn_forward.1} parent=5 // pred_fallthru
      _
    %p6455 = scmp.le.s32.totalorder 2, %s13
    // Predicated region
    $region53: #{simple_cnn_forward.1} parent=5 // pred_check
      %p6456 = pneg %p6455
    $region54: #{simple_cnn_forward.1} parent=5 // pred_check_branch
      %6458 = sbr.rel (%p6456) target = $region56
    $region55: #{simple_cnn_forward.1} parent=5 // pred_region
      %s6459 = ssub.s32 %s13, 2
      // Predicated region
      $region57: #{simple_cnn_forward.1} parent=55 // pred_check
        %p6460 = pneg %p194
      $region58: #{simple_cnn_forward.1} parent=55 // pred_check_branch
        %6462 = sbr.rel (%p6460) target = $region60
      $region59: #{simple_cnn_forward.1} parent=55 // pred_region
        %p6463 = scmp.lt.s32.totalorder %s19, 1
        %s6464 = scalar_select %p6463, %s19, 1
        %s6465 = smul.addr %s6464, 4
        %s6466 = smul.addr %s6465, 8
        %s6467 = scalar_lea.vmem %s7, %s6466
      $region60: #{simple_cnn_forward.1} parent=55 // pred_fallthru
        _
    $region56: #{simple_cnn_forward.1} parent=5 // pred_fallthru
      _
  $region6: #{simple_cnn_forward.1} parent=0 // loop_footer
    %s17 = sadd.s32 1, %s13
  $region7: #{simple_cnn_forward.1} parent=0 // loop_footer_branch
    %12 = sbr.rel target = $region3
  $region8: #{simple_cnn_forward.1} parent=0 // loop_exit
    _

</llo_original>
